<compile_context>
chip_gen: v5e
topology: v5e:2x2
jax: 0.10.0
libtpu: 0.0.40
codegen_flags: <defaults>
</compile_context>

<pallas_src>
import functools
import math

import jax
import jax.numpy as jnp
import numpy as np
from jax import lax
from jax.experimental import pallas as pl
from jax.experimental.pallas import tpu as pltpu


def _silu(x):
    # x * sigmoid(x); reciprocal routed to the EUP slot.
    return x * pl.reciprocal(1.0 + jnp.exp(-x), approx=True)


def _softplus(x):
    return jnp.where(x > 20.0, x, jnp.log1p(jnp.exp(jnp.minimum(x, 20.0))))


def mamba_block_kernel(
    x_ref,       # (lc*bb, D)      time-major rows: row = t*bb + b
    ln_w_ref,    # (1, D)
    ln_b_ref,    # (1, D)
    w_in_ref,    # (D, 2*DI)       in_proj.weight.T
    conv_w_ref,  # (DC, DI)        conv1d.weight[:, 0, :].T
    conv_b_ref,  # (1, DI)
    w_comb_ref,  # (DI, 2*N + DI)  columns = [B | C | dt (x_proj[:, :R] @ dt_proj.T folded)]
    dt_b_ref,    # (1, DI)         dt_proj.bias
    a_ref,       # (N, 1, DI)      A_log.T pre-shaped for leading-N broadcast
    d_ref,       # (1, DI)
    w_out_ref,   # (DI, D)         out_proj.weight.T
    out_ref,     # (lc*bb, D)
    convst_ref,  # (1, DC-1, bb, DI)   post-activation conv tail (torch layout fixed in glue)
    ssmst_ref,   # (1, N, bb, DI)      final ssm state
    dl_ref,      # scratch (lc*bb, DI)   delta
    du_ref,      # scratch (lc*bb, DI)   delta * u
    bc_ref,      # scratch (lc*bb, 2N)   [B | C]
    y_ref,       # scratch (lc*bb, DI)   scan output
    h_ref,       # scratch (N, bb, DI)   ssm state carried across L-chunks
    ccar_ref,    # scratch (DC-1, bb, DI) conv input tail carried across L-chunks
    *,
    bb,
    lc,
    t_chunk,
    mm_dtype,
):
    DC, DI = conv_w_ref.shape
    N = a_ref.shape[0]
    rows = lc * bb
    l = pl.program_id(1)
    n_l = pl.num_programs(1)

    # ---- reset per-batch-block carries at the first L-chunk ----
    @pl.when(l == 0)
    def _():
        h_ref[...] = jnp.zeros_like(h_ref)
        ccar_ref[...] = jnp.zeros_like(ccar_ref)

    xv = x_ref[...]                                        # residual

    # ---- LayerNorm (eps=1e-5, biased variance, affine) ----
    mu = jnp.mean(xv, axis=-1, keepdims=True)
    xc = xv - mu
    var = jnp.mean(xc * xc, axis=-1, keepdims=True)
    xn = xc * lax.rsqrt(var + 1e-5) * ln_w_ref[...] + ln_b_ref[...]

    # ---- in_proj (single MXU matmul over all rows of the block) ----
    xz = jnp.dot(xn.astype(mm_dtype), w_in_ref[...].astype(mm_dtype),
                 preferred_element_type=jnp.float32)
    x_in = xz[:, :DI]
    z = xz[:, DI:]

    # ---- causal depthwise conv over the whole time-major block (DC shifted reads) ----
    conv_w = conv_w_ref[...]
    xpad = jnp.concatenate([ccar_ref[j] for j in range(DC - 1)] + [x_in], axis=0)
    acc = jnp.zeros((rows, DI), jnp.float32) + conv_b_ref[...]
    for k in range(DC):
        acc = acc + conv_w[k:k + 1, :] * xpad[k * bb:k * bb + rows, :]
    u = _silu(acc)

    # carry the pre-activation in_proj tail for the next L-chunk's conv window
    for j in range(DC - 1):
        r0 = (lc - (DC - 1) + j) * bb
        ccar_ref[j] = x_in[r0:r0 + bb, :]

    # PyTorch slow path (state=None): conv state cache = post-activation conv tail
    @pl.when(l == n_l - 1)
    def _():
        for j in range(DC - 1):
            r0 = (lc - (DC - 1) + j) * bb
            convst_ref[0, j] = u[r0:r0 + bb, :]

    # ---- fused x_proj (+ folded dt_proj): one matmul, columns [B | C | dt] ----
    x_comb = jnp.dot(u.astype(mm_dtype), w_comb_ref[...].astype(mm_dtype),
                     preferred_element_type=jnp.float32)
    bc_ref[...] = x_comb[:, :2 * N]
    delta = _softplus(x_comb[:, 2 * N:] + dt_b_ref[...])
    dl_ref[...] = delta
    du_ref[...] = delta * u

    # ---- selective scan: fused over bb sequences, chunked exp, unrolled inner loop ----
    a_neg = -jnp.exp(a_ref[...])                           # (N, 1, DI)
    mI = lax.broadcasted_iota(jnp.int32, (2 * N, 1, 2 * N), 0)
    jI = lax.broadcasted_iota(jnp.int32, (2 * N, 1, 2 * N), 2)
    eye2n = (mI == jI).astype(jnp.float32)                 # lane->sublane selector

    rows_c = t_chunk * bb

    def chunk_body(c, h):
        base = c * rows_c
        dl_c = dl_ref[pl.ds(base, rows_c), :]              # (Tc*bb, DI)
        du_c = du_ref[pl.ds(base, rows_c), :]
        bc_c = bc_ref[pl.ds(base, rows_c), :]              # (Tc*bb, 2N)
        # chunk-wide EUP exp and B|C columnization, off the serial critical path
        dA = jnp.exp(a_neg * dl_c[None, :, :])             # (N, Tc*bb, DI)
        cols = jnp.sum(bc_c[None, :, :] * eye2n, axis=-1, keepdims=True)  # (2N, Tc*bb, 1)
        b_sel = cols[:N]
        c_sel = cols[N:]
        dBu = du_c[None, :, :] * b_sel                     # (N, Tc*bb, DI)
        ys = []
        for tau in range(t_chunk):                         # static unroll
            ts = tau * bb
            h = dA[:, ts:ts + bb, :] * h + dBu[:, ts:ts + bb, :]
            c_t = c_sel[:, ts:ts + bb, :]                  # (N, bb, 1)
            y_t = c_t[0] * h[0]
            for n in range(1, N):                          # C-contraction, pure VPU
                y_t = y_t + c_t[n] * h[n]
            ys.append(y_t)
        # one sublane-dense store per chunk instead of per-step masked stores
        y_ref[pl.ds(base, rows_c), :] = jnp.concatenate(ys, axis=0)
        return h

    h0 = h_ref[...]
    n_chunks = lc // t_chunk
    if n_chunks == 1:
        h_fin = chunk_body(0, h0)
    else:
        h_fin = lax.fori_loop(0, n_chunks, chunk_body, h0)
    h_ref[...] = h_fin

    @pl.when(l == n_l - 1)
    def _():
        ssmst_ref[0] = h_fin

    # ---- D-skip, gate, out_proj, residual ----
    y_g = (y_ref[...] + u * d_ref[...]) * _silu(z)
    out = jnp.dot(y_g.astype(mm_dtype), w_out_ref[...].astype(mm_dtype),
                  preferred_element_type=jnp.float32)
    out_ref[...] = xv + out


def _pick_batch_block(B, batch_block):
    if batch_block is not None:
        assert B % batch_block == 0, "batch_block must divide batch"
        return batch_block
    best = 1
    for cand in range(1, min(B, 8) + 1):          # keep >= 2 grid steps on the batch axis
        if B % cand == 0 and B // cand >= 2:
            best = cand
    return best


def _pick_seq_block(L, seq_block):
    if seq_block is not None:
        assert L % seq_block == 0, "seq_block must divide seqlen"
        return seq_block
    lc = min(L, 256)
    while L % lc:
        lc -= 1
    return lc


def _vmem_limit_bytes(rows_blk, D, DI, N, DC, bb, tch, mm_dtype, single_buffer):
    mmb = np.dtype(mm_dtype).itemsize
    w_f32 = 2 * D + DC * DI + 3 * DI + N * DI
    w_mm = D * 2 * DI + DI * (2 * N + DI) + DI * D
    weights = 4 * w_f32 + mmb * w_mm
    if not single_buffer:
        weights *= 2
    rowsb = 4 * rows_blk * (4 * D + 10 * DI + 4 * N)
    chunk = 4 * (3 * N * tch * bb * DI + 4 * N * tch * bb)
    carry = 4 * bb * DI * (2 * N + 3 * (DC - 1))
    est = weights + rowsb + chunk + carry
    try:
        cap = int(getattr(pltpu.get_tpu_info(), "vmem_capacity_bytes", 0) or 0)
    except Exception:
        cap = 0
    if cap <= 0:
        cap = 64 * 1024 * 1024                    # conservative (v7x per-core) fallback
    return int(min(0.85 * cap, max(32 * 1024 * 1024, 2 * est)))


def _build_call(*, total_rows, nb, nlc, bb, lc, tch, D, DI, N, DC, mm_dtype,
                single_buffer, vmem_limit):
    rows_blk = lc * bb
    kern = functools.partial(mamba_block_kernel, bb=bb, lc=lc, t_chunk=tch,
                             mm_dtype=mm_dtype)

    def wspec(shape):
        rank = len(shape)
        imap = lambda i, l: (0,) * rank
        if single_buffer:
            return pl.BlockSpec(shape, imap, pipeline_mode=pl.Buffered(1))
        return pl.BlockSpec(shape, imap)

    row_map = lambda i, l: (i * nlc + l, 0)
    state_map = lambda i, l: (i, 0, 0, 0)

    return pl.pallas_call(
        kern,
        grid=(nb, nlc),
        in_specs=[
            pl.BlockSpec((rows_blk, D), row_map),
            wspec((1, D)),
            wspec((1, D)),
            wspec((D, 2 * DI)),
            wspec((DC, DI)),
            wspec((1, DI)),
            wspec((DI, 2 * N + DI)),
            wspec((1, DI)),
            wspec((N, 1, DI)),
            wspec((1, DI)),
            wspec((DI, D)),
        ],
        out_specs=[
            pl.BlockSpec((rows_blk, D), row_map),
            pl.BlockSpec((1, DC - 1, bb, DI), state_map),
            pl.BlockSpec((1, N, bb, DI), state_map),
        ],
        out_shape=[
            jax.ShapeDtypeStruct((total_rows, D), jnp.float32),
            jax.ShapeDtypeStruct((nb, DC - 1, bb, DI), jnp.float32),
            jax.ShapeDtypeStruct((nb, N, bb, DI), jnp.float32),
        ],
        scratch_shapes=[
            pltpu.VMEM((rows_blk, DI), jnp.float32),      # delta
            pltpu.VMEM((rows_blk, DI), jnp.float32),      # delta*u
            pltpu.VMEM((rows_blk, 2 * N), jnp.float32),   # B|C
            pltpu.VMEM((rows_blk, DI), jnp.float32),      # y
            pltpu.VMEM((N, bb, DI), jnp.float32),         # h carry across L-chunks
            pltpu.VMEM((DC - 1, bb, DI), jnp.float32),    # conv input tail carry
        ],
        compiler_params=pltpu.CompilerParams(
            dimension_semantics=("parallel", "arbitrary"),
            vmem_limit_bytes=vmem_limit,
        ),
    )


def mamba_block_forward(x, p, *, batch_block=None, seq_block=None, scan_block=8,
                        matmul_dtype=jnp.bfloat16):
    B, L, D = x.shape
    DI = p["d"].shape[1]
    N = p["a_log"].shape[1]
    R = p["w_dt"].shape[0]
    DC = p["conv_w"].shape[0]
    assert DC >= 2 and L >= DC, "kernel assumes seqlen >= d_conv (PyTorch slow path case)"

    bb = _pick_batch_block(B, batch_block)
    nb = B // bb
    lc = _pick_seq_block(L, seq_block)
    nlc = L // lc
    tch = max(1, min(scan_block, lc))
    while lc % tch:
        tch -= 1
    rows_blk = lc * bb
    assert lc >= DC - 1, "seq_block must be >= d_conv - 1"
    assert rows_blk % 8 == 0 or (nb == 1 and nlc == 1), (
        "seq_block * batch_block must be a multiple of 8")

    # time-major rows within each batch block: row = t*bb + b (layout plumbing in the wrapper)
    x_g = x.reshape(nb, bb, L, D).transpose(0, 2, 1, 3).reshape(nb * L * bb, D)

    # fold dt_proj into x_proj (low-rank reassociation), column order [B | C | dt]
    w_dt_full = p["w_xproj"][:, :R] @ p["w_dt"]                       # (DI, DI)
    w_comb = jnp.concatenate([p["w_xproj"][:, R:], w_dt_full], axis=1)
    a3 = jnp.transpose(p["a_log"]).reshape(N, 1, DI)

    w_in, w_out = p["w_in"], p["w_out"]
    if matmul_dtype != jnp.float32:
        w_in = w_in.astype(matmul_dtype)
        w_comb = w_comb.astype(matmul_dtype)
        w_out = w_out.astype(matmul_dtype)

    args = (x_g, p["ln_w"], p["ln_b"], w_in, p["conv_w"], p["conv_b"],
            w_comb, p["dt_b"], a3, p["d"], w_out)

    total_rows = nb * L * bb
    result = None
    last_err = None
    # prefer single-buffered weights (pl.Buffered(1)); fall back to default buffering
    for single_buffer in (True, False):
        try:
            call = _build_call(
                total_rows=total_rows, nb=nb, nlc=nlc, bb=bb, lc=lc, tch=tch,
                D=D, DI=DI, N=N, DC=DC, mm_dtype=matmul_dtype,
                single_buffer=single_buffer,
                vmem_limit=_vmem_limit_bytes(rows_blk, D, DI, N, DC, bb, tch,
                                             matmul_dtype, single_buffer))
            result = call(*args)
            break
        except Exception as err:  # pragma: no cover - Buffered(1) unsupported fallback
            last_err = err
    if result is None:
        raise last_err
    out2, conv_tl, ssm_tl = result

    out = out2.reshape(nb, L, bb, D).transpose(0, 2, 1, 3).reshape(B, L, D)
    new_conv_state = jnp.transpose(conv_tl, (0, 2, 3, 1)).reshape(B, DI, DC - 1)
    new_ssm_state = jnp.transpose(ssm_tl, (0, 2, 3, 1)).reshape(B, DI, N)
    return out, (new_conv_state, new_ssm_state)


def init_params(key, d_model, d_state, d_conv, expand, dt_rank):
    DI = int(expand * d_model)
    R = dt_rank
    ks = jax.random.split(key, 7)

    def unif(k, shape, bound):
        return jax.random.uniform(k, shape, jnp.float32, -bound, bound)

    dt_init_std = R ** (-0.5)
    dt_min, dt_max, dt_init_floor = 1e-3, 1e-1, 1e-4
    rnd = jax.random.uniform(ks[5], (DI,), jnp.float32)
    dt_val = jnp.maximum(
        jnp.exp(rnd * (math.log(dt_max) - math.log(dt_min)) + math.log(dt_min)),
        dt_init_floor,
    )
    inv_dt = dt_val + jnp.log(-jnp.expm1(-dt_val))

    a_log = jnp.log(
        jnp.tile(jnp.arange(1, d_state + 1, dtype=jnp.float32)[None, :], (DI, 1))
    )

    return dict(
        ln_w=jnp.ones((1, d_model), jnp.float32),
        ln_b=jnp.zeros((1, d_model), jnp.float32),
        w_in=unif(ks[0], (d_model, 2 * DI), 1.0 / math.sqrt(d_model)),
        conv_w=unif(ks[1], (d_conv, DI), 1.0 / math.sqrt(d_conv)),
        conv_b=unif(ks[2], (1, DI), 1.0 / math.sqrt(d_conv)),
        w_xproj=unif(ks[3], (DI, R + 2 * d_state), 1.0 / math.sqrt(DI)),
        w_dt=unif(ks[4], (R, DI), dt_init_std),
        dt_b=inv_dt.reshape(1, DI),
        a_log=a_log,
        d=jnp.ones((1, DI), jnp.float32),
        w_out=unif(ks[6], (DI, d_model), 1.0 / math.sqrt(DI)),
    )


def mamba_block_ref(x, p):
    """Pure-JAX reference mirroring the PyTorch slow path (state=None)."""
    B, L, D = x.shape
    DI = p["w_dt"].shape[1]
    R = p["w_dt"].shape[0]
    N = p["a_log"].shape[1]
    DC = p["conv_w"].shape[0]

    mu = x.mean(-1, keepdims=True)
    var = ((x - mu) ** 2).mean(-1, keepdims=True)
    xn = (x - mu) / jnp.sqrt(var + 1e-5) * p["ln_w"][0] + p["ln_b"][0]

    xz = xn @ p["w_in"]
    x_in, z = xz[..., :DI], xz[..., DI:]

    xpad = jnp.concatenate([jnp.zeros((B, DC - 1, DI), jnp.float32), x_in], axis=1)
    acc = jnp.zeros((B, L, DI), jnp.float32) + p["conv_b"][0]
    for k in range(DC):
        acc = acc + p["conv_w"][k] * xpad[:, k:k + L, :]
    u = acc * jax.nn.sigmoid(acc)

    x_dbl = u @ p["w_xproj"]
    dt_low, Bm, Cm = x_dbl[..., :R], x_dbl[..., R:R + N], x_dbl[..., R + N:]
    delta = jax.nn.softplus(dt_low @ p["w_dt"] + p["dt_b"][0])
    A = -jnp.exp(p["a_log"])
    dA = jnp.exp(delta[..., None] * A)                     # (B, L, DI, N)
    dBu = (delta * u)[..., None] * Bm[:, :, None, :]

    def step(h, inp):
        dA_t, dBu_t, C_t = inp
        h = dA_t * h + dBu_t
        y = jnp.sum(h * C_t[:, None, :], axis=-1)
        return h, y

    h0 = jnp.zeros((B, DI, N), jnp.float32)
    hN, ys = lax.scan(
        step, h0,
        (dA.transpose(1, 0, 2, 3), dBu.transpose(1, 0, 2, 3), Cm.transpose(1, 0, 2)),
    )
    y = ys.transpose(1, 0, 2)                              # (B, L, DI)
    y = (y + u * p["d"][0]) * (z * jax.nn.sigmoid(z))
    out = x + y @ p["w_out"]
    conv_state = jnp.transpose(u[:, L - (DC - 1):, :], (0, 2, 1))
    return out, (conv_state, hN)


if __name__ == "__main__":
    d_state, d_conv, expand = 16, 4, 2

    def run_case(B, L, D, *, matmul_dtype, tol, **kw):
        dt_rank = math.ceil(D / 16)
        key = jax.random.PRNGKey(0)
        kx, kp = jax.random.split(key)
        x = jax.random.normal(kx, (B, L, D), dtype=jnp.float32)
        params = init_params(kp, D, d_state, d_conv, expand, dt_rank)
        with jax.default_matmul_precision("float32"):
            ref_out, (ref_cst, ref_sst) = mamba_block_ref(x, params)
        out, (cst, sst) = mamba_block_forward(x, params, matmul_dtype=matmul_dtype, **kw)
        jax.block_until_ready(out)
        for name, got, ref in (("out", out, ref_out), ("conv_state", cst, ref_cst),
                               ("ssm_state", sst, ref_sst)):
            g, r = np.asarray(got), np.asarray(ref)
            err = float(np.max(np.abs(g - r)))
            assert np.allclose(g, r, atol=tol, rtol=tol), (name, err)

    # small default config: grid split over batch (2 steps), single L-chunk, f32 matmuls
    run_case(2, 8, 32, matmul_dtype=jnp.float32, tol=2e-2)
    # same config with bf16 matmul operands (recommended default on v5e/v6e/v7x)
    run_case(2, 8, 32, matmul_dtype=jnp.bfloat16, tol=6e-2)
    # exercise the L-chunk grid axis + conv/ssm carries across 4 chunks with bb=2
    run_case(2, 32, 32, matmul_dtype=jnp.float32, tol=2e-2, batch_block=2, seq_block=8)
    # exercise several in-kernel scan chunks (T=4) under one L-chunk, bf16 matmuls
    run_case(4, 16, 32, matmul_dtype=jnp.bfloat16, tol=6e-2,
             batch_block=2, seq_block=16, scan_block=4)

    print("KERNEL_OK")
</pallas_src>

<mosaic_0001>
module attributes {stable_mosaic.version = 11 : i64} {
  func.func @mamba_block_kernel(%arg0: i32, %arg1: i32, %arg2: memref<8x32xf32, #tpu.memory_space<vmem>>, %arg3: memref<1x32xf32, #tpu.memory_space<vmem>>, %arg4: memref<1x32xf32, #tpu.memory_space<vmem>>, %arg5: memref<32x128xf32, #tpu.memory_space<vmem>>, %arg6: memref<4x64xf32, #tpu.memory_space<vmem>>, %arg7: memref<1x64xf32, #tpu.memory_space<vmem>>, %arg8: memref<64x96xf32, #tpu.memory_space<vmem>>, %arg9: memref<1x64xf32, #tpu.memory_space<vmem>>, %arg10: memref<16x1x64xf32, #tpu.memory_space<vmem>>, %arg11: memref<1x64xf32, #tpu.memory_space<vmem>>, %arg12: memref<64x32xf32, #tpu.memory_space<vmem>>, %arg13: memref<8x32xf32, #tpu.memory_space<vmem>>, %arg14: memref<1x3x1x64xf32, #tpu.memory_space<vmem>>, %arg15: memref<1x16x1x64xf32, #tpu.memory_space<vmem>>, %arg16: memref<8x64xf32, #tpu.memory_space<vmem>>, %arg17: memref<8x64xf32, #tpu.memory_space<vmem>>, %arg18: memref<8x32xf32, #tpu.memory_space<vmem>>, %arg19: memref<8x64xf32, #tpu.memory_space<vmem>>, %arg20: memref<16x1x64xf32, #tpu.memory_space<vmem>>, %arg21: memref<3x1x64xf32, #tpu.memory_space<vmem>>) attributes {dimension_semantics = [#tpu.dimension_semantics<parallel>, #tpu.dimension_semantics<arbitrary>], iteration_bounds = array<i64: 2, 1>, scalar_prefetch = 0 : i64, scratch_operands = 6 : i64, tpu.core_type = #tpu.core_type<tc>, window_params = [{transform_indices = @transform_0, window_bounds = array<i64: 8, 32>}, {pipeline_mode = #tpu.pipeline_mode<synchronous>, transform_indices = @transform_1, window_bounds = array<i64: 1, 32>}, {pipeline_mode = #tpu.pipeline_mode<synchronous>, transform_indices = @transform_2, window_bounds = array<i64: 1, 32>}, {pipeline_mode = #tpu.pipeline_mode<synchronous>, transform_indices = @transform_3, window_bounds = array<i64: 32, 128>}, {pipeline_mode = #tpu.pipeline_mode<synchronous>, transform_indices = @transform_4, window_bounds = array<i64: 4, 64>}, {pipeline_mode = #tpu.pipeline_mode<synchronous>, transform_indices = @transform_5, window_bounds = array<i64: 1, 64>}, {pipeline_mode = #tpu.pipeline_mode<synchronous>, transform_indices = @transform_6, window_bounds = array<i64: 64, 96>}, {pipeline_mode = #tpu.pipeline_mode<synchronous>, transform_indices = @transform_7, window_bounds = array<i64: 1, 64>}, {pipeline_mode = #tpu.pipeline_mode<synchronous>, transform_indices = @transform_8, window_bounds = array<i64: 16, 1, 64>}, {pipeline_mode = #tpu.pipeline_mode<synchronous>, transform_indices = @transform_9, window_bounds = array<i64: 1, 64>}, {pipeline_mode = #tpu.pipeline_mode<synchronous>, transform_indices = @transform_10, window_bounds = array<i64: 64, 32>}, {transform_indices = @transform_11, window_bounds = array<i64: 8, 32>}, {transform_indices = @transform_12, window_bounds = array<i64: 1, 3, 1, 64>}, {transform_indices = @transform_13, window_bounds = array<i64: 1, 16, 1, 64>}]} {
    %c0_i32 = arith.constant 0 : i32
    %0 = arith.cmpi eq, %arg1, %c0_i32 : i32
    %1 = arith.extui %0 : i1 to i32
    %c0_i32_0 = arith.constant 0 : i32
    %2 = arith.cmpi ne, %1, %c0_i32_0 : i32
    scf.if %2 {
      %cst_83 = arith.constant 0.000000e+00 : f32
      %1083 = vector.broadcast %cst_83 : f32 to vector<16x1x64xf32>
      %c0_84 = arith.constant 0 : index
      %c0_85 = arith.constant 0 : index
      %c0_86 = arith.constant 0 : index
      %1084 = vector.load %arg20[%c0_84, %c0_85, %c0_86] : memref<16x1x64xf32, #tpu.memory_space<vmem>>, vector<16x1x64xf32>
      tpu.vector_store %arg20[%c0_84, %c0_85, %c0_86], %1083 {strides = array<i32>} : memref<16x1x64xf32, #tpu.memory_space<vmem>>, vector<16x1x64xf32>,
      %cst_87 = arith.constant 0.000000e+00 : f32
      %1085 = vector.broadcast %cst_87 : f32 to vector<3x1x64xf32>
      %c0_88 = arith.constant 0 : index
      %c0_89 = arith.constant 0 : index
      %c0_90 = arith.constant 0 : index
      %1086 = vector.load %arg21[%c0_88, %c0_89, %c0_90] : memref<3x1x64xf32, #tpu.memory_space<vmem>>, vector<3x1x64xf32>
      tpu.vector_store %arg21[%c0_88, %c0_89, %c0_90], %1085 {strides = array<i32>} : memref<3x1x64xf32, #tpu.memory_space<vmem>>, vector<3x1x64xf32>,
    } else {
    }
    %c0 = arith.constant 0 : index
    %c0_1 = arith.constant 0 : index
    %3 = vector.load %arg2[%c0, %c0_1] : memref<8x32xf32, #tpu.memory_space<vmem>>, vector<8x32xf32>
    %cst = arith.constant dense<0.000000e+00> : vector<8xf32>
    %4 = vector.multi_reduction <add>, %3, %cst [1] : vector<8x32xf32> to vector<8xf32>
    %5 = vector.shape_cast %4 : vector<8xf32> to vector<8x1xf32>
    %cst_2 = arith.constant 3.200000e+01 : f32
    %6 = vector.broadcast %cst_2 : f32 to vector<8x1xf32>
    %7 = arith.divf %5, %6 : vector<8x1xf32>
    %8 = vector.broadcast %7 : vector<8x1xf32> to vector<8x32xf32>
    %9 = arith.subf %3, %8 : vector<8x32xf32>
    %10 = arith.mulf %9, %9 : vector<8x32xf32>
    %cst_3 = arith.constant dense<0.000000e+00> : vector<8xf32>
    %11 = vector.multi_reduction <add>, %10, %cst_3 [1] : vector<8x32xf32> to vector<8xf32>
    %12 = vector.shape_cast %11 : vector<8xf32> to vector<8x1xf32>
    %cst_4 = arith.constant 3.200000e+01 : f32
    %13 = vector.broadcast %cst_4 : f32 to vector<8x1xf32>
    %14 = arith.divf %12, %13 : vector<8x1xf32>
    %cst_5 = arith.constant 9.99999974E-6 : f32
    %15 = vector.broadcast %cst_5 : f32 to vector<8x1xf32>
    %16 = arith.addf %14, %15 : vector<8x1xf32>
    %17 = math.rsqrt %16 : vector<8x1xf32>
    %18 = vector.broadcast %17 : vector<8x1xf32> to vector<8x32xf32>
    %19 = arith.mulf %9, %18 : vector<8x32xf32>
    %c0_6 = arith.constant 0 : index
    %c0_7 = arith.constant 0 : index
    %20 = vector.load %arg3[%c0_6, %c0_7] : memref<1x32xf32, #tpu.memory_space<vmem>>, vector<1x32xf32>
    %21 = vector.broadcast %20 : vector<1x32xf32> to vector<8x32xf32>
    %22 = arith.mulf %19, %21 : vector<8x32xf32>
    %c0_8 = arith.constant 0 : index
    %c0_9 = arith.constant 0 : index
    %23 = vector.load %arg4[%c0_8, %c0_9] : memref<1x32xf32, #tpu.memory_space<vmem>>, vector<1x32xf32>
    %24 = vector.broadcast %23 : vector<1x32xf32> to vector<8x32xf32>
    %25 = arith.addf %22, %24 : vector<8x32xf32>
    %c0_10 = arith.constant 0 : index
    %c0_11 = arith.constant 0 : index
    %26 = vector.load %arg5[%c0_10, %c0_11] : memref<32x128xf32, #tpu.memory_space<vmem>>, vector<32x128xf32>
    %cst_12 = arith.constant dense<0.000000e+00> : vector<8x128xf32>
    %27 = tpu.matmul %25, %26, %cst_12 {dimension_numbers = #tpu.dot_dimension_numbers<[1], [0], [0], [1], [0, 0, 1, 1], [], []>} : vector<8x32xf32>, vector<32x128xf32>, vector<8x128xf32> -> vector<8x128xf32>
    %28 = vector.extract_strided_slice %27 {offsets = [0, 0], sizes = [8, 64], strides = [1, 1]} : vector<8x128xf32> to vector<8x64xf32>
    %29 = vector.extract_strided_slice %27 {offsets = [0, 64], sizes = [8, 64], strides = [1, 1]} : vector<8x128xf32> to vector<8x64xf32>
    %c0_13 = arith.constant 0 : index
    %c0_14 = arith.constant 0 : index
    %30 = vector.load %arg6[%c0_13, %c0_14] : memref<4x64xf32, #tpu.memory_space<vmem>>, vector<4x64xf32>
    %c0_15 = arith.constant 0 : index
    %c0_16 = arith.constant 0 : index
    %c0_17 = arith.constant 0 : index
    %31 = vector.load %arg21[%c0_15, %c0_16, %c0_17] : memref<3x1x64xf32, #tpu.memory_space<vmem>>, vector<1x1x64xf32>
    %32 = vector.shape_cast %31 : vector<1x1x64xf32> to vector<1x64xf32>
    %c1 = arith.constant 1 : index
    %c0_18 = arith.constant 0 : index
    %c0_19 = arith.constant 0 : index
    %33 = vector.load %arg21[%c1, %c0_18, %c0_19] : memref<3x1x64xf32, #tpu.memory_space<vmem>>, vector<1x1x64xf32>
    %34 = vector.shape_cast %33 : vector<1x1x64xf32> to vector<1x64xf32>
    %c2 = arith.constant 2 : index
    %c0_20 = arith.constant 0 : index
    %c0_21 = arith.constant 0 : index
    %35 = vector.load %arg21[%c2, %c0_20, %c0_21] : memref<3x1x64xf32, #tpu.memory_space<vmem>>, vector<1x1x64xf32>
    %36 = vector.shape_cast %35 : vector<1x1x64xf32> to vector<1x64xf32>
    %37 = tpu.concatenate %32, %34, %36, %28 in 0 : vector<1x64xf32>, vector<1x64xf32>, vector<1x64xf32>, vector<8x64xf32> -> vector<11x64xf32>
    %cst_22 = arith.constant 0.000000e+00 : f32
    %38 = vector.broadcast %cst_22 : f32 to vector<8x64xf32>
    %c0_23 = arith.constant 0 : index
    %c0_24 = arith.constant 0 : index
    %39 = vector.load %arg7[%c0_23, %c0_24] : memref<1x64xf32, #tpu.memory_space<vmem>>, vector<1x64xf32>
    %40 = vector.broadcast %39 : vector<1x64xf32> to vector<8x64xf32>
    %41 = arith.addf %38, %40 : vector<8x64xf32>
    %42 = vector.extract_strided_slice %30 {offsets = [0, 0], sizes = [1, 64], strides = [1, 1]} : vector<4x64xf32> to vector<1x64xf32>
    %43 = vector.extract_strided_slice %37 {offsets = [0, 0], sizes = [8, 64], strides = [1, 1]} : vector<11x64xf32> to vector<8x64xf32>
    %44 = vector.broadcast %42 : vector<1x64xf32> to vector<8x64xf32>
    %45 = arith.mulf %44, %43 : vector<8x64xf32>
    %46 = arith.addf %41, %45 : vector<8x64xf32>
    %47 = vector.extract_strided_slice %30 {offsets = [1, 0], sizes = [1, 64], strides = [1, 1]} : vector<4x64xf32> to vector<1x64xf32>
    %48 = vector.extract_strided_slice %37 {offsets = [1, 0], sizes = [8, 64], strides = [1, 1]} : vector<11x64xf32> to vector<8x64xf32>
    %49 = vector.broadcast %47 : vector<1x64xf32> to vector<8x64xf32>
    %50 = arith.mulf %49, %48 : vector<8x64xf32>
    %51 = arith.addf %46, %50 : vector<8x64xf32>
    %52 = vector.extract_strided_slice %30 {offsets = [2, 0], sizes = [1, 64], strides = [1, 1]} : vector<4x64xf32> to vector<1x64xf32>
    %53 = vector.extract_strided_slice %37 {offsets = [2, 0], sizes = [8, 64], strides = [1, 1]} : vector<11x64xf32> to vector<8x64xf32>
    %54 = vector.broadcast %52 : vector<1x64xf32> to vector<8x64xf32>
    %55 = arith.mulf %54, %53 : vector<8x64xf32>
    %56 = arith.addf %51, %55 : vector<8x64xf32>
    %57 = vector.extract_strided_slice %30 {offsets = [3, 0], sizes = [1, 64], strides = [1, 1]} : vector<4x64xf32> to vector<1x64xf32>
    %58 = vector.extract_strided_slice %37 {offsets = [3, 0], sizes = [8, 64], strides = [1, 1]} : vector<11x64xf32> to vector<8x64xf32>
    %59 = vector.broadcast %57 : vector<1x64xf32> to vector<8x64xf32>
    %60 = arith.mulf %59, %58 : vector<8x64xf32>
    %61 = arith.addf %56, %60 : vector<8x64xf32>
    %cst_25 = arith.constant 0.000000e+00 : f32
    %62 = vector.broadcast %cst_25 : f32 to vector<8x64xf32>
    %63 = arith.subf %62, %61 : vector<8x64xf32>
    %64 = math.exp %63 : vector<8x64xf32>
    %cst_26 = arith.constant 1.000000e+00 : f32
    %65 = vector.broadcast %cst_26 : f32 to vector<8x64xf32>
    %66 = arith.addf %65, %64 : vector<8x64xf32>
    %67 = tpu.reciprocal %66 {approx = true} : vector<8x64xf32> -> vector<8x64xf32>
    %68 = arith.mulf %61, %67 : vector<8x64xf32>
    %69 = vector.extract_strided_slice %28 {offsets = [5, 0], sizes = [1, 64], strides = [1, 1]} : vector<8x64xf32> to vector<1x64xf32>
    %c0_27 = arith.constant 0 : index
    %c0_28 = arith.constant 0 : index
    %c0_29 = arith.constant 0 : index
    %70 = vector.load %arg21[%c0_27, %c0_28, %c0_29] : memref<3x1x64xf32, #tpu.memory_space<vmem>>, vector<1x1x64xf32>
    %71 = vector.shape_cast %70 : vector<1x1x64xf32> to vector<1x64xf32>
    %72 = vector.shape_cast %69 : vector<1x64xf32> to vector<1x1x64xf32>
    tpu.vector_store %arg21[%c0_27, %c0_28, %c0_29], %72 {strides = array<i32>} : memref<3x1x64xf32, #tpu.memory_space<vmem>>, vector<1x1x64xf32>,
    %73 = vector.extract_strided_slice %28 {offsets = [6, 0], sizes = [1, 64], strides = [1, 1]} : vector<8x64xf32> to vector<1x64xf32>
    %c1_30 = arith.constant 1 : index
    %c0_31 = arith.constant 0 : index
    %c0_32 = arith.constant 0 : index
    %74 = vector.load %arg21[%c1_30, %c0_31, %c0_32] : memref<3x1x64xf32, #tpu.memory_space<vmem>>, vector<1x1x64xf32>
    %75 = vector.shape_cast %74 : vector<1x1x64xf32> to vector<1x64xf32>
    %76 = vector.shape_cast %73 : vector<1x64xf32> to vector<1x1x64xf32>
    tpu.vector_store %arg21[%c1_30, %c0_31, %c0_32], %76 {strides = array<i32>} : memref<3x1x64xf32, #tpu.memory_space<vmem>>, vector<1x1x64xf32>,
    %77 = vector.extract_strided_slice %28 {offsets = [7, 0], sizes = [1, 64], strides = [1, 1]} : vector<8x64xf32> to vector<1x64xf32>
    %c2_33 = arith.constant 2 : index
    %c0_34 = arith.constant 0 : index
    %c0_35 = arith.constant 0 : index
    %78 = vector.load %arg21[%c2_33, %c0_34, %c0_35] : memref<3x1x64xf32, #tpu.memory_space<vmem>>, vector<1x1x64xf32>
    %79 = vector.shape_cast %78 : vector<1x1x64xf32> to vector<1x64xf32>
    %80 = vector.shape_cast %77 : vector<1x64xf32> to vector<1x1x64xf32>
    tpu.vector_store %arg21[%c2_33, %c0_34, %c0_35], %80 {strides = array<i32>} : memref<3x1x64xf32, #tpu.memory_space<vmem>>, vector<1x1x64xf32>,
    %c0_i32_36 = arith.constant 0 : i32
    %81 = arith.cmpi eq, %arg1, %c0_i32_36 : i32
    %82 = arith.extui %81 : i1 to i32
    %c0_i32_37 = arith.constant 0 : i32
    %83 = arith.cmpi ne, %82, %c0_i32_37 : i32
    scf.if %83 {
      %1083 = vector.extract_strided_slice %68 {offsets = [5, 0], sizes = [1, 64], strides = [1, 1]} : vector<8x64xf32> to vector<1x64xf32>
      %c0_83 = arith.constant 0 : index
      %c0_84 = arith.constant 0 : index
      %c0_85 = arith.constant 0 : index
      %c0_86 = arith.constant 0 : index
      %1084 = vector.load %arg14[%c0_83, %c0_84, %c0_85, %c0_86] : memref<1x3x1x64xf32, #tpu.memory_space<vmem>>, vector<1x1x1x64xf32>
      %1085 = vector.shape_cast %1084 : vector<1x1x1x64xf32> to vector<1x64xf32>
      %1086 = vector.shape_cast %1083 : vector<1x64xf32> to vector<1x1x1x64xf32>
      tpu.vector_store %arg14[%c0_83, %c0_84, %c0_85, %c0_86], %1086 {strides = array<i32>} : memref<1x3x1x64xf32, #tpu.memory_space<vmem>>, vector<1x1x1x64xf32>,
      %1087 = vector.extract_strided_slice %68 {offsets = [6, 0], sizes = [1, 64], strides = [1, 1]} : vector<8x64xf32> to vector<1x64xf32>
      %c0_87 = arith.constant 0 : index
      %c1_88 = arith.constant 1 : index
      %c0_89 = arith.constant 0 : index
      %c0_90 = arith.constant 0 : index
      %1088 = vector.load %arg14[%c0_87, %c1_88, %c0_89, %c0_90] : memref<1x3x1x64xf32, #tpu.memory_space<vmem>>, vector<1x1x1x64xf32>
      %1089 = vector.shape_cast %1088 : vector<1x1x1x64xf32> to vector<1x64xf32>
      %1090 = vector.shape_cast %1087 : vector<1x64xf32> to vector<1x1x1x64xf32>
      tpu.vector_store %arg14[%c0_87, %c1_88, %c0_89, %c0_90], %1090 {strides = array<i32>} : memref<1x3x1x64xf32, #tpu.memory_space<vmem>>, vector<1x1x1x64xf32>,
      %1091 = vector.extract_strided_slice %68 {offsets = [7, 0], sizes = [1, 64], strides = [1, 1]} : vector<8x64xf32> to vector<1x64xf32>
      %c0_91 = arith.constant 0 : index
      %c2_92 = arith.constant 2 : index
      %c0_93 = arith.constant 0 : index
      %c0_94 = arith.constant 0 : index
      %1092 = vector.load %arg14[%c0_91, %c2_92, %c0_93, %c0_94] : memref<1x3x1x64xf32, #tpu.memory_space<vmem>>, vector<1x1x1x64xf32>
      %1093 = vector.shape_cast %1092 : vector<1x1x1x64xf32> to vector<1x64xf32>
      %1094 = vector.shape_cast %1091 : vector<1x64xf32> to vector<1x1x1x64xf32>
      tpu.vector_store %arg14[%c0_91, %c2_92, %c0_93, %c0_94], %1094 {strides = array<i32>} : memref<1x3x1x64xf32, #tpu.memory_space<vmem>>, vector<1x1x1x64xf32>,
    } else {
    }
    %c0_38 = arith.constant 0 : index
    %c0_39 = arith.constant 0 : index
    %84 = vector.load %arg8[%c0_38, %c0_39] : memref<64x96xf32, #tpu.memory_space<vmem>>, vector<64x96xf32>
    %cst_40 = arith.constant dense<0.000000e+00> : vector<8x96xf32>
    %85 = tpu.matmul %68, %84, %cst_40 {dimension_numbers = #tpu.dot_dimension_numbers<[1], [0], [0], [1], [0, 0, 1, 1], [], []>} : vector<8x64xf32>, vector<64x96xf32>, vector<8x96xf32> -> vector<8x96xf32>
    %86 = vector.extract_strided_slice %85 {offsets = [0, 0], sizes = [8, 32], strides = [1, 1]} : vector<8x96xf32> to vector<8x32xf32>
    %c0_41 = arith.constant 0 : index
    %c0_42 = arith.constant 0 : index
    %87 = vector.load %arg18[%c0_41, %c0_42] : memref<8x32xf32, #tpu.memory_space<vmem>>, vector<8x32xf32>
    tpu.vector_store %arg18[%c0_41, %c0_42], %86 {strides = array<i32>} : memref<8x32xf32, #tpu.memory_space<vmem>>, vector<8x32xf32>,
    %88 = vector.extract_strided_slice %85 {offsets = [0, 32], sizes = [8, 64], strides = [1, 1]} : vector<8x96xf32> to vector<8x64xf32>
    %c0_43 = arith.constant 0 : index
    %c0_44 = arith.constant 0 : index
    %89 = vector.load %arg9[%c0_43, %c0_44] : memref<1x64xf32, #tpu.memory_space<vmem>>, vector<1x64xf32>
    %90 = vector.broadcast %89 : vector<1x64xf32> to vector<8x64xf32>
    %91 = arith.addf %88, %90 : vector<8x64xf32>
    %cst_45 = arith.constant 2.000000e+01 : f32
    %92 = vector.broadcast %cst_45 : f32 to vector<8x64xf32>
    %93 = arith.cmpf ogt, %91, %92 : vector<8x64xf32>
    %cst_46 = arith.constant 2.000000e+01 : f32
    %94 = vector.broadcast %cst_46 : f32 to vector<8x64xf32>
    %95 = arith.minimumf %91, %94 : vector<8x64xf32>
    %96 = math.exp %95 : vector<8x64xf32>
    %97 = math.log1p %96 : vector<8x64xf32>
    %98 = arith.select %93, %91, %97 : vector<8x64xi1>, vector<8x64xf32>
    %c0_47 = arith.constant 0 : index
    %c0_48 = arith.constant 0 : index
    %99 = vector.load %arg16[%c0_47, %c0_48] : memref<8x64xf32, #tpu.memory_space<vmem>>, vector<8x64xf32>
    tpu.vector_store %arg16[%c0_47, %c0_48], %98 {strides = array<i32>} : memref<8x64xf32, #tpu.memory_space<vmem>>, vector<8x64xf32>,
    %100 = arith.mulf %98, %68 : vector<8x64xf32>
    %c0_49 = arith.constant 0 : index
    %c0_50 = arith.constant 0 : index
    %101 = vector.load %arg17[%c0_49, %c0_50] : memref<8x64xf32, #tpu.memory_space<vmem>>, vector<8x64xf32>
    tpu.vector_store %arg17[%c0_49, %c0_50], %100 {strides = array<i32>} : memref<8x64xf32, #tpu.memory_space<vmem>>, vector<8x64xf32>,
    %c0_51 = arith.constant 0 : index
    %c0_52 = arith.constant 0 : index
    %c0_53 = arith.constant 0 : index
    %102 = vector.load %arg10[%c0_51, %c0_52, %c0_53] : memref<16x1x64xf32, #tpu.memory_space<vmem>>, vector<16x1x64xf32>
    %103 = math.exp %102 : vector<16x1x64xf32>
    %cst_54 = arith.constant 0.000000e+00 : f32
    %104 = vector.broadcast %cst_54 : f32 to vector<16x1x64xf32>
    %105 = arith.subf %104, %103 : vector<16x1x64xf32>
    %106 = tpu.iota {dimensions = array<i32: 0>} : vector<32x1x32xi32>
    %107 = tpu.iota {dimensions = array<i32: 2>} : vector<32x1x32xi32>
    %108 = arith.cmpi eq, %106, %107 : vector<32x1x32xi32>
    %109 = arith.extui %108 : vector<32x1x32xi1> to vector<32x1x32xi32>
    %110 = arith.sitofp %109 : vector<32x1x32xi32> to vector<32x1x32xf32>
    %c0_55 = arith.constant 0 : index
    %c0_56 = arith.constant 0 : index
    %c0_57 = arith.constant 0 : index
    %111 = vector.load %arg20[%c0_55, %c0_56, %c0_57] : memref<16x1x64xf32, #tpu.memory_space<vmem>>, vector<16x1x64xf32>
    %c0_58 = arith.constant 0 : index
    %c0_59 = arith.constant 0 : index
    %112 = vector.load %arg16[%c0_58, %c0_59] : memref<8x64xf32, #tpu.memory_space<vmem>>, vector<8x64xf32>
    %c0_60 = arith.constant 0 : index
    %c0_61 = arith.constant 0 : index
    %113 = vector.load %arg17[%c0_60, %c0_61] : memref<8x64xf32, #tpu.memory_space<vmem>>, vector<8x64xf32>
    %c0_62 = arith.constant 0 : index
    %c0_63 = arith.constant 0 : index
    %114 = vector.load %arg18[%c0_62, %c0_63] : memref<8x32xf32, #tpu.memory_space<vmem>>, vector<8x32xf32>
    %115 = vector.shape_cast %112 : vector<8x64xf32> to vector<1x8x64xf32>
    %116 = vector.broadcast %105 : vector<16x1x64xf32> to vector<16x8x64xf32>
    %117 = vector.broadcast %115 : vector<1x8x64xf32> to vector<16x8x64xf32>
    %118 = arith.mulf %116, %117 : vector<16x8x64xf32>
    %119 = math.exp %118 : vector<16x8x64xf32>
    %120 = vector.shape_cast %114 : vector<8x32xf32> to vector<1x8x32xf32>
    %121 = vector.broadcast %120 : vector<1x8x32xf32> to vector<32x8x32xf32>
    %122 = vector.broadcast %110 : vector<32x1x32xf32> to vector<32x8x32xf32>
    %123 = arith.mulf %121, %122 : vector<32x8x32xf32>
    %cst_64 = arith.constant dense<0.000000e+00> : vector<32x8xf32>
    %124 = vector.multi_reduction <add>, %123, %cst_64 [2] : vector<32x8x32xf32> to vector<32x8xf32>
    %125 = vector.shape_cast %124 : vector<32x8xf32> to vector<32x8x1xf32>
    %126 = vector.extract_strided_slice %125 {offsets = [0, 0, 0], sizes = [16, 8, 1], strides = [1, 1, 1]} : vector<32x8x1xf32> to vector<16x8x1xf32>
    %127 = vector.extract_strided_slice %125 {offsets = [16, 0, 0], sizes = [16, 8, 1], strides = [1, 1, 1]} : vector<32x8x1xf32> to vector<16x8x1xf32>
    %128 = vector.shape_cast %113 : vector<8x64xf32> to vector<1x8x64xf32>
    %129 = vector.broadcast %128 : vector<1x8x64xf32> to vector<16x8x64xf32>
    %130 = vector.broadcast %126 : vector<16x8x1xf32> to vector<16x8x64xf32>
    %131 = arith.mulf %129, %130 : vector<16x8x64xf32>
    %132 = vector.extract_strided_slice %119 {offsets = [0, 0, 0], sizes = [16, 1, 64], strides = [1, 1, 1]} : vector<16x8x64xf32> to vector<16x1x64xf32>
    %133 = arith.mulf %132, %111 : vector<16x1x64xf32>
    %134 = vector.extract_strided_slice %131 {offsets = [0, 0, 0], sizes = [16, 1, 64], strides = [1, 1, 1]} : vector<16x8x64xf32> to vector<16x1x64xf32>
    %135 = arith.addf %133, %134 : vector<16x1x64xf32>
    %136 = vector.extract_strided_slice %127 {offsets = [0, 0, 0], sizes = [16, 1, 1], strides = [1, 1, 1]} : vector<16x8x1xf32> to vector<16x1x1xf32>
    %137 = vector.extract_strided_slice %136 {offsets = [0, 0, 0], sizes = [1, 1, 1], strides = [1, 1, 1]} : vector<16x1x1xf32> to vector<1x1x1xf32>
    %138 = vector.shape_cast %137 : vector<1x1x1xf32> to vector<1x1xf32>
    %139 = vector.extract_strided_slice %135 {offsets = [0, 0, 0], sizes = [1, 1, 64], strides = [1, 1, 1]} : vector<16x1x64xf32> to vector<1x1x64xf32>
    %140 = vector.shape_cast %139 : vector<1x1x64xf32> to vector<1x64xf32>
    %141 = vector.broadcast %138 : vector<1x1xf32> to vector<1x64xf32>
    %142 = arith.mulf %141, %140 : vector<1x64xf32>
    %143 = vector.extract_strided_slice %136 {offsets = [1, 0, 0], sizes = [1, 1, 1], strides = [1, 1, 1]} : vector<16x1x1xf32> to vector<1x1x1xf32>
    %144 = vector.shape_cast %143 : vector<1x1x1xf32> to vector<1x1xf32>
    %145 = vector.extract_strided_slice %135 {offsets = [1, 0, 0], sizes = [1, 1, 64], strides = [1, 1, 1]} : vector<16x1x64xf32> to vector<1x1x64xf32>
    %146 = vector.shape_cast %145 : vector<1x1x64xf32> to vector<1x64xf32>
    %147 = vector.broadcast %144 : vector<1x1xf32> to vector<1x64xf32>
    %148 = arith.mulf %147, %146 : vector<1x64xf32>
    %149 = arith.addf %142, %148 : vector<1x64xf32>
    %150 = vector.extract_strided_slice %136 {offsets = [2, 0, 0], sizes = [1, 1, 1], strides = [1, 1, 1]} : vector<16x1x1xf32> to vector<1x1x1xf32>
    %151 = vector.shape_cast %150 : vector<1x1x1xf32> to vector<1x1xf32>
    %152 = vector.extract_strided_slice %135 {offsets = [2, 0, 0], sizes = [1, 1, 64], strides = [1, 1, 1]} : vector<16x1x64xf32> to vector<1x1x64xf32>
    %153 = vector.shape_cast %152 : vector<1x1x64xf32> to vector<1x64xf32>
    %154 = vector.broadcast %151 : vector<1x1xf32> to vector<1x64xf32>
    %155 = arith.mulf %154, %153 : vector<1x64xf32>
    %156 = arith.addf %149, %155 : vector<1x64xf32>
    %157 = vector.extract_strided_slice %136 {offsets = [3, 0, 0], sizes = [1, 1, 1], strides = [1, 1, 1]} : vector<16x1x1xf32> to vector<1x1x1xf32>
    %158 = vector.shape_cast %157 : vector<1x1x1xf32> to vector<1x1xf32>
    %159 = vector.extract_strided_slice %135 {offsets = [3, 0, 0], sizes = [1, 1, 64], strides = [1, 1, 1]} : vector<16x1x64xf32> to vector<1x1x64xf32>
    %160 = vector.shape_cast %159 : vector<1x1x64xf32> to vector<1x64xf32>
    %161 = vector.broadcast %158 : vector<1x1xf32> to vector<1x64xf32>
    %162 = arith.mulf %161, %160 : vector<1x64xf32>
    %163 = arith.addf %156, %162 : vector<1x64xf32>
    %164 = vector.extract_strided_slice %136 {offsets = [4, 0, 0], sizes = [1, 1, 1], strides = [1, 1, 1]} : vector<16x1x1xf32> to vector<1x1x1xf32>
    %165 = vector.shape_cast %164 : vector<1x1x1xf32> to vector<1x1xf32>
    %166 = vector.extract_strided_slice %135 {offsets = [4, 0, 0], sizes = [1, 1, 64], strides = [1, 1, 1]} : vector<16x1x64xf32> to vector<1x1x64xf32>
    %167 = vector.shape_cast %166 : vector<1x1x64xf32> to vector<1x64xf32>
    %168 = vector.broadcast %165 : vector<1x1xf32> to vector<1x64xf32>
    %169 = arith.mulf %168, %167 : vector<1x64xf32>
    %170 = arith.addf %163, %169 : vector<1x64xf32>
    %171 = vector.extract_strided_slice %136 {offsets = [5, 0, 0], sizes = [1, 1, 1], strides = [1, 1, 1]} : vector<16x1x1xf32> to vector<1x1x1xf32>
    %172 = vector.shape_cast %171 : vector<1x1x1xf32> to vector<1x1xf32>
    %173 = vector.extract_strided_slice %135 {offsets = [5, 0, 0], sizes = [1, 1, 64], strides = [1, 1, 1]} : vector<16x1x64xf32> to vector<1x1x64xf32>
    %174 = vector.shape_cast %173 : vector<1x1x64xf32> to vector<1x64xf32>
    %175 = vector.broadcast %172 : vector<1x1xf32> to vector<1x64xf32>
    %176 = arith.mulf %175, %174 : vector<1x64xf32>
    %177 = arith.addf %170, %176 : vector<1x64xf32>
    %178 = vector.extract_strided_slice %136 {offsets = [6, 0, 0], sizes = [1, 1, 1], strides = [1, 1, 1]} : vector<16x1x1xf32> to vector<1x1x1xf32>
    %179 = vector.shape_cast %178 : vector<1x1x1xf32> to vector<1x1xf32>
    %180 = vector.extract_strided_slice %135 {offsets = [6, 0, 0], sizes = [1, 1, 64], strides = [1, 1, 1]} : vector<16x1x64xf32> to vector<1x1x64xf32>
    %181 = vector.shape_cast %180 : vector<1x1x64xf32> to vector<1x64xf32>
    %182 = vector.broadcast %179 : vector<1x1xf32> to vector<1x64xf32>
    %183 = arith.mulf %182, %181 : vector<1x64xf32>
    %184 = arith.addf %177, %183 : vector<1x64xf32>
    %185 = vector.extract_strided_slice %136 {offsets = [7, 0, 0], sizes = [1, 1, 1], strides = [1, 1, 1]} : vector<16x1x1xf32> to vector<1x1x1xf32>
    %186 = vector.shape_cast %185 : vector<1x1x1xf32> to vector<1x1xf32>
    %187 = vector.extract_strided_slice %135 {offsets = [7, 0, 0], sizes = [1, 1, 64], strides = [1, 1, 1]} : vector<16x1x64xf32> to vector<1x1x64xf32>
    %188 = vector.shape_cast %187 : vector<1x1x64xf32> to vector<1x64xf32>
    %189 = vector.broadcast %186 : vector<1x1xf32> to vector<1x64xf32>
    %190 = arith.mulf %189, %188 : vector<1x64xf32>
    %191 = arith.addf %184, %190 : vector<1x64xf32>
    %192 = vector.extract_strided_slice %136 {offsets = [8, 0, 0], sizes = [1, 1, 1], strides = [1, 1, 1]} : vector<16x1x1xf32> to vector<1x1x1xf32>
    %193 = vector.shape_cast %192 : vector<1x1x1xf32> to vector<1x1xf32>
    %194 = vector.extract_strided_slice %135 {offsets = [8, 0, 0], sizes = [1, 1, 64], strides = [1, 1, 1]} : vector<16x1x64xf32> to vector<1x1x64xf32>
    %195 = vector.shape_cast %194 : vector<1x1x64xf32> to vector<1x64xf32>
    %196 = vector.broadcast %193 : vector<1x1xf32> to vector<1x64xf32>
    %197 = arith.mulf %196, %195 : vector<1x64xf32>
    %198 = arith.addf %191, %197 : vector<1x64xf32>
    %199 = vector.extract_strided_slice %136 {offsets = [9, 0, 0], sizes = [1, 1, 1], strides = [1, 1, 1]} : vector<16x1x1xf32> to vector<1x1x1xf32>
    %200 = vector.shape_cast %199 : vector<1x1x1xf32> to vector<1x1xf32>
    %201 = vector.extract_strided_slice %135 {offsets = [9, 0, 0], sizes = [1, 1, 64], strides = [1, 1, 1]} : vector<16x1x64xf32> to vector<1x1x64xf32>
    %202 = vector.shape_cast %201 : vector<1x1x64xf32> to vector<1x64xf32>
    %203 = vector.broadcast %200 : vector<1x1xf32> to vector<1x64xf32>
    %204 = arith.mulf %203, %202 : vector<1x64xf32>
    %205 = arith.addf %198, %204 : vector<1x64xf32>
    %206 = vector.extract_strided_slice %136 {offsets = [10, 0, 0], sizes = [1, 1, 1], strides = [1, 1, 1]} : vector<16x1x1xf32> to vector<1x1x1xf32>
    %207 = vector.shape_cast %206 : vector<1x1x1xf32> to vector<1x1xf32>
    %208 = vector.extract_strided_slice %135 {offsets = [10, 0, 0], sizes = [1, 1, 64], strides = [1, 1, 1]} : vector<16x1x64xf32> to vector<1x1x64xf32>
    %209 = vector.shape_cast %208 : vector<1x1x64xf32> to vector<1x64xf32>
    %210 = vector.broadcast %207 : vector<1x1xf32> to vector<1x64xf32>
    %211 = arith.mulf %210, %209 : vector<1x64xf32>
    %212 = arith.addf %205, %211 : vector<1x64xf32>
    %213 = vector.extract_strided_slice %136 {offsets = [11, 0, 0], sizes = [1, 1, 1], strides = [1, 1, 1]} : vector<16x1x1xf32> to vector<1x1x1xf32>
    %214 = vector.shape_cast %213 : vector<1x1x1xf32> to vector<1x1xf32>
    %215 = vector.extract_strided_slice %135 {offsets = [11, 0, 0], sizes = [1, 1, 64], strides = [1, 1, 1]} : vector<16x1x64xf32> to vector<1x1x64xf32>
    %216 = vector.shape_cast %215 : vector<1x1x64xf32> to vector<1x64xf32>
    %217 = vector.broadcast %214 : vector<1x1xf32> to vector<1x64xf32>
    %218 = arith.mulf %217, %216 : vector<1x64xf32>
    %219 = arith.addf %212, %218 : vector<1x64xf32>
    %220 = vector.extract_strided_slice %136 {offsets = [12, 0, 0], sizes = [1, 1, 1], strides = [1, 1, 1]} : vector<16x1x1xf32> to vector<1x1x1xf32>
    %221 = vector.shape_cast %220 : vector<1x1x1xf32> to vector<1x1xf32>
    %222 = vector.extract_strided_slice %135 {offsets = [12, 0, 0], sizes = [1, 1, 64], strides = [1, 1, 1]} : vector<16x1x64xf32> to vector<1x1x64xf32>
    %223 = vector.shape_cast %222 : vector<1x1x64xf32> to vector<1x64xf32>
    %224 = vector.broadcast %221 : vector<1x1xf32> to vector<1x64xf32>
    %225 = arith.mulf %224, %223 : vector<1x64xf32>
    %226 = arith.addf %219, %225 : vector<1x64xf32>
    %227 = vector.extract_strided_slice %136 {offsets = [13, 0, 0], sizes = [1, 1, 1], strides = [1, 1, 1]} : vector<16x1x1xf32> to vector<1x1x1xf32>
    %228 = vector.shape_cast %227 : vector<1x1x1xf32> to vector<1x1xf32>
    %229 = vector.extract_strided_slice %135 {offsets = [13, 0, 0], sizes = [1, 1, 64], strides = [1, 1, 1]} : vector<16x1x64xf32> to vector<1x1x64xf32>
    %230 = vector.shape_cast %229 : vector<1x1x64xf32> to vector<1x64xf32>
    %231 = vector.broadcast %228 : vector<1x1xf32> to vector<1x64xf32>
    %232 = arith.mulf %231, %230 : vector<1x64xf32>
    %233 = arith.addf %226, %232 : vector<1x64xf32>
    %234 = vector.extract_strided_slice %136 {offsets = [14, 0, 0], sizes = [1, 1, 1], strides = [1, 1, 1]} : vector<16x1x1xf32> to vector<1x1x1xf32>
    %235 = vector.shape_cast %234 : vector<1x1x1xf32> to vector<1x1xf32>
    %236 = vector.extract_strided_slice %135 {offsets = [14, 0, 0], sizes = [1, 1, 64], strides = [1, 1, 1]} : vector<16x1x64xf32> to vector<1x1x64xf32>
    %237 = vector.shape_cast %236 : vector<1x1x64xf32> to vector<1x64xf32>
    %238 = vector.broadcast %235 : vector<1x1xf32> to vector<1x64xf32>
    %239 = arith.mulf %238, %237 : vector<1x64xf32>
    %240 = arith.addf %233, %239 : vector<1x64xf32>
    %241 = vector.extract_strided_slice %136 {offsets = [15, 0, 0], sizes = [1, 1, 1], strides = [1, 1, 1]} : vector<16x1x1xf32> to vector<1x1x1xf32>
    %242 = vector.shape_cast %241 : vector<1x1x1xf32> to vector<1x1xf32>
    %243 = vector.extract_strided_slice %135 {offsets = [15, 0, 0], sizes = [1, 1, 64], strides = [1, 1, 1]} : vector<16x1x64xf32> to vector<1x1x64xf32>
    %244 = vector.shape_cast %243 : vector<1x1x64xf32> to vector<1x64xf32>
    %245 = vector.broadcast %242 : vector<1x1xf32> to vector<1x64xf32>
    %246 = arith.mulf %245, %244 : vector<1x64xf32>
    %247 = arith.addf %240, %246 : vector<1x64xf32>
    %248 = vector.extract_strided_slice %119 {offsets = [0, 1, 0], sizes = [16, 1, 64], strides = [1, 1, 1]} : vector<16x8x64xf32> to vector<16x1x64xf32>
    %249 = arith.mulf %248, %135 : vector<16x1x64xf32>
    %250 = vector.extract_strided_slice %131 {offsets = [0, 1, 0], sizes = [16, 1, 64], strides = [1, 1, 1]} : vector<16x8x64xf32> to vector<16x1x64xf32>
    %251 = arith.addf %249, %250 : vector<16x1x64xf32>
    %252 = vector.extract_strided_slice %127 {offsets = [0, 1, 0], sizes = [16, 1, 1], strides = [1, 1, 1]} : vector<16x8x1xf32> to vector<16x1x1xf32>
    %253 = vector.extract_strided_slice %252 {offsets = [0, 0, 0], sizes = [1, 1, 1], strides = [1, 1, 1]} : vector<16x1x1xf32> to vector<1x1x1xf32>
    %254 = vector.shape_cast %253 : vector<1x1x1xf32> to vector<1x1xf32>
    %255 = vector.extract_strided_slice %251 {offsets = [0, 0, 0], sizes = [1, 1, 64], strides = [1, 1, 1]} : vector<16x1x64xf32> to vector<1x1x64xf32>
    %256 = vector.shape_cast %255 : vector<1x1x64xf32> to vector<1x64xf32>
    %257 = vector.broadcast %254 : vector<1x1xf32> to vector<1x64xf32>
    %258 = arith.mulf %257, %256 : vector<1x64xf32>
    %259 = vector.extract_strided_slice %252 {offsets = [1, 0, 0], sizes = [1, 1, 1], strides = [1, 1, 1]} : vector<16x1x1xf32> to vector<1x1x1xf32>
    %260 = vector.shape_cast %259 : vector<1x1x1xf32> to vector<1x1xf32>
    %261 = vector.extract_strided_slice %251 {offsets = [1, 0, 0], sizes = [1, 1, 64], strides = [1, 1, 1]} : vector<16x1x64xf32> to vector<1x1x64xf32>
    %262 = vector.shape_cast %261 : vector<1x1x64xf32> to vector<1x64xf32>
    %263 = vector.broadcast %260 : vector<1x1xf32> to vector<1x64xf32>
    %264 = arith.mulf %263, %262 : vector<1x64xf32>
    %265 = arith.addf %258, %264 : vector<1x64xf32>
    %266 = vector.extract_strided_slice %252 {offsets = [2, 0, 0], sizes = [1, 1, 1], strides = [1, 1, 1]} : vector<16x1x1xf32> to vector<1x1x1xf32>
    %267 = vector.shape_cast %266 : vector<1x1x1xf32> to vector<1x1xf32>
    %268 = vector.extract_strided_slice %251 {offsets = [2, 0, 0], sizes = [1, 1, 64], strides = [1, 1, 1]} : vector<16x1x64xf32> to vector<1x1x64xf32>
    %269 = vector.shape_cast %268 : vector<1x1x64xf32> to vector<1x64xf32>
    %270 = vector.broadcast %267 : vector<1x1xf32> to vector<1x64xf32>
    %271 = arith.mulf %270, %269 : vector<1x64xf32>
    %272 = arith.addf %265, %271 : vector<1x64xf32>
    %273 = vector.extract_strided_slice %252 {offsets = [3, 0, 0], sizes = [1, 1, 1], strides = [1, 1, 1]} : vector<16x1x1xf32> to vector<1x1x1xf32>
    %274 = vector.shape_cast %273 : vector<1x1x1xf32> to vector<1x1xf32>
    %275 = vector.extract_strided_slice %251 {offsets = [3, 0, 0], sizes = [1, 1, 64], strides = [1, 1, 1]} : vector<16x1x64xf32> to vector<1x1x64xf32>
    %276 = vector.shape_cast %275 : vector<1x1x64xf32> to vector<1x64xf32>
    %277 = vector.broadcast %274 : vector<1x1xf32> to vector<1x64xf32>
    %278 = arith.mulf %277, %276 : vector<1x64xf32>
    %279 = arith.addf %272, %278 : vector<1x64xf32>
    %280 = vector.extract_strided_slice %252 {offsets = [4, 0, 0], sizes = [1, 1, 1], strides = [1, 1, 1]} : vector<16x1x1xf32> to vector<1x1x1xf32>
    %281 = vector.shape_cast %280 : vector<1x1x1xf32> to vector<1x1xf32>
    %282 = vector.extract_strided_slice %251 {offsets = [4, 0, 0], sizes = [1, 1, 64], strides = [1, 1, 1]} : vector<16x1x64xf32> to vector<1x1x64xf32>
    %283 = vector.shape_cast %282 : vector<1x1x64xf32> to vector<1x64xf32>
    %284 = vector.broadcast %281 : vector<1x1xf32> to vector<1x64xf32>
    %285 = arith.mulf %284, %283 : vector<1x64xf32>
    %286 = arith.addf %279, %285 : vector<1x64xf32>
    %287 = vector.extract_strided_slice %252 {offsets = [5, 0, 0], sizes = [1, 1, 1], strides = [1, 1, 1]} : vector<16x1x1xf32> to vector<1x1x1xf32>
    %288 = vector.shape_cast %287 : vector<1x1x1xf32> to vector<1x1xf32>
    %289 = vector.extract_strided_slice %251 {offsets = [5, 0, 0], sizes = [1, 1, 64], strides = [1, 1, 1]} : vector<16x1x64xf32> to vector<1x1x64xf32>
    %290 = vector.shape_cast %289 : vector<1x1x64xf32> to vector<1x64xf32>
    %291 = vector.broadcast %288 : vector<1x1xf32> to vector<1x64xf32>
    %292 = arith.mulf %291, %290 : vector<1x64xf32>
    %293 = arith.addf %286, %292 : vector<1x64xf32>
    %294 = vector.extract_strided_slice %252 {offsets = [6, 0, 0], sizes = [1, 1, 1], strides = [1, 1, 1]} : vector<16x1x1xf32> to vector<1x1x1xf32>
    %295 = vector.shape_cast %294 : vector<1x1x1xf32> to vector<1x1xf32>
    %296 = vector.extract_strided_slice %251 {offsets = [6, 0, 0], sizes = [1, 1, 64], strides = [1, 1, 1]} : vector<16x1x64xf32> to vector<1x1x64xf32>
    %297 = vector.shape_cast %296 : vector<1x1x64xf32> to vector<1x64xf32>
    %298 = vector.broadcast %295 : vector<1x1xf32> to vector<1x64xf32>
    %299 = arith.mulf %298, %297 : vector<1x64xf32>
    %300 = arith.addf %293, %299 : vector<1x64xf32>
    %301 = vector.extract_strided_slice %252 {offsets = [7, 0, 0], sizes = [1, 1, 1], strides = [1, 1, 1]} : vector<16x1x1xf32> to vector<1x1x1xf32>
    %302 = vector.shape_cast %301 : vector<1x1x1xf32> to vector<1x1xf32>
    %303 = vector.extract_strided_slice %251 {offsets = [7, 0, 0], sizes = [1, 1, 64], strides = [1, 1, 1]} : vector<16x1x64xf32> to vector<1x1x64xf32>
    %304 = vector.shape_cast %303 : vector<1x1x64xf32> to vector<1x64xf32>
    %305 = vector.broadcast %302 : vector<1x1xf32> to vector<1x64xf32>
    %306 = arith.mulf %305, %304 : vector<1x64xf32>
    %307 = arith.addf %300, %306 : vector<1x64xf32>
    %308 = vector.extract_strided_slice %252 {offsets = [8, 0, 0], sizes = [1, 1, 1], strides = [1, 1, 1]} : vector<16x1x1xf32> to vector<1x1x1xf32>
    %309 = vector.shape_cast %308 : vector<1x1x1xf32> to vector<1x1xf32>
    %310 = vector.extract_strided_slice %251 {offsets = [8, 0, 0], sizes = [1, 1, 64], strides = [1, 1, 1]} : vector<16x1x64xf32> to vector<1x1x64xf32>
    %311 = vector.shape_cast %310 : vector<1x1x64xf32> to vector<1x64xf32>
    %312 = vector.broadcast %309 : vector<1x1xf32> to vector<1x64xf32>
    %313 = arith.mulf %312, %311 : vector<1x64xf32>
    %314 = arith.addf %307, %313 : vector<1x64xf32>
    %315 = vector.extract_strided_slice %252 {offsets = [9, 0, 0], sizes = [1, 1, 1], strides = [1, 1, 1]} : vector<16x1x1xf32> to vector<1x1x1xf32>
    %316 = vector.shape_cast %315 : vector<1x1x1xf32> to vector<1x1xf32>
    %317 = vector.extract_strided_slice %251 {offsets = [9, 0, 0], sizes = [1, 1, 64], strides = [1, 1, 1]} : vector<16x1x64xf32> to vector<1x1x64xf32>
    %318 = vector.shape_cast %317 : vector<1x1x64xf32> to vector<1x64xf32>
    %319 = vector.broadcast %316 : vector<1x1xf32> to vector<1x64xf32>
    %320 = arith.mulf %319, %318 : vector<1x64xf32>
    %321 = arith.addf %314, %320 : vector<1x64xf32>
    %322 = vector.extract_strided_slice %252 {offsets = [10, 0, 0], sizes = [1, 1, 1], strides = [1, 1, 1]} : vector<16x1x1xf32> to vector<1x1x1xf32>
    %323 = vector.shape_cast %322 : vector<1x1x1xf32> to vector<1x1xf32>
    %324 = vector.extract_strided_slice %251 {offsets = [10, 0, 0], sizes = [1, 1, 64], strides = [1, 1, 1]} : vector<16x1x64xf32> to vector<1x1x64xf32>
    %325 = vector.shape_cast %324 : vector<1x1x64xf32> to vector<1x64xf32>
    %326 = vector.broadcast %323 : vector<1x1xf32> to vector<1x64xf32>
    %327 = arith.mulf %326, %325 : vector<1x64xf32>
    %328 = arith.addf %321, %327 : vector<1x64xf32>
    %329 = vector.extract_strided_slice %252 {offsets = [11, 0, 0], sizes = [1, 1, 1], strides = [1, 1, 1]} : vector<16x1x1xf32> to vector<1x1x1xf32>
    %330 = vector.shape_cast %329 : vector<1x1x1xf32> to vector<1x1xf32>
    %331 = vector.extract_strided_slice %251 {offsets = [11, 0, 0], sizes = [1, 1, 64], strides = [1, 1, 1]} : vector<16x1x64xf32> to vector<1x1x64xf32>
    %332 = vector.shape_cast %331 : vector<1x1x64xf32> to vector<1x64xf32>
    %333 = vector.broadcast %330 : vector<1x1xf32> to vector<1x64xf32>
    %334 = arith.mulf %333, %332 : vector<1x64xf32>
    %335 = arith.addf %328, %334 : vector<1x64xf32>
    %336 = vector.extract_strided_slice %252 {offsets = [12, 0, 0], sizes = [1, 1, 1], strides = [1, 1, 1]} : vector<16x1x1xf32> to vector<1x1x1xf32>
    %337 = vector.shape_cast %336 : vector<1x1x1xf32> to vector<1x1xf32>
    %338 = vector.extract_strided_slice %251 {offsets = [12, 0, 0], sizes = [1, 1, 64], strides = [1, 1, 1]} : vector<16x1x64xf32> to vector<1x1x64xf32>
    %339 = vector.shape_cast %338 : vector<1x1x64xf32> to vector<1x64xf32>
    %340 = vector.broadcast %337 : vector<1x1xf32> to vector<1x64xf32>
    %341 = arith.mulf %340, %339 : vector<1x64xf32>
    %342 = arith.addf %335, %341 : vector<1x64xf32>
    %343 = vector.extract_strided_slice %252 {offsets = [13, 0, 0], sizes = [1, 1, 1], strides = [1, 1, 1]} : vector<16x1x1xf32> to vector<1x1x1xf32>
    %344 = vector.shape_cast %343 : vector<1x1x1xf32> to vector<1x1xf32>
    %345 = vector.extract_strided_slice %251 {offsets = [13, 0, 0], sizes = [1, 1, 64], strides = [1, 1, 1]} : vector<16x1x64xf32> to vector<1x1x64xf32>
    %346 = vector.shape_cast %345 : vector<1x1x64xf32> to vector<1x64xf32>
    %347 = vector.broadcast %344 : vector<1x1xf32> to vector<1x64xf32>
    %348 = arith.mulf %347, %346 : vector<1x64xf32>
    %349 = arith.addf %342, %348 : vector<1x64xf32>
    %350 = vector.extract_strided_slice %252 {offsets = [14, 0, 0], sizes = [1, 1, 1], strides = [1, 1, 1]} : vector<16x1x1xf32> to vector<1x1x1xf32>
    %351 = vector.shape_cast %350 : vector<1x1x1xf32> to vector<1x1xf32>
    %352 = vector.extract_strided_slice %251 {offsets = [14, 0, 0], sizes = [1, 1, 64], strides = [1, 1, 1]} : vector<16x1x64xf32> to vector<1x1x64xf32>
    %353 = vector.shape_cast %352 : vector<1x1x64xf32> to vector<1x64xf32>
    %354 = vector.broadcast %351 : vector<1x1xf32> to vector<1x64xf32>
    %355 = arith.mulf %354, %353 : vector<1x64xf32>
    %356 = arith.addf %349, %355 : vector<1x64xf32>
    %357 = vector.extract_strided_slice %252 {offsets = [15, 0, 0], sizes = [1, 1, 1], strides = [1, 1, 1]} : vector<16x1x1xf32> to vector<1x1x1xf32>
    %358 = vector.shape_cast %357 : vector<1x1x1xf32> to vector<1x1xf32>
    %359 = vector.extract_strided_slice %251 {offsets = [15, 0, 0], sizes = [1, 1, 64], strides = [1, 1, 1]} : vector<16x1x64xf32> to vector<1x1x64xf32>
    %360 = vector.shape_cast %359 : vector<1x1x64xf32> to vector<1x64xf32>
    %361 = vector.broadcast %358 : vector<1x1xf32> to vector<1x64xf32>
    %362 = arith.mulf %361, %360 : vector<1x64xf32>
    %363 = arith.addf %356, %362 : vector<1x64xf32>
    %364 = vector.extract_strided_slice %119 {offsets = [0, 2, 0], sizes = [16, 1, 64], strides = [1, 1, 1]} : vector<16x8x64xf32> to vector<16x1x64xf32>
    %365 = arith.mulf %364, %251 : vector<16x1x64xf32>
    %366 = vector.extract_strided_slice %131 {offsets = [0, 2, 0], sizes = [16, 1, 64], strides = [1, 1, 1]} : vector<16x8x64xf32> to vector<16x1x64xf32>
    %367 = arith.addf %365, %366 : vector<16x1x64xf32>
    %368 = vector.extract_strided_slice %127 {offsets = [0, 2, 0], sizes = [16, 1, 1], strides = [1, 1, 1]} : vector<16x8x1xf32> to vector<16x1x1xf32>
    %369 = vector.extract_strided_slice %368 {offsets = [0, 0, 0], sizes = [1, 1, 1], strides = [1, 1, 1]} : vector<16x1x1xf32> to vector<1x1x1xf32>
    %370 = vector.shape_cast %369 : vector<1x1x1xf32> to vector<1x1xf32>
    %371 = vector.extract_strided_slice %367 {offsets = [0, 0, 0], sizes = [1, 1, 64], strides = [1, 1, 1]} : vector<16x1x64xf32> to vector<1x1x64xf32>
    %372 = vector.shape_cast %371 : vector<1x1x64xf32> to vector<1x64xf32>
    %373 = vector.broadcast %370 : vector<1x1xf32> to vector<1x64xf32>
    %374 = arith.mulf %373, %372 : vector<1x64xf32>
    %375 = vector.extract_strided_slice %368 {offsets = [1, 0, 0], sizes = [1, 1, 1], strides = [1, 1, 1]} : vector<16x1x1xf32> to vector<1x1x1xf32>
    %376 = vector.shape_cast %375 : vector<1x1x1xf32> to vector<1x1xf32>
    %377 = vector.extract_strided_slice %367 {offsets = [1, 0, 0], sizes = [1, 1, 64], strides = [1, 1, 1]} : vector<16x1x64xf32> to vector<1x1x64xf32>
    %378 = vector.shape_cast %377 : vector<1x1x64xf32> to vector<1x64xf32>
    %379 = vector.broadcast %376 : vector<1x1xf32> to vector<1x64xf32>
    %380 = arith.mulf %379, %378 : vector<1x64xf32>
    %381 = arith.addf %374, %380 : vector<1x64xf32>
    %382 = vector.extract_strided_slice %368 {offsets = [2, 0, 0], sizes = [1, 1, 1], strides = [1, 1, 1]} : vector<16x1x1xf32> to vector<1x1x1xf32>
    %383 = vector.shape_cast %382 : vector<1x1x1xf32> to vector<1x1xf32>
    %384 = vector.extract_strided_slice %367 {offsets = [2, 0, 0], sizes = [1, 1, 64], strides = [1, 1, 1]} : vector<16x1x64xf32> to vector<1x1x64xf32>
    %385 = vector.shape_cast %384 : vector<1x1x64xf32> to vector<1x64xf32>
    %386 = vector.broadcast %383 : vector<1x1xf32> to vector<1x64xf32>
    %387 = arith.mulf %386, %385 : vector<1x64xf32>
    %388 = arith.addf %381, %387 : vector<1x64xf32>
    %389 = vector.extract_strided_slice %368 {offsets = [3, 0, 0], sizes = [1, 1, 1], strides = [1, 1, 1]} : vector<16x1x1xf32> to vector<1x1x1xf32>
    %390 = vector.shape_cast %389 : vector<1x1x1xf32> to vector<1x1xf32>
    %391 = vector.extract_strided_slice %367 {offsets = [3, 0, 0], sizes = [1, 1, 64], strides = [1, 1, 1]} : vector<16x1x64xf32> to vector<1x1x64xf32>
    %392 = vector.shape_cast %391 : vector<1x1x64xf32> to vector<1x64xf32>
    %393 = vector.broadcast %390 : vector<1x1xf32> to vector<1x64xf32>
    %394 = arith.mulf %393, %392 : vector<1x64xf32>
    %395 = arith.addf %388, %394 : vector<1x64xf32>
    %396 = vector.extract_strided_slice %368 {offsets = [4, 0, 0], sizes = [1, 1, 1], strides = [1, 1, 1]} : vector<16x1x1xf32> to vector<1x1x1xf32>
    %397 = vector.shape_cast %396 : vector<1x1x1xf32> to vector<1x1xf32>
    %398 = vector.extract_strided_slice %367 {offsets = [4, 0, 0], sizes = [1, 1, 64], strides = [1, 1, 1]} : vector<16x1x64xf32> to vector<1x1x64xf32>
    %399 = vector.shape_cast %398 : vector<1x1x64xf32> to vector<1x64xf32>
    %400 = vector.broadcast %397 : vector<1x1xf32> to vector<1x64xf32>
    %401 = arith.mulf %400, %399 : vector<1x64xf32>
    %402 = arith.addf %395, %401 : vector<1x64xf32>
    %403 = vector.extract_strided_slice %368 {offsets = [5, 0, 0], sizes = [1, 1, 1], strides = [1, 1, 1]} : vector<16x1x1xf32> to vector<1x1x1xf32>
    %404 = vector.shape_cast %403 : vector<1x1x1xf32> to vector<1x1xf32>
    %405 = vector.extract_strided_slice %367 {offsets = [5, 0, 0], sizes = [1, 1, 64], strides = [1, 1, 1]} : vector<16x1x64xf32> to vector<1x1x64xf32>
    %406 = vector.shape_cast %405 : vector<1x1x64xf32> to vector<1x64xf32>
    %407 = vector.broadcast %404 : vector<1x1xf32> to vector<1x64xf32>
    %408 = arith.mulf %407, %406 : vector<1x64xf32>
    %409 = arith.addf %402, %408 : vector<1x64xf32>
    %410 = vector.extract_strided_slice %368 {offsets = [6, 0, 0], sizes = [1, 1, 1], strides = [1, 1, 1]} : vector<16x1x1xf32> to vector<1x1x1xf32>
    %411 = vector.shape_cast %410 : vector<1x1x1xf32> to vector<1x1xf32>
    %412 = vector.extract_strided_slice %367 {offsets = [6, 0, 0], sizes = [1, 1, 64], strides = [1, 1, 1]} : vector<16x1x64xf32> to vector<1x1x64xf32>
    %413 = vector.shape_cast %412 : vector<1x1x64xf32> to vector<1x64xf32>
    %414 = vector.broadcast %411 : vector<1x1xf32> to vector<1x64xf32>
    %415 = arith.mulf %414, %413 : vector<1x64xf32>
    %416 = arith.addf %409, %415 : vector<1x64xf32>
    %417 = vector.extract_strided_slice %368 {offsets = [7, 0, 0], sizes = [1, 1, 1], strides = [1, 1, 1]} : vector<16x1x1xf32> to vector<1x1x1xf32>
    %418 = vector.shape_cast %417 : vector<1x1x1xf32> to vector<1x1xf32>
    %419 = vector.extract_strided_slice %367 {offsets = [7, 0, 0], sizes = [1, 1, 64], strides = [1, 1, 1]} : vector<16x1x64xf32> to vector<1x1x64xf32>
    %420 = vector.shape_cast %419 : vector<1x1x64xf32> to vector<1x64xf32>
    %421 = vector.broadcast %418 : vector<1x1xf32> to vector<1x64xf32>
    %422 = arith.mulf %421, %420 : vector<1x64xf32>
    %423 = arith.addf %416, %422 : vector<1x64xf32>
    %424 = vector.extract_strided_slice %368 {offsets = [8, 0, 0], sizes = [1, 1, 1], strides = [1, 1, 1]} : vector<16x1x1xf32> to vector<1x1x1xf32>
    %425 = vector.shape_cast %424 : vector<1x1x1xf32> to vector<1x1xf32>
    %426 = vector.extract_strided_slice %367 {offsets = [8, 0, 0], sizes = [1, 1, 64], strides = [1, 1, 1]} : vector<16x1x64xf32> to vector<1x1x64xf32>
    %427 = vector.shape_cast %426 : vector<1x1x64xf32> to vector<1x64xf32>
    %428 = vector.broadcast %425 : vector<1x1xf32> to vector<1x64xf32>
    %429 = arith.mulf %428, %427 : vector<1x64xf32>
    %430 = arith.addf %423, %429 : vector<1x64xf32>
    %431 = vector.extract_strided_slice %368 {offsets = [9, 0, 0], sizes = [1, 1, 1], strides = [1, 1, 1]} : vector<16x1x1xf32> to vector<1x1x1xf32>
    %432 = vector.shape_cast %431 : vector<1x1x1xf32> to vector<1x1xf32>
    %433 = vector.extract_strided_slice %367 {offsets = [9, 0, 0], sizes = [1, 1, 64], strides = [1, 1, 1]} : vector<16x1x64xf32> to vector<1x1x64xf32>
    %434 = vector.shape_cast %433 : vector<1x1x64xf32> to vector<1x64xf32>
    %435 = vector.broadcast %432 : vector<1x1xf32> to vector<1x64xf32>
    %436 = arith.mulf %435, %434 : vector<1x64xf32>
    %437 = arith.addf %430, %436 : vector<1x64xf32>
    %438 = vector.extract_strided_slice %368 {offsets = [10, 0, 0], sizes = [1, 1, 1], strides = [1, 1, 1]} : vector<16x1x1xf32> to vector<1x1x1xf32>
    %439 = vector.shape_cast %438 : vector<1x1x1xf32> to vector<1x1xf32>
    %440 = vector.extract_strided_slice %367 {offsets = [10, 0, 0], sizes = [1, 1, 64], strides = [1, 1, 1]} : vector<16x1x64xf32> to vector<1x1x64xf32>
    %441 = vector.shape_cast %440 : vector<1x1x64xf32> to vector<1x64xf32>
    %442 = vector.broadcast %439 : vector<1x1xf32> to vector<1x64xf32>
    %443 = arith.mulf %442, %441 : vector<1x64xf32>
    %444 = arith.addf %437, %443 : vector<1x64xf32>
    %445 = vector.extract_strided_slice %368 {offsets = [11, 0, 0], sizes = [1, 1, 1], strides = [1, 1, 1]} : vector<16x1x1xf32> to vector<1x1x1xf32>
    %446 = vector.shape_cast %445 : vector<1x1x1xf32> to vector<1x1xf32>
    %447 = vector.extract_strided_slice %367 {offsets = [11, 0, 0], sizes = [1, 1, 64], strides = [1, 1, 1]} : vector<16x1x64xf32> to vector<1x1x64xf32>
    %448 = vector.shape_cast %447 : vector<1x1x64xf32> to vector<1x64xf32>
    %449 = vector.broadcast %446 : vector<1x1xf32> to vector<1x64xf32>
    %450 = arith.mulf %449, %448 : vector<1x64xf32>
    %451 = arith.addf %444, %450 : vector<1x64xf32>
    %452 = vector.extract_strided_slice %368 {offsets = [12, 0, 0], sizes = [1, 1, 1], strides = [1, 1, 1]} : vector<16x1x1xf32> to vector<1x1x1xf32>
    %453 = vector.shape_cast %452 : vector<1x1x1xf32> to vector<1x1xf32>
    %454 = vector.extract_strided_slice %367 {offsets = [12, 0, 0], sizes = [1, 1, 64], strides = [1, 1, 1]} : vector<16x1x64xf32> to vector<1x1x64xf32>
    %455 = vector.shape_cast %454 : vector<1x1x64xf32> to vector<1x64xf32>
    %456 = vector.broadcast %453 : vector<1x1xf32> to vector<1x64xf32>
    %457 = arith.mulf %456, %455 : vector<1x64xf32>
    %458 = arith.addf %451, %457 : vector<1x64xf32>
    %459 = vector.extract_strided_slice %368 {offsets = [13, 0, 0], sizes = [1, 1, 1], strides = [1, 1, 1]} : vector<16x1x1xf32> to vector<1x1x1xf32>
    %460 = vector.shape_cast %459 : vector<1x1x1xf32> to vector<1x1xf32>
    %461 = vector.extract_strided_slice %367 {offsets = [13, 0, 0], sizes = [1, 1, 64], strides = [1, 1, 1]} : vector<16x1x64xf32> to vector<1x1x64xf32>
    %462 = vector.shape_cast %461 : vector<1x1x64xf32> to vector<1x64xf32>
    %463 = vector.broadcast %460 : vector<1x1xf32> to vector<1x64xf32>
    %464 = arith.mulf %463, %462 : vector<1x64xf32>
    %465 = arith.addf %458, %464 : vector<1x64xf32>
    %466 = vector.extract_strided_slice %368 {offsets = [14, 0, 0], sizes = [1, 1, 1], strides = [1, 1, 1]} : vector<16x1x1xf32> to vector<1x1x1xf32>
    %467 = vector.shape_cast %466 : vector<1x1x1xf32> to vector<1x1xf32>
    %468 = vector.extract_strided_slice %367 {offsets = [14, 0, 0], sizes = [1, 1, 64], strides = [1, 1, 1]} : vector<16x1x64xf32> to vector<1x1x64xf32>
    %469 = vector.shape_cast %468 : vector<1x1x64xf32> to vector<1x64xf32>
    %470 = vector.broadcast %467 : vector<1x1xf32> to vector<1x64xf32>
    %471 = arith.mulf %470, %469 : vector<1x64xf32>
    %472 = arith.addf %465, %471 : vector<1x64xf32>
    %473 = vector.extract_strided_slice %368 {offsets = [15, 0, 0], sizes = [1, 1, 1], strides = [1, 1, 1]} : vector<16x1x1xf32> to vector<1x1x1xf32>
    %474 = vector.shape_cast %473 : vector<1x1x1xf32> to vector<1x1xf32>
    %475 = vector.extract_strided_slice %367 {offsets = [15, 0, 0], sizes = [1, 1, 64], strides = [1, 1, 1]} : vector<16x1x64xf32> to vector<1x1x64xf32>
    %476 = vector.shape_cast %475 : vector<1x1x64xf32> to vector<1x64xf32>
    %477 = vector.broadcast %474 : vector<1x1xf32> to vector<1x64xf32>
    %478 = arith.mulf %477, %476 : vector<1x64xf32>
    %479 = arith.addf %472, %478 : vector<1x64xf32>
    %480 = vector.extract_strided_slice %119 {offsets = [0, 3, 0], sizes = [16, 1, 64], strides = [1, 1, 1]} : vector<16x8x64xf32> to vector<16x1x64xf32>
    %481 = arith.mulf %480, %367 : vector<16x1x64xf32>
    %482 = vector.extract_strided_slice %131 {offsets = [0, 3, 0], sizes = [16, 1, 64], strides = [1, 1, 1]} : vector<16x8x64xf32> to vector<16x1x64xf32>
    %483 = arith.addf %481, %482 : vector<16x1x64xf32>
    %484 = vector.extract_strided_slice %127 {offsets = [0, 3, 0], sizes = [16, 1, 1], strides = [1, 1, 1]} : vector<16x8x1xf32> to vector<16x1x1xf32>
    %485 = vector.extract_strided_slice %484 {offsets = [0, 0, 0], sizes = [1, 1, 1], strides = [1, 1, 1]} : vector<16x1x1xf32> to vector<1x1x1xf32>
    %486 = vector.shape_cast %485 : vector<1x1x1xf32> to vector<1x1xf32>
    %487 = vector.extract_strided_slice %483 {offsets = [0, 0, 0], sizes = [1, 1, 64], strides = [1, 1, 1]} : vector<16x1x64xf32> to vector<1x1x64xf32>
    %488 = vector.shape_cast %487 : vector<1x1x64xf32> to vector<1x64xf32>
    %489 = vector.broadcast %486 : vector<1x1xf32> to vector<1x64xf32>
    %490 = arith.mulf %489, %488 : vector<1x64xf32>
    %491 = vector.extract_strided_slice %484 {offsets = [1, 0, 0], sizes = [1, 1, 1], strides = [1, 1, 1]} : vector<16x1x1xf32> to vector<1x1x1xf32>
    %492 = vector.shape_cast %491 : vector<1x1x1xf32> to vector<1x1xf32>
    %493 = vector.extract_strided_slice %483 {offsets = [1, 0, 0], sizes = [1, 1, 64], strides = [1, 1, 1]} : vector<16x1x64xf32> to vector<1x1x64xf32>
    %494 = vector.shape_cast %493 : vector<1x1x64xf32> to vector<1x64xf32>
    %495 = vector.broadcast %492 : vector<1x1xf32> to vector<1x64xf32>
    %496 = arith.mulf %495, %494 : vector<1x64xf32>
    %497 = arith.addf %490, %496 : vector<1x64xf32>
    %498 = vector.extract_strided_slice %484 {offsets = [2, 0, 0], sizes = [1, 1, 1], strides = [1, 1, 1]} : vector<16x1x1xf32> to vector<1x1x1xf32>
    %499 = vector.shape_cast %498 : vector<1x1x1xf32> to vector<1x1xf32>
    %500 = vector.extract_strided_slice %483 {offsets = [2, 0, 0], sizes = [1, 1, 64], strides = [1, 1, 1]} : vector<16x1x64xf32> to vector<1x1x64xf32>
    %501 = vector.shape_cast %500 : vector<1x1x64xf32> to vector<1x64xf32>
    %502 = vector.broadcast %499 : vector<1x1xf32> to vector<1x64xf32>
    %503 = arith.mulf %502, %501 : vector<1x64xf32>
    %504 = arith.addf %497, %503 : vector<1x64xf32>
    %505 = vector.extract_strided_slice %484 {offsets = [3, 0, 0], sizes = [1, 1, 1], strides = [1, 1, 1]} : vector<16x1x1xf32> to vector<1x1x1xf32>
    %506 = vector.shape_cast %505 : vector<1x1x1xf32> to vector<1x1xf32>
    %507 = vector.extract_strided_slice %483 {offsets = [3, 0, 0], sizes = [1, 1, 64], strides = [1, 1, 1]} : vector<16x1x64xf32> to vector<1x1x64xf32>
    %508 = vector.shape_cast %507 : vector<1x1x64xf32> to vector<1x64xf32>
    %509 = vector.broadcast %506 : vector<1x1xf32> to vector<1x64xf32>
    %510 = arith.mulf %509, %508 : vector<1x64xf32>
    %511 = arith.addf %504, %510 : vector<1x64xf32>
    %512 = vector.extract_strided_slice %484 {offsets = [4, 0, 0], sizes = [1, 1, 1], strides = [1, 1, 1]} : vector<16x1x1xf32> to vector<1x1x1xf32>
    %513 = vector.shape_cast %512 : vector<1x1x1xf32> to vector<1x1xf32>
    %514 = vector.extract_strided_slice %483 {offsets = [4, 0, 0], sizes = [1, 1, 64], strides = [1, 1, 1]} : vector<16x1x64xf32> to vector<1x1x64xf32>
    %515 = vector.shape_cast %514 : vector<1x1x64xf32> to vector<1x64xf32>
    %516 = vector.broadcast %513 : vector<1x1xf32> to vector<1x64xf32>
    %517 = arith.mulf %516, %515 : vector<1x64xf32>
    %518 = arith.addf %511, %517 : vector<1x64xf32>
    %519 = vector.extract_strided_slice %484 {offsets = [5, 0, 0], sizes = [1, 1, 1], strides = [1, 1, 1]} : vector<16x1x1xf32> to vector<1x1x1xf32>
    %520 = vector.shape_cast %519 : vector<1x1x1xf32> to vector<1x1xf32>
    %521 = vector.extract_strided_slice %483 {offsets = [5, 0, 0], sizes = [1, 1, 64], strides = [1, 1, 1]} : vector<16x1x64xf32> to vector<1x1x64xf32>
    %522 = vector.shape_cast %521 : vector<1x1x64xf32> to vector<1x64xf32>
    %523 = vector.broadcast %520 : vector<1x1xf32> to vector<1x64xf32>
    %524 = arith.mulf %523, %522 : vector<1x64xf32>
    %525 = arith.addf %518, %524 : vector<1x64xf32>
    %526 = vector.extract_strided_slice %484 {offsets = [6, 0, 0], sizes = [1, 1, 1], strides = [1, 1, 1]} : vector<16x1x1xf32> to vector<1x1x1xf32>
    %527 = vector.shape_cast %526 : vector<1x1x1xf32> to vector<1x1xf32>
    %528 = vector.extract_strided_slice %483 {offsets = [6, 0, 0], sizes = [1, 1, 64], strides = [1, 1, 1]} : vector<16x1x64xf32> to vector<1x1x64xf32>
    %529 = vector.shape_cast %528 : vector<1x1x64xf32> to vector<1x64xf32>
    %530 = vector.broadcast %527 : vector<1x1xf32> to vector<1x64xf32>
    %531 = arith.mulf %530, %529 : vector<1x64xf32>
    %532 = arith.addf %525, %531 : vector<1x64xf32>
    %533 = vector.extract_strided_slice %484 {offsets = [7, 0, 0], sizes = [1, 1, 1], strides = [1, 1, 1]} : vector<16x1x1xf32> to vector<1x1x1xf32>
    %534 = vector.shape_cast %533 : vector<1x1x1xf32> to vector<1x1xf32>
    %535 = vector.extract_strided_slice %483 {offsets = [7, 0, 0], sizes = [1, 1, 64], strides = [1, 1, 1]} : vector<16x1x64xf32> to vector<1x1x64xf32>
    %536 = vector.shape_cast %535 : vector<1x1x64xf32> to vector<1x64xf32>
    %537 = vector.broadcast %534 : vector<1x1xf32> to vector<1x64xf32>
    %538 = arith.mulf %537, %536 : vector<1x64xf32>
    %539 = arith.addf %532, %538 : vector<1x64xf32>
    %540 = vector.extract_strided_slice %484 {offsets = [8, 0, 0], sizes = [1, 1, 1], strides = [1, 1, 1]} : vector<16x1x1xf32> to vector<1x1x1xf32>
    %541 = vector.shape_cast %540 : vector<1x1x1xf32> to vector<1x1xf32>
    %542 = vector.extract_strided_slice %483 {offsets = [8, 0, 0], sizes = [1, 1, 64], strides = [1, 1, 1]} : vector<16x1x64xf32> to vector<1x1x64xf32>
    %543 = vector.shape_cast %542 : vector<1x1x64xf32> to vector<1x64xf32>
    %544 = vector.broadcast %541 : vector<1x1xf32> to vector<1x64xf32>
    %545 = arith.mulf %544, %543 : vector<1x64xf32>
    %546 = arith.addf %539, %545 : vector<1x64xf32>
    %547 = vector.extract_strided_slice %484 {offsets = [9, 0, 0], sizes = [1, 1, 1], strides = [1, 1, 1]} : vector<16x1x1xf32> to vector<1x1x1xf32>
    %548 = vector.shape_cast %547 : vector<1x1x1xf32> to vector<1x1xf32>
    %549 = vector.extract_strided_slice %483 {offsets = [9, 0, 0], sizes = [1, 1, 64], strides = [1, 1, 1]} : vector<16x1x64xf32> to vector<1x1x64xf32>
    %550 = vector.shape_cast %549 : vector<1x1x64xf32> to vector<1x64xf32>
    %551 = vector.broadcast %548 : vector<1x1xf32> to vector<1x64xf32>
    %552 = arith.mulf %551, %550 : vector<1x64xf32>
    %553 = arith.addf %546, %552 : vector<1x64xf32>
    %554 = vector.extract_strided_slice %484 {offsets = [10, 0, 0], sizes = [1, 1, 1], strides = [1, 1, 1]} : vector<16x1x1xf32> to vector<1x1x1xf32>
    %555 = vector.shape_cast %554 : vector<1x1x1xf32> to vector<1x1xf32>
    %556 = vector.extract_strided_slice %483 {offsets = [10, 0, 0], sizes = [1, 1, 64], strides = [1, 1, 1]} : vector<16x1x64xf32> to vector<1x1x64xf32>
    %557 = vector.shape_cast %556 : vector<1x1x64xf32> to vector<1x64xf32>
    %558 = vector.broadcast %555 : vector<1x1xf32> to vector<1x64xf32>
    %559 = arith.mulf %558, %557 : vector<1x64xf32>
    %560 = arith.addf %553, %559 : vector<1x64xf32>
    %561 = vector.extract_strided_slice %484 {offsets = [11, 0, 0], sizes = [1, 1, 1], strides = [1, 1, 1]} : vector<16x1x1xf32> to vector<1x1x1xf32>
    %562 = vector.shape_cast %561 : vector<1x1x1xf32> to vector<1x1xf32>
    %563 = vector.extract_strided_slice %483 {offsets = [11, 0, 0], sizes = [1, 1, 64], strides = [1, 1, 1]} : vector<16x1x64xf32> to vector<1x1x64xf32>
    %564 = vector.shape_cast %563 : vector<1x1x64xf32> to vector<1x64xf32>
    %565 = vector.broadcast %562 : vector<1x1xf32> to vector<1x64xf32>
    %566 = arith.mulf %565, %564 : vector<1x64xf32>
    %567 = arith.addf %560, %566 : vector<1x64xf32>
    %568 = vector.extract_strided_slice %484 {offsets = [12, 0, 0], sizes = [1, 1, 1], strides = [1, 1, 1]} : vector<16x1x1xf32> to vector<1x1x1xf32>
    %569 = vector.shape_cast %568 : vector<1x1x1xf32> to vector<1x1xf32>
    %570 = vector.extract_strided_slice %483 {offsets = [12, 0, 0], sizes = [1, 1, 64], strides = [1, 1, 1]} : vector<16x1x64xf32> to vector<1x1x64xf32>
    %571 = vector.shape_cast %570 : vector<1x1x64xf32> to vector<1x64xf32>
    %572 = vector.broadcast %569 : vector<1x1xf32> to vector<1x64xf32>
    %573 = arith.mulf %572, %571 : vector<1x64xf32>
    %574 = arith.addf %567, %573 : vector<1x64xf32>
    %575 = vector.extract_strided_slice %484 {offsets = [13, 0, 0], sizes = [1, 1, 1], strides = [1, 1, 1]} : vector<16x1x1xf32> to vector<1x1x1xf32>
    %576 = vector.shape_cast %575 : vector<1x1x1xf32> to vector<1x1xf32>
    %577 = vector.extract_strided_slice %483 {offsets = [13, 0, 0], sizes = [1, 1, 64], strides = [1, 1, 1]} : vector<16x1x64xf32> to vector<1x1x64xf32>
    %578 = vector.shape_cast %577 : vector<1x1x64xf32> to vector<1x64xf32>
    %579 = vector.broadcast %576 : vector<1x1xf32> to vector<1x64xf32>
    %580 = arith.mulf %579, %578 : vector<1x64xf32>
    %581 = arith.addf %574, %580 : vector<1x64xf32>
    %582 = vector.extract_strided_slice %484 {offsets = [14, 0, 0], sizes = [1, 1, 1], strides = [1, 1, 1]} : vector<16x1x1xf32> to vector<1x1x1xf32>
    %583 = vector.shape_cast %582 : vector<1x1x1xf32> to vector<1x1xf32>
    %584 = vector.extract_strided_slice %483 {offsets = [14, 0, 0], sizes = [1, 1, 64], strides = [1, 1, 1]} : vector<16x1x64xf32> to vector<1x1x64xf32>
    %585 = vector.shape_cast %584 : vector<1x1x64xf32> to vector<1x64xf32>
    %586 = vector.broadcast %583 : vector<1x1xf32> to vector<1x64xf32>
    %587 = arith.mulf %586, %585 : vector<1x64xf32>
    %588 = arith.addf %581, %587 : vector<1x64xf32>
    %589 = vector.extract_strided_slice %484 {offsets = [15, 0, 0], sizes = [1, 1, 1], strides = [1, 1, 1]} : vector<16x1x1xf32> to vector<1x1x1xf32>
    %590 = vector.shape_cast %589 : vector<1x1x1xf32> to vector<1x1xf32>
    %591 = vector.extract_strided_slice %483 {offsets = [15, 0, 0], sizes = [1, 1, 64], strides = [1, 1, 1]} : vector<16x1x64xf32> to vector<1x1x64xf32>
    %592 = vector.shape_cast %591 : vector<1x1x64xf32> to vector<1x64xf32>
    %593 = vector.broadcast %590 : vector<1x1xf32> to vector<1x64xf32>
    %594 = arith.mulf %593, %592 : vector<1x64xf32>
    %595 = arith.addf %588, %594 : vector<1x64xf32>
    %596 = vector.extract_strided_slice %119 {offsets = [0, 4, 0], sizes = [16, 1, 64], strides = [1, 1, 1]} : vector<16x8x64xf32> to vector<16x1x64xf32>
    %597 = arith.mulf %596, %483 : vector<16x1x64xf32>
    %598 = vector.extract_strided_slice %131 {offsets = [0, 4, 0], sizes = [16, 1, 64], strides = [1, 1, 1]} : vector<16x8x64xf32> to vector<16x1x64xf32>
    %599 = arith.addf %597, %598 : vector<16x1x64xf32>
    %600 = vector.extract_strided_slice %127 {offsets = [0, 4, 0], sizes = [16, 1, 1], strides = [1, 1, 1]} : vector<16x8x1xf32> to vector<16x1x1xf32>
    %601 = vector.extract_strided_slice %600 {offsets = [0, 0, 0], sizes = [1, 1, 1], strides = [1, 1, 1]} : vector<16x1x1xf32> to vector<1x1x1xf32>
    %602 = vector.shape_cast %601 : vector<1x1x1xf32> to vector<1x1xf32>
    %603 = vector.extract_strided_slice %599 {offsets = [0, 0, 0], sizes = [1, 1, 64], strides = [1, 1, 1]} : vector<16x1x64xf32> to vector<1x1x64xf32>
    %604 = vector.shape_cast %603 : vector<1x1x64xf32> to vector<1x64xf32>
    %605 = vector.broadcast %602 : vector<1x1xf32> to vector<1x64xf32>
    %606 = arith.mulf %605, %604 : vector<1x64xf32>
    %607 = vector.extract_strided_slice %600 {offsets = [1, 0, 0], sizes = [1, 1, 1], strides = [1, 1, 1]} : vector<16x1x1xf32> to vector<1x1x1xf32>
    %608 = vector.shape_cast %607 : vector<1x1x1xf32> to vector<1x1xf32>
    %609 = vector.extract_strided_slice %599 {offsets = [1, 0, 0], sizes = [1, 1, 64], strides = [1, 1, 1]} : vector<16x1x64xf32> to vector<1x1x64xf32>
    %610 = vector.shape_cast %609 : vector<1x1x64xf32> to vector<1x64xf32>
    %611 = vector.broadcast %608 : vector<1x1xf32> to vector<1x64xf32>
    %612 = arith.mulf %611, %610 : vector<1x64xf32>
    %613 = arith.addf %606, %612 : vector<1x64xf32>
    %614 = vector.extract_strided_slice %600 {offsets = [2, 0, 0], sizes = [1, 1, 1], strides = [1, 1, 1]} : vector<16x1x1xf32> to vector<1x1x1xf32>
    %615 = vector.shape_cast %614 : vector<1x1x1xf32> to vector<1x1xf32>
    %616 = vector.extract_strided_slice %599 {offsets = [2, 0, 0], sizes = [1, 1, 64], strides = [1, 1, 1]} : vector<16x1x64xf32> to vector<1x1x64xf32>
    %617 = vector.shape_cast %616 : vector<1x1x64xf32> to vector<1x64xf32>
    %618 = vector.broadcast %615 : vector<1x1xf32> to vector<1x64xf32>
    %619 = arith.mulf %618, %617 : vector<1x64xf32>
    %620 = arith.addf %613, %619 : vector<1x64xf32>
    %621 = vector.extract_strided_slice %600 {offsets = [3, 0, 0], sizes = [1, 1, 1], strides = [1, 1, 1]} : vector<16x1x1xf32> to vector<1x1x1xf32>
    %622 = vector.shape_cast %621 : vector<1x1x1xf32> to vector<1x1xf32>
    %623 = vector.extract_strided_slice %599 {offsets = [3, 0, 0], sizes = [1, 1, 64], strides = [1, 1, 1]} : vector<16x1x64xf32> to vector<1x1x64xf32>
    %624 = vector.shape_cast %623 : vector<1x1x64xf32> to vector<1x64xf32>
    %625 = vector.broadcast %622 : vector<1x1xf32> to vector<1x64xf32>
    %626 = arith.mulf %625, %624 : vector<1x64xf32>
    %627 = arith.addf %620, %626 : vector<1x64xf32>
    %628 = vector.extract_strided_slice %600 {offsets = [4, 0, 0], sizes = [1, 1, 1], strides = [1, 1, 1]} : vector<16x1x1xf32> to vector<1x1x1xf32>
    %629 = vector.shape_cast %628 : vector<1x1x1xf32> to vector<1x1xf32>
    %630 = vector.extract_strided_slice %599 {offsets = [4, 0, 0], sizes = [1, 1, 64], strides = [1, 1, 1]} : vector<16x1x64xf32> to vector<1x1x64xf32>
    %631 = vector.shape_cast %630 : vector<1x1x64xf32> to vector<1x64xf32>
    %632 = vector.broadcast %629 : vector<1x1xf32> to vector<1x64xf32>
    %633 = arith.mulf %632, %631 : vector<1x64xf32>
    %634 = arith.addf %627, %633 : vector<1x64xf32>
    %635 = vector.extract_strided_slice %600 {offsets = [5, 0, 0], sizes = [1, 1, 1], strides = [1, 1, 1]} : vector<16x1x1xf32> to vector<1x1x1xf32>
    %636 = vector.shape_cast %635 : vector<1x1x1xf32> to vector<1x1xf32>
    %637 = vector.extract_strided_slice %599 {offsets = [5, 0, 0], sizes = [1, 1, 64], strides = [1, 1, 1]} : vector<16x1x64xf32> to vector<1x1x64xf32>
    %638 = vector.shape_cast %637 : vector<1x1x64xf32> to vector<1x64xf32>
    %639 = vector.broadcast %636 : vector<1x1xf32> to vector<1x64xf32>
    %640 = arith.mulf %639, %638 : vector<1x64xf32>
    %641 = arith.addf %634, %640 : vector<1x64xf32>
    %642 = vector.extract_strided_slice %600 {offsets = [6, 0, 0], sizes = [1, 1, 1], strides = [1, 1, 1]} : vector<16x1x1xf32> to vector<1x1x1xf32>
    %643 = vector.shape_cast %642 : vector<1x1x1xf32> to vector<1x1xf32>
    %644 = vector.extract_strided_slice %599 {offsets = [6, 0, 0], sizes = [1, 1, 64], strides = [1, 1, 1]} : vector<16x1x64xf32> to vector<1x1x64xf32>
    %645 = vector.shape_cast %644 : vector<1x1x64xf32> to vector<1x64xf32>
    %646 = vector.broadcast %643 : vector<1x1xf32> to vector<1x64xf32>
    %647 = arith.mulf %646, %645 : vector<1x64xf32>
    %648 = arith.addf %641, %647 : vector<1x64xf32>
    %649 = vector.extract_strided_slice %600 {offsets = [7, 0, 0], sizes = [1, 1, 1], strides = [1, 1, 1]} : vector<16x1x1xf32> to vector<1x1x1xf32>
    %650 = vector.shape_cast %649 : vector<1x1x1xf32> to vector<1x1xf32>
    %651 = vector.extract_strided_slice %599 {offsets = [7, 0, 0], sizes = [1, 1, 64], strides = [1, 1, 1]} : vector<16x1x64xf32> to vector<1x1x64xf32>
    %652 = vector.shape_cast %651 : vector<1x1x64xf32> to vector<1x64xf32>
    %653 = vector.broadcast %650 : vector<1x1xf32> to vector<1x64xf32>
    %654 = arith.mulf %653, %652 : vector<1x64xf32>
    %655 = arith.addf %648, %654 : vector<1x64xf32>
    %656 = vector.extract_strided_slice %600 {offsets = [8, 0, 0], sizes = [1, 1, 1], strides = [1, 1, 1]} : vector<16x1x1xf32> to vector<1x1x1xf32>
    %657 = vector.shape_cast %656 : vector<1x1x1xf32> to vector<1x1xf32>
    %658 = vector.extract_strided_slice %599 {offsets = [8, 0, 0], sizes = [1, 1, 64], strides = [1, 1, 1]} : vector<16x1x64xf32> to vector<1x1x64xf32>
    %659 = vector.shape_cast %658 : vector<1x1x64xf32> to vector<1x64xf32>
    %660 = vector.broadcast %657 : vector<1x1xf32> to vector<1x64xf32>
    %661 = arith.mulf %660, %659 : vector<1x64xf32>
    %662 = arith.addf %655, %661 : vector<1x64xf32>
    %663 = vector.extract_strided_slice %600 {offsets = [9, 0, 0], sizes = [1, 1, 1], strides = [1, 1, 1]} : vector<16x1x1xf32> to vector<1x1x1xf32>
    %664 = vector.shape_cast %663 : vector<1x1x1xf32> to vector<1x1xf32>
    %665 = vector.extract_strided_slice %599 {offsets = [9, 0, 0], sizes = [1, 1, 64], strides = [1, 1, 1]} : vector<16x1x64xf32> to vector<1x1x64xf32>
    %666 = vector.shape_cast %665 : vector<1x1x64xf32> to vector<1x64xf32>
    %667 = vector.broadcast %664 : vector<1x1xf32> to vector<1x64xf32>
    %668 = arith.mulf %667, %666 : vector<1x64xf32>
    %669 = arith.addf %662, %668 : vector<1x64xf32>
    %670 = vector.extract_strided_slice %600 {offsets = [10, 0, 0], sizes = [1, 1, 1], strides = [1, 1, 1]} : vector<16x1x1xf32> to vector<1x1x1xf32>
    %671 = vector.shape_cast %670 : vector<1x1x1xf32> to vector<1x1xf32>
    %672 = vector.extract_strided_slice %599 {offsets = [10, 0, 0], sizes = [1, 1, 64], strides = [1, 1, 1]} : vector<16x1x64xf32> to vector<1x1x64xf32>
    %673 = vector.shape_cast %672 : vector<1x1x64xf32> to vector<1x64xf32>
    %674 = vector.broadcast %671 : vector<1x1xf32> to vector<1x64xf32>
    %675 = arith.mulf %674, %673 : vector<1x64xf32>
    %676 = arith.addf %669, %675 : vector<1x64xf32>
    %677 = vector.extract_strided_slice %600 {offsets = [11, 0, 0], sizes = [1, 1, 1], strides = [1, 1, 1]} : vector<16x1x1xf32> to vector<1x1x1xf32>
    %678 = vector.shape_cast %677 : vector<1x1x1xf32> to vector<1x1xf32>
    %679 = vector.extract_strided_slice %599 {offsets = [11, 0, 0], sizes = [1, 1, 64], strides = [1, 1, 1]} : vector<16x1x64xf32> to vector<1x1x64xf32>
    %680 = vector.shape_cast %679 : vector<1x1x64xf32> to vector<1x64xf32>
    %681 = vector.broadcast %678 : vector<1x1xf32> to vector<1x64xf32>
    %682 = arith.mulf %681, %680 : vector<1x64xf32>
    %683 = arith.addf %676, %682 : vector<1x64xf32>
    %684 = vector.extract_strided_slice %600 {offsets = [12, 0, 0], sizes = [1, 1, 1], strides = [1, 1, 1]} : vector<16x1x1xf32> to vector<1x1x1xf32>
    %685 = vector.shape_cast %684 : vector<1x1x1xf32> to vector<1x1xf32>
    %686 = vector.extract_strided_slice %599 {offsets = [12, 0, 0], sizes = [1, 1, 64], strides = [1, 1, 1]} : vector<16x1x64xf32> to vector<1x1x64xf32>
    %687 = vector.shape_cast %686 : vector<1x1x64xf32> to vector<1x64xf32>
    %688 = vector.broadcast %685 : vector<1x1xf32> to vector<1x64xf32>
    %689 = arith.mulf %688, %687 : vector<1x64xf32>
    %690 = arith.addf %683, %689 : vector<1x64xf32>
    %691 = vector.extract_strided_slice %600 {offsets = [13, 0, 0], sizes = [1, 1, 1], strides = [1, 1, 1]} : vector<16x1x1xf32> to vector<1x1x1xf32>
    %692 = vector.shape_cast %691 : vector<1x1x1xf32> to vector<1x1xf32>
    %693 = vector.extract_strided_slice %599 {offsets = [13, 0, 0], sizes = [1, 1, 64], strides = [1, 1, 1]} : vector<16x1x64xf32> to vector<1x1x64xf32>
    %694 = vector.shape_cast %693 : vector<1x1x64xf32> to vector<1x64xf32>
    %695 = vector.broadcast %692 : vector<1x1xf32> to vector<1x64xf32>
    %696 = arith.mulf %695, %694 : vector<1x64xf32>
    %697 = arith.addf %690, %696 : vector<1x64xf32>
    %698 = vector.extract_strided_slice %600 {offsets = [14, 0, 0], sizes = [1, 1, 1], strides = [1, 1, 1]} : vector<16x1x1xf32> to vector<1x1x1xf32>
    %699 = vector.shape_cast %698 : vector<1x1x1xf32> to vector<1x1xf32>
    %700 = vector.extract_strided_slice %599 {offsets = [14, 0, 0], sizes = [1, 1, 64], strides = [1, 1, 1]} : vector<16x1x64xf32> to vector<1x1x64xf32>
    %701 = vector.shape_cast %700 : vector<1x1x64xf32> to vector<1x64xf32>
    %702 = vector.broadcast %699 : vector<1x1xf32> to vector<1x64xf32>
    %703 = arith.mulf %702, %701 : vector<1x64xf32>
    %704 = arith.addf %697, %703 : vector<1x64xf32>
    %705 = vector.extract_strided_slice %600 {offsets = [15, 0, 0], sizes = [1, 1, 1], strides = [1, 1, 1]} : vector<16x1x1xf32> to vector<1x1x1xf32>
    %706 = vector.shape_cast %705 : vector<1x1x1xf32> to vector<1x1xf32>
    %707 = vector.extract_strided_slice %599 {offsets = [15, 0, 0], sizes = [1, 1, 64], strides = [1, 1, 1]} : vector<16x1x64xf32> to vector<1x1x64xf32>
    %708 = vector.shape_cast %707 : vector<1x1x64xf32> to vector<1x64xf32>
    %709 = vector.broadcast %706 : vector<1x1xf32> to vector<1x64xf32>
    %710 = arith.mulf %709, %708 : vector<1x64xf32>
    %711 = arith.addf %704, %710 : vector<1x64xf32>
    %712 = vector.extract_strided_slice %119 {offsets = [0, 5, 0], sizes = [16, 1, 64], strides = [1, 1, 1]} : vector<16x8x64xf32> to vector<16x1x64xf32>
    %713 = arith.mulf %712, %599 : vector<16x1x64xf32>
    %714 = vector.extract_strided_slice %131 {offsets = [0, 5, 0], sizes = [16, 1, 64], strides = [1, 1, 1]} : vector<16x8x64xf32> to vector<16x1x64xf32>
    %715 = arith.addf %713, %714 : vector<16x1x64xf32>
    %716 = vector.extract_strided_slice %127 {offsets = [0, 5, 0], sizes = [16, 1, 1], strides = [1, 1, 1]} : vector<16x8x1xf32> to vector<16x1x1xf32>
    %717 = vector.extract_strided_slice %716 {offsets = [0, 0, 0], sizes = [1, 1, 1], strides = [1, 1, 1]} : vector<16x1x1xf32> to vector<1x1x1xf32>
    %718 = vector.shape_cast %717 : vector<1x1x1xf32> to vector<1x1xf32>
    %719 = vector.extract_strided_slice %715 {offsets = [0, 0, 0], sizes = [1, 1, 64], strides = [1, 1, 1]} : vector<16x1x64xf32> to vector<1x1x64xf32>
    %720 = vector.shape_cast %719 : vector<1x1x64xf32> to vector<1x64xf32>
    %721 = vector.broadcast %718 : vector<1x1xf32> to vector<1x64xf32>
    %722 = arith.mulf %721, %720 : vector<1x64xf32>
    %723 = vector.extract_strided_slice %716 {offsets = [1, 0, 0], sizes = [1, 1, 1], strides = [1, 1, 1]} : vector<16x1x1xf32> to vector<1x1x1xf32>
    %724 = vector.shape_cast %723 : vector<1x1x1xf32> to vector<1x1xf32>
    %725 = vector.extract_strided_slice %715 {offsets = [1, 0, 0], sizes = [1, 1, 64], strides = [1, 1, 1]} : vector<16x1x64xf32> to vector<1x1x64xf32>
    %726 = vector.shape_cast %725 : vector<1x1x64xf32> to vector<1x64xf32>
    %727 = vector.broadcast %724 : vector<1x1xf32> to vector<1x64xf32>
    %728 = arith.mulf %727, %726 : vector<1x64xf32>
    %729 = arith.addf %722, %728 : vector<1x64xf32>
    %730 = vector.extract_strided_slice %716 {offsets = [2, 0, 0], sizes = [1, 1, 1], strides = [1, 1, 1]} : vector<16x1x1xf32> to vector<1x1x1xf32>
    %731 = vector.shape_cast %730 : vector<1x1x1xf32> to vector<1x1xf32>
    %732 = vector.extract_strided_slice %715 {offsets = [2, 0, 0], sizes = [1, 1, 64], strides = [1, 1, 1]} : vector<16x1x64xf32> to vector<1x1x64xf32>
    %733 = vector.shape_cast %732 : vector<1x1x64xf32> to vector<1x64xf32>
    %734 = vector.broadcast %731 : vector<1x1xf32> to vector<1x64xf32>
    %735 = arith.mulf %734, %733 : vector<1x64xf32>
    %736 = arith.addf %729, %735 : vector<1x64xf32>
    %737 = vector.extract_strided_slice %716 {offsets = [3, 0, 0], sizes = [1, 1, 1], strides = [1, 1, 1]} : vector<16x1x1xf32> to vector<1x1x1xf32>
    %738 = vector.shape_cast %737 : vector<1x1x1xf32> to vector<1x1xf32>
    %739 = vector.extract_strided_slice %715 {offsets = [3, 0, 0], sizes = [1, 1, 64], strides = [1, 1, 1]} : vector<16x1x64xf32> to vector<1x1x64xf32>
    %740 = vector.shape_cast %739 : vector<1x1x64xf32> to vector<1x64xf32>
    %741 = vector.broadcast %738 : vector<1x1xf32> to vector<1x64xf32>
    %742 = arith.mulf %741, %740 : vector<1x64xf32>
    %743 = arith.addf %736, %742 : vector<1x64xf32>
    %744 = vector.extract_strided_slice %716 {offsets = [4, 0, 0], sizes = [1, 1, 1], strides = [1, 1, 1]} : vector<16x1x1xf32> to vector<1x1x1xf32>
    %745 = vector.shape_cast %744 : vector<1x1x1xf32> to vector<1x1xf32>
    %746 = vector.extract_strided_slice %715 {offsets = [4, 0, 0], sizes = [1, 1, 64], strides = [1, 1, 1]} : vector<16x1x64xf32> to vector<1x1x64xf32>
    %747 = vector.shape_cast %746 : vector<1x1x64xf32> to vector<1x64xf32>
    %748 = vector.broadcast %745 : vector<1x1xf32> to vector<1x64xf32>
    %749 = arith.mulf %748, %747 : vector<1x64xf32>
    %750 = arith.addf %743, %749 : vector<1x64xf32>
    %751 = vector.extract_strided_slice %716 {offsets = [5, 0, 0], sizes = [1, 1, 1], strides = [1, 1, 1]} : vector<16x1x1xf32> to vector<1x1x1xf32>
    %752 = vector.shape_cast %751 : vector<1x1x1xf32> to vector<1x1xf32>
    %753 = vector.extract_strided_slice %715 {offsets = [5, 0, 0], sizes = [1, 1, 64], strides = [1, 1, 1]} : vector<16x1x64xf32> to vector<1x1x64xf32>
    %754 = vector.shape_cast %753 : vector<1x1x64xf32> to vector<1x64xf32>
    %755 = vector.broadcast %752 : vector<1x1xf32> to vector<1x64xf32>
    %756 = arith.mulf %755, %754 : vector<1x64xf32>
    %757 = arith.addf %750, %756 : vector<1x64xf32>
    %758 = vector.extract_strided_slice %716 {offsets = [6, 0, 0], sizes = [1, 1, 1], strides = [1, 1, 1]} : vector<16x1x1xf32> to vector<1x1x1xf32>
    %759 = vector.shape_cast %758 : vector<1x1x1xf32> to vector<1x1xf32>
    %760 = vector.extract_strided_slice %715 {offsets = [6, 0, 0], sizes = [1, 1, 64], strides = [1, 1, 1]} : vector<16x1x64xf32> to vector<1x1x64xf32>
    %761 = vector.shape_cast %760 : vector<1x1x64xf32> to vector<1x64xf32>
    %762 = vector.broadcast %759 : vector<1x1xf32> to vector<1x64xf32>
    %763 = arith.mulf %762, %761 : vector<1x64xf32>
    %764 = arith.addf %757, %763 : vector<1x64xf32>
    %765 = vector.extract_strided_slice %716 {offsets = [7, 0, 0], sizes = [1, 1, 1], strides = [1, 1, 1]} : vector<16x1x1xf32> to vector<1x1x1xf32>
    %766 = vector.shape_cast %765 : vector<1x1x1xf32> to vector<1x1xf32>
    %767 = vector.extract_strided_slice %715 {offsets = [7, 0, 0], sizes = [1, 1, 64], strides = [1, 1, 1]} : vector<16x1x64xf32> to vector<1x1x64xf32>
    %768 = vector.shape_cast %767 : vector<1x1x64xf32> to vector<1x64xf32>
    %769 = vector.broadcast %766 : vector<1x1xf32> to vector<1x64xf32>
    %770 = arith.mulf %769, %768 : vector<1x64xf32>
    %771 = arith.addf %764, %770 : vector<1x64xf32>
    %772 = vector.extract_strided_slice %716 {offsets = [8, 0, 0], sizes = [1, 1, 1], strides = [1, 1, 1]} : vector<16x1x1xf32> to vector<1x1x1xf32>
    %773 = vector.shape_cast %772 : vector<1x1x1xf32> to vector<1x1xf32>
    %774 = vector.extract_strided_slice %715 {offsets = [8, 0, 0], sizes = [1, 1, 64], strides = [1, 1, 1]} : vector<16x1x64xf32> to vector<1x1x64xf32>
    %775 = vector.shape_cast %774 : vector<1x1x64xf32> to vector<1x64xf32>
    %776 = vector.broadcast %773 : vector<1x1xf32> to vector<1x64xf32>
    %777 = arith.mulf %776, %775 : vector<1x64xf32>
    %778 = arith.addf %771, %777 : vector<1x64xf32>
    %779 = vector.extract_strided_slice %716 {offsets = [9, 0, 0], sizes = [1, 1, 1], strides = [1, 1, 1]} : vector<16x1x1xf32> to vector<1x1x1xf32>
    %780 = vector.shape_cast %779 : vector<1x1x1xf32> to vector<1x1xf32>
    %781 = vector.extract_strided_slice %715 {offsets = [9, 0, 0], sizes = [1, 1, 64], strides = [1, 1, 1]} : vector<16x1x64xf32> to vector<1x1x64xf32>
    %782 = vector.shape_cast %781 : vector<1x1x64xf32> to vector<1x64xf32>
    %783 = vector.broadcast %780 : vector<1x1xf32> to vector<1x64xf32>
    %784 = arith.mulf %783, %782 : vector<1x64xf32>
    %785 = arith.addf %778, %784 : vector<1x64xf32>
    %786 = vector.extract_strided_slice %716 {offsets = [10, 0, 0], sizes = [1, 1, 1], strides = [1, 1, 1]} : vector<16x1x1xf32> to vector<1x1x1xf32>
    %787 = vector.shape_cast %786 : vector<1x1x1xf32> to vector<1x1xf32>
    %788 = vector.extract_strided_slice %715 {offsets = [10, 0, 0], sizes = [1, 1, 64], strides = [1, 1, 1]} : vector<16x1x64xf32> to vector<1x1x64xf32>
    %789 = vector.shape_cast %788 : vector<1x1x64xf32> to vector<1x64xf32>
    %790 = vector.broadcast %787 : vector<1x1xf32> to vector<1x64xf32>
    %791 = arith.mulf %790, %789 : vector<1x64xf32>
    %792 = arith.addf %785, %791 : vector<1x64xf32>
    %793 = vector.extract_strided_slice %716 {offsets = [11, 0, 0], sizes = [1, 1, 1], strides = [1, 1, 1]} : vector<16x1x1xf32> to vector<1x1x1xf32>
    %794 = vector.shape_cast %793 : vector<1x1x1xf32> to vector<1x1xf32>
    %795 = vector.extract_strided_slice %715 {offsets = [11, 0, 0], sizes = [1, 1, 64], strides = [1, 1, 1]} : vector<16x1x64xf32> to vector<1x1x64xf32>
    %796 = vector.shape_cast %795 : vector<1x1x64xf32> to vector<1x64xf32>
    %797 = vector.broadcast %794 : vector<1x1xf32> to vector<1x64xf32>
    %798 = arith.mulf %797, %796 : vector<1x64xf32>
    %799 = arith.addf %792, %798 : vector<1x64xf32>
    %800 = vector.extract_strided_slice %716 {offsets = [12, 0, 0], sizes = [1, 1, 1], strides = [1, 1, 1]} : vector<16x1x1xf32> to vector<1x1x1xf32>
    %801 = vector.shape_cast %800 : vector<1x1x1xf32> to vector<1x1xf32>
    %802 = vector.extract_strided_slice %715 {offsets = [12, 0, 0], sizes = [1, 1, 64], strides = [1, 1, 1]} : vector<16x1x64xf32> to vector<1x1x64xf32>
    %803 = vector.shape_cast %802 : vector<1x1x64xf32> to vector<1x64xf32>
    %804 = vector.broadcast %801 : vector<1x1xf32> to vector<1x64xf32>
    %805 = arith.mulf %804, %803 : vector<1x64xf32>
    %806 = arith.addf %799, %805 : vector<1x64xf32>
    %807 = vector.extract_strided_slice %716 {offsets = [13, 0, 0], sizes = [1, 1, 1], strides = [1, 1, 1]} : vector<16x1x1xf32> to vector<1x1x1xf32>
    %808 = vector.shape_cast %807 : vector<1x1x1xf32> to vector<1x1xf32>
    %809 = vector.extract_strided_slice %715 {offsets = [13, 0, 0], sizes = [1, 1, 64], strides = [1, 1, 1]} : vector<16x1x64xf32> to vector<1x1x64xf32>
    %810 = vector.shape_cast %809 : vector<1x1x64xf32> to vector<1x64xf32>
    %811 = vector.broadcast %808 : vector<1x1xf32> to vector<1x64xf32>
    %812 = arith.mulf %811, %810 : vector<1x64xf32>
    %813 = arith.addf %806, %812 : vector<1x64xf32>
    %814 = vector.extract_strided_slice %716 {offsets = [14, 0, 0], sizes = [1, 1, 1], strides = [1, 1, 1]} : vector<16x1x1xf32> to vector<1x1x1xf32>
    %815 = vector.shape_cast %814 : vector<1x1x1xf32> to vector<1x1xf32>
    %816 = vector.extract_strided_slice %715 {offsets = [14, 0, 0], sizes = [1, 1, 64], strides = [1, 1, 1]} : vector<16x1x64xf32> to vector<1x1x64xf32>
    %817 = vector.shape_cast %816 : vector<1x1x64xf32> to vector<1x64xf32>
    %818 = vector.broadcast %815 : vector<1x1xf32> to vector<1x64xf32>
    %819 = arith.mulf %818, %817 : vector<1x64xf32>
    %820 = arith.addf %813, %819 : vector<1x64xf32>
    %821 = vector.extract_strided_slice %716 {offsets = [15, 0, 0], sizes = [1, 1, 1], strides = [1, 1, 1]} : vector<16x1x1xf32> to vector<1x1x1xf32>
    %822 = vector.shape_cast %821 : vector<1x1x1xf32> to vector<1x1xf32>
    %823 = vector.extract_strided_slice %715 {offsets = [15, 0, 0], sizes = [1, 1, 64], strides = [1, 1, 1]} : vector<16x1x64xf32> to vector<1x1x64xf32>
    %824 = vector.shape_cast %823 : vector<1x1x64xf32> to vector<1x64xf32>
    %825 = vector.broadcast %822 : vector<1x1xf32> to vector<1x64xf32>
    %826 = arith.mulf %825, %824 : vector<1x64xf32>
    %827 = arith.addf %820, %826 : vector<1x64xf32>
    %828 = vector.extract_strided_slice %119 {offsets = [0, 6, 0], sizes = [16, 1, 64], strides = [1, 1, 1]} : vector<16x8x64xf32> to vector<16x1x64xf32>
    %829 = arith.mulf %828, %715 : vector<16x1x64xf32>
    %830 = vector.extract_strided_slice %131 {offsets = [0, 6, 0], sizes = [16, 1, 64], strides = [1, 1, 1]} : vector<16x8x64xf32> to vector<16x1x64xf32>
    %831 = arith.addf %829, %830 : vector<16x1x64xf32>
    %832 = vector.extract_strided_slice %127 {offsets = [0, 6, 0], sizes = [16, 1, 1], strides = [1, 1, 1]} : vector<16x8x1xf32> to vector<16x1x1xf32>
    %833 = vector.extract_strided_slice %832 {offsets = [0, 0, 0], sizes = [1, 1, 1], strides = [1, 1, 1]} : vector<16x1x1xf32> to vector<1x1x1xf32>
    %834 = vector.shape_cast %833 : vector<1x1x1xf32> to vector<1x1xf32>
    %835 = vector.extract_strided_slice %831 {offsets = [0, 0, 0], sizes = [1, 1, 64], strides = [1, 1, 1]} : vector<16x1x64xf32> to vector<1x1x64xf32>
    %836 = vector.shape_cast %835 : vector<1x1x64xf32> to vector<1x64xf32>
    %837 = vector.broadcast %834 : vector<1x1xf32> to vector<1x64xf32>
    %838 = arith.mulf %837, %836 : vector<1x64xf32>
    %839 = vector.extract_strided_slice %832 {offsets = [1, 0, 0], sizes = [1, 1, 1], strides = [1, 1, 1]} : vector<16x1x1xf32> to vector<1x1x1xf32>
    %840 = vector.shape_cast %839 : vector<1x1x1xf32> to vector<1x1xf32>
    %841 = vector.extract_strided_slice %831 {offsets = [1, 0, 0], sizes = [1, 1, 64], strides = [1, 1, 1]} : vector<16x1x64xf32> to vector<1x1x64xf32>
    %842 = vector.shape_cast %841 : vector<1x1x64xf32> to vector<1x64xf32>
    %843 = vector.broadcast %840 : vector<1x1xf32> to vector<1x64xf32>
    %844 = arith.mulf %843, %842 : vector<1x64xf32>
    %845 = arith.addf %838, %844 : vector<1x64xf32>
    %846 = vector.extract_strided_slice %832 {offsets = [2, 0, 0], sizes = [1, 1, 1], strides = [1, 1, 1]} : vector<16x1x1xf32> to vector<1x1x1xf32>
    %847 = vector.shape_cast %846 : vector<1x1x1xf32> to vector<1x1xf32>
    %848 = vector.extract_strided_slice %831 {offsets = [2, 0, 0], sizes = [1, 1, 64], strides = [1, 1, 1]} : vector<16x1x64xf32> to vector<1x1x64xf32>
    %849 = vector.shape_cast %848 : vector<1x1x64xf32> to vector<1x64xf32>
    %850 = vector.broadcast %847 : vector<1x1xf32> to vector<1x64xf32>
    %851 = arith.mulf %850, %849 : vector<1x64xf32>
    %852 = arith.addf %845, %851 : vector<1x64xf32>
    %853 = vector.extract_strided_slice %832 {offsets = [3, 0, 0], sizes = [1, 1, 1], strides = [1, 1, 1]} : vector<16x1x1xf32> to vector<1x1x1xf32>
    %854 = vector.shape_cast %853 : vector<1x1x1xf32> to vector<1x1xf32>
    %855 = vector.extract_strided_slice %831 {offsets = [3, 0, 0], sizes = [1, 1, 64], strides = [1, 1, 1]} : vector<16x1x64xf32> to vector<1x1x64xf32>
    %856 = vector.shape_cast %855 : vector<1x1x64xf32> to vector<1x64xf32>
    %857 = vector.broadcast %854 : vector<1x1xf32> to vector<1x64xf32>
    %858 = arith.mulf %857, %856 : vector<1x64xf32>
    %859 = arith.addf %852, %858 : vector<1x64xf32>
    %860 = vector.extract_strided_slice %832 {offsets = [4, 0, 0], sizes = [1, 1, 1], strides = [1, 1, 1]} : vector<16x1x1xf32> to vector<1x1x1xf32>
    %861 = vector.shape_cast %860 : vector<1x1x1xf32> to vector<1x1xf32>
    %862 = vector.extract_strided_slice %831 {offsets = [4, 0, 0], sizes = [1, 1, 64], strides = [1, 1, 1]} : vector<16x1x64xf32> to vector<1x1x64xf32>
    %863 = vector.shape_cast %862 : vector<1x1x64xf32> to vector<1x64xf32>
    %864 = vector.broadcast %861 : vector<1x1xf32> to vector<1x64xf32>
    %865 = arith.mulf %864, %863 : vector<1x64xf32>
    %866 = arith.addf %859, %865 : vector<1x64xf32>
    %867 = vector.extract_strided_slice %832 {offsets = [5, 0, 0], sizes = [1, 1, 1], strides = [1, 1, 1]} : vector<16x1x1xf32> to vector<1x1x1xf32>
    %868 = vector.shape_cast %867 : vector<1x1x1xf32> to vector<1x1xf32>
    %869 = vector.extract_strided_slice %831 {offsets = [5, 0, 0], sizes = [1, 1, 64], strides = [1, 1, 1]} : vector<16x1x64xf32> to vector<1x1x64xf32>
    %870 = vector.shape_cast %869 : vector<1x1x64xf32> to vector<1x64xf32>
    %871 = vector.broadcast %868 : vector<1x1xf32> to vector<1x64xf32>
    %872 = arith.mulf %871, %870 : vector<1x64xf32>
    %873 = arith.addf %866, %872 : vector<1x64xf32>
    %874 = vector.extract_strided_slice %832 {offsets = [6, 0, 0], sizes = [1, 1, 1], strides = [1, 1, 1]} : vector<16x1x1xf32> to vector<1x1x1xf32>
    %875 = vector.shape_cast %874 : vector<1x1x1xf32> to vector<1x1xf32>
    %876 = vector.extract_strided_slice %831 {offsets = [6, 0, 0], sizes = [1, 1, 64], strides = [1, 1, 1]} : vector<16x1x64xf32> to vector<1x1x64xf32>
    %877 = vector.shape_cast %876 : vector<1x1x64xf32> to vector<1x64xf32>
    %878 = vector.broadcast %875 : vector<1x1xf32> to vector<1x64xf32>
    %879 = arith.mulf %878, %877 : vector<1x64xf32>
    %880 = arith.addf %873, %879 : vector<1x64xf32>
    %881 = vector.extract_strided_slice %832 {offsets = [7, 0, 0], sizes = [1, 1, 1], strides = [1, 1, 1]} : vector<16x1x1xf32> to vector<1x1x1xf32>
    %882 = vector.shape_cast %881 : vector<1x1x1xf32> to vector<1x1xf32>
    %883 = vector.extract_strided_slice %831 {offsets = [7, 0, 0], sizes = [1, 1, 64], strides = [1, 1, 1]} : vector<16x1x64xf32> to vector<1x1x64xf32>
    %884 = vector.shape_cast %883 : vector<1x1x64xf32> to vector<1x64xf32>
    %885 = vector.broadcast %882 : vector<1x1xf32> to vector<1x64xf32>
    %886 = arith.mulf %885, %884 : vector<1x64xf32>
    %887 = arith.addf %880, %886 : vector<1x64xf32>
    %888 = vector.extract_strided_slice %832 {offsets = [8, 0, 0], sizes = [1, 1, 1], strides = [1, 1, 1]} : vector<16x1x1xf32> to vector<1x1x1xf32>
    %889 = vector.shape_cast %888 : vector<1x1x1xf32> to vector<1x1xf32>
    %890 = vector.extract_strided_slice %831 {offsets = [8, 0, 0], sizes = [1, 1, 64], strides = [1, 1, 1]} : vector<16x1x64xf32> to vector<1x1x64xf32>
    %891 = vector.shape_cast %890 : vector<1x1x64xf32> to vector<1x64xf32>
    %892 = vector.broadcast %889 : vector<1x1xf32> to vector<1x64xf32>
    %893 = arith.mulf %892, %891 : vector<1x64xf32>
    %894 = arith.addf %887, %893 : vector<1x64xf32>
    %895 = vector.extract_strided_slice %832 {offsets = [9, 0, 0], sizes = [1, 1, 1], strides = [1, 1, 1]} : vector<16x1x1xf32> to vector<1x1x1xf32>
    %896 = vector.shape_cast %895 : vector<1x1x1xf32> to vector<1x1xf32>
    %897 = vector.extract_strided_slice %831 {offsets = [9, 0, 0], sizes = [1, 1, 64], strides = [1, 1, 1]} : vector<16x1x64xf32> to vector<1x1x64xf32>
    %898 = vector.shape_cast %897 : vector<1x1x64xf32> to vector<1x64xf32>
    %899 = vector.broadcast %896 : vector<1x1xf32> to vector<1x64xf32>
    %900 = arith.mulf %899, %898 : vector<1x64xf32>
    %901 = arith.addf %894, %900 : vector<1x64xf32>
    %902 = vector.extract_strided_slice %832 {offsets = [10, 0, 0], sizes = [1, 1, 1], strides = [1, 1, 1]} : vector<16x1x1xf32> to vector<1x1x1xf32>
    %903 = vector.shape_cast %902 : vector<1x1x1xf32> to vector<1x1xf32>
    %904 = vector.extract_strided_slice %831 {offsets = [10, 0, 0], sizes = [1, 1, 64], strides = [1, 1, 1]} : vector<16x1x64xf32> to vector<1x1x64xf32>
    %905 = vector.shape_cast %904 : vector<1x1x64xf32> to vector<1x64xf32>
    %906 = vector.broadcast %903 : vector<1x1xf32> to vector<1x64xf32>
    %907 = arith.mulf %906, %905 : vector<1x64xf32>
    %908 = arith.addf %901, %907 : vector<1x64xf32>
    %909 = vector.extract_strided_slice %832 {offsets = [11, 0, 0], sizes = [1, 1, 1], strides = [1, 1, 1]} : vector<16x1x1xf32> to vector<1x1x1xf32>
    %910 = vector.shape_cast %909 : vector<1x1x1xf32> to vector<1x1xf32>
    %911 = vector.extract_strided_slice %831 {offsets = [11, 0, 0], sizes = [1, 1, 64], strides = [1, 1, 1]} : vector<16x1x64xf32> to vector<1x1x64xf32>
    %912 = vector.shape_cast %911 : vector<1x1x64xf32> to vector<1x64xf32>
    %913 = vector.broadcast %910 : vector<1x1xf32> to vector<1x64xf32>
    %914 = arith.mulf %913, %912 : vector<1x64xf32>
    %915 = arith.addf %908, %914 : vector<1x64xf32>
    %916 = vector.extract_strided_slice %832 {offsets = [12, 0, 0], sizes = [1, 1, 1], strides = [1, 1, 1]} : vector<16x1x1xf32> to vector<1x1x1xf32>
    %917 = vector.shape_cast %916 : vector<1x1x1xf32> to vector<1x1xf32>
    %918 = vector.extract_strided_slice %831 {offsets = [12, 0, 0], sizes = [1, 1, 64], strides = [1, 1, 1]} : vector<16x1x64xf32> to vector<1x1x64xf32>
    %919 = vector.shape_cast %918 : vector<1x1x64xf32> to vector<1x64xf32>
    %920 = vector.broadcast %917 : vector<1x1xf32> to vector<1x64xf32>
    %921 = arith.mulf %920, %919 : vector<1x64xf32>
    %922 = arith.addf %915, %921 : vector<1x64xf32>
    %923 = vector.extract_strided_slice %832 {offsets = [13, 0, 0], sizes = [1, 1, 1], strides = [1, 1, 1]} : vector<16x1x1xf32> to vector<1x1x1xf32>
    %924 = vector.shape_cast %923 : vector<1x1x1xf32> to vector<1x1xf32>
    %925 = vector.extract_strided_slice %831 {offsets = [13, 0, 0], sizes = [1, 1, 64], strides = [1, 1, 1]} : vector<16x1x64xf32> to vector<1x1x64xf32>
    %926 = vector.shape_cast %925 : vector<1x1x64xf32> to vector<1x64xf32>
    %927 = vector.broadcast %924 : vector<1x1xf32> to vector<1x64xf32>
    %928 = arith.mulf %927, %926 : vector<1x64xf32>
    %929 = arith.addf %922, %928 : vector<1x64xf32>
    %930 = vector.extract_strided_slice %832 {offsets = [14, 0, 0], sizes = [1, 1, 1], strides = [1, 1, 1]} : vector<16x1x1xf32> to vector<1x1x1xf32>
    %931 = vector.shape_cast %930 : vector<1x1x1xf32> to vector<1x1xf32>
    %932 = vector.extract_strided_slice %831 {offsets = [14, 0, 0], sizes = [1, 1, 64], strides = [1, 1, 1]} : vector<16x1x64xf32> to vector<1x1x64xf32>
    %933 = vector.shape_cast %932 : vector<1x1x64xf32> to vector<1x64xf32>
    %934 = vector.broadcast %931 : vector<1x1xf32> to vector<1x64xf32>
    %935 = arith.mulf %934, %933 : vector<1x64xf32>
    %936 = arith.addf %929, %935 : vector<1x64xf32>
    %937 = vector.extract_strided_slice %832 {offsets = [15, 0, 0], sizes = [1, 1, 1], strides = [1, 1, 1]} : vector<16x1x1xf32> to vector<1x1x1xf32>
    %938 = vector.shape_cast %937 : vector<1x1x1xf32> to vector<1x1xf32>
    %939 = vector.extract_strided_slice %831 {offsets = [15, 0, 0], sizes = [1, 1, 64], strides = [1, 1, 1]} : vector<16x1x64xf32> to vector<1x1x64xf32>
    %940 = vector.shape_cast %939 : vector<1x1x64xf32> to vector<1x64xf32>
    %941 = vector.broadcast %938 : vector<1x1xf32> to vector<1x64xf32>
    %942 = arith.mulf %941, %940 : vector<1x64xf32>
    %943 = arith.addf %936, %942 : vector<1x64xf32>
    %944 = vector.extract_strided_slice %119 {offsets = [0, 7, 0], sizes = [16, 1, 64], strides = [1, 1, 1]} : vector<16x8x64xf32> to vector<16x1x64xf32>
    %945 = arith.mulf %944, %831 : vector<16x1x64xf32>
    %946 = vector.extract_strided_slice %131 {offsets = [0, 7, 0], sizes = [16, 1, 64], strides = [1, 1, 1]} : vector<16x8x64xf32> to vector<16x1x64xf32>
    %947 = arith.addf %945, %946 : vector<16x1x64xf32>
    %948 = vector.extract_strided_slice %127 {offsets = [0, 7, 0], sizes = [16, 1, 1], strides = [1, 1, 1]} : vector<16x8x1xf32> to vector<16x1x1xf32>
    %949 = vector.extract_strided_slice %948 {offsets = [0, 0, 0], sizes = [1, 1, 1], strides = [1, 1, 1]} : vector<16x1x1xf32> to vector<1x1x1xf32>
    %950 = vector.shape_cast %949 : vector<1x1x1xf32> to vector<1x1xf32>
    %951 = vector.extract_strided_slice %947 {offsets = [0, 0, 0], sizes = [1, 1, 64], strides = [1, 1, 1]} : vector<16x1x64xf32> to vector<1x1x64xf32>
    %952 = vector.shape_cast %951 : vector<1x1x64xf32> to vector<1x64xf32>
    %953 = vector.broadcast %950 : vector<1x1xf32> to vector<1x64xf32>
    %954 = arith.mulf %953, %952 : vector<1x64xf32>
    %955 = vector.extract_strided_slice %948 {offsets = [1, 0, 0], sizes = [1, 1, 1], strides = [1, 1, 1]} : vector<16x1x1xf32> to vector<1x1x1xf32>
    %956 = vector.shape_cast %955 : vector<1x1x1xf32> to vector<1x1xf32>
    %957 = vector.extract_strided_slice %947 {offsets = [1, 0, 0], sizes = [1, 1, 64], strides = [1, 1, 1]} : vector<16x1x64xf32> to vector<1x1x64xf32>
    %958 = vector.shape_cast %957 : vector<1x1x64xf32> to vector<1x64xf32>
    %959 = vector.broadcast %956 : vector<1x1xf32> to vector<1x64xf32>
    %960 = arith.mulf %959, %958 : vector<1x64xf32>
    %961 = arith.addf %954, %960 : vector<1x64xf32>
    %962 = vector.extract_strided_slice %948 {offsets = [2, 0, 0], sizes = [1, 1, 1], strides = [1, 1, 1]} : vector<16x1x1xf32> to vector<1x1x1xf32>
    %963 = vector.shape_cast %962 : vector<1x1x1xf32> to vector<1x1xf32>
    %964 = vector.extract_strided_slice %947 {offsets = [2, 0, 0], sizes = [1, 1, 64], strides = [1, 1, 1]} : vector<16x1x64xf32> to vector<1x1x64xf32>
    %965 = vector.shape_cast %964 : vector<1x1x64xf32> to vector<1x64xf32>
    %966 = vector.broadcast %963 : vector<1x1xf32> to vector<1x64xf32>
    %967 = arith.mulf %966, %965 : vector<1x64xf32>
    %968 = arith.addf %961, %967 : vector<1x64xf32>
    %969 = vector.extract_strided_slice %948 {offsets = [3, 0, 0], sizes = [1, 1, 1], strides = [1, 1, 1]} : vector<16x1x1xf32> to vector<1x1x1xf32>
    %970 = vector.shape_cast %969 : vector<1x1x1xf32> to vector<1x1xf32>
    %971 = vector.extract_strided_slice %947 {offsets = [3, 0, 0], sizes = [1, 1, 64], strides = [1, 1, 1]} : vector<16x1x64xf32> to vector<1x1x64xf32>
    %972 = vector.shape_cast %971 : vector<1x1x64xf32> to vector<1x64xf32>
    %973 = vector.broadcast %970 : vector<1x1xf32> to vector<1x64xf32>
    %974 = arith.mulf %973, %972 : vector<1x64xf32>
    %975 = arith.addf %968, %974 : vector<1x64xf32>
    %976 = vector.extract_strided_slice %948 {offsets = [4, 0, 0], sizes = [1, 1, 1], strides = [1, 1, 1]} : vector<16x1x1xf32> to vector<1x1x1xf32>
    %977 = vector.shape_cast %976 : vector<1x1x1xf32> to vector<1x1xf32>
    %978 = vector.extract_strided_slice %947 {offsets = [4, 0, 0], sizes = [1, 1, 64], strides = [1, 1, 1]} : vector<16x1x64xf32> to vector<1x1x64xf32>
    %979 = vector.shape_cast %978 : vector<1x1x64xf32> to vector<1x64xf32>
    %980 = vector.broadcast %977 : vector<1x1xf32> to vector<1x64xf32>
    %981 = arith.mulf %980, %979 : vector<1x64xf32>
    %982 = arith.addf %975, %981 : vector<1x64xf32>
    %983 = vector.extract_strided_slice %948 {offsets = [5, 0, 0], sizes = [1, 1, 1], strides = [1, 1, 1]} : vector<16x1x1xf32> to vector<1x1x1xf32>
    %984 = vector.shape_cast %983 : vector<1x1x1xf32> to vector<1x1xf32>
    %985 = vector.extract_strided_slice %947 {offsets = [5, 0, 0], sizes = [1, 1, 64], strides = [1, 1, 1]} : vector<16x1x64xf32> to vector<1x1x64xf32>
    %986 = vector.shape_cast %985 : vector<1x1x64xf32> to vector<1x64xf32>
    %987 = vector.broadcast %984 : vector<1x1xf32> to vector<1x64xf32>
    %988 = arith.mulf %987, %986 : vector<1x64xf32>
    %989 = arith.addf %982, %988 : vector<1x64xf32>
    %990 = vector.extract_strided_slice %948 {offsets = [6, 0, 0], sizes = [1, 1, 1], strides = [1, 1, 1]} : vector<16x1x1xf32> to vector<1x1x1xf32>
    %991 = vector.shape_cast %990 : vector<1x1x1xf32> to vector<1x1xf32>
    %992 = vector.extract_strided_slice %947 {offsets = [6, 0, 0], sizes = [1, 1, 64], strides = [1, 1, 1]} : vector<16x1x64xf32> to vector<1x1x64xf32>
    %993 = vector.shape_cast %992 : vector<1x1x64xf32> to vector<1x64xf32>
    %994 = vector.broadcast %991 : vector<1x1xf32> to vector<1x64xf32>
    %995 = arith.mulf %994, %993 : vector<1x64xf32>
    %996 = arith.addf %989, %995 : vector<1x64xf32>
    %997 = vector.extract_strided_slice %948 {offsets = [7, 0, 0], sizes = [1, 1, 1], strides = [1, 1, 1]} : vector<16x1x1xf32> to vector<1x1x1xf32>
    %998 = vector.shape_cast %997 : vector<1x1x1xf32> to vector<1x1xf32>
    %999 = vector.extract_strided_slice %947 {offsets = [7, 0, 0], sizes = [1, 1, 64], strides = [1, 1, 1]} : vector<16x1x64xf32> to vector<1x1x64xf32>
    %1000 = vector.shape_cast %999 : vector<1x1x64xf32> to vector<1x64xf32>
    %1001 = vector.broadcast %998 : vector<1x1xf32> to vector<1x64xf32>
    %1002 = arith.mulf %1001, %1000 : vector<1x64xf32>
    %1003 = arith.addf %996, %1002 : vector<1x64xf32>
    %1004 = vector.extract_strided_slice %948 {offsets = [8, 0, 0], sizes = [1, 1, 1], strides = [1, 1, 1]} : vector<16x1x1xf32> to vector<1x1x1xf32>
    %1005 = vector.shape_cast %1004 : vector<1x1x1xf32> to vector<1x1xf32>
    %1006 = vector.extract_strided_slice %947 {offsets = [8, 0, 0], sizes = [1, 1, 64], strides = [1, 1, 1]} : vector<16x1x64xf32> to vector<1x1x64xf32>
    %1007 = vector.shape_cast %1006 : vector<1x1x64xf32> to vector<1x64xf32>
    %1008 = vector.broadcast %1005 : vector<1x1xf32> to vector<1x64xf32>
    %1009 = arith.mulf %1008, %1007 : vector<1x64xf32>
    %1010 = arith.addf %1003, %1009 : vector<1x64xf32>
    %1011 = vector.extract_strided_slice %948 {offsets = [9, 0, 0], sizes = [1, 1, 1], strides = [1, 1, 1]} : vector<16x1x1xf32> to vector<1x1x1xf32>
    %1012 = vector.shape_cast %1011 : vector<1x1x1xf32> to vector<1x1xf32>
    %1013 = vector.extract_strided_slice %947 {offsets = [9, 0, 0], sizes = [1, 1, 64], strides = [1, 1, 1]} : vector<16x1x64xf32> to vector<1x1x64xf32>
    %1014 = vector.shape_cast %1013 : vector<1x1x64xf32> to vector<1x64xf32>
    %1015 = vector.broadcast %1012 : vector<1x1xf32> to vector<1x64xf32>
    %1016 = arith.mulf %1015, %1014 : vector<1x64xf32>
    %1017 = arith.addf %1010, %1016 : vector<1x64xf32>
    %1018 = vector.extract_strided_slice %948 {offsets = [10, 0, 0], sizes = [1, 1, 1], strides = [1, 1, 1]} : vector<16x1x1xf32> to vector<1x1x1xf32>
    %1019 = vector.shape_cast %1018 : vector<1x1x1xf32> to vector<1x1xf32>
    %1020 = vector.extract_strided_slice %947 {offsets = [10, 0, 0], sizes = [1, 1, 64], strides = [1, 1, 1]} : vector<16x1x64xf32> to vector<1x1x64xf32>
    %1021 = vector.shape_cast %1020 : vector<1x1x64xf32> to vector<1x64xf32>
    %1022 = vector.broadcast %1019 : vector<1x1xf32> to vector<1x64xf32>
    %1023 = arith.mulf %1022, %1021 : vector<1x64xf32>
    %1024 = arith.addf %1017, %1023 : vector<1x64xf32>
    %1025 = vector.extract_strided_slice %948 {offsets = [11, 0, 0], sizes = [1, 1, 1], strides = [1, 1, 1]} : vector<16x1x1xf32> to vector<1x1x1xf32>
    %1026 = vector.shape_cast %1025 : vector<1x1x1xf32> to vector<1x1xf32>
    %1027 = vector.extract_strided_slice %947 {offsets = [11, 0, 0], sizes = [1, 1, 64], strides = [1, 1, 1]} : vector<16x1x64xf32> to vector<1x1x64xf32>
    %1028 = vector.shape_cast %1027 : vector<1x1x64xf32> to vector<1x64xf32>
    %1029 = vector.broadcast %1026 : vector<1x1xf32> to vector<1x64xf32>
    %1030 = arith.mulf %1029, %1028 : vector<1x64xf32>
    %1031 = arith.addf %1024, %1030 : vector<1x64xf32>
    %1032 = vector.extract_strided_slice %948 {offsets = [12, 0, 0], sizes = [1, 1, 1], strides = [1, 1, 1]} : vector<16x1x1xf32> to vector<1x1x1xf32>
    %1033 = vector.shape_cast %1032 : vector<1x1x1xf32> to vector<1x1xf32>
    %1034 = vector.extract_strided_slice %947 {offsets = [12, 0, 0], sizes = [1, 1, 64], strides = [1, 1, 1]} : vector<16x1x64xf32> to vector<1x1x64xf32>
    %1035 = vector.shape_cast %1034 : vector<1x1x64xf32> to vector<1x64xf32>
    %1036 = vector.broadcast %1033 : vector<1x1xf32> to vector<1x64xf32>
    %1037 = arith.mulf %1036, %1035 : vector<1x64xf32>
    %1038 = arith.addf %1031, %1037 : vector<1x64xf32>
    %1039 = vector.extract_strided_slice %948 {offsets = [13, 0, 0], sizes = [1, 1, 1], strides = [1, 1, 1]} : vector<16x1x1xf32> to vector<1x1x1xf32>
    %1040 = vector.shape_cast %1039 : vector<1x1x1xf32> to vector<1x1xf32>
    %1041 = vector.extract_strided_slice %947 {offsets = [13, 0, 0], sizes = [1, 1, 64], strides = [1, 1, 1]} : vector<16x1x64xf32> to vector<1x1x64xf32>
    %1042 = vector.shape_cast %1041 : vector<1x1x64xf32> to vector<1x64xf32>
    %1043 = vector.broadcast %1040 : vector<1x1xf32> to vector<1x64xf32>
    %1044 = arith.mulf %1043, %1042 : vector<1x64xf32>
    %1045 = arith.addf %1038, %1044 : vector<1x64xf32>
    %1046 = vector.extract_strided_slice %948 {offsets = [14, 0, 0], sizes = [1, 1, 1], strides = [1, 1, 1]} : vector<16x1x1xf32> to vector<1x1x1xf32>
    %1047 = vector.shape_cast %1046 : vector<1x1x1xf32> to vector<1x1xf32>
    %1048 = vector.extract_strided_slice %947 {offsets = [14, 0, 0], sizes = [1, 1, 64], strides = [1, 1, 1]} : vector<16x1x64xf32> to vector<1x1x64xf32>
    %1049 = vector.shape_cast %1048 : vector<1x1x64xf32> to vector<1x64xf32>
    %1050 = vector.broadcast %1047 : vector<1x1xf32> to vector<1x64xf32>
    %1051 = arith.mulf %1050, %1049 : vector<1x64xf32>
    %1052 = arith.addf %1045, %1051 : vector<1x64xf32>
    %1053 = vector.extract_strided_slice %948 {offsets = [15, 0, 0], sizes = [1, 1, 1], strides = [1, 1, 1]} : vector<16x1x1xf32> to vector<1x1x1xf32>
    %1054 = vector.shape_cast %1053 : vector<1x1x1xf32> to vector<1x1xf32>
    %1055 = vector.extract_strided_slice %947 {offsets = [15, 0, 0], sizes = [1, 1, 64], strides = [1, 1, 1]} : vector<16x1x64xf32> to vector<1x1x64xf32>
    %1056 = vector.shape_cast %1055 : vector<1x1x64xf32> to vector<1x64xf32>
    %1057 = vector.broadcast %1054 : vector<1x1xf32> to vector<1x64xf32>
    %1058 = arith.mulf %1057, %1056 : vector<1x64xf32>
    %1059 = arith.addf %1052, %1058 : vector<1x64xf32>
    %1060 = tpu.concatenate %247, %363, %479, %595, %711, %827, %943, %1059 in 0 : vector<1x64xf32>, vector<1x64xf32>, vector<1x64xf32>, vector<1x64xf32>, vector<1x64xf32>, vector<1x64xf32>, vector<1x64xf32>, vector<1x64xf32> -> vector<8x64xf32>
    %c0_65 = arith.constant 0 : index
    %c0_66 = arith.constant 0 : index
    %1061 = vector.load %arg19[%c0_65, %c0_66] : memref<8x64xf32, #tpu.memory_space<vmem>>, vector<8x64xf32>
    tpu.vector_store %arg19[%c0_65, %c0_66], %1060 {strides = array<i32>} : memref<8x64xf32, #tpu.memory_space<vmem>>, vector<8x64xf32>,
    %c0_67 = arith.constant 0 : index
    %c0_68 = arith.constant 0 : index
    %c0_69 = arith.constant 0 : index
    %1062 = vector.load %arg20[%c0_67, %c0_68, %c0_69] : memref<16x1x64xf32, #tpu.memory_space<vmem>>, vector<16x1x64xf32>
    tpu.vector_store %arg20[%c0_67, %c0_68, %c0_69], %947 {strides = array<i32>} : memref<16x1x64xf32, #tpu.memory_space<vmem>>, vector<16x1x64xf32>,
    %c0_i32_70 = arith.constant 0 : i32
    %1063 = arith.cmpi eq, %arg1, %c0_i32_70 : i32
    %1064 = arith.extui %1063 : i1 to i32
    %c0_i32_71 = arith.constant 0 : i32
    %1065 = arith.cmpi ne, %1064, %c0_i32_71 : i32
    scf.if %1065 {
      %c0_83 = arith.constant 0 : index
      %c0_84 = arith.constant 0 : index
      %c0_85 = arith.constant 0 : index
      %c0_86 = arith.constant 0 : index
      %1083 = vector.load %arg15[%c0_83, %c0_84, %c0_85, %c0_86] : memref<1x16x1x64xf32, #tpu.memory_space<vmem>>, vector<1x16x1x64xf32>
      %1084 = vector.shape_cast %1083 : vector<1x16x1x64xf32> to vector<16x1x64xf32>
      %1085 = vector.shape_cast %947 : vector<16x1x64xf32> to vector<1x16x1x64xf32>
      tpu.vector_store %arg15[%c0_83, %c0_84, %c0_85, %c0_86], %1085 {strides = array<i32>} : memref<1x16x1x64xf32, #tpu.memory_space<vmem>>, vector<1x16x1x64xf32>,
    } else {
    }
    %c0_72 = arith.constant 0 : index
    %c0_73 = arith.constant 0 : index
    %1066 = vector.load %arg19[%c0_72, %c0_73] : memref<8x64xf32, #tpu.memory_space<vmem>>, vector<8x64xf32>
    %c0_74 = arith.constant 0 : index
    %c0_75 = arith.constant 0 : index
    %1067 = vector.load %arg11[%c0_74, %c0_75] : memref<1x64xf32, #tpu.memory_space<vmem>>, vector<1x64xf32>
    %1068 = vector.broadcast %1067 : vector<1x64xf32> to vector<8x64xf32>
    %1069 = arith.mulf %68, %1068 : vector<8x64xf32>
    %1070 = arith.addf %1066, %1069 : vector<8x64xf32>
    %cst_76 = arith.constant 0.000000e+00 : f32
    %1071 = vector.broadcast %cst_76 : f32 to vector<8x64xf32>
    %1072 = arith.subf %1071, %29 : vector<8x64xf32>
    %1073 = math.exp %1072 : vector<8x64xf32>
    %cst_77 = arith.constant 1.000000e+00 : f32
    %1074 = vector.broadcast %cst_77 : f32 to vector<8x64xf32>
    %1075 = arith.addf %1074, %1073 : vector<8x64xf32>
    %1076 = tpu.reciprocal %1075 {approx = true} : vector<8x64xf32> -> vector<8x64xf32>
    %1077 = arith.mulf %29, %1076 : vector<8x64xf32>
    %1078 = arith.mulf %1070, %1077 : vector<8x64xf32>
    %c0_78 = arith.constant 0 : index
    %c0_79 = arith.constant 0 : index
    %1079 = vector.load %arg12[%c0_78, %c0_79] : memref<64x32xf32, #tpu.memory_space<vmem>>, vector<64x32xf32>
    %cst_80 = arith.constant dense<0.000000e+00> : vector<8x32xf32>
    %1080 = tpu.matmul %1078, %1079, %cst_80 {dimension_numbers = #tpu.dot_dimension_numbers<[1], [0], [0], [1], [0, 0, 1, 1], [], []>} : vector<8x64xf32>, vector<64x32xf32>, vector<8x32xf32> -> vector<8x32xf32>
    %1081 = arith.addf %3, %1080 : vector<8x32xf32>
    %c0_81 = arith.constant 0 : index
    %c0_82 = arith.constant 0 : index
    %1082 = vector.load %arg13[%c0_81, %c0_82] : memref<8x32xf32, #tpu.memory_space<vmem>>, vector<8x32xf32>
    tpu.vector_store %arg13[%c0_81, %c0_82], %1081 {strides = array<i32>} : memref<8x32xf32, #tpu.memory_space<vmem>>, vector<8x32xf32>,
    return
  }
  func.func @transform_0(%arg0: i32, %arg1: i32) -> (i32, i32) {
    %c1_i32 = arith.constant 1 : i32
    %0 = arith.muli %arg0, %c1_i32 : i32
    %1 = arith.addi %0, %arg1 : i32
    %c0_i32 = arith.constant 0 : i32
    %c0_i32_0 = arith.constant 0 : i32
    return %1, %c0_i32 : i32, i32
  }
  func.func @transform_1(%arg0: i32, %arg1: i32) -> (i32, i32) {
    %c0_i32 = arith.constant 0 : i32
    %c0_i32_0 = arith.constant 0 : i32
    %c0_i32_1 = arith.constant 0 : i32
    return %c0_i32, %c0_i32_0 : i32, i32
  }
  func.func @transform_2(%arg0: i32, %arg1: i32) -> (i32, i32) {
    %c0_i32 = arith.constant 0 : i32
    %c0_i32_0 = arith.constant 0 : i32
    %c0_i32_1 = arith.constant 0 : i32
    return %c0_i32, %c0_i32_0 : i32, i32
  }
  func.func @transform_3(%arg0: i32, %arg1: i32) -> (i32, i32) {
    %c0_i32 = arith.constant 0 : i32
    %c0_i32_0 = arith.constant 0 : i32
    %c0_i32_1 = arith.constant 0 : i32
    return %c0_i32, %c0_i32_0 : i32, i32
  }
  func.func @transform_4(%arg0: i32, %arg1: i32) -> (i32, i32) {
    %c0_i32 = arith.constant 0 : i32
    %c0_i32_0 = arith.constant 0 : i32
    %c0_i32_1 = arith.constant 0 : i32
    return %c0_i32, %c0_i32_0 : i32, i32
  }
  func.func @transform_5(%arg0: i32, %arg1: i32) -> (i32, i32) {
    %c0_i32 = arith.constant 0 : i32
    %c0_i32_0 = arith.constant 0 : i32
    %c0_i32_1 = arith.constant 0 : i32
    return %c0_i32, %c0_i32_0 : i32, i32
  }
  func.func @transform_6(%arg0: i32, %arg1: i32) -> (i32, i32) {
    %c0_i32 = arith.constant 0 : i32
    %c0_i32_0 = arith.constant 0 : i32
    %c0_i32_1 = arith.constant 0 : i32
    return %c0_i32, %c0_i32_0 : i32, i32
  }
  func.func @transform_7(%arg0: i32, %arg1: i32) -> (i32, i32) {
    %c0_i32 = arith.constant 0 : i32
    %c0_i32_0 = arith.constant 0 : i32
    %c0_i32_1 = arith.constant 0 : i32
    return %c0_i32, %c0_i32_0 : i32, i32
  }
  func.func @transform_8(%arg0: i32, %arg1: i32) -> (i32, i32, i32) {
    %c0_i32 = arith.constant 0 : i32
    %c0_i32_0 = arith.constant 0 : i32
    %c0_i32_1 = arith.constant 0 : i32
    %c0_i32_2 = arith.constant 0 : i32
    return %c0_i32, %c0_i32_0, %c0_i32_1 : i32, i32, i32
  }
  func.func @transform_9(%arg0: i32, %arg1: i32) -> (i32, i32) {
    %c0_i32 = arith.constant 0 : i32
    %c0_i32_0 = arith.constant 0 : i32
    %c0_i32_1 = arith.constant 0 : i32
    return %c0_i32, %c0_i32_0 : i32, i32
  }
  func.func @transform_10(%arg0: i32, %arg1: i32) -> (i32, i32) {
    %c0_i32 = arith.constant 0 : i32
    %c0_i32_0 = arith.constant 0 : i32
    %c0_i32_1 = arith.constant 0 : i32
    return %c0_i32, %c0_i32_0 : i32, i32
  }
  func.func @transform_11(%arg0: i32, %arg1: i32) -> (i32, i32) {
    %c1_i32 = arith.constant 1 : i32
    %0 = arith.muli %arg0, %c1_i32 : i32
    %1 = arith.addi %0, %arg1 : i32
    %c0_i32 = arith.constant 0 : i32
    %c0_i32_0 = arith.constant 0 : i32
    return %1, %c0_i32 : i32, i32
  }
  func.func @transform_12(%arg0: i32, %arg1: i32) -> (i32, i32, i32, i32) {
    %c0_i32 = arith.constant 0 : i32
    %c0_i32_0 = arith.constant 0 : i32
    %c0_i32_1 = arith.constant 0 : i32
    %c0_i32_2 = arith.constant 0 : i32
    return %arg0, %c0_i32, %c0_i32_0, %c0_i32_1 : i32, i32, i32, i32
  }
  func.func @transform_13(%arg0: i32, %arg1: i32) -> (i32, i32, i32, i32) {
    %c0_i32 = arith.constant 0 : i32
    %c0_i32_0 = arith.constant 0 : i32
    %c0_i32_1 = arith.constant 0 : i32
    %c0_i32_2 = arith.constant 0 : i32
    return %arg0, %c0_i32, %c0_i32_0, %c0_i32_1 : i32, i32, i32, i32
  }
}

module attributes {stable_mosaic.version = 11 : i64} {
  func.func @mamba_block_kernel(%arg0: i32, %arg1: i32, %arg2: memref<8x32xf32, #tpu.memory_space<vmem>>, %arg3: memref<1x32xf32, #tpu.memory_space<vmem>>, %arg4: memref<1x32xf32, #tpu.memory_space<vmem>>, %arg5: memref<32x128xf32, #tpu.memory_space<vmem>>, %arg6: memref<4x64xf32, #tpu.memory_space<vmem>>, %arg7: memref<1x64xf32, #tpu.memory_space<vmem>>, %arg8: memref<64x96xf32, #tpu.memory_space<vmem>>, %arg9: memref<1x64xf32, #tpu.memory_space<vmem>>, %arg10: memref<16x1x64xf32, #tpu.memory_space<vmem>>, %arg11: memref<1x64xf32, #tpu.memory_space<vmem>>, %arg12: memref<64x32xf32, #tpu.memory_space<vmem>>, %arg13: memref<8x32xf32, #tpu.memory_space<vmem>>, %arg14: memref<1x3x1x64xf32, #tpu.memory_space<vmem>>, %arg15: memref<1x16x1x64xf32, #tpu.memory_space<vmem>>, %arg16: memref<8x64xf32, #tpu.memory_space<vmem>>, %arg17: memref<8x64xf32, #tpu.memory_space<vmem>>, %arg18: memref<8x32xf32, #tpu.memory_space<vmem>>, %arg19: memref<8x64xf32, #tpu.memory_space<vmem>>, %arg20: memref<16x1x64xf32, #tpu.memory_space<vmem>>, %arg21: memref<3x1x64xf32, #tpu.memory_space<vmem>>) attributes {dimension_semantics = [#tpu.dimension_semantics<parallel>, #tpu.dimension_semantics<arbitrary>], iteration_bounds = array<i64: 2, 1>, scalar_prefetch = 0 : i64, scratch_operands = 6 : i64, tpu.core_type = #tpu.core_type<tc>, window_params = [{transform_indices = @transform_0, window_bounds = array<i64: 8, 32>}, {pipeline_mode = #tpu.pipeline_mode<synchronous>, transform_indices = @transform_1, window_bounds = array<i64: 1, 32>}, {pipeline_mode = #tpu.pipeline_mode<synchronous>, transform_indices = @transform_2, window_bounds = array<i64: 1, 32>}, {pipeline_mode = #tpu.pipeline_mode<synchronous>, transform_indices = @transform_3, window_bounds = array<i64: 32, 128>}, {pipeline_mode = #tpu.pipeline_mode<synchronous>, transform_indices = @transform_4, window_bounds = array<i64: 4, 64>}, {pipeline_mode = #tpu.pipeline_mode<synchronous>, transform_indices = @transform_5, window_bounds = array<i64: 1, 64>}, {pipeline_mode = #tpu.pipeline_mode<synchronous>, transform_indices = @transform_6, window_bounds = array<i64: 64, 96>}, {pipeline_mode = #tpu.pipeline_mode<synchronous>, transform_indices = @transform_7, window_bounds = array<i64: 1, 64>}, {pipeline_mode = #tpu.pipeline_mode<synchronous>, transform_indices = @transform_8, window_bounds = array<i64: 16, 1, 64>}, {pipeline_mode = #tpu.pipeline_mode<synchronous>, transform_indices = @transform_9, window_bounds = array<i64: 1, 64>}, {pipeline_mode = #tpu.pipeline_mode<synchronous>, transform_indices = @transform_10, window_bounds = array<i64: 64, 32>}, {transform_indices = @transform_11, window_bounds = array<i64: 8, 32>}, {transform_indices = @transform_12, window_bounds = array<i64: 1, 3, 1, 64>}, {transform_indices = @transform_13, window_bounds = array<i64: 1, 16, 1, 64>}]} {
    %c0_i32 = arith.constant 0 : i32
    %0 = arith.cmpi eq, %arg1, %c0_i32 : i32
    %1 = arith.extui %0 : i1 to i32
    %c0_i32_0 = arith.constant 0 : i32
    %2 = arith.cmpi ne, %1, %c0_i32_0 : i32
    scf.if %2 {
      %cst_83 = arith.constant 0.000000e+00 : f32
      %1083 = vector.broadcast %cst_83 : f32 to vector<16x1x64xf32>
      %c0_84 = arith.constant 0 : index
      %c0_85 = arith.constant 0 : index
      %c0_86 = arith.constant 0 : index
      %1084 = vector.load %arg20[%c0_84, %c0_85, %c0_86] : memref<16x1x64xf32, #tpu.memory_space<vmem>>, vector<16x1x64xf32>
      tpu.vector_store %arg20[%c0_84, %c0_85, %c0_86], %1083 {strides = array<i32>} : memref<16x1x64xf32, #tpu.memory_space<vmem>>, vector<16x1x64xf32>,
      %cst_87 = arith.constant 0.000000e+00 : f32
      %1085 = vector.broadcast %cst_87 : f32 to vector<3x1x64xf32>
      %c0_88 = arith.constant 0 : index
      %c0_89 = arith.constant 0 : index
      %c0_90 = arith.constant 0 : index
      %1086 = vector.load %arg21[%c0_88, %c0_89, %c0_90] : memref<3x1x64xf32, #tpu.memory_space<vmem>>, vector<3x1x64xf32>
      tpu.vector_store %arg21[%c0_88, %c0_89, %c0_90], %1085 {strides = array<i32>} : memref<3x1x64xf32, #tpu.memory_space<vmem>>, vector<3x1x64xf32>,
    } else {
    }
    %c0 = arith.constant 0 : index
    %c0_1 = arith.constant 0 : index
    %3 = vector.load %arg2[%c0, %c0_1] : memref<8x32xf32, #tpu.memory_space<vmem>>, vector<8x32xf32>
    %cst = arith.constant dense<0.000000e+00> : vector<8xf32>
    %4 = vector.multi_reduction <add>, %3, %cst [1] : vector<8x32xf32> to vector<8xf32>
    %5 = vector.shape_cast %4 : vector<8xf32> to vector<8x1xf32>
    %cst_2 = arith.constant 3.200000e+01 : f32
    %6 = vector.broadcast %cst_2 : f32 to vector<8x1xf32>
    %7 = arith.divf %5, %6 : vector<8x1xf32>
    %8 = vector.broadcast %7 : vector<8x1xf32> to vector<8x32xf32>
    %9 = arith.subf %3, %8 : vector<8x32xf32>
    %10 = arith.mulf %9, %9 : vector<8x32xf32>
    %cst_3 = arith.constant dense<0.000000e+00> : vector<8xf32>
    %11 = vector.multi_reduction <add>, %10, %cst_3 [1] : vector<8x32xf32> to vector<8xf32>
    %12 = vector.shape_cast %11 : vector<8xf32> to vector<8x1xf32>
    %cst_4 = arith.constant 3.200000e+01 : f32
    %13 = vector.broadcast %cst_4 : f32 to vector<8x1xf32>
    %14 = arith.divf %12, %13 : vector<8x1xf32>
    %cst_5 = arith.constant 9.99999974E-6 : f32
    %15 = vector.broadcast %cst_5 : f32 to vector<8x1xf32>
    %16 = arith.addf %14, %15 : vector<8x1xf32>
    %17 = math.rsqrt %16 : vector<8x1xf32>
    %18 = vector.broadcast %17 : vector<8x1xf32> to vector<8x32xf32>
    %19 = arith.mulf %9, %18 : vector<8x32xf32>
    %c0_6 = arith.constant 0 : index
    %c0_7 = arith.constant 0 : index
    %20 = vector.load %arg3[%c0_6, %c0_7] : memref<1x32xf32, #tpu.memory_space<vmem>>, vector<1x32xf32>
    %21 = vector.broadcast %20 : vector<1x32xf32> to vector<8x32xf32>
    %22 = arith.mulf %19, %21 : vector<8x32xf32>
    %c0_8 = arith.constant 0 : index
    %c0_9 = arith.constant 0 : index
    %23 = vector.load %arg4[%c0_8, %c0_9] : memref<1x32xf32, #tpu.memory_space<vmem>>, vector<1x32xf32>
    %24 = vector.broadcast %23 : vector<1x32xf32> to vector<8x32xf32>
    %25 = arith.addf %22, %24 : vector<8x32xf32>
    %c0_10 = arith.constant 0 : index
    %c0_11 = arith.constant 0 : index
    %26 = vector.load %arg5[%c0_10, %c0_11] : memref<32x128xf32, #tpu.memory_space<vmem>>, vector<32x128xf32>
    %cst_12 = arith.constant dense<0.000000e+00> : vector<8x128xf32>
    %27 = tpu.matmul %25, %26, %cst_12 {dimension_numbers = #tpu.dot_dimension_numbers<[1], [0], [0], [1], [0, 0, 1, 1], [], []>} : vector<8x32xf32>, vector<32x128xf32>, vector<8x128xf32> -> vector<8x128xf32>
    %28 = vector.extract_strided_slice %27 {offsets = [0, 0], sizes = [8, 64], strides = [1, 1]} : vector<8x128xf32> to vector<8x64xf32>
    %29 = vector.extract_strided_slice %27 {offsets = [0, 64], sizes = [8, 64], strides = [1, 1]} : vector<8x128xf32> to vector<8x64xf32>
    %c0_13 = arith.constant 0 : index
    %c0_14 = arith.constant 0 : index
    %30 = vector.load %arg6[%c0_13, %c0_14] : memref<4x64xf32, #tpu.memory_space<vmem>>, vector<4x64xf32>
    %c0_15 = arith.constant 0 : index
    %c0_16 = arith.constant 0 : index
    %c0_17 = arith.constant 0 : index
    %31 = vector.load %arg21[%c0_15, %c0_16, %c0_17] : memref<3x1x64xf32, #tpu.memory_space<vmem>>, vector<1x1x64xf32>
    %32 = vector.shape_cast %31 : vector<1x1x64xf32> to vector<1x64xf32>
    %c1 = arith.constant 1 : index
    %c0_18 = arith.constant 0 : index
    %c0_19 = arith.constant 0 : index
    %33 = vector.load %arg21[%c1, %c0_18, %c0_19] : memref<3x1x64xf32, #tpu.memory_space<vmem>>, vector<1x1x64xf32>
    %34 = vector.shape_cast %33 : vector<1x1x64xf32> to vector<1x64xf32>
    %c2 = arith.constant 2 : index
    %c0_20 = arith.constant 0 : index
    %c0_21 = arith.constant 0 : index
    %35 = vector.load %arg21[%c2, %c0_20, %c0_21] : memref<3x1x64xf32, #tpu.memory_space<vmem>>, vector<1x1x64xf32>
    %36 = vector.shape_cast %35 : vector<1x1x64xf32> to vector<1x64xf32>
    %37 = tpu.concatenate %32, %34, %36, %28 in 0 : vector<1x64xf32>, vector<1x64xf32>, vector<1x64xf32>, vector<8x64xf32> -> vector<11x64xf32>
    %cst_22 = arith.constant 0.000000e+00 : f32
    %38 = vector.broadcast %cst_22 : f32 to vector<8x64xf32>
    %c0_23 = arith.constant 0 : index
    %c0_24 = arith.constant 0 : index
    %39 = vector.load %arg7[%c0_23, %c0_24] : memref<1x64xf32, #tpu.memory_space<vmem>>, vector<1x64xf32>
    %40 = vector.broadcast %39 : vector<1x64xf32> to vector<8x64xf32>
    %41 = arith.addf %38, %40 : vector<8x64xf32>
    %42 = vector.extract_strided_slice %30 {offsets = [0, 0], sizes = [1, 64], strides = [1, 1]} : vector<4x64xf32> to vector<1x64xf32>
    %43 = vector.extract_strided_slice %37 {offsets = [0, 0], sizes = [8, 64], strides = [1, 1]} : vector<11x64xf32> to vector<8x64xf32>
    %44 = vector.broadcast %42 : vector<1x64xf32> to vector<8x64xf32>
    %45 = arith.mulf %44, %43 : vector<8x64xf32>
    %46 = arith.addf %41, %45 : vector<8x64xf32>
    %47 = vector.extract_strided_slice %30 {offsets = [1, 0], sizes = [1, 64], strides = [1, 1]} : vector<4x64xf32> to vector<1x64xf32>
    %48 = vector.extract_strided_slice %37 {offsets = [1, 0], sizes = [8, 64], strides = [1, 1]} : vector<11x64xf32> to vector<8x64xf32>
    %49 = vector.broadcast %47 : vector<1x64xf32> to vector<8x64xf32>
    %50 = arith.mulf %49, %48 : vector<8x64xf32>
    %51 = arith.addf %46, %50 : vector<8x64xf32>
    %52 = vector.extract_strided_slice %30 {offsets = [2, 0], sizes = [1, 64], strides = [1, 1]} : vector<4x64xf32> to vector<1x64xf32>
    %53 = vector.extract_strided_slice %37 {offsets = [2, 0], sizes = [8, 64], strides = [1, 1]} : vector<11x64xf32> to vector<8x64xf32>
    %54 = vector.broadcast %52 : vector<1x64xf32> to vector<8x64xf32>
    %55 = arith.mulf %54, %53 : vector<8x64xf32>
    %56 = arith.addf %51, %55 : vector<8x64xf32>
    %57 = vector.extract_strided_slice %30 {offsets = [3, 0], sizes = [1, 64], strides = [1, 1]} : vector<4x64xf32> to vector<1x64xf32>
    %58 = vector.extract_strided_slice %37 {offsets = [3, 0], sizes = [8, 64], strides = [1, 1]} : vector<11x64xf32> to vector<8x64xf32>
    %59 = vector.broadcast %57 : vector<1x64xf32> to vector<8x64xf32>
    %60 = arith.mulf %59, %58 : vector<8x64xf32>
    %61 = arith.addf %56, %60 : vector<8x64xf32>
    %cst_25 = arith.constant 0.000000e+00 : f32
    %62 = vector.broadcast %cst_25 : f32 to vector<8x64xf32>
    %63 = arith.subf %62, %61 : vector<8x64xf32>
    %64 = math.exp %63 : vector<8x64xf32>
    %cst_26 = arith.constant 1.000000e+00 : f32
    %65 = vector.broadcast %cst_26 : f32 to vector<8x64xf32>
    %66 = arith.addf %65, %64 : vector<8x64xf32>
    %67 = tpu.reciprocal %66 {approx = true} : vector<8x64xf32> -> vector<8x64xf32>
    %68 = arith.mulf %61, %67 : vector<8x64xf32>
    %69 = vector.extract_strided_slice %28 {offsets = [5, 0], sizes = [1, 64], strides = [1, 1]} : vector<8x64xf32> to vector<1x64xf32>
    %c0_27 = arith.constant 0 : index
    %c0_28 = arith.constant 0 : index
    %c0_29 = arith.constant 0 : index
    %70 = vector.load %arg21[%c0_27, %c0_28, %c0_29] : memref<3x1x64xf32, #tpu.memory_space<vmem>>, vector<1x1x64xf32>
    %71 = vector.shape_cast %70 : vector<1x1x64xf32> to vector<1x64xf32>
    %72 = vector.shape_cast %69 : vector<1x64xf32> to vector<1x1x64xf32>
    tpu.vector_store %arg21[%c0_27, %c0_28, %c0_29], %72 {strides = array<i32>} : memref<3x1x64xf32, #tpu.memory_space<vmem>>, vector<1x1x64xf32>,
    %73 = vector.extract_strided_slice %28 {offsets = [6, 0], sizes = [1, 64], strides = [1, 1]} : vector<8x64xf32> to vector<1x64xf32>
    %c1_30 = arith.constant 1 : index
    %c0_31 = arith.constant 0 : index
    %c0_32 = arith.constant 0 : index
    %74 = vector.load %arg21[%c1_30, %c0_31, %c0_32] : memref<3x1x64xf32, #tpu.memory_space<vmem>>, vector<1x1x64xf32>
    %75 = vector.shape_cast %74 : vector<1x1x64xf32> to vector<1x64xf32>
    %76 = vector.shape_cast %73 : vector<1x64xf32> to vector<1x1x64xf32>
    tpu.vector_store %arg21[%c1_30, %c0_31, %c0_32], %76 {strides = array<i32>} : memref<3x1x64xf32, #tpu.memory_space<vmem>>, vector<1x1x64xf32>,
    %77 = vector.extract_strided_slice %28 {offsets = [7, 0], sizes = [1, 64], strides = [1, 1]} : vector<8x64xf32> to vector<1x64xf32>
    %c2_33 = arith.constant 2 : index
    %c0_34 = arith.constant 0 : index
    %c0_35 = arith.constant 0 : index
    %78 = vector.load %arg21[%c2_33, %c0_34, %c0_35] : memref<3x1x64xf32, #tpu.memory_space<vmem>>, vector<1x1x64xf32>
    %79 = vector.shape_cast %78 : vector<1x1x64xf32> to vector<1x64xf32>
    %80 = vector.shape_cast %77 : vector<1x64xf32> to vector<1x1x64xf32>
    tpu.vector_store %arg21[%c2_33, %c0_34, %c0_35], %80 {strides = array<i32>} : memref<3x1x64xf32, #tpu.memory_space<vmem>>, vector<1x1x64xf32>,
    %c0_i32_36 = arith.constant 0 : i32
    %81 = arith.cmpi eq, %arg1, %c0_i32_36 : i32
    %82 = arith.extui %81 : i1 to i32
    %c0_i32_37 = arith.constant 0 : i32
    %83 = arith.cmpi ne, %82, %c0_i32_37 : i32
    scf.if %83 {
      %1083 = vector.extract_strided_slice %68 {offsets = [5, 0], sizes = [1, 64], strides = [1, 1]} : vector<8x64xf32> to vector<1x64xf32>
      %c0_83 = arith.constant 0 : index
      %c0_84 = arith.constant 0 : index
      %c0_85 = arith.constant 0 : index
      %c0_86 = arith.constant 0 : index
      %1084 = vector.load %arg14[%c0_83, %c0_84, %c0_85, %c0_86] : memref<1x3x1x64xf32, #tpu.memory_space<vmem>>, vector<1x1x1x64xf32>
      %1085 = vector.shape_cast %1084 : vector<1x1x1x64xf32> to vector<1x64xf32>
      %1086 = vector.shape_cast %1083 : vector<1x64xf32> to vector<1x1x1x64xf32>
      tpu.vector_store %arg14[%c0_83, %c0_84, %c0_85, %c0_86], %1086 {strides = array<i32>} : memref<1x3x1x64xf32, #tpu.memory_space<vmem>>, vector<1x1x1x64xf32>,
      %1087 = vector.extract_strided_slice %68 {offsets = [6, 0], sizes = [1, 64], strides = [1, 1]} : vector<8x64xf32> to vector<1x64xf32>
      %c0_87 = arith.constant 0 : index
      %c1_88 = arith.constant 1 : index
      %c0_89 = arith.constant 0 : index
      %c0_90 = arith.constant 0 : index
      %1088 = vector.load %arg14[%c0_87, %c1_88, %c0_89, %c0_90] : memref<1x3x1x64xf32, #tpu.memory_space<vmem>>, vector<1x1x1x64xf32>
      %1089 = vector.shape_cast %1088 : vector<1x1x1x64xf32> to vector<1x64xf32>
      %1090 = vector.shape_cast %1087 : vector<1x64xf32> to vector<1x1x1x64xf32>
      tpu.vector_store %arg14[%c0_87, %c1_88, %c0_89, %c0_90], %1090 {strides = array<i32>} : memref<1x3x1x64xf32, #tpu.memory_space<vmem>>, vector<1x1x1x64xf32>,
      %1091 = vector.extract_strided_slice %68 {offsets = [7, 0], sizes = [1, 64], strides = [1, 1]} : vector<8x64xf32> to vector<1x64xf32>
      %c0_91 = arith.constant 0 : index
      %c2_92 = arith.constant 2 : index
      %c0_93 = arith.constant 0 : index
      %c0_94 = arith.constant 0 : index
      %1092 = vector.load %arg14[%c0_91, %c2_92, %c0_93, %c0_94] : memref<1x3x1x64xf32, #tpu.memory_space<vmem>>, vector<1x1x1x64xf32>
      %1093 = vector.shape_cast %1092 : vector<1x1x1x64xf32> to vector<1x64xf32>
      %1094 = vector.shape_cast %1091 : vector<1x64xf32> to vector<1x1x1x64xf32>
      tpu.vector_store %arg14[%c0_91, %c2_92, %c0_93, %c0_94], %1094 {strides = array<i32>} : memref<1x3x1x64xf32, #tpu.memory_space<vmem>>, vector<1x1x1x64xf32>,
    } else {
    }
    %c0_38 = arith.constant 0 : index
    %c0_39 = arith.constant 0 : index
    %84 = vector.load %arg8[%c0_38, %c0_39] : memref<64x96xf32, #tpu.memory_space<vmem>>, vector<64x96xf32>
    %cst_40 = arith.constant dense<0.000000e+00> : vector<8x96xf32>
    %85 = tpu.matmul %68, %84, %cst_40 {dimension_numbers = #tpu.dot_dimension_numbers<[1], [0], [0], [1], [0, 0, 1, 1], [], []>} : vector<8x64xf32>, vector<64x96xf32>, vector<8x96xf32> -> vector<8x96xf32>
    %86 = vector.extract_strided_slice %85 {offsets = [0, 0], sizes = [8, 32], strides = [1, 1]} : vector<8x96xf32> to vector<8x32xf32>
    %c0_41 = arith.constant 0 : index
    %c0_42 = arith.constant 0 : index
    %87 = vector.load %arg18[%c0_41, %c0_42] : memref<8x32xf32, #tpu.memory_space<vmem>>, vector<8x32xf32>
    tpu.vector_store %arg18[%c0_41, %c0_42], %86 {strides = array<i32>} : memref<8x32xf32, #tpu.memory_space<vmem>>, vector<8x32xf32>,
    %88 = vector.extract_strided_slice %85 {offsets = [0, 32], sizes = [8, 64], strides = [1, 1]} : vector<8x96xf32> to vector<8x64xf32>
    %c0_43 = arith.constant 0 : index
    %c0_44 = arith.constant 0 : index
    %89 = vector.load %arg9[%c0_43, %c0_44] : memref<1x64xf32, #tpu.memory_space<vmem>>, vector<1x64xf32>
    %90 = vector.broadcast %89 : vector<1x64xf32> to vector<8x64xf32>
    %91 = arith.addf %88, %90 : vector<8x64xf32>
    %cst_45 = arith.constant 2.000000e+01 : f32
    %92 = vector.broadcast %cst_45 : f32 to vector<8x64xf32>
    %93 = arith.cmpf ogt, %91, %92 : vector<8x64xf32>
    %cst_46 = arith.constant 2.000000e+01 : f32
    %94 = vector.broadcast %cst_46 : f32 to vector<8x64xf32>
    %95 = arith.minimumf %91, %94 : vector<8x64xf32>
    %96 = math.exp %95 : vector<8x64xf32>
    %97 = math.log1p %96 : vector<8x64xf32>
    %98 = arith.select %93, %91, %97 : vector<8x64xi1>, vector<8x64xf32>
    %c0_47 = arith.constant 0 : index
    %c0_48 = arith.constant 0 : index
    %99 = vector.load %arg16[%c0_47, %c0_48] : memref<8x64xf32, #tpu.memory_space<vmem>>, vector<8x64xf32>
    tpu.vector_store %arg16[%c0_47, %c0_48], %98 {strides = array<i32>} : memref<8x64xf32, #tpu.memory_space<vmem>>, vector<8x64xf32>,
    %100 = arith.mulf %98, %68 : vector<8x64xf32>
    %c0_49 = arith.constant 0 : index
    %c0_50 = arith.constant 0 : index
    %101 = vector.load %arg17[%c0_49, %c0_50] : memref<8x64xf32, #tpu.memory_space<vmem>>, vector<8x64xf32>
    tpu.vector_store %arg17[%c0_49, %c0_50], %100 {strides = array<i32>} : memref<8x64xf32, #tpu.memory_space<vmem>>, vector<8x64xf32>,
    %c0_51 = arith.constant 0 : index
    %c0_52 = arith.constant 0 : index
    %c0_53 = arith.constant 0 : index
    %102 = vector.load %arg10[%c0_51, %c0_52, %c0_53] : memref<16x1x64xf32, #tpu.memory_space<vmem>>, vector<16x1x64xf32>
    %103 = math.exp %102 : vector<16x1x64xf32>
    %cst_54 = arith.constant 0.000000e+00 : f32
    %104 = vector.broadcast %cst_54 : f32 to vector<16x1x64xf32>
    %105 = arith.subf %104, %103 : vector<16x1x64xf32>
    %106 = tpu.iota {dimensions = array<i32: 0>} : vector<32x1x32xi32>
    %107 = tpu.iota {dimensions = array<i32: 2>} : vector<32x1x32xi32>
    %108 = arith.cmpi eq, %106, %107 : vector<32x1x32xi32>
    %109 = arith.extui %108 : vector<32x1x32xi1> to vector<32x1x32xi32>
    %110 = arith.sitofp %109 : vector<32x1x32xi32> to vector<32x1x32xf32>
    %c0_55 = arith.constant 0 : index
    %c0_56 = arith.constant 0 : index
    %c0_57 = arith.constant 0 : index
    %111 = vector.load %arg20[%c0_55, %c0_56, %c0_57] : memref<16x1x64xf32, #tpu.memory_space<vmem>>, vector<16x1x64xf32>
    %c0_58 = arith.constant 0 : index
    %c0_59 = arith.constant 0 : index
    %112 = vector.load %arg16[%c0_58, %c0_59] : memref<8x64xf32, #tpu.memory_space<vmem>>, vector<8x64xf32>
    %c0_60 = arith.constant 0 : index
    %c0_61 = arith.constant 0 : index
    %113 = vector.load %arg17[%c0_60, %c0_61] : memref<8x64xf32, #tpu.memory_space<vmem>>, vector<8x64xf32>
    %c0_62 = arith.constant 0 : index
    %c0_63 = arith.constant 0 : index
    %114 = vector.load %arg18[%c0_62, %c0_63] : memref<8x32xf32, #tpu.memory_space<vmem>>, vector<8x32xf32>
    %115 = vector.shape_cast %112 : vector<8x64xf32> to vector<1x8x64xf32>
    %116 = vector.broadcast %105 : vector<16x1x64xf32> to vector<16x8x64xf32>
    %117 = vector.broadcast %115 : vector<1x8x64xf32> to vector<16x8x64xf32>
    %118 = arith.mulf %116, %117 : vector<16x8x64xf32>
    %119 = math.exp %118 : vector<16x8x64xf32>
    %120 = vector.shape_cast %114 : vector<8x32xf32> to vector<1x8x32xf32>
    %121 = vector.broadcast %120 : vector<1x8x32xf32> to vector<32x8x32xf32>
    %122 = vector.broadcast %110 : vector<32x1x32xf32> to vector<32x8x32xf32>
    %123 = arith.mulf %121, %122 : vector<32x8x32xf32>
    %cst_64 = arith.constant dense<0.000000e+00> : vector<32x8xf32>
    %124 = vector.multi_reduction <add>, %123, %cst_64 [2] : vector<32x8x32xf32> to vector<32x8xf32>
    %125 = vector.shape_cast %124 : vector<32x8xf32> to vector<32x8x1xf32>
    %126 = vector.extract_strided_slice %125 {offsets = [0, 0, 0], sizes = [16, 8, 1], strides = [1, 1, 1]} : vector<32x8x1xf32> to vector<16x8x1xf32>
    %127 = vector.extract_strided_slice %125 {offsets = [16, 0, 0], sizes = [16, 8, 1], strides = [1, 1, 1]} : vector<32x8x1xf32> to vector<16x8x1xf32>
    %128 = vector.shape_cast %113 : vector<8x64xf32> to vector<1x8x64xf32>
    %129 = vector.broadcast %128 : vector<1x8x64xf32> to vector<16x8x64xf32>
    %130 = vector.broadcast %126 : vector<16x8x1xf32> to vector<16x8x64xf32>
    %131 = arith.mulf %129, %130 : vector<16x8x64xf32>
    %132 = vector.extract_strided_slice %119 {offsets = [0, 0, 0], sizes = [16, 1, 64], strides = [1, 1, 1]} : vector<16x8x64xf32> to vector<16x1x64xf32>
    %133 = arith.mulf %132, %111 : vector<16x1x64xf32>
    %134 = vector.extract_strided_slice %131 {offsets = [0, 0, 0], sizes = [16, 1, 64], strides = [1, 1, 1]} : vector<16x8x64xf32> to vector<16x1x64xf32>
    %135 = arith.addf %133, %134 : vector<16x1x64xf32>
    %136 = vector.extract_strided_slice %127 {offsets = [0, 0, 0], sizes = [16, 1, 1], strides = [1, 1, 1]} : vector<16x8x1xf32> to vector<16x1x1xf32>
    %137 = vector.extract_strided_slice %136 {offsets = [0, 0, 0], sizes = [1, 1, 1], strides = [1, 1, 1]} : vector<16x1x1xf32> to vector<1x1x1xf32>
    %138 = vector.shape_cast %137 : vector<1x1x1xf32> to vector<1x1xf32>
    %139 = vector.extract_strided_slice %135 {offsets = [0, 0, 0], sizes = [1, 1, 64], strides = [1, 1, 1]} : vector<16x1x64xf32> to vector<1x1x64xf32>
    %140 = vector.shape_cast %139 : vector<1x1x64xf32> to vector<1x64xf32>
    %141 = vector.broadcast %138 : vector<1x1xf32> to vector<1x64xf32>
    %142 = arith.mulf %141, %140 : vector<1x64xf32>
    %143 = vector.extract_strided_slice %136 {offsets = [1, 0, 0], sizes = [1, 1, 1], strides = [1, 1, 1]} : vector<16x1x1xf32> to vector<1x1x1xf32>
    %144 = vector.shape_cast %143 : vector<1x1x1xf32> to vector<1x1xf32>
    %145 = vector.extract_strided_slice %135 {offsets = [1, 0, 0], sizes = [1, 1, 64], strides = [1, 1, 1]} : vector<16x1x64xf32> to vector<1x1x64xf32>
    %146 = vector.shape_cast %145 : vector<1x1x64xf32> to vector<1x64xf32>
    %147 = vector.broadcast %144 : vector<1x1xf32> to vector<1x64xf32>
    %148 = arith.mulf %147, %146 : vector<1x64xf32>
    %149 = arith.addf %142, %148 : vector<1x64xf32>
    %150 = vector.extract_strided_slice %136 {offsets = [2, 0, 0], sizes = [1, 1, 1], strides = [1, 1, 1]} : vector<16x1x1xf32> to vector<1x1x1xf32>
    %151 = vector.shape_cast %150 : vector<1x1x1xf32> to vector<1x1xf32>
    %152 = vector.extract_strided_slice %135 {offsets = [2, 0, 0], sizes = [1, 1, 64], strides = [1, 1, 1]} : vector<16x1x64xf32> to vector<1x1x64xf32>
    %153 = vector.shape_cast %152 : vector<1x1x64xf32> to vector<1x64xf32>
    %154 = vector.broadcast %151 : vector<1x1xf32> to vector<1x64xf32>
    %155 = arith.mulf %154, %153 : vector<1x64xf32>
    %156 = arith.addf %149, %155 : vector<1x64xf32>
    %157 = vector.extract_strided_slice %136 {offsets = [3, 0, 0], sizes = [1, 1, 1], strides = [1, 1, 1]} : vector<16x1x1xf32> to vector<1x1x1xf32>
    %158 = vector.shape_cast %157 : vector<1x1x1xf32> to vector<1x1xf32>
    %159 = vector.extract_strided_slice %135 {offsets = [3, 0, 0], sizes = [1, 1, 64], strides = [1, 1, 1]} : vector<16x1x64xf32> to vector<1x1x64xf32>
    %160 = vector.shape_cast %159 : vector<1x1x64xf32> to vector<1x64xf32>
    %161 = vector.broadcast %158 : vector<1x1xf32> to vector<1x64xf32>
    %162 = arith.mulf %161, %160 : vector<1x64xf32>
    %163 = arith.addf %156, %162 : vector<1x64xf32>
    %164 = vector.extract_strided_slice %136 {offsets = [4, 0, 0], sizes = [1, 1, 1], strides = [1, 1, 1]} : vector<16x1x1xf32> to vector<1x1x1xf32>
    %165 = vector.shape_cast %164 : vector<1x1x1xf32> to vector<1x1xf32>
    %166 = vector.extract_strided_slice %135 {offsets = [4, 0, 0], sizes = [1, 1, 64], strides = [1, 1, 1]} : vector<16x1x64xf32> to vector<1x1x64xf32>
    %167 = vector.shape_cast %166 : vector<1x1x64xf32> to vector<1x64xf32>
    %168 = vector.broadcast %165 : vector<1x1xf32> to vector<1x64xf32>
    %169 = arith.mulf %168, %167 : vector<1x64xf32>
    %170 = arith.addf %163, %169 : vector<1x64xf32>
    %171 = vector.extract_strided_slice %136 {offsets = [5, 0, 0], sizes = [1, 1, 1], strides = [1, 1, 1]} : vector<16x1x1xf32> to vector<1x1x1xf32>
    %172 = vector.shape_cast %171 : vector<1x1x1xf32> to vector<1x1xf32>
    %173 = vector.extract_strided_slice %135 {offsets = [5, 0, 0], sizes = [1, 1, 64], strides = [1, 1, 1]} : vector<16x1x64xf32> to vector<1x1x64xf32>
    %174 = vector.shape_cast %173 : vector<1x1x64xf32> to vector<1x64xf32>
    %175 = vector.broadcast %172 : vector<1x1xf32> to vector<1x64xf32>
    %176 = arith.mulf %175, %174 : vector<1x64xf32>
    %177 = arith.addf %170, %176 : vector<1x64xf32>
    %178 = vector.extract_strided_slice %136 {offsets = [6, 0, 0], sizes = [1, 1, 1], strides = [1, 1, 1]} : vector<16x1x1xf32> to vector<1x1x1xf32>
    %179 = vector.shape_cast %178 : vector<1x1x1xf32> to vector<1x1xf32>
    %180 = vector.extract_strided_slice %135 {offsets = [6, 0, 0], sizes = [1, 1, 64], strides = [1, 1, 1]} : vector<16x1x64xf32> to vector<1x1x64xf32>
    %181 = vector.shape_cast %180 : vector<1x1x64xf32> to vector<1x64xf32>
    %182 = vector.broadcast %179 : vector<1x1xf32> to vector<1x64xf32>
    %183 = arith.mulf %182, %181 : vector<1x64xf32>
    %184 = arith.addf %177, %183 : vector<1x64xf32>
    %185 = vector.extract_strided_slice %136 {offsets = [7, 0, 0], sizes = [1, 1, 1], strides = [1, 1, 1]} : vector<16x1x1xf32> to vector<1x1x1xf32>
    %186 = vector.shape_cast %185 : vector<1x1x1xf32> to vector<1x1xf32>
    %187 = vector.extract_strided_slice %135 {offsets = [7, 0, 0], sizes = [1, 1, 64], strides = [1, 1, 1]} : vector<16x1x64xf32> to vector<1x1x64xf32>
    %188 = vector.shape_cast %187 : vector<1x1x64xf32> to vector<1x64xf32>
    %189 = vector.broadcast %186 : vector<1x1xf32> to vector<1x64xf32>
    %190 = arith.mulf %189, %188 : vector<1x64xf32>
    %191 = arith.addf %184, %190 : vector<1x64xf32>
    %192 = vector.extract_strided_slice %136 {offsets = [8, 0, 0], sizes = [1, 1, 1], strides = [1, 1, 1]} : vector<16x1x1xf32> to vector<1x1x1xf32>
    %193 = vector.shape_cast %192 : vector<1x1x1xf32> to vector<1x1xf32>
    %194 = vector.extract_strided_slice %135 {offsets = [8, 0, 0], sizes = [1, 1, 64], strides = [1, 1, 1]} : vector<16x1x64xf32> to vector<1x1x64xf32>
    %195 = vector.shape_cast %194 : vector<1x1x64xf32> to vector<1x64xf32>
    %196 = vector.broadcast %193 : vector<1x1xf32> to vector<1x64xf32>
    %197 = arith.mulf %196, %195 : vector<1x64xf32>
    %198 = arith.addf %191, %197 : vector<1x64xf32>
    %199 = vector.extract_strided_slice %136 {offsets = [9, 0, 0], sizes = [1, 1, 1], strides = [1, 1, 1]} : vector<16x1x1xf32> to vector<1x1x1xf32>
    %200 = vector.shape_cast %199 : vector<1x1x1xf32> to vector<1x1xf32>
    %201 = vector.extract_strided_slice %135 {offsets = [9, 0, 0], sizes = [1, 1, 64], strides = [1, 1, 1]} : vector<16x1x64xf32> to vector<1x1x64xf32>
    %202 = vector.shape_cast %201 : vector<1x1x64xf32> to vector<1x64xf32>
    %203 = vector.broadcast %200 : vector<1x1xf32> to vector<1x64xf32>
    %204 = arith.mulf %203, %202 : vector<1x64xf32>
    %205 = arith.addf %198, %204 : vector<1x64xf32>
    %206 = vector.extract_strided_slice %136 {offsets = [10, 0, 0], sizes = [1, 1, 1], strides = [1, 1, 1]} : vector<16x1x1xf32> to vector<1x1x1xf32>
    %207 = vector.shape_cast %206 : vector<1x1x1xf32> to vector<1x1xf32>
    %208 = vector.extract_strided_slice %135 {offsets = [10, 0, 0], sizes = [1, 1, 64], strides = [1, 1, 1]} : vector<16x1x64xf32> to vector<1x1x64xf32>
    %209 = vector.shape_cast %208 : vector<1x1x64xf32> to vector<1x64xf32>
    %210 = vector.broadcast %207 : vector<1x1xf32> to vector<1x64xf32>
    %211 = arith.mulf %210, %209 : vector<1x64xf32>
    %212 = arith.addf %205, %211 : vector<1x64xf32>
    %213 = vector.extract_strided_slice %136 {offsets = [11, 0, 0], sizes = [1, 1, 1], strides = [1, 1, 1]} : vector<16x1x1xf32> to vector<1x1x1xf32>
    %214 = vector.shape_cast %213 : vector<1x1x1xf32> to vector<1x1xf32>
    %215 = vector.extract_strided_slice %135 {offsets = [11, 0, 0], sizes = [1, 1, 64], strides = [1, 1, 1]} : vector<16x1x64xf32> to vector<1x1x64xf32>
    %216 = vector.shape_cast %215 : vector<1x1x64xf32> to vector<1x64xf32>
    %217 = vector.broadcast %214 : vector<1x1xf32> to vector<1x64xf32>
    %218 = arith.mulf %217, %216 : vector<1x64xf32>
    %219 = arith.addf %212, %218 : vector<1x64xf32>
    %220 = vector.extract_strided_slice %136 {offsets = [12, 0, 0], sizes = [1, 1, 1], strides = [1, 1, 1]} : vector<16x1x1xf32> to vector<1x1x1xf32>
    %221 = vector.shape_cast %220 : vector<1x1x1xf32> to vector<1x1xf32>
    %222 = vector.extract_strided_slice %135 {offsets = [12, 0, 0], sizes = [1, 1, 64], strides = [1, 1, 1]} : vector<16x1x64xf32> to vector<1x1x64xf32>
    %223 = vector.shape_cast %222 : vector<1x1x64xf32> to vector<1x64xf32>
    %224 = vector.broadcast %221 : vector<1x1xf32> to vector<1x64xf32>
    %225 = arith.mulf %224, %223 : vector<1x64xf32>
    %226 = arith.addf %219, %225 : vector<1x64xf32>
    %227 = vector.extract_strided_slice %136 {offsets = [13, 0, 0], sizes = [1, 1, 1], strides = [1, 1, 1]} : vector<16x1x1xf32> to vector<1x1x1xf32>
    %228 = vector.shape_cast %227 : vector<1x1x1xf32> to vector<1x1xf32>
    %229 = vector.extract_strided_slice %135 {offsets = [13, 0, 0], sizes = [1, 1, 64], strides = [1, 1, 1]} : vector<16x1x64xf32> to vector<1x1x64xf32>
    %230 = vector.shape_cast %229 : vector<1x1x64xf32> to vector<1x64xf32>
    %231 = vector.broadcast %228 : vector<1x1xf32> to vector<1x64xf32>
    %232 = arith.mulf %231, %230 : vector<1x64xf32>
    %233 = arith.addf %226, %232 : vector<1x64xf32>
    %234 = vector.extract_strided_slice %136 {offsets = [14, 0, 0], sizes = [1, 1, 1], strides = [1, 1, 1]} : vector<16x1x1xf32> to vector<1x1x1xf32>
    %235 = vector.shape_cast %234 : vector<1x1x1xf32> to vector<1x1xf32>
    %236 = vector.extract_strided_slice %135 {offsets = [14, 0, 0], sizes = [1, 1, 64], strides = [1, 1, 1]} : vector<16x1x64xf32> to vector<1x1x64xf32>
    %237 = vector.shape_cast %236 : vector<1x1x64xf32> to vector<1x64xf32>
    %238 = vector.broadcast %235 : vector<1x1xf32> to vector<1x64xf32>
    %239 = arith.mulf %238, %237 : vector<1x64xf32>
    %240 = arith.addf %233, %239 : vector<1x64xf32>
    %241 = vector.extract_strided_slice %136 {offsets = [15, 0, 0], sizes = [1, 1, 1], strides = [1, 1, 1]} : vector<16x1x1xf32> to vector<1x1x1xf32>
    %242 = vector.shape_cast %241 : vector<1x1x1xf32> to vector<1x1xf32>
    %243 = vector.extract_strided_slice %135 {offsets = [15, 0, 0], sizes = [1, 1, 64], strides = [1, 1, 1]} : vector<16x1x64xf32> to vector<1x1x64xf32>
    %244 = vector.shape_cast %243 : vector<1x1x64xf32> to vector<1x64xf32>
    %245 = vector.broadcast %242 : vector<1x1xf32> to vector<1x64xf32>
    %246 = arith.mulf %245, %244 : vector<1x64xf32>
    %247 = arith.addf %240, %246 : vector<1x64xf32>
    %248 = vector.extract_strided_slice %119 {offsets = [0, 1, 0], sizes = [16, 1, 64], strides = [1, 1, 1]} : vector<16x8x64xf32> to vector<16x1x64xf32>
    %249 = arith.mulf %248, %135 : vector<16x1x64xf32>
    %250 = vector.extract_strided_slice %131 {offsets = [0, 1, 0], sizes = [16, 1, 64], strides = [1, 1, 1]} : vector<16x8x64xf32> to vector<16x1x64xf32>
    %251 = arith.addf %249, %250 : vector<16x1x64xf32>
    %252 = vector.extract_strided_slice %127 {offsets = [0, 1, 0], sizes = [16, 1, 1], strides = [1, 1, 1]} : vector<16x8x1xf32> to vector<16x1x1xf32>
    %253 = vector.extract_strided_slice %252 {offsets = [0, 0, 0], sizes = [1, 1, 1], strides = [1, 1, 1]} : vector<16x1x1xf32> to vector<1x1x1xf32>
    %254 = vector.shape_cast %253 : vector<1x1x1xf32> to vector<1x1xf32>
    %255 = vector.extract_strided_slice %251 {offsets = [0, 0, 0], sizes = [1, 1, 64], strides = [1, 1, 1]} : vector<16x1x64xf32> to vector<1x1x64xf32>
    %256 = vector.shape_cast %255 : vector<1x1x64xf32> to vector<1x64xf32>
    %257 = vector.broadcast %254 : vector<1x1xf32> to vector<1x64xf32>
    %258 = arith.mulf %257, %256 : vector<1x64xf32>
    %259 = vector.extract_strided_slice %252 {offsets = [1, 0, 0], sizes = [1, 1, 1], strides = [1, 1, 1]} : vector<16x1x1xf32> to vector<1x1x1xf32>
    %260 = vector.shape_cast %259 : vector<1x1x1xf32> to vector<1x1xf32>
    %261 = vector.extract_strided_slice %251 {offsets = [1, 0, 0], sizes = [1, 1, 64], strides = [1, 1, 1]} : vector<16x1x64xf32> to vector<1x1x64xf32>
    %262 = vector.shape_cast %261 : vector<1x1x64xf32> to vector<1x64xf32>
    %263 = vector.broadcast %260 : vector<1x1xf32> to vector<1x64xf32>
    %264 = arith.mulf %263, %262 : vector<1x64xf32>
    %265 = arith.addf %258, %264 : vector<1x64xf32>
    %266 = vector.extract_strided_slice %252 {offsets = [2, 0, 0], sizes = [1, 1, 1], strides = [1, 1, 1]} : vector<16x1x1xf32> to vector<1x1x1xf32>
    %267 = vector.shape_cast %266 : vector<1x1x1xf32> to vector<1x1xf32>
    %268 = vector.extract_strided_slice %251 {offsets = [2, 0, 0], sizes = [1, 1, 64], strides = [1, 1, 1]} : vector<16x1x64xf32> to vector<1x1x64xf32>
    %269 = vector.shape_cast %268 : vector<1x1x64xf32> to vector<1x64xf32>
    %270 = vector.broadcast %267 : vector<1x1xf32> to vector<1x64xf32>
    %271 = arith.mulf %270, %269 : vector<1x64xf32>
    %272 = arith.addf %265, %271 : vector<1x64xf32>
    %273 = vector.extract_strided_slice %252 {offsets = [3, 0, 0], sizes = [1, 1, 1], strides = [1, 1, 1]} : vector<16x1x1xf32> to vector<1x1x1xf32>
    %274 = vector.shape_cast %273 : vector<1x1x1xf32> to vector<1x1xf32>
    %275 = vector.extract_strided_slice %251 {offsets = [3, 0, 0], sizes = [1, 1, 64], strides = [1, 1, 1]} : vector<16x1x64xf32> to vector<1x1x64xf32>
    %276 = vector.shape_cast %275 : vector<1x1x64xf32> to vector<1x64xf32>
    %277 = vector.broadcast %274 : vector<1x1xf32> to vector<1x64xf32>
    %278 = arith.mulf %277, %276 : vector<1x64xf32>
    %279 = arith.addf %272, %278 : vector<1x64xf32>
    %280 = vector.extract_strided_slice %252 {offsets = [4, 0, 0], sizes = [1, 1, 1], strides = [1, 1, 1]} : vector<16x1x1xf32> to vector<1x1x1xf32>
    %281 = vector.shape_cast %280 : vector<1x1x1xf32> to vector<1x1xf32>
    %282 = vector.extract_strided_slice %251 {offsets = [4, 0, 0], sizes = [1, 1, 64], strides = [1, 1, 1]} : vector<16x1x64xf32> to vector<1x1x64xf32>
    %283 = vector.shape_cast %282 : vector<1x1x64xf32> to vector<1x64xf32>
    %284 = vector.broadcast %281 : vector<1x1xf32> to vector<1x64xf32>
    %285 = arith.mulf %284, %283 : vector<1x64xf32>
    %286 = arith.addf %279, %285 : vector<1x64xf32>
    %287 = vector.extract_strided_slice %252 {offsets = [5, 0, 0], sizes = [1, 1, 1], strides = [1, 1, 1]} : vector<16x1x1xf32> to vector<1x1x1xf32>
    %288 = vector.shape_cast %287 : vector<1x1x1xf32> to vector<1x1xf32>
    %289 = vector.extract_strided_slice %251 {offsets = [5, 0, 0], sizes = [1, 1, 64], strides = [1, 1, 1]} : vector<16x1x64xf32> to vector<1x1x64xf32>
    %290 = vector.shape_cast %289 : vector<1x1x64xf32> to vector<1x64xf32>
    %291 = vector.broadcast %288 : vector<1x1xf32> to vector<1x64xf32>
    %292 = arith.mulf %291, %290 : vector<1x64xf32>
    %293 = arith.addf %286, %292 : vector<1x64xf32>
    %294 = vector.extract_strided_slice %252 {offsets = [6, 0, 0], sizes = [1, 1, 1], strides = [1, 1, 1]} : vector<16x1x1xf32> to vector<1x1x1xf32>
    %295 = vector.shape_cast %294 : vector<1x1x1xf32> to vector<1x1xf32>
    %296 = vector.extract_strided_slice %251 {offsets = [6, 0, 0], sizes = [1, 1, 64], strides = [1, 1, 1]} : vector<16x1x64xf32> to vector<1x1x64xf32>
    %297 = vector.shape_cast %296 : vector<1x1x64xf32> to vector<1x64xf32>
    %298 = vector.broadcast %295 : vector<1x1xf32> to vector<1x64xf32>
    %299 = arith.mulf %298, %297 : vector<1x64xf32>
    %300 = arith.addf %293, %299 : vector<1x64xf32>
    %301 = vector.extract_strided_slice %252 {offsets = [7, 0, 0], sizes = [1, 1, 1], strides = [1, 1, 1]} : vector<16x1x1xf32> to vector<1x1x1xf32>
    %302 = vector.shape_cast %301 : vector<1x1x1xf32> to vector<1x1xf32>
    %303 = vector.extract_strided_slice %251 {offsets = [7, 0, 0], sizes = [1, 1, 64], strides = [1, 1, 1]} : vector<16x1x64xf32> to vector<1x1x64xf32>
    %304 = vector.shape_cast %303 : vector<1x1x64xf32> to vector<1x64xf32>
    %305 = vector.broadcast %302 : vector<1x1xf32> to vector<1x64xf32>
    %306 = arith.mulf %305, %304 : vector<1x64xf32>
    %307 = arith.addf %300, %306 : vector<1x64xf32>
    %308 = vector.extract_strided_slice %252 {offsets = [8, 0, 0], sizes = [1, 1, 1], strides = [1, 1, 1]} : vector<16x1x1xf32> to vector<1x1x1xf32>
    %309 = vector.shape_cast %308 : vector<1x1x1xf32> to vector<1x1xf32>
    %310 = vector.extract_strided_slice %251 {offsets = [8, 0, 0], sizes = [1, 1, 64], strides = [1, 1, 1]} : vector<16x1x64xf32> to vector<1x1x64xf32>
    %311 = vector.shape_cast %310 : vector<1x1x64xf32> to vector<1x64xf32>
    %312 = vector.broadcast %309 : vector<1x1xf32> to vector<1x64xf32>
    %313 = arith.mulf %312, %311 : vector<1x64xf32>
    %314 = arith.addf %307, %313 : vector<1x64xf32>
    %315 = vector.extract_strided_slice %252 {offsets = [9, 0, 0], sizes = [1, 1, 1], strides = [1, 1, 1]} : vector<16x1x1xf32> to vector<1x1x1xf32>
    %316 = vector.shape_cast %315 : vector<1x1x1xf32> to vector<1x1xf32>
    %317 = vector.extract_strided_slice %251 {offsets = [9, 0, 0], sizes = [1, 1, 64], strides = [1, 1, 1]} : vector<16x1x64xf32> to vector<1x1x64xf32>
    %318 = vector.shape_cast %317 : vector<1x1x64xf32> to vector<1x64xf32>
    %319 = vector.broadcast %316 : vector<1x1xf32> to vector<1x64xf32>
    %320 = arith.mulf %319, %318 : vector<1x64xf32>
    %321 = arith.addf %314, %320 : vector<1x64xf32>
    %322 = vector.extract_strided_slice %252 {offsets = [10, 0, 0], sizes = [1, 1, 1], strides = [1, 1, 1]} : vector<16x1x1xf32> to vector<1x1x1xf32>
    %323 = vector.shape_cast %322 : vector<1x1x1xf32> to vector<1x1xf32>
    %324 = vector.extract_strided_slice %251 {offsets = [10, 0, 0], sizes = [1, 1, 64], strides = [1, 1, 1]} : vector<16x1x64xf32> to vector<1x1x64xf32>
    %325 = vector.shape_cast %324 : vector<1x1x64xf32> to vector<1x64xf32>
    %326 = vector.broadcast %323 : vector<1x1xf32> to vector<1x64xf32>
    %327 = arith.mulf %326, %325 : vector<1x64xf32>
    %328 = arith.addf %321, %327 : vector<1x64xf32>
    %329 = vector.extract_strided_slice %252 {offsets = [11, 0, 0], sizes = [1, 1, 1], strides = [1, 1, 1]} : vector<16x1x1xf32> to vector<1x1x1xf32>
    %330 = vector.shape_cast %329 : vector<1x1x1xf32> to vector<1x1xf32>
    %331 = vector.extract_strided_slice %251 {offsets = [11, 0, 0], sizes = [1, 1, 64], strides = [1, 1, 1]} : vector<16x1x64xf32> to vector<1x1x64xf32>
    %332 = vector.shape_cast %331 : vector<1x1x64xf32> to vector<1x64xf32>
    %333 = vector.broadcast %330 : vector<1x1xf32> to vector<1x64xf32>
    %334 = arith.mulf %333, %332 : vector<1x64xf32>
    %335 = arith.addf %328, %334 : vector<1x64xf32>
    %336 = vector.extract_strided_slice %252 {offsets = [12, 0, 0], sizes = [1, 1, 1], strides = [1, 1, 1]} : vector<16x1x1xf32> to vector<1x1x1xf32>
    %337 = vector.shape_cast %336 : vector<1x1x1xf32> to vector<1x1xf32>
    %338 = vector.extract_strided_slice %251 {offsets = [12, 0, 0], sizes = [1, 1, 64], strides = [1, 1, 1]} : vector<16x1x64xf32> to vector<1x1x64xf32>
    %339 = vector.shape_cast %338 : vector<1x1x64xf32> to vector<1x64xf32>
    %340 = vector.broadcast %337 : vector<1x1xf32> to vector<1x64xf32>
    %341 = arith.mulf %340, %339 : vector<1x64xf32>
    %342 = arith.addf %335, %341 : vector<1x64xf32>
    %343 = vector.extract_strided_slice %252 {offsets = [13, 0, 0], sizes = [1, 1, 1], strides = [1, 1, 1]} : vector<16x1x1xf32> to vector<1x1x1xf32>
    %344 = vector.shape_cast %343 : vector<1x1x1xf32> to vector<1x1xf32>
    %345 = vector.extract_strided_slice %251 {offsets = [13, 0, 0], sizes = [1, 1, 64], strides = [1, 1, 1]} : vector<16x1x64xf32> to vector<1x1x64xf32>
    %346 = vector.shape_cast %345 : vector<1x1x64xf32> to vector<1x64xf32>
    %347 = vector.broadcast %344 : vector<1x1xf32> to vector<1x64xf32>
    %348 = arith.mulf %347, %346 : vector<1x64xf32>
    %349 = arith.addf %342, %348 : vector<1x64xf32>
    %350 = vector.extract_strided_slice %252 {offsets = [14, 0, 0], sizes = [1, 1, 1], strides = [1, 1, 1]} : vector<16x1x1xf32> to vector<1x1x1xf32>
    %351 = vector.shape_cast %350 : vector<1x1x1xf32> to vector<1x1xf32>
    %352 = vector.extract_strided_slice %251 {offsets = [14, 0, 0], sizes = [1, 1, 64], strides = [1, 1, 1]} : vector<16x1x64xf32> to vector<1x1x64xf32>
    %353 = vector.shape_cast %352 : vector<1x1x64xf32> to vector<1x64xf32>
    %354 = vector.broadcast %351 : vector<1x1xf32> to vector<1x64xf32>
    %355 = arith.mulf %354, %353 : vector<1x64xf32>
    %356 = arith.addf %349, %355 : vector<1x64xf32>
    %357 = vector.extract_strided_slice %252 {offsets = [15, 0, 0], sizes = [1, 1, 1], strides = [1, 1, 1]} : vector<16x1x1xf32> to vector<1x1x1xf32>
    %358 = vector.shape_cast %357 : vector<1x1x1xf32> to vector<1x1xf32>
    %359 = vector.extract_strided_slice %251 {offsets = [15, 0, 0], sizes = [1, 1, 64], strides = [1, 1, 1]} : vector<16x1x64xf32> to vector<1x1x64xf32>
    %360 = vector.shape_cast %359 : vector<1x1x64xf32> to vector<1x64xf32>
    %361 = vector.broadcast %358 : vector<1x1xf32> to vector<1x64xf32>
    %362 = arith.mulf %361, %360 : vector<1x64xf32>
    %363 = arith.addf %356, %362 : vector<1x64xf32>
    %364 = vector.extract_strided_slice %119 {offsets = [0, 2, 0], sizes = [16, 1, 64], strides = [1, 1, 1]} : vector<16x8x64xf32> to vector<16x1x64xf32>
    %365 = arith.mulf %364, %251 : vector<16x1x64xf32>
    %366 = vector.extract_strided_slice %131 {offsets = [0, 2, 0], sizes = [16, 1, 64], strides = [1, 1, 1]} : vector<16x8x64xf32> to vector<16x1x64xf32>
    %367 = arith.addf %365, %366 : vector<16x1x64xf32>
    %368 = vector.extract_strided_slice %127 {offsets = [0, 2, 0], sizes = [16, 1, 1], strides = [1, 1, 1]} : vector<16x8x1xf32> to vector<16x1x1xf32>
    %369 = vector.extract_strided_slice %368 {offsets = [0, 0, 0], sizes = [1, 1, 1], strides = [1, 1, 1]} : vector<16x1x1xf32> to vector<1x1x1xf32>
    %370 = vector.shape_cast %369 : vector<1x1x1xf32> to vector<1x1xf32>
    %371 = vector.extract_strided_slice %367 {offsets = [0, 0, 0], sizes = [1, 1, 64], strides = [1, 1, 1]} : vector<16x1x64xf32> to vector<1x1x64xf32>
    %372 = vector.shape_cast %371 : vector<1x1x64xf32> to vector<1x64xf32>
    %373 = vector.broadcast %370 : vector<1x1xf32> to vector<1x64xf32>
    %374 = arith.mulf %373, %372 : vector<1x64xf32>
    %375 = vector.extract_strided_slice %368 {offsets = [1, 0, 0], sizes = [1, 1, 1], strides = [1, 1, 1]} : vector<16x1x1xf32> to vector<1x1x1xf32>
    %376 = vector.shape_cast %375 : vector<1x1x1xf32> to vector<1x1xf32>
    %377 = vector.extract_strided_slice %367 {offsets = [1, 0, 0], sizes = [1, 1, 64], strides = [1, 1, 1]} : vector<16x1x64xf32> to vector<1x1x64xf32>
    %378 = vector.shape_cast %377 : vector<1x1x64xf32> to vector<1x64xf32>
    %379 = vector.broadcast %376 : vector<1x1xf32> to vector<1x64xf32>
    %380 = arith.mulf %379, %378 : vector<1x64xf32>
    %381 = arith.addf %374, %380 : vector<1x64xf32>
    %382 = vector.extract_strided_slice %368 {offsets = [2, 0, 0], sizes = [1, 1, 1], strides = [1, 1, 1]} : vector<16x1x1xf32> to vector<1x1x1xf32>
    %383 = vector.shape_cast %382 : vector<1x1x1xf32> to vector<1x1xf32>
    %384 = vector.extract_strided_slice %367 {offsets = [2, 0, 0], sizes = [1, 1, 64], strides = [1, 1, 1]} : vector<16x1x64xf32> to vector<1x1x64xf32>
    %385 = vector.shape_cast %384 : vector<1x1x64xf32> to vector<1x64xf32>
    %386 = vector.broadcast %383 : vector<1x1xf32> to vector<1x64xf32>
    %387 = arith.mulf %386, %385 : vector<1x64xf32>
    %388 = arith.addf %381, %387 : vector<1x64xf32>
    %389 = vector.extract_strided_slice %368 {offsets = [3, 0, 0], sizes = [1, 1, 1], strides = [1, 1, 1]} : vector<16x1x1xf32> to vector<1x1x1xf32>
    %390 = vector.shape_cast %389 : vector<1x1x1xf32> to vector<1x1xf32>
    %391 = vector.extract_strided_slice %367 {offsets = [3, 0, 0], sizes = [1, 1, 64], strides = [1, 1, 1]} : vector<16x1x64xf32> to vector<1x1x64xf32>
    %392 = vector.shape_cast %391 : vector<1x1x64xf32> to vector<1x64xf32>
    %393 = vector.broadcast %390 : vector<1x1xf32> to vector<1x64xf32>
    %394 = arith.mulf %393, %392 : vector<1x64xf32>
    %395 = arith.addf %388, %394 : vector<1x64xf32>
    %396 = vector.extract_strided_slice %368 {offsets = [4, 0, 0], sizes = [1, 1, 1], strides = [1, 1, 1]} : vector<16x1x1xf32> to vector<1x1x1xf32>
    %397 = vector.shape_cast %396 : vector<1x1x1xf32> to vector<1x1xf32>
    %398 = vector.extract_strided_slice %367 {offsets = [4, 0, 0], sizes = [1, 1, 64], strides = [1, 1, 1]} : vector<16x1x64xf32> to vector<1x1x64xf32>
    %399 = vector.shape_cast %398 : vector<1x1x64xf32> to vector<1x64xf32>
    %400 = vector.broadcast %397 : vector<1x1xf32> to vector<1x64xf32>
    %401 = arith.mulf %400, %399 : vector<1x64xf32>
    %402 = arith.addf %395, %401 : vector<1x64xf32>
    %403 = vector.extract_strided_slice %368 {offsets = [5, 0, 0], sizes = [1, 1, 1], strides = [1, 1, 1]} : vector<16x1x1xf32> to vector<1x1x1xf32>
    %404 = vector.shape_cast %403 : vector<1x1x1xf32> to vector<1x1xf32>
    %405 = vector.extract_strided_slice %367 {offsets = [5, 0, 0], sizes = [1, 1, 64], strides = [1, 1, 1]} : vector<16x1x64xf32> to vector<1x1x64xf32>
    %406 = vector.shape_cast %405 : vector<1x1x64xf32> to vector<1x64xf32>
    %407 = vector.broadcast %404 : vector<1x1xf32> to vector<1x64xf32>
    %408 = arith.mulf %407, %406 : vector<1x64xf32>
    %409 = arith.addf %402, %408 : vector<1x64xf32>
    %410 = vector.extract_strided_slice %368 {offsets = [6, 0, 0], sizes = [1, 1, 1], strides = [1, 1, 1]} : vector<16x1x1xf32> to vector<1x1x1xf32>
    %411 = vector.shape_cast %410 : vector<1x1x1xf32> to vector<1x1xf32>
    %412 = vector.extract_strided_slice %367 {offsets = [6, 0, 0], sizes = [1, 1, 64], strides = [1, 1, 1]} : vector<16x1x64xf32> to vector<1x1x64xf32>
    %413 = vector.shape_cast %412 : vector<1x1x64xf32> to vector<1x64xf32>
    %414 = vector.broadcast %411 : vector<1x1xf32> to vector<1x64xf32>
    %415 = arith.mulf %414, %413 : vector<1x64xf32>
    %416 = arith.addf %409, %415 : vector<1x64xf32>
    %417 = vector.extract_strided_slice %368 {offsets = [7, 0, 0], sizes = [1, 1, 1], strides = [1, 1, 1]} : vector<16x1x1xf32> to vector<1x1x1xf32>
    %418 = vector.shape_cast %417 : vector<1x1x1xf32> to vector<1x1xf32>
    %419 = vector.extract_strided_slice %367 {offsets = [7, 0, 0], sizes = [1, 1, 64], strides = [1, 1, 1]} : vector<16x1x64xf32> to vector<1x1x64xf32>
    %420 = vector.shape_cast %419 : vector<1x1x64xf32> to vector<1x64xf32>
    %421 = vector.broadcast %418 : vector<1x1xf32> to vector<1x64xf32>
    %422 = arith.mulf %421, %420 : vector<1x64xf32>
    %423 = arith.addf %416, %422 : vector<1x64xf32>
    %424 = vector.extract_strided_slice %368 {offsets = [8, 0, 0], sizes = [1, 1, 1], strides = [1, 1, 1]} : vector<16x1x1xf32> to vector<1x1x1xf32>
    %425 = vector.shape_cast %424 : vector<1x1x1xf32> to vector<1x1xf32>
    %426 = vector.extract_strided_slice %367 {offsets = [8, 0, 0], sizes = [1, 1, 64], strides = [1, 1, 1]} : vector<16x1x64xf32> to vector<1x1x64xf32>
    %427 = vector.shape_cast %426 : vector<1x1x64xf32> to vector<1x64xf32>
    %428 = vector.broadcast %425 : vector<1x1xf32> to vector<1x64xf32>
    %429 = arith.mulf %428, %427 : vector<1x64xf32>
    %430 = arith.addf %423, %429 : vector<1x64xf32>
    %431 = vector.extract_strided_slice %368 {offsets = [9, 0, 0], sizes = [1, 1, 1], strides = [1, 1, 1]} : vector<16x1x1xf32> to vector<1x1x1xf32>
    %432 = vector.shape_cast %431 : vector<1x1x1xf32> to vector<1x1xf32>
    %433 = vector.extract_strided_slice %367 {offsets = [9, 0, 0], sizes = [1, 1, 64], strides = [1, 1, 1]} : vector<16x1x64xf32> to vector<1x1x64xf32>
    %434 = vector.shape_cast %433 : vector<1x1x64xf32> to vector<1x64xf32>
    %435 = vector.broadcast %432 : vector<1x1xf32> to vector<1x64xf32>
    %436 = arith.mulf %435, %434 : vector<1x64xf32>
    %437 = arith.addf %430, %436 : vector<1x64xf32>
    %438 = vector.extract_strided_slice %368 {offsets = [10, 0, 0], sizes = [1, 1, 1], strides = [1, 1, 1]} : vector<16x1x1xf32> to vector<1x1x1xf32>
    %439 = vector.shape_cast %438 : vector<1x1x1xf32> to vector<1x1xf32>
    %440 = vector.extract_strided_slice %367 {offsets = [10, 0, 0], sizes = [1, 1, 64], strides = [1, 1, 1]} : vector<16x1x64xf32> to vector<1x1x64xf32>
    %441 = vector.shape_cast %440 : vector<1x1x64xf32> to vector<1x64xf32>
    %442 = vector.broadcast %439 : vector<1x1xf32> to vector<1x64xf32>
    %443 = arith.mulf %442, %441 : vector<1x64xf32>
    %444 = arith.addf %437, %443 : vector<1x64xf32>
    %445 = vector.extract_strided_slice %368 {offsets = [11, 0, 0], sizes = [1, 1, 1], strides = [1, 1, 1]} : vector<16x1x1xf32> to vector<1x1x1xf32>
    %446 = vector.shape_cast %445 : vector<1x1x1xf32> to vector<1x1xf32>
    %447 = vector.extract_strided_slice %367 {offsets = [11, 0, 0], sizes = [1, 1, 64], strides = [1, 1, 1]} : vector<16x1x64xf32> to vector<1x1x64xf32>
    %448 = vector.shape_cast %447 : vector<1x1x64xf32> to vector<1x64xf32>
    %449 = vector.broadcast %446 : vector<1x1xf32> to vector<1x64xf32>
    %450 = arith.mulf %449, %448 : vector<1x64xf32>
    %451 = arith.addf %444, %450 : vector<1x64xf32>
    %452 = vector.extract_strided_slice %368 {offsets = [12, 0, 0], sizes = [1, 1, 1], strides = [1, 1, 1]} : vector<16x1x1xf32> to vector<1x1x1xf32>
    %453 = vector.shape_cast %452 : vector<1x1x1xf32> to vector<1x1xf32>
    %454 = vector.extract_strided_slice %367 {offsets = [12, 0, 0], sizes = [1, 1, 64], strides = [1, 1, 1]} : vector<16x1x64xf32> to vector<1x1x64xf32>
    %455 = vector.shape_cast %454 : vector<1x1x64xf32> to vector<1x64xf32>
    %456 = vector.broadcast %453 : vector<1x1xf32> to vector<1x64xf32>
    %457 = arith.mulf %456, %455 : vector<1x64xf32>
    %458 = arith.addf %451, %457 : vector<1x64xf32>
    %459 = vector.extract_strided_slice %368 {offsets = [13, 0, 0], sizes = [1, 1, 1], strides = [1, 1, 1]} : vector<16x1x1xf32> to vector<1x1x1xf32>
    %460 = vector.shape_cast %459 : vector<1x1x1xf32> to vector<1x1xf32>
    %461 = vector.extract_strided_slice %367 {offsets = [13, 0, 0], sizes = [1, 1, 64], strides = [1, 1, 1]} : vector<16x1x64xf32> to vector<1x1x64xf32>
    %462 = vector.shape_cast %461 : vector<1x1x64xf32> to vector<1x64xf32>
    %463 = vector.broadcast %460 : vector<1x1xf32> to vector<1x64xf32>
    %464 = arith.mulf %463, %462 : vector<1x64xf32>
    %465 = arith.addf %458, %464 : vector<1x64xf32>
    %466 = vector.extract_strided_slice %368 {offsets = [14, 0, 0], sizes = [1, 1, 1], strides = [1, 1, 1]} : vector<16x1x1xf32> to vector<1x1x1xf32>
    %467 = vector.shape_cast %466 : vector<1x1x1xf32> to vector<1x1xf32>
    %468 = vector.extract_strided_slice %367 {offsets = [14, 0, 0], sizes = [1, 1, 64], strides = [1, 1, 1]} : vector<16x1x64xf32> to vector<1x1x64xf32>
    %469 = vector.shape_cast %468 : vector<1x1x64xf32> to vector<1x64xf32>
    %470 = vector.broadcast %467 : vector<1x1xf32> to vector<1x64xf32>
    %471 = arith.mulf %470, %469 : vector<1x64xf32>
    %472 = arith.addf %465, %471 : vector<1x64xf32>
    %473 = vector.extract_strided_slice %368 {offsets = [15, 0, 0], sizes = [1, 1, 1], strides = [1, 1, 1]} : vector<16x1x1xf32> to vector<1x1x1xf32>
    %474 = vector.shape_cast %473 : vector<1x1x1xf32> to vector<1x1xf32>
    %475 = vector.extract_strided_slice %367 {offsets = [15, 0, 0], sizes = [1, 1, 64], strides = [1, 1, 1]} : vector<16x1x64xf32> to vector<1x1x64xf32>
    %476 = vector.shape_cast %475 : vector<1x1x64xf32> to vector<1x64xf32>
    %477 = vector.broadcast %474 : vector<1x1xf32> to vector<1x64xf32>
    %478 = arith.mulf %477, %476 : vector<1x64xf32>
    %479 = arith.addf %472, %478 : vector<1x64xf32>
    %480 = vector.extract_strided_slice %119 {offsets = [0, 3, 0], sizes = [16, 1, 64], strides = [1, 1, 1]} : vector<16x8x64xf32> to vector<16x1x64xf32>
    %481 = arith.mulf %480, %367 : vector<16x1x64xf32>
    %482 = vector.extract_strided_slice %131 {offsets = [0, 3, 0], sizes = [16, 1, 64], strides = [1, 1, 1]} : vector<16x8x64xf32> to vector<16x1x64xf32>
    %483 = arith.addf %481, %482 : vector<16x1x64xf32>
    %484 = vector.extract_strided_slice %127 {offsets = [0, 3, 0], sizes = [16, 1, 1], strides = [1, 1, 1]} : vector<16x8x1xf32> to vector<16x1x1xf32>
    %485 = vector.extract_strided_slice %484 {offsets = [0, 0, 0], sizes = [1, 1, 1], strides = [1, 1, 1]} : vector<16x1x1xf32> to vector<1x1x1xf32>
    %486 = vector.shape_cast %485 : vector<1x1x1xf32> to vector<1x1xf32>
    %487 = vector.extract_strided_slice %483 {offsets = [0, 0, 0], sizes = [1, 1, 64], strides = [1, 1, 1]} : vector<16x1x64xf32> to vector<1x1x64xf32>
    %488 = vector.shape_cast %487 : vector<1x1x64xf32> to vector<1x64xf32>
    %489 = vector.broadcast %486 : vector<1x1xf32> to vector<1x64xf32>
    %490 = arith.mulf %489, %488 : vector<1x64xf32>
    %491 = vector.extract_strided_slice %484 {offsets = [1, 0, 0], sizes = [1, 1, 1], strides = [1, 1, 1]} : vector<16x1x1xf32> to vector<1x1x1xf32>
    %492 = vector.shape_cast %491 : vector<1x1x1xf32> to vector<1x1xf32>
    %493 = vector.extract_strided_slice %483 {offsets = [1, 0, 0], sizes = [1, 1, 64], strides = [1, 1, 1]} : vector<16x1x64xf32> to vector<1x1x64xf32>
    %494 = vector.shape_cast %493 : vector<1x1x64xf32> to vector<1x64xf32>
    %495 = vector.broadcast %492 : vector<1x1xf32> to vector<1x64xf32>
    %496 = arith.mulf %495, %494 : vector<1x64xf32>
    %497 = arith.addf %490, %496 : vector<1x64xf32>
    %498 = vector.extract_strided_slice %484 {offsets = [2, 0, 0], sizes = [1, 1, 1], strides = [1, 1, 1]} : vector<16x1x1xf32> to vector<1x1x1xf32>
    %499 = vector.shape_cast %498 : vector<1x1x1xf32> to vector<1x1xf32>
    %500 = vector.extract_strided_slice %483 {offsets = [2, 0, 0], sizes = [1, 1, 64], strides = [1, 1, 1]} : vector<16x1x64xf32> to vector<1x1x64xf32>
    %501 = vector.shape_cast %500 : vector<1x1x64xf32> to vector<1x64xf32>
    %502 = vector.broadcast %499 : vector<1x1xf32> to vector<1x64xf32>
    %503 = arith.mulf %502, %501 : vector<1x64xf32>
    %504 = arith.addf %497, %503 : vector<1x64xf32>
    %505 = vector.extract_strided_slice %484 {offsets = [3, 0, 0], sizes = [1, 1, 1], strides = [1, 1, 1]} : vector<16x1x1xf32> to vector<1x1x1xf32>
    %506 = vector.shape_cast %505 : vector<1x1x1xf32> to vector<1x1xf32>
    %507 = vector.extract_strided_slice %483 {offsets = [3, 0, 0], sizes = [1, 1, 64], strides = [1, 1, 1]} : vector<16x1x64xf32> to vector<1x1x64xf32>
    %508 = vector.shape_cast %507 : vector<1x1x64xf32> to vector<1x64xf32>
    %509 = vector.broadcast %506 : vector<1x1xf32> to vector<1x64xf32>
    %510 = arith.mulf %509, %508 : vector<1x64xf32>
    %511 = arith.addf %504, %510 : vector<1x64xf32>
    %512 = vector.extract_strided_slice %484 {offsets = [4, 0, 0], sizes = [1, 1, 1], strides = [1, 1, 1]} : vector<16x1x1xf32> to vector<1x1x1xf32>
    %513 = vector.shape_cast %512 : vector<1x1x1xf32> to vector<1x1xf32>
    %514 = vector.extract_strided_slice %483 {offsets = [4, 0, 0], sizes = [1, 1, 64], strides = [1, 1, 1]} : vector<16x1x64xf32> to vector<1x1x64xf32>
    %515 = vector.shape_cast %514 : vector<1x1x64xf32> to vector<1x64xf32>
    %516 = vector.broadcast %513 : vector<1x1xf32> to vector<1x64xf32>
    %517 = arith.mulf %516, %515 : vector<1x64xf32>
    %518 = arith.addf %511, %517 : vector<1x64xf32>
    %519 = vector.extract_strided_slice %484 {offsets = [5, 0, 0], sizes = [1, 1, 1], strides = [1, 1, 1]} : vector<16x1x1xf32> to vector<1x1x1xf32>
    %520 = vector.shape_cast %519 : vector<1x1x1xf32> to vector<1x1xf32>
    %521 = vector.extract_strided_slice %483 {offsets = [5, 0, 0], sizes = [1, 1, 64], strides = [1, 1, 1]} : vector<16x1x64xf32> to vector<1x1x64xf32>
    %522 = vector.shape_cast %521 : vector<1x1x64xf32> to vector<1x64xf32>
    %523 = vector.broadcast %520 : vector<1x1xf32> to vector<1x64xf32>
    %524 = arith.mulf %523, %522 : vector<1x64xf32>
    %525 = arith.addf %518, %524 : vector<1x64xf32>
    %526 = vector.extract_strided_slice %484 {offsets = [6, 0, 0], sizes = [1, 1, 1], strides = [1, 1, 1]} : vector<16x1x1xf32> to vector<1x1x1xf32>
    %527 = vector.shape_cast %526 : vector<1x1x1xf32> to vector<1x1xf32>
    %528 = vector.extract_strided_slice %483 {offsets = [6, 0, 0], sizes = [1, 1, 64], strides = [1, 1, 1]} : vector<16x1x64xf32> to vector<1x1x64xf32>
    %529 = vector.shape_cast %528 : vector<1x1x64xf32> to vector<1x64xf32>
    %530 = vector.broadcast %527 : vector<1x1xf32> to vector<1x64xf32>
    %531 = arith.mulf %530, %529 : vector<1x64xf32>
    %532 = arith.addf %525, %531 : vector<1x64xf32>
    %533 = vector.extract_strided_slice %484 {offsets = [7, 0, 0], sizes = [1, 1, 1], strides = [1, 1, 1]} : vector<16x1x1xf32> to vector<1x1x1xf32>
    %534 = vector.shape_cast %533 : vector<1x1x1xf32> to vector<1x1xf32>
    %535 = vector.extract_strided_slice %483 {offsets = [7, 0, 0], sizes = [1, 1, 64], strides = [1, 1, 1]} : vector<16x1x64xf32> to vector<1x1x64xf32>
    %536 = vector.shape_cast %535 : vector<1x1x64xf32> to vector<1x64xf32>
    %537 = vector.broadcast %534 : vector<1x1xf32> to vector<1x64xf32>
    %538 = arith.mulf %537, %536 : vector<1x64xf32>
    %539 = arith.addf %532, %538 : vector<1x64xf32>
    %540 = vector.extract_strided_slice %484 {offsets = [8, 0, 0], sizes = [1, 1, 1], strides = [1, 1, 1]} : vector<16x1x1xf32> to vector<1x1x1xf32>
    %541 = vector.shape_cast %540 : vector<1x1x1xf32> to vector<1x1xf32>
    %542 = vector.extract_strided_slice %483 {offsets = [8, 0, 0], sizes = [1, 1, 64], strides = [1, 1, 1]} : vector<16x1x64xf32> to vector<1x1x64xf32>
    %543 = vector.shape_cast %542 : vector<1x1x64xf32> to vector<1x64xf32>
    %544 = vector.broadcast %541 : vector<1x1xf32> to vector<1x64xf32>
    %545 = arith.mulf %544, %543 : vector<1x64xf32>
    %546 = arith.addf %539, %545 : vector<1x64xf32>
    %547 = vector.extract_strided_slice %484 {offsets = [9, 0, 0], sizes = [1, 1, 1], strides = [1, 1, 1]} : vector<16x1x1xf32> to vector<1x1x1xf32>
    %548 = vector.shape_cast %547 : vector<1x1x1xf32> to vector<1x1xf32>
    %549 = vector.extract_strided_slice %483 {offsets = [9, 0, 0], sizes = [1, 1, 64], strides = [1, 1, 1]} : vector<16x1x64xf32> to vector<1x1x64xf32>
    %550 = vector.shape_cast %549 : vector<1x1x64xf32> to vector<1x64xf32>
    %551 = vector.broadcast %548 : vector<1x1xf32> to vector<1x64xf32>
    %552 = arith.mulf %551, %550 : vector<1x64xf32>
    %553 = arith.addf %546, %552 : vector<1x64xf32>
    %554 = vector.extract_strided_slice %484 {offsets = [10, 0, 0], sizes = [1, 1, 1], strides = [1, 1, 1]} : vector<16x1x1xf32> to vector<1x1x1xf32>
    %555 = vector.shape_cast %554 : vector<1x1x1xf32> to vector<1x1xf32>
    %556 = vector.extract_strided_slice %483 {offsets = [10, 0, 0], sizes = [1, 1, 64], strides = [1, 1, 1]} : vector<16x1x64xf32> to vector<1x1x64xf32>
    %557 = vector.shape_cast %556 : vector<1x1x64xf32> to vector<1x64xf32>
    %558 = vector.broadcast %555 : vector<1x1xf32> to vector<1x64xf32>
    %559 = arith.mulf %558, %557 : vector<1x64xf32>
    %560 = arith.addf %553, %559 : vector<1x64xf32>
    %561 = vector.extract_strided_slice %484 {offsets = [11, 0, 0], sizes = [1, 1, 1], strides = [1, 1, 1]} : vector<16x1x1xf32> to vector<1x1x1xf32>
    %562 = vector.shape_cast %561 : vector<1x1x1xf32> to vector<1x1xf32>
    %563 = vector.extract_strided_slice %483 {offsets = [11, 0, 0], sizes = [1, 1, 64], strides = [1, 1, 1]} : vector<16x1x64xf32> to vector<1x1x64xf32>
    %564 = vector.shape_cast %563 : vector<1x1x64xf32> to vector<1x64xf32>
    %565 = vector.broadcast %562 : vector<1x1xf32> to vector<1x64xf32>
    %566 = arith.mulf %565, %564 : vector<1x64xf32>
    %567 = arith.addf %560, %566 : vector<1x64xf32>
    %568 = vector.extract_strided_slice %484 {offsets = [12, 0, 0], sizes = [1, 1, 1], strides = [1, 1, 1]} : vector<16x1x1xf32> to vector<1x1x1xf32>
    %569 = vector.shape_cast %568 : vector<1x1x1xf32> to vector<1x1xf32>
    %570 = vector.extract_strided_slice %483 {offsets = [12, 0, 0], sizes = [1, 1, 64], strides = [1, 1, 1]} : vector<16x1x64xf32> to vector<1x1x64xf32>
    %571 = vector.shape_cast %570 : vector<1x1x64xf32> to vector<1x64xf32>
    %572 = vector.broadcast %569 : vector<1x1xf32> to vector<1x64xf32>
    %573 = arith.mulf %572, %571 : vector<1x64xf32>
    %574 = arith.addf %567, %573 : vector<1x64xf32>
    %575 = vector.extract_strided_slice %484 {offsets = [13, 0, 0], sizes = [1, 1, 1], strides = [1, 1, 1]} : vector<16x1x1xf32> to vector<1x1x1xf32>
    %576 = vector.shape_cast %575 : vector<1x1x1xf32> to vector<1x1xf32>
    %577 = vector.extract_strided_slice %483 {offsets = [13, 0, 0], sizes = [1, 1, 64], strides = [1, 1, 1]} : vector<16x1x64xf32> to vector<1x1x64xf32>
    %578 = vector.shape_cast %577 : vector<1x1x64xf32> to vector<1x64xf32>
    %579 = vector.broadcast %576 : vector<1x1xf32> to vector<1x64xf32>
    %580 = arith.mulf %579, %578 : vector<1x64xf32>
    %581 = arith.addf %574, %580 : vector<1x64xf32>
    %582 = vector.extract_strided_slice %484 {offsets = [14, 0, 0], sizes = [1, 1, 1], strides = [1, 1, 1]} : vector<16x1x1xf32> to vector<1x1x1xf32>
    %583 = vector.shape_cast %582 : vector<1x1x1xf32> to vector<1x1xf32>
    %584 = vector.extract_strided_slice %483 {offsets = [14, 0, 0], sizes = [1, 1, 64], strides = [1, 1, 1]} : vector<16x1x64xf32> to vector<1x1x64xf32>
    %585 = vector.shape_cast %584 : vector<1x1x64xf32> to vector<1x64xf32>
    %586 = vector.broadcast %583 : vector<1x1xf32> to vector<1x64xf32>
    %587 = arith.mulf %586, %585 : vector<1x64xf32>
    %588 = arith.addf %581, %587 : vector<1x64xf32>
    %589 = vector.extract_strided_slice %484 {offsets = [15, 0, 0], sizes = [1, 1, 1], strides = [1, 1, 1]} : vector<16x1x1xf32> to vector<1x1x1xf32>
    %590 = vector.shape_cast %589 : vector<1x1x1xf32> to vector<1x1xf32>
    %591 = vector.extract_strided_slice %483 {offsets = [15, 0, 0], sizes = [1, 1, 64], strides = [1, 1, 1]} : vector<16x1x64xf32> to vector<1x1x64xf32>
    %592 = vector.shape_cast %591 : vector<1x1x64xf32> to vector<1x64xf32>
    %593 = vector.broadcast %590 : vector<1x1xf32> to vector<1x64xf32>
    %594 = arith.mulf %593, %592 : vector<1x64xf32>
    %595 = arith.addf %588, %594 : vector<1x64xf32>
    %596 = vector.extract_strided_slice %119 {offsets = [0, 4, 0], sizes = [16, 1, 64], strides = [1, 1, 1]} : vector<16x8x64xf32> to vector<16x1x64xf32>
    %597 = arith.mulf %596, %483 : vector<16x1x64xf32>
    %598 = vector.extract_strided_slice %131 {offsets = [0, 4, 0], sizes = [16, 1, 64], strides = [1, 1, 1]} : vector<16x8x64xf32> to vector<16x1x64xf32>
    %599 = arith.addf %597, %598 : vector<16x1x64xf32>
    %600 = vector.extract_strided_slice %127 {offsets = [0, 4, 0], sizes = [16, 1, 1], strides = [1, 1, 1]} : vector<16x8x1xf32> to vector<16x1x1xf32>
    %601 = vector.extract_strided_slice %600 {offsets = [0, 0, 0], sizes = [1, 1, 1], strides = [1, 1, 1]} : vector<16x1x1xf32> to vector<1x1x1xf32>
    %602 = vector.shape_cast %601 : vector<1x1x1xf32> to vector<1x1xf32>
    %603 = vector.extract_strided_slice %599 {offsets = [0, 0, 0], sizes = [1, 1, 64], strides = [1, 1, 1]} : vector<16x1x64xf32> to vector<1x1x64xf32>
    %604 = vector.shape_cast %603 : vector<1x1x64xf32> to vector<1x64xf32>
    %605 = vector.broadcast %602 : vector<1x1xf32> to vector<1x64xf32>
    %606 = arith.mulf %605, %604 : vector<1x64xf32>
    %607 = vector.extract_strided_slice %600 {offsets = [1, 0, 0], sizes = [1, 1, 1], strides = [1, 1, 1]} : vector<16x1x1xf32> to vector<1x1x1xf32>
    %608 = vector.shape_cast %607 : vector<1x1x1xf32> to vector<1x1xf32>
    %609 = vector.extract_strided_slice %599 {offsets = [1, 0, 0], sizes = [1, 1, 64], strides = [1, 1, 1]} : vector<16x1x64xf32> to vector<1x1x64xf32>
    %610 = vector.shape_cast %609 : vector<1x1x64xf32> to vector<1x64xf32>
    %611 = vector.broadcast %608 : vector<1x1xf32> to vector<1x64xf32>
    %612 = arith.mulf %611, %610 : vector<1x64xf32>
    %613 = arith.addf %606, %612 : vector<1x64xf32>
    %614 = vector.extract_strided_slice %600 {offsets = [2, 0, 0], sizes = [1, 1, 1], strides = [1, 1, 1]} : vector<16x1x1xf32> to vector<1x1x1xf32>
    %615 = vector.shape_cast %614 : vector<1x1x1xf32> to vector<1x1xf32>
    %616 = vector.extract_strided_slice %599 {offsets = [2, 0, 0], sizes = [1, 1, 64], strides = [1, 1, 1]} : vector<16x1x64xf32> to vector<1x1x64xf32>
    %617 = vector.shape_cast %616 : vector<1x1x64xf32> to vector<1x64xf32>
    %618 = vector.broadcast %615 : vector<1x1xf32> to vector<1x64xf32>
    %619 = arith.mulf %618, %617 : vector<1x64xf32>
    %620 = arith.addf %613, %619 : vector<1x64xf32>
    %621 = vector.extract_strided_slice %600 {offsets = [3, 0, 0], sizes = [1, 1, 1], strides = [1, 1, 1]} : vector<16x1x1xf32> to vector<1x1x1xf32>
    %622 = vector.shape_cast %621 : vector<1x1x1xf32> to vector<1x1xf32>
    %623 = vector.extract_strided_slice %599 {offsets = [3, 0, 0], sizes = [1, 1, 64], strides = [1, 1, 1]} : vector<16x1x64xf32> to vector<1x1x64xf32>
    %624 = vector.shape_cast %623 : vector<1x1x64xf32> to vector<1x64xf32>
    %625 = vector.broadcast %622 : vector<1x1xf32> to vector<1x64xf32>
    %626 = arith.mulf %625, %624 : vector<1x64xf32>
    %627 = arith.addf %620, %626 : vector<1x64xf32>
    %628 = vector.extract_strided_slice %600 {offsets = [4, 0, 0], sizes = [1, 1, 1], strides = [1, 1, 1]} : vector<16x1x1xf32> to vector<1x1x1xf32>
    %629 = vector.shape_cast %628 : vector<1x1x1xf32> to vector<1x1xf32>
    %630 = vector.extract_strided_slice %599 {offsets = [4, 0, 0], sizes = [1, 1, 64], strides = [1, 1, 1]} : vector<16x1x64xf32> to vector<1x1x64xf32>
    %631 = vector.shape_cast %630 : vector<1x1x64xf32> to vector<1x64xf32>
    %632 = vector.broadcast %629 : vector<1x1xf32> to vector<1x64xf32>
    %633 = arith.mulf %632, %631 : vector<1x64xf32>
    %634 = arith.addf %627, %633 : vector<1x64xf32>
    %635 = vector.extract_strided_slice %600 {offsets = [5, 0, 0], sizes = [1, 1, 1], strides = [1, 1, 1]} : vector<16x1x1xf32> to vector<1x1x1xf32>
    %636 = vector.shape_cast %635 : vector<1x1x1xf32> to vector<1x1xf32>
    %637 = vector.extract_strided_slice %599 {offsets = [5, 0, 0], sizes = [1, 1, 64], strides = [1, 1, 1]} : vector<16x1x64xf32> to vector<1x1x64xf32>
    %638 = vector.shape_cast %637 : vector<1x1x64xf32> to vector<1x64xf32>
    %639 = vector.broadcast %636 : vector<1x1xf32> to vector<1x64xf32>
    %640 = arith.mulf %639, %638 : vector<1x64xf32>
    %641 = arith.addf %634, %640 : vector<1x64xf32>
    %642 = vector.extract_strided_slice %600 {offsets = [6, 0, 0], sizes = [1, 1, 1], strides = [1, 1, 1]} : vector<16x1x1xf32> to vector<1x1x1xf32>
    %643 = vector.shape_cast %642 : vector<1x1x1xf32> to vector<1x1xf32>
    %644 = vector.extract_strided_slice %599 {offsets = [6, 0, 0], sizes = [1, 1, 64], strides = [1, 1, 1]} : vector<16x1x64xf32> to vector<1x1x64xf32>
    %645 = vector.shape_cast %644 : vector<1x1x64xf32> to vector<1x64xf32>
    %646 = vector.broadcast %643 : vector<1x1xf32> to vector<1x64xf32>
    %647 = arith.mulf %646, %645 : vector<1x64xf32>
    %648 = arith.addf %641, %647 : vector<1x64xf32>
    %649 = vector.extract_strided_slice %600 {offsets = [7, 0, 0], sizes = [1, 1, 1], strides = [1, 1, 1]} : vector<16x1x1xf32> to vector<1x1x1xf32>
    %650 = vector.shape_cast %649 : vector<1x1x1xf32> to vector<1x1xf32>
    %651 = vector.extract_strided_slice %599 {offsets = [7, 0, 0], sizes = [1, 1, 64], strides = [1, 1, 1]} : vector<16x1x64xf32> to vector<1x1x64xf32>
    %652 = vector.shape_cast %651 : vector<1x1x64xf32> to vector<1x64xf32>
    %653 = vector.broadcast %650 : vector<1x1xf32> to vector<1x64xf32>
    %654 = arith.mulf %653, %652 : vector<1x64xf32>
    %655 = arith.addf %648, %654 : vector<1x64xf32>
    %656 = vector.extract_strided_slice %600 {offsets = [8, 0, 0], sizes = [1, 1, 1], strides = [1, 1, 1]} : vector<16x1x1xf32> to vector<1x1x1xf32>
    %657 = vector.shape_cast %656 : vector<1x1x1xf32> to vector<1x1xf32>
    %658 = vector.extract_strided_slice %599 {offsets = [8, 0, 0], sizes = [1, 1, 64], strides = [1, 1, 1]} : vector<16x1x64xf32> to vector<1x1x64xf32>
    %659 = vector.shape_cast %658 : vector<1x1x64xf32> to vector<1x64xf32>
    %660 = vector.broadcast %657 : vector<1x1xf32> to vector<1x64xf32>
    %661 = arith.mulf %660, %659 : vector<1x64xf32>
    %662 = arith.addf %655, %661 : vector<1x64xf32>
    %663 = vector.extract_strided_slice %600 {offsets = [9, 0, 0], sizes = [1, 1, 1], strides = [1, 1, 1]} : vector<16x1x1xf32> to vector<1x1x1xf32>
    %664 = vector.shape_cast %663 : vector<1x1x1xf32> to vector<1x1xf32>
    %665 = vector.extract_strided_slice %599 {offsets = [9, 0, 0], sizes = [1, 1, 64], strides = [1, 1, 1]} : vector<16x1x64xf32> to vector<1x1x64xf32>
    %666 = vector.shape_cast %665 : vector<1x1x64xf32> to vector<1x64xf32>
    %667 = vector.broadcast %664 : vector<1x1xf32> to vector<1x64xf32>
    %668 = arith.mulf %667, %666 : vector<1x64xf32>
    %669 = arith.addf %662, %668 : vector<1x64xf32>
    %670 = vector.extract_strided_slice %600 {offsets = [10, 0, 0], sizes = [1, 1, 1], strides = [1, 1, 1]} : vector<16x1x1xf32> to vector<1x1x1xf32>
    %671 = vector.shape_cast %670 : vector<1x1x1xf32> to vector<1x1xf32>
    %672 = vector.extract_strided_slice %599 {offsets = [10, 0, 0], sizes = [1, 1, 64], strides = [1, 1, 1]} : vector<16x1x64xf32> to vector<1x1x64xf32>
    %673 = vector.shape_cast %672 : vector<1x1x64xf32> to vector<1x64xf32>
    %674 = vector.broadcast %671 : vector<1x1xf32> to vector<1x64xf32>
    %675 = arith.mulf %674, %673 : vector<1x64xf32>
    %676 = arith.addf %669, %675 : vector<1x64xf32>
    %677 = vector.extract_strided_slice %600 {offsets = [11, 0, 0], sizes = [1, 1, 1], strides = [1, 1, 1]} : vector<16x1x1xf32> to vector<1x1x1xf32>
    %678 = vector.shape_cast %677 : vector<1x1x1xf32> to vector<1x1xf32>
    %679 = vector.extract_strided_slice %599 {offsets = [11, 0, 0], sizes = [1, 1, 64], strides = [1, 1, 1]} : vector<16x1x64xf32> to vector<1x1x64xf32>
    %680 = vector.shape_cast %679 : vector<1x1x64xf32> to vector<1x64xf32>
    %681 = vector.broadcast %678 : vector<1x1xf32> to vector<1x64xf32>
    %682 = arith.mulf %681, %680 : vector<1x64xf32>
    %683 = arith.addf %676, %682 : vector<1x64xf32>
    %684 = vector.extract_strided_slice %600 {offsets = [12, 0, 0], sizes = [1, 1, 1], strides = [1, 1, 1]} : vector<16x1x1xf32> to vector<1x1x1xf32>
    %685 = vector.shape_cast %684 : vector<1x1x1xf32> to vector<1x1xf32>
    %686 = vector.extract_strided_slice %599 {offsets = [12, 0, 0], sizes = [1, 1, 64], strides = [1, 1, 1]} : vector<16x1x64xf32> to vector<1x1x64xf32>
    %687 = vector.shape_cast %686 : vector<1x1x64xf32> to vector<1x64xf32>
    %688 = vector.broadcast %685 : vector<1x1xf32> to vector<1x64xf32>
    %689 = arith.mulf %688, %687 : vector<1x64xf32>
    %690 = arith.addf %683, %689 : vector<1x64xf32>
    %691 = vector.extract_strided_slice %600 {offsets = [13, 0, 0], sizes = [1, 1, 1], strides = [1, 1, 1]} : vector<16x1x1xf32> to vector<1x1x1xf32>
    %692 = vector.shape_cast %691 : vector<1x1x1xf32> to vector<1x1xf32>
    %693 = vector.extract_strided_slice %599 {offsets = [13, 0, 0], sizes = [1, 1, 64], strides = [1, 1, 1]} : vector<16x1x64xf32> to vector<1x1x64xf32>
    %694 = vector.shape_cast %693 : vector<1x1x64xf32> to vector<1x64xf32>
    %695 = vector.broadcast %692 : vector<1x1xf32> to vector<1x64xf32>
    %696 = arith.mulf %695, %694 : vector<1x64xf32>
    %697 = arith.addf %690, %696 : vector<1x64xf32>
    %698 = vector.extract_strided_slice %600 {offsets = [14, 0, 0], sizes = [1, 1, 1], strides = [1, 1, 1]} : vector<16x1x1xf32> to vector<1x1x1xf32>
    %699 = vector.shape_cast %698 : vector<1x1x1xf32> to vector<1x1xf32>
    %700 = vector.extract_strided_slice %599 {offsets = [14, 0, 0], sizes = [1, 1, 64], strides = [1, 1, 1]} : vector<16x1x64xf32> to vector<1x1x64xf32>
    %701 = vector.shape_cast %700 : vector<1x1x64xf32> to vector<1x64xf32>
    %702 = vector.broadcast %699 : vector<1x1xf32> to vector<1x64xf32>
    %703 = arith.mulf %702, %701 : vector<1x64xf32>
    %704 = arith.addf %697, %703 : vector<1x64xf32>
    %705 = vector.extract_strided_slice %600 {offsets = [15, 0, 0], sizes = [1, 1, 1], strides = [1, 1, 1]} : vector<16x1x1xf32> to vector<1x1x1xf32>
    %706 = vector.shape_cast %705 : vector<1x1x1xf32> to vector<1x1xf32>
    %707 = vector.extract_strided_slice %599 {offsets = [15, 0, 0], sizes = [1, 1, 64], strides = [1, 1, 1]} : vector<16x1x64xf32> to vector<1x1x64xf32>
    %708 = vector.shape_cast %707 : vector<1x1x64xf32> to vector<1x64xf32>
    %709 = vector.broadcast %706 : vector<1x1xf32> to vector<1x64xf32>
    %710 = arith.mulf %709, %708 : vector<1x64xf32>
    %711 = arith.addf %704, %710 : vector<1x64xf32>
    %712 = vector.extract_strided_slice %119 {offsets = [0, 5, 0], sizes = [16, 1, 64], strides = [1, 1, 1]} : vector<16x8x64xf32> to vector<16x1x64xf32>
    %713 = arith.mulf %712, %599 : vector<16x1x64xf32>
    %714 = vector.extract_strided_slice %131 {offsets = [0, 5, 0], sizes = [16, 1, 64], strides = [1, 1, 1]} : vector<16x8x64xf32> to vector<16x1x64xf32>
    %715 = arith.addf %713, %714 : vector<16x1x64xf32>
    %716 = vector.extract_strided_slice %127 {offsets = [0, 5, 0], sizes = [16, 1, 1], strides = [1, 1, 1]} : vector<16x8x1xf32> to vector<16x1x1xf32>
    %717 = vector.extract_strided_slice %716 {offsets = [0, 0, 0], sizes = [1, 1, 1], strides = [1, 1, 1]} : vector<16x1x1xf32> to vector<1x1x1xf32>
    %718 = vector.shape_cast %717 : vector<1x1x1xf32> to vector<1x1xf32>
    %719 = vector.extract_strided_slice %715 {offsets = [0, 0, 0], sizes = [1, 1, 64], strides = [1, 1, 1]} : vector<16x1x64xf32> to vector<1x1x64xf32>
    %720 = vector.shape_cast %719 : vector<1x1x64xf32> to vector<1x64xf32>
    %721 = vector.broadcast %718 : vector<1x1xf32> to vector<1x64xf32>
    %722 = arith.mulf %721, %720 : vector<1x64xf32>
    %723 = vector.extract_strided_slice %716 {offsets = [1, 0, 0], sizes = [1, 1, 1], strides = [1, 1, 1]} : vector<16x1x1xf32> to vector<1x1x1xf32>
    %724 = vector.shape_cast %723 : vector<1x1x1xf32> to vector<1x1xf32>
    %725 = vector.extract_strided_slice %715 {offsets = [1, 0, 0], sizes = [1, 1, 64], strides = [1, 1, 1]} : vector<16x1x64xf32> to vector<1x1x64xf32>
    %726 = vector.shape_cast %725 : vector<1x1x64xf32> to vector<1x64xf32>
    %727 = vector.broadcast %724 : vector<1x1xf32> to vector<1x64xf32>
    %728 = arith.mulf %727, %726 : vector<1x64xf32>
    %729 = arith.addf %722, %728 : vector<1x64xf32>
    %730 = vector.extract_strided_slice %716 {offsets = [2, 0, 0], sizes = [1, 1, 1], strides = [1, 1, 1]} : vector<16x1x1xf32> to vector<1x1x1xf32>
    %731 = vector.shape_cast %730 : vector<1x1x1xf32> to vector<1x1xf32>
    %732 = vector.extract_strided_slice %715 {offsets = [2, 0, 0], sizes = [1, 1, 64], strides = [1, 1, 1]} : vector<16x1x64xf32> to vector<1x1x64xf32>
    %733 = vector.shape_cast %732 : vector<1x1x64xf32> to vector<1x64xf32>
    %734 = vector.broadcast %731 : vector<1x1xf32> to vector<1x64xf32>
    %735 = arith.mulf %734, %733 : vector<1x64xf32>
    %736 = arith.addf %729, %735 : vector<1x64xf32>
    %737 = vector.extract_strided_slice %716 {offsets = [3, 0, 0], sizes = [1, 1, 1], strides = [1, 1, 1]} : vector<16x1x1xf32> to vector<1x1x1xf32>
    %738 = vector.shape_cast %737 : vector<1x1x1xf32> to vector<1x1xf32>
    %739 = vector.extract_strided_slice %715 {offsets = [3, 0, 0], sizes = [1, 1, 64], strides = [1, 1, 1]} : vector<16x1x64xf32> to vector<1x1x64xf32>
    %740 = vector.shape_cast %739 : vector<1x1x64xf32> to vector<1x64xf32>
    %741 = vector.broadcast %738 : vector<1x1xf32> to vector<1x64xf32>
    %742 = arith.mulf %741, %740 : vector<1x64xf32>
    %743 = arith.addf %736, %742 : vector<1x64xf32>
    %744 = vector.extract_strided_slice %716 {offsets = [4, 0, 0], sizes = [1, 1, 1], strides = [1, 1, 1]} : vector<16x1x1xf32> to vector<1x1x1xf32>
    %745 = vector.shape_cast %744 : vector<1x1x1xf32> to vector<1x1xf32>
    %746 = vector.extract_strided_slice %715 {offsets = [4, 0, 0], sizes = [1, 1, 64], strides = [1, 1, 1]} : vector<16x1x64xf32> to vector<1x1x64xf32>
    %747 = vector.shape_cast %746 : vector<1x1x64xf32> to vector<1x64xf32>
    %748 = vector.broadcast %745 : vector<1x1xf32> to vector<1x64xf32>
    %749 = arith.mulf %748, %747 : vector<1x64xf32>
    %750 = arith.addf %743, %749 : vector<1x64xf32>
    %751 = vector.extract_strided_slice %716 {offsets = [5, 0, 0], sizes = [1, 1, 1], strides = [1, 1, 1]} : vector<16x1x1xf32> to vector<1x1x1xf32>
    %752 = vector.shape_cast %751 : vector<1x1x1xf32> to vector<1x1xf32>
    %753 = vector.extract_strided_slice %715 {offsets = [5, 0, 0], sizes = [1, 1, 64], strides = [1, 1, 1]} : vector<16x1x64xf32> to vector<1x1x64xf32>
    %754 = vector.shape_cast %753 : vector<1x1x64xf32> to vector<1x64xf32>
    %755 = vector.broadcast %752 : vector<1x1xf32> to vector<1x64xf32>
    %756 = arith.mulf %755, %754 : vector<1x64xf32>
    %757 = arith.addf %750, %756 : vector<1x64xf32>
    %758 = vector.extract_strided_slice %716 {offsets = [6, 0, 0], sizes = [1, 1, 1], strides = [1, 1, 1]} : vector<16x1x1xf32> to vector<1x1x1xf32>
    %759 = vector.shape_cast %758 : vector<1x1x1xf32> to vector<1x1xf32>
    %760 = vector.extract_strided_slice %715 {offsets = [6, 0, 0], sizes = [1, 1, 64], strides = [1, 1, 1]} : vector<16x1x64xf32> to vector<1x1x64xf32>
    %761 = vector.shape_cast %760 : vector<1x1x64xf32> to vector<1x64xf32>
    %762 = vector.broadcast %759 : vector<1x1xf32> to vector<1x64xf32>
    %763 = arith.mulf %762, %761 : vector<1x64xf32>
    %764 = arith.addf %757, %763 : vector<1x64xf32>
    %765 = vector.extract_strided_slice %716 {offsets = [7, 0, 0], sizes = [1, 1, 1], strides = [1, 1, 1]} : vector<16x1x1xf32> to vector<1x1x1xf32>
    %766 = vector.shape_cast %765 : vector<1x1x1xf32> to vector<1x1xf32>
    %767 = vector.extract_strided_slice %715 {offsets = [7, 0, 0], sizes = [1, 1, 64], strides = [1, 1, 1]} : vector<16x1x64xf32> to vector<1x1x64xf32>
    %768 = vector.shape_cast %767 : vector<1x1x64xf32> to vector<1x64xf32>
    %769 = vector.broadcast %766 : vector<1x1xf32> to vector<1x64xf32>
    %770 = arith.mulf %769, %768 : vector<1x64xf32>
    %771 = arith.addf %764, %770 : vector<1x64xf32>
    %772 = vector.extract_strided_slice %716 {offsets = [8, 0, 0], sizes = [1, 1, 1], strides = [1, 1, 1]} : vector<16x1x1xf32> to vector<1x1x1xf32>
    %773 = vector.shape_cast %772 : vector<1x1x1xf32> to vector<1x1xf32>
    %774 = vector.extract_strided_slice %715 {offsets = [8, 0, 0], sizes = [1, 1, 64], strides = [1, 1, 1]} : vector<16x1x64xf32> to vector<1x1x64xf32>
    %775 = vector.shape_cast %774 : vector<1x1x64xf32> to vector<1x64xf32>
    %776 = vector.broadcast %773 : vector<1x1xf32> to vector<1x64xf32>
    %777 = arith.mulf %776, %775 : vector<1x64xf32>
    %778 = arith.addf %771, %777 : vector<1x64xf32>
    %779 = vector.extract_strided_slice %716 {offsets = [9, 0, 0], sizes = [1, 1, 1], strides = [1, 1, 1]} : vector<16x1x1xf32> to vector<1x1x1xf32>
    %780 = vector.shape_cast %779 : vector<1x1x1xf32> to vector<1x1xf32>
    %781 = vector.extract_strided_slice %715 {offsets = [9, 0, 0], sizes = [1, 1, 64], strides = [1, 1, 1]} : vector<16x1x64xf32> to vector<1x1x64xf32>
    %782 = vector.shape_cast %781 : vector<1x1x64xf32> to vector<1x64xf32>
    %783 = vector.broadcast %780 : vector<1x1xf32> to vector<1x64xf32>
    %784 = arith.mulf %783, %782 : vector<1x64xf32>
    %785 = arith.addf %778, %784 : vector<1x64xf32>
    %786 = vector.extract_strided_slice %716 {offsets = [10, 0, 0], sizes = [1, 1, 1], strides = [1, 1, 1]} : vector<16x1x1xf32> to vector<1x1x1xf32>
    %787 = vector.shape_cast %786 : vector<1x1x1xf32> to vector<1x1xf32>
    %788 = vector.extract_strided_slice %715 {offsets = [10, 0, 0], sizes = [1, 1, 64], strides = [1, 1, 1]} : vector<16x1x64xf32> to vector<1x1x64xf32>
    %789 = vector.shape_cast %788 : vector<1x1x64xf32> to vector<1x64xf32>
    %790 = vector.broadcast %787 : vector<1x1xf32> to vector<1x64xf32>
    %791 = arith.mulf %790, %789 : vector<1x64xf32>
    %792 = arith.addf %785, %791 : vector<1x64xf32>
    %793 = vector.extract_strided_slice %716 {offsets = [11, 0, 0], sizes = [1, 1, 1], strides = [1, 1, 1]} : vector<16x1x1xf32> to vector<1x1x1xf32>
    %794 = vector.shape_cast %793 : vector<1x1x1xf32> to vector<1x1xf32>
    %795 = vector.extract_strided_slice %715 {offsets = [11, 0, 0], sizes = [1, 1, 64], strides = [1, 1, 1]} : vector<16x1x64xf32> to vector<1x1x64xf32>
    %796 = vector.shape_cast %795 : vector<1x1x64xf32> to vector<1x64xf32>
    %797 = vector.broadcast %794 : vector<1x1xf32> to vector<1x64xf32>
    %798 = arith.mulf %797, %796 : vector<1x64xf32>
    %799 = arith.addf %792, %798 : vector<1x64xf32>
    %800 = vector.extract_strided_slice %716 {offsets = [12, 0, 0], sizes = [1, 1, 1], strides = [1, 1, 1]} : vector<16x1x1xf32> to vector<1x1x1xf32>
    %801 = vector.shape_cast %800 : vector<1x1x1xf32> to vector<1x1xf32>
    %802 = vector.extract_strided_slice %715 {offsets = [12, 0, 0], sizes = [1, 1, 64], strides = [1, 1, 1]} : vector<16x1x64xf32> to vector<1x1x64xf32>
    %803 = vector.shape_cast %802 : vector<1x1x64xf32> to vector<1x64xf32>
    %804 = vector.broadcast %801 : vector<1x1xf32> to vector<1x64xf32>
    %805 = arith.mulf %804, %803 : vector<1x64xf32>
    %806 = arith.addf %799, %805 : vector<1x64xf32>
    %807 = vector.extract_strided_slice %716 {offsets = [13, 0, 0], sizes = [1, 1, 1], strides = [1, 1, 1]} : vector<16x1x1xf32> to vector<1x1x1xf32>
    %808 = vector.shape_cast %807 : vector<1x1x1xf32> to vector<1x1xf32>
    %809 = vector.extract_strided_slice %715 {offsets = [13, 0, 0], sizes = [1, 1, 64], strides = [1, 1, 1]} : vector<16x1x64xf32> to vector<1x1x64xf32>
    %810 = vector.shape_cast %809 : vector<1x1x64xf32> to vector<1x64xf32>
    %811 = vector.broadcast %808 : vector<1x1xf32> to vector<1x64xf32>
    %812 = arith.mulf %811, %810 : vector<1x64xf32>
    %813 = arith.addf %806, %812 : vector<1x64xf32>
    %814 = vector.extract_strided_slice %716 {offsets = [14, 0, 0], sizes = [1, 1, 1], strides = [1, 1, 1]} : vector<16x1x1xf32> to vector<1x1x1xf32>
    %815 = vector.shape_cast %814 : vector<1x1x1xf32> to vector<1x1xf32>
    %816 = vector.extract_strided_slice %715 {offsets = [14, 0, 0], sizes = [1, 1, 64], strides = [1, 1, 1]} : vector<16x1x64xf32> to vector<1x1x64xf32>
    %817 = vector.shape_cast %816 : vector<1x1x64xf32> to vector<1x64xf32>
    %818 = vector.broadcast %815 : vector<1x1xf32> to vector<1x64xf32>
    %819 = arith.mulf %818, %817 : vector<1x64xf32>
    %820 = arith.addf %813, %819 : vector<1x64xf32>
    %821 = vector.extract_strided_slice %716 {offsets = [15, 0, 0], sizes = [1, 1, 1], strides = [1, 1, 1]} : vector<16x1x1xf32> to vector<1x1x1xf32>
    %822 = vector.shape_cast %821 : vector<1x1x1xf32> to vector<1x1xf32>
    %823 = vector.extract_strided_slice %715 {offsets = [15, 0, 0], sizes = [1, 1, 64], strides = [1, 1, 1]} : vector<16x1x64xf32> to vector<1x1x64xf32>
    %824 = vector.shape_cast %823 : vector<1x1x64xf32> to vector<1x64xf32>
    %825 = vector.broadcast %822 : vector<1x1xf32> to vector<1x64xf32>
    %826 = arith.mulf %825, %824 : vector<1x64xf32>
    %827 = arith.addf %820, %826 : vector<1x64xf32>
    %828 = vector.extract_strided_slice %119 {offsets = [0, 6, 0], sizes = [16, 1, 64], strides = [1, 1, 1]} : vector<16x8x64xf32> to vector<16x1x64xf32>
    %829 = arith.mulf %828, %715 : vector<16x1x64xf32>
    %830 = vector.extract_strided_slice %131 {offsets = [0, 6, 0], sizes = [16, 1, 64], strides = [1, 1, 1]} : vector<16x8x64xf32> to vector<16x1x64xf32>
    %831 = arith.addf %829, %830 : vector<16x1x64xf32>
    %832 = vector.extract_strided_slice %127 {offsets = [0, 6, 0], sizes = [16, 1, 1], strides = [1, 1, 1]} : vector<16x8x1xf32> to vector<16x1x1xf32>
    %833 = vector.extract_strided_slice %832 {offsets = [0, 0, 0], sizes = [1, 1, 1], strides = [1, 1, 1]} : vector<16x1x1xf32> to vector<1x1x1xf32>
    %834 = vector.shape_cast %833 : vector<1x1x1xf32> to vector<1x1xf32>
    %835 = vector.extract_strided_slice %831 {offsets = [0, 0, 0], sizes = [1, 1, 64], strides = [1, 1, 1]} : vector<16x1x64xf32> to vector<1x1x64xf32>
    %836 = vector.shape_cast %835 : vector<1x1x64xf32> to vector<1x64xf32>
    %837 = vector.broadcast %834 : vector<1x1xf32> to vector<1x64xf32>
    %838 = arith.mulf %837, %836 : vector<1x64xf32>
    %839 = vector.extract_strided_slice %832 {offsets = [1, 0, 0], sizes = [1, 1, 1], strides = [1, 1, 1]} : vector<16x1x1xf32> to vector<1x1x1xf32>
    %840 = vector.shape_cast %839 : vector<1x1x1xf32> to vector<1x1xf32>
    %841 = vector.extract_strided_slice %831 {offsets = [1, 0, 0], sizes = [1, 1, 64], strides = [1, 1, 1]} : vector<16x1x64xf32> to vector<1x1x64xf32>
    %842 = vector.shape_cast %841 : vector<1x1x64xf32> to vector<1x64xf32>
    %843 = vector.broadcast %840 : vector<1x1xf32> to vector<1x64xf32>
    %844 = arith.mulf %843, %842 : vector<1x64xf32>
    %845 = arith.addf %838, %844 : vector<1x64xf32>
    %846 = vector.extract_strided_slice %832 {offsets = [2, 0, 0], sizes = [1, 1, 1], strides = [1, 1, 1]} : vector<16x1x1xf32> to vector<1x1x1xf32>
    %847 = vector.shape_cast %846 : vector<1x1x1xf32> to vector<1x1xf32>
    %848 = vector.extract_strided_slice %831 {offsets = [2, 0, 0], sizes = [1, 1, 64], strides = [1, 1, 1]} : vector<16x1x64xf32> to vector<1x1x64xf32>
    %849 = vector.shape_cast %848 : vector<1x1x64xf32> to vector<1x64xf32>
    %850 = vector.broadcast %847 : vector<1x1xf32> to vector<1x64xf32>
    %851 = arith.mulf %850, %849 : vector<1x64xf32>
    %852 = arith.addf %845, %851 : vector<1x64xf32>
    %853 = vector.extract_strided_slice %832 {offsets = [3, 0, 0], sizes = [1, 1, 1], strides = [1, 1, 1]} : vector<16x1x1xf32> to vector<1x1x1xf32>
    %854 = vector.shape_cast %853 : vector<1x1x1xf32> to vector<1x1xf32>
    %855 = vector.extract_strided_slice %831 {offsets = [3, 0, 0], sizes = [1, 1, 64], strides = [1, 1, 1]} : vector<16x1x64xf32> to vector<1x1x64xf32>
    %856 = vector.shape_cast %855 : vector<1x1x64xf32> to vector<1x64xf32>
    %857 = vector.broadcast %854 : vector<1x1xf32> to vector<1x64xf32>
    %858 = arith.mulf %857, %856 : vector<1x64xf32>
    %859 = arith.addf %852, %858 : vector<1x64xf32>
    %860 = vector.extract_strided_slice %832 {offsets = [4, 0, 0], sizes = [1, 1, 1], strides = [1, 1, 1]} : vector<16x1x1xf32> to vector<1x1x1xf32>
    %861 = vector.shape_cast %860 : vector<1x1x1xf32> to vector<1x1xf32>
    %862 = vector.extract_strided_slice %831 {offsets = [4, 0, 0], sizes = [1, 1, 64], strides = [1, 1, 1]} : vector<16x1x64xf32> to vector<1x1x64xf32>
    %863 = vector.shape_cast %862 : vector<1x1x64xf32> to vector<1x64xf32>
    %864 = vector.broadcast %861 : vector<1x1xf32> to vector<1x64xf32>
    %865 = arith.mulf %864, %863 : vector<1x64xf32>
    %866 = arith.addf %859, %865 : vector<1x64xf32>
    %867 = vector.extract_strided_slice %832 {offsets = [5, 0, 0], sizes = [1, 1, 1], strides = [1, 1, 1]} : vector<16x1x1xf32> to vector<1x1x1xf32>
    %868 = vector.shape_cast %867 : vector<1x1x1xf32> to vector<1x1xf32>
    %869 = vector.extract_strided_slice %831 {offsets = [5, 0, 0], sizes = [1, 1, 64], strides = [1, 1, 1]} : vector<16x1x64xf32> to vector<1x1x64xf32>
    %870 = vector.shape_cast %869 : vector<1x1x64xf32> to vector<1x64xf32>
    %871 = vector.broadcast %868 : vector<1x1xf32> to vector<1x64xf32>
    %872 = arith.mulf %871, %870 : vector<1x64xf32>
    %873 = arith.addf %866, %872 : vector<1x64xf32>
    %874 = vector.extract_strided_slice %832 {offsets = [6, 0, 0], sizes = [1, 1, 1], strides = [1, 1, 1]} : vector<16x1x1xf32> to vector<1x1x1xf32>
    %875 = vector.shape_cast %874 : vector<1x1x1xf32> to vector<1x1xf32>
    %876 = vector.extract_strided_slice %831 {offsets = [6, 0, 0], sizes = [1, 1, 64], strides = [1, 1, 1]} : vector<16x1x64xf32> to vector<1x1x64xf32>
    %877 = vector.shape_cast %876 : vector<1x1x64xf32> to vector<1x64xf32>
    %878 = vector.broadcast %875 : vector<1x1xf32> to vector<1x64xf32>
    %879 = arith.mulf %878, %877 : vector<1x64xf32>
    %880 = arith.addf %873, %879 : vector<1x64xf32>
    %881 = vector.extract_strided_slice %832 {offsets = [7, 0, 0], sizes = [1, 1, 1], strides = [1, 1, 1]} : vector<16x1x1xf32> to vector<1x1x1xf32>
    %882 = vector.shape_cast %881 : vector<1x1x1xf32> to vector<1x1xf32>
    %883 = vector.extract_strided_slice %831 {offsets = [7, 0, 0], sizes = [1, 1, 64], strides = [1, 1, 1]} : vector<16x1x64xf32> to vector<1x1x64xf32>
    %884 = vector.shape_cast %883 : vector<1x1x64xf32> to vector<1x64xf32>
    %885 = vector.broadcast %882 : vector<1x1xf32> to vector<1x64xf32>
    %886 = arith.mulf %885, %884 : vector<1x64xf32>
    %887 = arith.addf %880, %886 : vector<1x64xf32>
    %888 = vector.extract_strided_slice %832 {offsets = [8, 0, 0], sizes = [1, 1, 1], strides = [1, 1, 1]} : vector<16x1x1xf32> to vector<1x1x1xf32>
    %889 = vector.shape_cast %888 : vector<1x1x1xf32> to vector<1x1xf32>
    %890 = vector.extract_strided_slice %831 {offsets = [8, 0, 0], sizes = [1, 1, 64], strides = [1, 1, 1]} : vector<16x1x64xf32> to vector<1x1x64xf32>
    %891 = vector.shape_cast %890 : vector<1x1x64xf32> to vector<1x64xf32>
    %892 = vector.broadcast %889 : vector<1x1xf32> to vector<1x64xf32>
    %893 = arith.mulf %892, %891 : vector<1x64xf32>
    %894 = arith.addf %887, %893 : vector<1x64xf32>
    %895 = vector.extract_strided_slice %832 {offsets = [9, 0, 0], sizes = [1, 1, 1], strides = [1, 1, 1]} : vector<16x1x1xf32> to vector<1x1x1xf32>
    %896 = vector.shape_cast %895 : vector<1x1x1xf32> to vector<1x1xf32>
    %897 = vector.extract_strided_slice %831 {offsets = [9, 0, 0], sizes = [1, 1, 64], strides = [1, 1, 1]} : vector<16x1x64xf32> to vector<1x1x64xf32>
    %898 = vector.shape_cast %897 : vector<1x1x64xf32> to vector<1x64xf32>
    %899 = vector.broadcast %896 : vector<1x1xf32> to vector<1x64xf32>
    %900 = arith.mulf %899, %898 : vector<1x64xf32>
    %901 = arith.addf %894, %900 : vector<1x64xf32>
    %902 = vector.extract_strided_slice %832 {offsets = [10, 0, 0], sizes = [1, 1, 1], strides = [1, 1, 1]} : vector<16x1x1xf32> to vector<1x1x1xf32>
    %903 = vector.shape_cast %902 : vector<1x1x1xf32> to vector<1x1xf32>
    %904 = vector.extract_strided_slice %831 {offsets = [10, 0, 0], sizes = [1, 1, 64], strides = [1, 1, 1]} : vector<16x1x64xf32> to vector<1x1x64xf32>
    %905 = vector.shape_cast %904 : vector<1x1x64xf32> to vector<1x64xf32>
    %906 = vector.broadcast %903 : vector<1x1xf32> to vector<1x64xf32>
    %907 = arith.mulf %906, %905 : vector<1x64xf32>
    %908 = arith.addf %901, %907 : vector<1x64xf32>
    %909 = vector.extract_strided_slice %832 {offsets = [11, 0, 0], sizes = [1, 1, 1], strides = [1, 1, 1]} : vector<16x1x1xf32> to vector<1x1x1xf32>
    %910 = vector.shape_cast %909 : vector<1x1x1xf32> to vector<1x1xf32>
    %911 = vector.extract_strided_slice %831 {offsets = [11, 0, 0], sizes = [1, 1, 64], strides = [1, 1, 1]} : vector<16x1x64xf32> to vector<1x1x64xf32>
    %912 = vector.shape_cast %911 : vector<1x1x64xf32> to vector<1x64xf32>
    %913 = vector.broadcast %910 : vector<1x1xf32> to vector<1x64xf32>
    %914 = arith.mulf %913, %912 : vector<1x64xf32>
    %915 = arith.addf %908, %914 : vector<1x64xf32>
    %916 = vector.extract_strided_slice %832 {offsets = [12, 0, 0], sizes = [1, 1, 1], strides = [1, 1, 1]} : vector<16x1x1xf32> to vector<1x1x1xf32>
    %917 = vector.shape_cast %916 : vector<1x1x1xf32> to vector<1x1xf32>
    %918 = vector.extract_strided_slice %831 {offsets = [12, 0, 0], sizes = [1, 1, 64], strides = [1, 1, 1]} : vector<16x1x64xf32> to vector<1x1x64xf32>
    %919 = vector.shape_cast %918 : vector<1x1x64xf32> to vector<1x64xf32>
    %920 = vector.broadcast %917 : vector<1x1xf32> to vector<1x64xf32>
    %921 = arith.mulf %920, %919 : vector<1x64xf32>
    %922 = arith.addf %915, %921 : vector<1x64xf32>
    %923 = vector.extract_strided_slice %832 {offsets = [13, 0, 0], sizes = [1, 1, 1], strides = [1, 1, 1]} : vector<16x1x1xf32> to vector<1x1x1xf32>
    %924 = vector.shape_cast %923 : vector<1x1x1xf32> to vector<1x1xf32>
    %925 = vector.extract_strided_slice %831 {offsets = [13, 0, 0], sizes = [1, 1, 64], strides = [1, 1, 1]} : vector<16x1x64xf32> to vector<1x1x64xf32>
    %926 = vector.shape_cast %925 : vector<1x1x64xf32> to vector<1x64xf32>
    %927 = vector.broadcast %924 : vector<1x1xf32> to vector<1x64xf32>
    %928 = arith.mulf %927, %926 : vector<1x64xf32>
    %929 = arith.addf %922, %928 : vector<1x64xf32>
    %930 = vector.extract_strided_slice %832 {offsets = [14, 0, 0], sizes = [1, 1, 1], strides = [1, 1, 1]} : vector<16x1x1xf32> to vector<1x1x1xf32>
    %931 = vector.shape_cast %930 : vector<1x1x1xf32> to vector<1x1xf32>
    %932 = vector.extract_strided_slice %831 {offsets = [14, 0, 0], sizes = [1, 1, 64], strides = [1, 1, 1]} : vector<16x1x64xf32> to vector<1x1x64xf32>
    %933 = vector.shape_cast %932 : vector<1x1x64xf32> to vector<1x64xf32>
    %934 = vector.broadcast %931 : vector<1x1xf32> to vector<1x64xf32>
    %935 = arith.mulf %934, %933 : vector<1x64xf32>
    %936 = arith.addf %929, %935 : vector<1x64xf32>
    %937 = vector.extract_strided_slice %832 {offsets = [15, 0, 0], sizes = [1, 1, 1], strides = [1, 1, 1]} : vector<16x1x1xf32> to vector<1x1x1xf32>
    %938 = vector.shape_cast %937 : vector<1x1x1xf32> to vector<1x1xf32>
    %939 = vector.extract_strided_slice %831 {offsets = [15, 0, 0], sizes = [1, 1, 64], strides = [1, 1, 1]} : vector<16x1x64xf32> to vector<1x1x64xf32>
    %940 = vector.shape_cast %939 : vector<1x1x64xf32> to vector<1x64xf32>
    %941 = vector.broadcast %938 : vector<1x1xf32> to vector<1x64xf32>
    %942 = arith.mulf %941, %940 : vector<1x64xf32>
    %943 = arith.addf %936, %942 : vector<1x64xf32>
    %944 = vector.extract_strided_slice %119 {offsets = [0, 7, 0], sizes = [16, 1, 64], strides = [1, 1, 1]} : vector<16x8x64xf32> to vector<16x1x64xf32>
    %945 = arith.mulf %944, %831 : vector<16x1x64xf32>
    %946 = vector.extract_strided_slice %131 {offsets = [0, 7, 0], sizes = [16, 1, 64], strides = [1, 1, 1]} : vector<16x8x64xf32> to vector<16x1x64xf32>
    %947 = arith.addf %945, %946 : vector<16x1x64xf32>
    %948 = vector.extract_strided_slice %127 {offsets = [0, 7, 0], sizes = [16, 1, 1], strides = [1, 1, 1]} : vector<16x8x1xf32> to vector<16x1x1xf32>
    %949 = vector.extract_strided_slice %948 {offsets = [0, 0, 0], sizes = [1, 1, 1], strides = [1, 1, 1]} : vector<16x1x1xf32> to vector<1x1x1xf32>
    %950 = vector.shape_cast %949 : vector<1x1x1xf32> to vector<1x1xf32>
    %951 = vector.extract_strided_slice %947 {offsets = [0, 0, 0], sizes = [1, 1, 64], strides = [1, 1, 1]} : vector<16x1x64xf32> to vector<1x1x64xf32>
    %952 = vector.shape_cast %951 : vector<1x1x64xf32> to vector<1x64xf32>
    %953 = vector.broadcast %950 : vector<1x1xf32> to vector<1x64xf32>
    %954 = arith.mulf %953, %952 : vector<1x64xf32>
    %955 = vector.extract_strided_slice %948 {offsets = [1, 0, 0], sizes = [1, 1, 1], strides = [1, 1, 1]} : vector<16x1x1xf32> to vector<1x1x1xf32>
    %956 = vector.shape_cast %955 : vector<1x1x1xf32> to vector<1x1xf32>
    %957 = vector.extract_strided_slice %947 {offsets = [1, 0, 0], sizes = [1, 1, 64], strides = [1, 1, 1]} : vector<16x1x64xf32> to vector<1x1x64xf32>
    %958 = vector.shape_cast %957 : vector<1x1x64xf32> to vector<1x64xf32>
    %959 = vector.broadcast %956 : vector<1x1xf32> to vector<1x64xf32>
    %960 = arith.mulf %959, %958 : vector<1x64xf32>
    %961 = arith.addf %954, %960 : vector<1x64xf32>
    %962 = vector.extract_strided_slice %948 {offsets = [2, 0, 0], sizes = [1, 1, 1], strides = [1, 1, 1]} : vector<16x1x1xf32> to vector<1x1x1xf32>
    %963 = vector.shape_cast %962 : vector<1x1x1xf32> to vector<1x1xf32>
    %964 = vector.extract_strided_slice %947 {offsets = [2, 0, 0], sizes = [1, 1, 64], strides = [1, 1, 1]} : vector<16x1x64xf32> to vector<1x1x64xf32>
    %965 = vector.shape_cast %964 : vector<1x1x64xf32> to vector<1x64xf32>
    %966 = vector.broadcast %963 : vector<1x1xf32> to vector<1x64xf32>
    %967 = arith.mulf %966, %965 : vector<1x64xf32>
    %968 = arith.addf %961, %967 : vector<1x64xf32>
    %969 = vector.extract_strided_slice %948 {offsets = [3, 0, 0], sizes = [1, 1, 1], strides = [1, 1, 1]} : vector<16x1x1xf32> to vector<1x1x1xf32>
    %970 = vector.shape_cast %969 : vector<1x1x1xf32> to vector<1x1xf32>
    %971 = vector.extract_strided_slice %947 {offsets = [3, 0, 0], sizes = [1, 1, 64], strides = [1, 1, 1]} : vector<16x1x64xf32> to vector<1x1x64xf32>
    %972 = vector.shape_cast %971 : vector<1x1x64xf32> to vector<1x64xf32>
    %973 = vector.broadcast %970 : vector<1x1xf32> to vector<1x64xf32>
    %974 = arith.mulf %973, %972 : vector<1x64xf32>
    %975 = arith.addf %968, %974 : vector<1x64xf32>
    %976 = vector.extract_strided_slice %948 {offsets = [4, 0, 0], sizes = [1, 1, 1], strides = [1, 1, 1]} : vector<16x1x1xf32> to vector<1x1x1xf32>
    %977 = vector.shape_cast %976 : vector<1x1x1xf32> to vector<1x1xf32>
    %978 = vector.extract_strided_slice %947 {offsets = [4, 0, 0], sizes = [1, 1, 64], strides = [1, 1, 1]} : vector<16x1x64xf32> to vector<1x1x64xf32>
    %979 = vector.shape_cast %978 : vector<1x1x64xf32> to vector<1x64xf32>
    %980 = vector.broadcast %977 : vector<1x1xf32> to vector<1x64xf32>
    %981 = arith.mulf %980, %979 : vector<1x64xf32>
    %982 = arith.addf %975, %981 : vector<1x64xf32>
    %983 = vector.extract_strided_slice %948 {offsets = [5, 0, 0], sizes = [1, 1, 1], strides = [1, 1, 1]} : vector<16x1x1xf32> to vector<1x1x1xf32>
    %984 = vector.shape_cast %983 : vector<1x1x1xf32> to vector<1x1xf32>
    %985 = vector.extract_strided_slice %947 {offsets = [5, 0, 0], sizes = [1, 1, 64], strides = [1, 1, 1]} : vector<16x1x64xf32> to vector<1x1x64xf32>
    %986 = vector.shape_cast %985 : vector<1x1x64xf32> to vector<1x64xf32>
    %987 = vector.broadcast %984 : vector<1x1xf32> to vector<1x64xf32>
    %988 = arith.mulf %987, %986 : vector<1x64xf32>
    %989 = arith.addf %982, %988 : vector<1x64xf32>
    %990 = vector.extract_strided_slice %948 {offsets = [6, 0, 0], sizes = [1, 1, 1], strides = [1, 1, 1]} : vector<16x1x1xf32> to vector<1x1x1xf32>
    %991 = vector.shape_cast %990 : vector<1x1x1xf32> to vector<1x1xf32>
    %992 = vector.extract_strided_slice %947 {offsets = [6, 0, 0], sizes = [1, 1, 64], strides = [1, 1, 1]} : vector<16x1x64xf32> to vector<1x1x64xf32>
    %993 = vector.shape_cast %992 : vector<1x1x64xf32> to vector<1x64xf32>
    %994 = vector.broadcast %991 : vector<1x1xf32> to vector<1x64xf32>
    %995 = arith.mulf %994, %993 : vector<1x64xf32>
    %996 = arith.addf %989, %995 : vector<1x64xf32>
    %997 = vector.extract_strided_slice %948 {offsets = [7, 0, 0], sizes = [1, 1, 1], strides = [1, 1, 1]} : vector<16x1x1xf32> to vector<1x1x1xf32>
    %998 = vector.shape_cast %997 : vector<1x1x1xf32> to vector<1x1xf32>
    %999 = vector.extract_strided_slice %947 {offsets = [7, 0, 0], sizes = [1, 1, 64], strides = [1, 1, 1]} : vector<16x1x64xf32> to vector<1x1x64xf32>
    %1000 = vector.shape_cast %999 : vector<1x1x64xf32> to vector<1x64xf32>
    %1001 = vector.broadcast %998 : vector<1x1xf32> to vector<1x64xf32>
    %1002 = arith.mulf %1001, %1000 : vector<1x64xf32>
    %1003 = arith.addf %996, %1002 : vector<1x64xf32>
    %1004 = vector.extract_strided_slice %948 {offsets = [8, 0, 0], sizes = [1, 1, 1], strides = [1, 1, 1]} : vector<16x1x1xf32> to vector<1x1x1xf32>
    %1005 = vector.shape_cast %1004 : vector<1x1x1xf32> to vector<1x1xf32>
    %1006 = vector.extract_strided_slice %947 {offsets = [8, 0, 0], sizes = [1, 1, 64], strides = [1, 1, 1]} : vector<16x1x64xf32> to vector<1x1x64xf32>
    %1007 = vector.shape_cast %1006 : vector<1x1x64xf32> to vector<1x64xf32>
    %1008 = vector.broadcast %1005 : vector<1x1xf32> to vector<1x64xf32>
    %1009 = arith.mulf %1008, %1007 : vector<1x64xf32>
    %1010 = arith.addf %1003, %1009 : vector<1x64xf32>
    %1011 = vector.extract_strided_slice %948 {offsets = [9, 0, 0], sizes = [1, 1, 1], strides = [1, 1, 1]} : vector<16x1x1xf32> to vector<1x1x1xf32>
    %1012 = vector.shape_cast %1011 : vector<1x1x1xf32> to vector<1x1xf32>
    %1013 = vector.extract_strided_slice %947 {offsets = [9, 0, 0], sizes = [1, 1, 64], strides = [1, 1, 1]} : vector<16x1x64xf32> to vector<1x1x64xf32>
    %1014 = vector.shape_cast %1013 : vector<1x1x64xf32> to vector<1x64xf32>
    %1015 = vector.broadcast %1012 : vector<1x1xf32> to vector<1x64xf32>
    %1016 = arith.mulf %1015, %1014 : vector<1x64xf32>
    %1017 = arith.addf %1010, %1016 : vector<1x64xf32>
    %1018 = vector.extract_strided_slice %948 {offsets = [10, 0, 0], sizes = [1, 1, 1], strides = [1, 1, 1]} : vector<16x1x1xf32> to vector<1x1x1xf32>
    %1019 = vector.shape_cast %1018 : vector<1x1x1xf32> to vector<1x1xf32>
    %1020 = vector.extract_strided_slice %947 {offsets = [10, 0, 0], sizes = [1, 1, 64], strides = [1, 1, 1]} : vector<16x1x64xf32> to vector<1x1x64xf32>
    %1021 = vector.shape_cast %1020 : vector<1x1x64xf32> to vector<1x64xf32>
    %1022 = vector.broadcast %1019 : vector<1x1xf32> to vector<1x64xf32>
    %1023 = arith.mulf %1022, %1021 : vector<1x64xf32>
    %1024 = arith.addf %1017, %1023 : vector<1x64xf32>
    %1025 = vector.extract_strided_slice %948 {offsets = [11, 0, 0], sizes = [1, 1, 1], strides = [1, 1, 1]} : vector<16x1x1xf32> to vector<1x1x1xf32>
    %1026 = vector.shape_cast %1025 : vector<1x1x1xf32> to vector<1x1xf32>
    %1027 = vector.extract_strided_slice %947 {offsets = [11, 0, 0], sizes = [1, 1, 64], strides = [1, 1, 1]} : vector<16x1x64xf32> to vector<1x1x64xf32>
    %1028 = vector.shape_cast %1027 : vector<1x1x64xf32> to vector<1x64xf32>
    %1029 = vector.broadcast %1026 : vector<1x1xf32> to vector<1x64xf32>
    %1030 = arith.mulf %1029, %1028 : vector<1x64xf32>
    %1031 = arith.addf %1024, %1030 : vector<1x64xf32>
    %1032 = vector.extract_strided_slice %948 {offsets = [12, 0, 0], sizes = [1, 1, 1], strides = [1, 1, 1]} : vector<16x1x1xf32> to vector<1x1x1xf32>
    %1033 = vector.shape_cast %1032 : vector<1x1x1xf32> to vector<1x1xf32>
    %1034 = vector.extract_strided_slice %947 {offsets = [12, 0, 0], sizes = [1, 1, 64], strides = [1, 1, 1]} : vector<16x1x64xf32> to vector<1x1x64xf32>
    %1035 = vector.shape_cast %1034 : vector<1x1x64xf32> to vector<1x64xf32>
    %1036 = vector.broadcast %1033 : vector<1x1xf32> to vector<1x64xf32>
    %1037 = arith.mulf %1036, %1035 : vector<1x64xf32>
    %1038 = arith.addf %1031, %1037 : vector<1x64xf32>
    %1039 = vector.extract_strided_slice %948 {offsets = [13, 0, 0], sizes = [1, 1, 1], strides = [1, 1, 1]} : vector<16x1x1xf32> to vector<1x1x1xf32>
    %1040 = vector.shape_cast %1039 : vector<1x1x1xf32> to vector<1x1xf32>
    %1041 = vector.extract_strided_slice %947 {offsets = [13, 0, 0], sizes = [1, 1, 64], strides = [1, 1, 1]} : vector<16x1x64xf32> to vector<1x1x64xf32>
    %1042 = vector.shape_cast %1041 : vector<1x1x64xf32> to vector<1x64xf32>
    %1043 = vector.broadcast %1040 : vector<1x1xf32> to vector<1x64xf32>
    %1044 = arith.mulf %1043, %1042 : vector<1x64xf32>
    %1045 = arith.addf %1038, %1044 : vector<1x64xf32>
    %1046 = vector.extract_strided_slice %948 {offsets = [14, 0, 0], sizes = [1, 1, 1], strides = [1, 1, 1]} : vector<16x1x1xf32> to vector<1x1x1xf32>
    %1047 = vector.shape_cast %1046 : vector<1x1x1xf32> to vector<1x1xf32>
    %1048 = vector.extract_strided_slice %947 {offsets = [14, 0, 0], sizes = [1, 1, 64], strides = [1, 1, 1]} : vector<16x1x64xf32> to vector<1x1x64xf32>
    %1049 = vector.shape_cast %1048 : vector<1x1x64xf32> to vector<1x64xf32>
    %1050 = vector.broadcast %1047 : vector<1x1xf32> to vector<1x64xf32>
    %1051 = arith.mulf %1050, %1049 : vector<1x64xf32>
    %1052 = arith.addf %1045, %1051 : vector<1x64xf32>
    %1053 = vector.extract_strided_slice %948 {offsets = [15, 0, 0], sizes = [1, 1, 1], strides = [1, 1, 1]} : vector<16x1x1xf32> to vector<1x1x1xf32>
    %1054 = vector.shape_cast %1053 : vector<1x1x1xf32> to vector<1x1xf32>
    %1055 = vector.extract_strided_slice %947 {offsets = [15, 0, 0], sizes = [1, 1, 64], strides = [1, 1, 1]} : vector<16x1x64xf32> to vector<1x1x64xf32>
    %1056 = vector.shape_cast %1055 : vector<1x1x64xf32> to vector<1x64xf32>
    %1057 = vector.broadcast %1054 : vector<1x1xf32> to vector<1x64xf32>
    %1058 = arith.mulf %1057, %1056 : vector<1x64xf32>
    %1059 = arith.addf %1052, %1058 : vector<1x64xf32>
    %1060 = tpu.concatenate %247, %363, %479, %595, %711, %827, %943, %1059 in 0 : vector<1x64xf32>, vector<1x64xf32>, vector<1x64xf32>, vector<1x64xf32>, vector<1x64xf32>, vector<1x64xf32>, vector<1x64xf32>, vector<1x64xf32> -> vector<8x64xf32>
    %c0_65 = arith.constant 0 : index
    %c0_66 = arith.constant 0 : index
    %1061 = vector.load %arg19[%c0_65, %c0_66] : memref<8x64xf32, #tpu.memory_space<vmem>>, vector<8x64xf32>
    tpu.vector_store %arg19[%c0_65, %c0_66], %1060 {strides = array<i32>} : memref<8x64xf32, #tpu.memory_space<vmem>>, vector<8x64xf32>,
    %c0_67 = arith.constant 0 : index
    %c0_68 = arith.constant 0 : index
    %c0_69 = arith.constant 0 : index
    %1062 = vector.load %arg20[%c0_67, %c0_68, %c0_69] : memref<16x1x64xf32, #tpu.memory_space<vmem>>, vector<16x1x64xf32>
    tpu.vector_store %arg20[%c0_67, %c0_68, %c0_69], %947 {strides = array<i32>} : memref<16x1x64xf32, #tpu.memory_space<vmem>>, vector<16x1x64xf32>,
    %c0_i32_70 = arith.constant 0 : i32
    %1063 = arith.cmpi eq, %arg1, %c0_i32_70 : i32
    %1064 = arith.extui %1063 : i1 to i32
    %c0_i32_71 = arith.constant 0 : i32
    %1065 = arith.cmpi ne, %1064, %c0_i32_71 : i32
    scf.if %1065 {
      %c0_83 = arith.constant 0 : index
      %c0_84 = arith.constant 0 : index
      %c0_85 = arith.constant 0 : index
      %c0_86 = arith.constant 0 : index
      %1083 = vector.load %arg15[%c0_83, %c0_84, %c0_85, %c0_86] : memref<1x16x1x64xf32, #tpu.memory_space<vmem>>, vector<1x16x1x64xf32>
      %1084 = vector.shape_cast %1083 : vector<1x16x1x64xf32> to vector<16x1x64xf32>
      %1085 = vector.shape_cast %947 : vector<16x1x64xf32> to vector<1x16x1x64xf32>
      tpu.vector_store %arg15[%c0_83, %c0_84, %c0_85, %c0_86], %1085 {strides = array<i32>} : memref<1x16x1x64xf32, #tpu.memory_space<vmem>>, vector<1x16x1x64xf32>,
    } else {
    }
    %c0_72 = arith.constant 0 : index
    %c0_73 = arith.constant 0 : index
    %1066 = vector.load %arg19[%c0_72, %c0_73] : memref<8x64xf32, #tpu.memory_space<vmem>>, vector<8x64xf32>
    %c0_74 = arith.constant 0 : index
    %c0_75 = arith.constant 0 : index
    %1067 = vector.load %arg11[%c0_74, %c0_75] : memref<1x64xf32, #tpu.memory_space<vmem>>, vector<1x64xf32>
    %1068 = vector.broadcast %1067 : vector<1x64xf32> to vector<8x64xf32>
    %1069 = arith.mulf %68, %1068 : vector<8x64xf32>
    %1070 = arith.addf %1066, %1069 : vector<8x64xf32>
    %cst_76 = arith.constant 0.000000e+00 : f32
    %1071 = vector.broadcast %cst_76 : f32 to vector<8x64xf32>
    %1072 = arith.subf %1071, %29 : vector<8x64xf32>
    %1073 = math.exp %1072 : vector<8x64xf32>
    %cst_77 = arith.constant 1.000000e+00 : f32
    %1074 = vector.broadcast %cst_77 : f32 to vector<8x64xf32>
    %1075 = arith.addf %1074, %1073 : vector<8x64xf32>
    %1076 = tpu.reciprocal %1075 {approx = true} : vector<8x64xf32> -> vector<8x64xf32>
    %1077 = arith.mulf %29, %1076 : vector<8x64xf32>
    %1078 = arith.mulf %1070, %1077 : vector<8x64xf32>
    %c0_78 = arith.constant 0 : index
    %c0_79 = arith.constant 0 : index
    %1079 = vector.load %arg12[%c0_78, %c0_79] : memref<64x32xf32, #tpu.memory_space<vmem>>, vector<64x32xf32>
    %cst_80 = arith.constant dense<0.000000e+00> : vector<8x32xf32>
    %1080 = tpu.matmul %1078, %1079, %cst_80 {dimension_numbers = #tpu.dot_dimension_numbers<[1], [0], [0], [1], [0, 0, 1, 1], [], []>} : vector<8x64xf32>, vector<64x32xf32>, vector<8x32xf32> -> vector<8x32xf32>
    %1081 = arith.addf %3, %1080 : vector<8x32xf32>
    %c0_81 = arith.constant 0 : index
    %c0_82 = arith.constant 0 : index
    %1082 = vector.load %arg13[%c0_81, %c0_82] : memref<8x32xf32, #tpu.memory_space<vmem>>, vector<8x32xf32>
    tpu.vector_store %arg13[%c0_81, %c0_82], %1081 {strides = array<i32>} : memref<8x32xf32, #tpu.memory_space<vmem>>, vector<8x32xf32>,
    return
  }
  func.func @transform_0(%arg0: i32, %arg1: i32) -> (i32, i32) {
    %c1_i32 = arith.constant 1 : i32
    %0 = arith.muli %arg0, %c1_i32 : i32
    %1 = arith.addi %0, %arg1 : i32
    %c0_i32 = arith.constant 0 : i32
    %c0_i32_0 = arith.constant 0 : i32
    return %1, %c0_i32 : i32, i32
  }
  func.func @transform_1(%arg0: i32, %arg1: i32) -> (i32, i32) {
    %c0_i32 = arith.constant 0 : i32
    %c0_i32_0 = arith.constant 0 : i32
    %c0_i32_1 = arith.constant 0 : i32
    return %c0_i32, %c0_i32_0 : i32, i32
  }
  func.func @transform_2(%arg0: i32, %arg1: i32) -> (i32, i32) {
    %c0_i32 = arith.constant 0 : i32
    %c0_i32_0 = arith.constant 0 : i32
    %c0_i32_1 = arith.constant 0 : i32
    return %c0_i32, %c0_i32_0 : i32, i32
  }
  func.func @transform_3(%arg0: i32, %arg1: i32) -> (i32, i32) {
    %c0_i32 = arith.constant 0 : i32
    %c0_i32_0 = arith.constant 0 : i32
    %c0_i32_1 = arith.constant 0 : i32
    return %c0_i32, %c0_i32_0 : i32, i32
  }
  func.func @transform_4(%arg0: i32, %arg1: i32) -> (i32, i32) {
    %c0_i32 = arith.constant 0 : i32
    %c0_i32_0 = arith.constant 0 : i32
    %c0_i32_1 = arith.constant 0 : i32
    return %c0_i32, %c0_i32_0 : i32, i32
  }
  func.func @transform_5(%arg0: i32, %arg1: i32) -> (i32, i32) {
    %c0_i32 = arith.constant 0 : i32
    %c0_i32_0 = arith.constant 0 : i32
    %c0_i32_1 = arith.constant 0 : i32
    return %c0_i32, %c0_i32_0 : i32, i32
  }
  func.func @transform_6(%arg0: i32, %arg1: i32) -> (i32, i32) {
    %c0_i32 = arith.constant 0 : i32
    %c0_i32_0 = arith.constant 0 : i32
    %c0_i32_1 = arith.constant 0 : i32
    return %c0_i32, %c0_i32_0 : i32, i32
  }
  func.func @transform_7(%arg0: i32, %arg1: i32) -> (i32, i32) {
    %c0_i32 = arith.constant 0 : i32
    %c0_i32_0 = arith.constant 0 : i32
    %c0_i32_1 = arith.constant 0 : i32
    return %c0_i32, %c0_i32_0 : i32, i32
  }
  func.func @transform_8(%arg0: i32, %arg1: i32) -> (i32, i32, i32) {
    %c0_i32 = arith.constant 0 : i32
    %c0_i32_0 = arith.constant 0 : i32
    %c0_i32_1 = arith.constant 0 : i32
    %c0_i32_2 = arith.constant 0 : i32
    return %c0_i32, %c0_i32_0, %c0_i32_1 : i32, i32, i32
  }
  func.func @transform_9(%arg0: i32, %arg1: i32) -> (i32, i32) {
    %c0_i32 = arith.constant 0 : i32
    %c0_i32_0 = arith.constant 0 : i32
    %c0_i32_1 = arith.constant 0 : i32
    return %c0_i32, %c0_i32_0 : i32, i32
  }
  func.func @transform_10(%arg0: i32, %arg1: i32) -> (i32, i32) {
    %c0_i32 = arith.constant 0 : i32
    %c0_i32_0 = arith.constant 0 : i32
    %c0_i32_1 = arith.constant 0 : i32
    return %c0_i32, %c0_i32_0 : i32, i32
  }
  func.func @transform_11(%arg0: i32, %arg1: i32) -> (i32, i32) {
    %c1_i32 = arith.constant 1 : i32
    %0 = arith.muli %arg0, %c1_i32 : i32
    %1 = arith.addi %0, %arg1 : i32
    %c0_i32 = arith.constant 0 : i32
    %c0_i32_0 = arith.constant 0 : i32
    return %1, %c0_i32 : i32, i32
  }
  func.func @transform_12(%arg0: i32, %arg1: i32) -> (i32, i32, i32, i32) {
    %c0_i32 = arith.constant 0 : i32
    %c0_i32_0 = arith.constant 0 : i32
    %c0_i32_1 = arith.constant 0 : i32
    %c0_i32_2 = arith.constant 0 : i32
    return %arg0, %c0_i32, %c0_i32_0, %c0_i32_1 : i32, i32, i32, i32
  }
  func.func @transform_13(%arg0: i32, %arg1: i32) -> (i32, i32, i32, i32) {
    %c0_i32 = arith.constant 0 : i32
    %c0_i32_0 = arith.constant 0 : i32
    %c0_i32_1 = arith.constant 0 : i32
    %c0_i32_2 = arith.constant 0 : i32
    return %arg0, %c0_i32, %c0_i32_0, %c0_i32_1 : i32, i32, i32, i32
  }
}

</mosaic_0001>

<llo_original>
// kernel: tpu_custom_call.1
$region0: #{tpu_custom_call.1}
  #allocation0 [shape = 'u32[]', space=smem, size = 0x4, offset = 0x4, fixed_abs, tag = 'smem constant byte address 0x4 - core index']
  #allocation1 [shape = 'u32[72,128]{1,0:T(1,128)}', space=vmem, size = 0x9000, scoped, tag = 'internal scratch']
  #allocation2 [shape = 'f32[8,64]{1,0:T(8,128)}', space=vmem, size = 0x1000, scoped, tag = 'scratch operand']
  #allocation3 [shape = 'f32[8,64]{1,0:T(8,128)}', space=vmem, size = 0x1000, scoped, tag = 'scratch operand']
  #allocation4 [shape = 'f32[8,32]{1,0:T(8,128)}', space=vmem, size = 0x1000, scoped, tag = 'scratch operand']
  #allocation5 [shape = 'f32[8,64]{1,0:T(8,128)}', space=vmem, size = 0x1000, scoped, tag = 'scratch operand']
  #allocation6 [shape = 'f32[16,1,64]{2,1,0:T(1,128)}', space=vmem, size = 0x2000, scoped, tag = 'scratch operand']
  #allocation7 [shape = 'f32[3,1,64]{2,1,0:T(1,128)}', space=vmem, size = 0x600, scoped, tag = 'scratch operand']
  %s0 = inlined_call_operand.hbm [shape: f32[16,32], index: 0, kind: input, shape index: {}]
  %s1 = inlined_call_operand.vmem [shape: f32[1,32], index: 1, kind: input, shape index: {}]
  %s2 = inlined_call_operand.hbm [shape: f32[1,32], index: 2, kind: input, shape index: {}]
  %s3 = inlined_call_operand.vmem [shape: f32[32,128], index: 3, kind: input, shape index: {}]
  %s4 = inlined_call_operand.vmem [shape: f32[4,64], index: 4, kind: input, shape index: {}]
  %s5 = inlined_call_operand.hbm [shape: f32[1,64], index: 5, kind: input, shape index: {}]
  %s6 = inlined_call_operand.vmem [shape: f32[64,96], index: 6, kind: input, shape index: {}]
  %s7 = inlined_call_operand.hbm [shape: f32[1,64], index: 7, kind: input, shape index: {}]
  %s8 = inlined_call_operand.hbm [shape: f32[16,1,64], index: 8, kind: input, shape index: {}]
  %s9 = inlined_call_operand.vmem [shape: f32[1,64], index: 9, kind: input, shape index: {}]
  %s10 = inlined_call_operand.vmem [shape: f32[64,32], index: 10, kind: input, shape index: {}]
  %s11 = inlined_call_operand.hbm [shape: f32[16,32], index: 11, kind: output, shape index: {0}]
  %s12 = inlined_call_operand.hbm [shape: f32[2,3,1,64], index: 12, kind: output, shape index: {1}]
  %s13 = inlined_call_operand.hbm [shape: f32[2,16,1,64], index: 13, kind: output, shape index: {2}]
  %14 = xla_tuple %s11, %s12, %s13
  %s15 = sld [smem:[#allocation0]]
  $region125: #{tpu_custom_call.1} parent=0
    _
  %s17 = ssub.s32 1, %s15
  %s18 = scalar_select 0, %s17, %s15
  $region1: #{tpu_custom_call.1} parent=0
    #allocation8 [shape = 'u8[8192]{0}', space=vmem, size = 0x2000, scoped, tag = 'input window, operand 0']
    #allocation9 [shape = 's32[2]{0}', space=sflag, size = 0x8, scoped, tag = 'scoped memory for tpu_custom_call.1']
    #allocation10 [shape = 's32[2]{0}', space=sflag, size = 0x8, scoped, tag = 'scoped memory for tpu_custom_call.1']
    #allocation11 [shape = 'u8[512]{0}', space=vmem, size = 0x400, scoped, tag = 'input window, operand 2, single buffered']
    #allocation12 [shape = 's32[1]{0}', space=sflag, size = 0x4, scoped, tag = 'scoped memory for tpu_custom_call.1']
    #allocation13 [shape = 'u8[512]{0}', space=vmem, size = 0x400, scoped, tag = 'input window, operand 5, single buffered']
    #allocation14 [shape = 'u8[512]{0}', space=vmem, size = 0x400, scoped, tag = 'input window, operand 7, single buffered']
    #allocation15 [shape = 's32[1]{0}', space=sflag, size = 0x4, scoped, tag = 'scoped memory for tpu_custom_call.1']
    #allocation16 [shape = 'u8[8192]{0}', space=vmem, size = 0x2000, scoped, tag = 'input window, operand 8, single buffered']
    #allocation17 [shape = 'u8[8192]{0}', space=vmem, size = 0x2000, scoped, tag = 'output window, operand 0']
    #allocation18 [shape = 'u8[3072]{0}', space=vmem, size = 0xc00, scoped, tag = 'output window, operand 1']
    #allocation19 [shape = 's32[2]{0}', space=sflag, size = 0x8, scoped, tag = 'scoped memory for tpu_custom_call.1']
    #allocation20 [shape = 'u8[16384]{0}', space=vmem, size = 0x4000, scoped, tag = 'output window, operand 2']
    %19 = vsyncpa [#allocation9], 0
    %s20 = scalar_lea.sflag [#allocation9], 1
    %21 = vsyncpa %s20, 0
    %22 = vsyncpa [#allocation12], 0
    %23 = vsyncpa [#allocation15], 0
    %24 = vsyncpa [#allocation10], 0
    %s25 = scalar_lea.sflag [#allocation10], 1
    %26 = vsyncpa %s25, 0
    %27 = vsyncpa [#allocation19], 0
    %s28 = scalar_lea.sflag [#allocation19], 1
    %29 = vsyncpa %s28, 0
    loop: start=0, step=1, limit=4
    $region2: #{tpu_custom_call.1} parent=1 // loop_pre_header
      _
    $region3: #{tpu_custom_call.1} parent=1 // loop_header
      %s31 = sphi 0, %s35
      %p32 = scmp.ge.s32.totalorder %s31, 4
      %s38 = sphi 0, %s50
      %s39 = sphi 0, %s46
      %s40 = sphi 0, %s38
      %s41 = sphi 0, %s39
      %s42 = sphi 0, %s40
      %s43 = sphi 0, %s41
      %s55 = sphi 0, %s57
      %s58 = sphi 0, %s55
      %s59 = sphi 0, %s58
      %s75 = sphi 0, %s59
      %s79 = sphi 0, %s79
      %s81 = sphi 0, %s79
      %s82 = sphi 0, %s81
      %s96 = sphi 0, %s82
      %s100 = sphi 0, %s100
      %s102 = sphi 0, %s100
      %s103 = sphi 0, %s102
      %s117 = sphi 0, %s103
      %s121 = sphi 0, %s121
      %s123 = sphi 0, %s121
      %s124 = sphi 0, %s123
      %s138 = sphi 0, %s124
      %s142 = sphi 0, %s142
      %s144 = sphi 0, %s142
      %s145 = sphi 0, %s144
      %s159 = sphi 0, %s145
      %s163 = sphi 0, %s163
      %s165 = sphi 0, %s163
      %s166 = sphi 0, %s165
      %s180 = sphi 0, %s166
      %s184 = sphi 0, %s184
      %s186 = sphi 0, %s184
      %s187 = sphi 0, %s186
      %s201 = sphi 0, %s187
      %s205 = sphi 0, %s205
      %s207 = sphi 0, %s205
      %s208 = sphi 0, %s207
      %s222 = sphi 0, %s208
      %s226 = sphi 0, %s226
      %s228 = sphi 0, %s226
      %s229 = sphi 0, %s228
      %s243 = sphi 0, %s229
      %s247 = sphi 0, %s247
      %s249 = sphi 0, %s247
      %s250 = sphi 0, %s249
      %s264 = sphi 0, %s250
      %s268 = sphi 0, %s268
      %s270 = sphi 0, %s268
      %s271 = sphi 0, %s270
      %s285 = sphi 0, %s271
      %s293 = sphi 0, %s295
      %s296 = sphi 0, %s293
      %s297 = sphi 0, %s296
      %s313 = sphi 0, %s297
      %s319 = sphi 0, %s321
      %s322 = sphi 0, %s319
      %s323 = sphi 0, %s322
      %s339 = sphi 0, %s323
      %s345 = sphi 0, %s347
      %s348 = sphi 0, %s345
      %s349 = sphi 0, %s348
      %s365 = sphi 0, %s349
    $region4: #{tpu_custom_call.1} parent=1 // loop_header_branch
      %34 = sbr.rel (%p32) target = $region8
    $region5: #{tpu_custom_call.1} parent=1 // loop_body
      %s36 = ssub.s32 %s31, 1
      %s37 = ssub.s32 %s31, 2
      %s44 = sadd.s32 1, %s39
      %p45 = scmp.ge.s32.totalorder %s44, 1
      %s46 = scalar_select %p45, 0, %s44
      %s47 = sadd.s32 1, %s38
      %s48 = scalar_select %p45, %s47, %s38
      %p49 = scmp.ge.s32.totalorder %s48, 2
      %s50 = scalar_select %p49, 0, %s48
      %s51 = sadd.s32 %s38, %s39
      %s52 = sadd.s32 %s50, %s46
      %s53 = ssub.s32 %s51, %s52
      %p54 = scmp.eq.s32.totalorder %s53, 0
      %s56 = sadd.s32 %s55, 1
      %s57 = scalar_select %p54, %s55, %s56
      %p60 = pneg %p54
      %p61 = scmp.eq.s32.totalorder %s31, 1
      %p62 = por %p60, %p61
      %p63 = scmp.ne.s32.totalorder %s55, %s58
      %p64 = scmp.eq.s32.totalorder %s31, 0
      %p65 = por %p63, %p64
      %p66 = scmp.ne.s32.totalorder %s55, %s58
      %p67 = scmp.eq.s32.totalorder %s36, 1
      %p68 = por %p66, %p67
      %p69 = scmp.ne.s32.totalorder %s58, %s59
      %p70 = scmp.eq.s32.totalorder %s36, 0
      %p71 = por %p69, %p70
      %p72 = scmp.ne.s32.totalorder %s58, %s59
      %p73 = scmp.eq.s32.totalorder %s37, 1
      %p74 = por %p72, %p73
      %p76 = scmp.ne.s32.totalorder %s59, %s75
      %p77 = scmp.eq.s32.totalorder %s37, 0
      %p78 = por %p76, %p77
      %s80 = sadd.s32 %s79, 1
      %p83 = scmp.eq.s32.totalorder %s31, 1
      %p84 = scmp.ne.s32.totalorder %s79, %s81
      %p85 = scmp.eq.s32.totalorder %s31, 0
      %p86 = por %p84, %p85
      %p87 = scmp.ne.s32.totalorder %s79, %s81
      %p88 = scmp.eq.s32.totalorder %s36, 1
      %p89 = por %p87, %p88
      %p90 = scmp.ne.s32.totalorder %s81, %s82
      %p91 = scmp.eq.s32.totalorder %s36, 0
      %p92 = por %p90, %p91
      %p93 = scmp.ne.s32.totalorder %s81, %s82
      %p94 = scmp.eq.s32.totalorder %s37, 1
      %p95 = por %p93, %p94
      %p97 = scmp.ne.s32.totalorder %s82, %s96
      %p98 = scmp.eq.s32.totalorder %s37, 0
      %p99 = por %p97, %p98
      %s101 = sadd.s32 %s100, 1
      %p104 = scmp.eq.s32.totalorder %s31, 1
      %p105 = scmp.ne.s32.totalorder %s100, %s102
      %p106 = scmp.eq.s32.totalorder %s31, 0
      %p107 = por %p105, %p106
      %p108 = scmp.ne.s32.totalorder %s100, %s102
      %p109 = scmp.eq.s32.totalorder %s36, 1
      %p110 = por %p108, %p109
      %p111 = scmp.ne.s32.totalorder %s102, %s103
      %p112 = scmp.eq.s32.totalorder %s36, 0
      %p113 = por %p111, %p112
      %p114 = scmp.ne.s32.totalorder %s102, %s103
      %p115 = scmp.eq.s32.totalorder %s37, 1
      %p116 = por %p114, %p115
      %p118 = scmp.ne.s32.totalorder %s103, %s117
      %p119 = scmp.eq.s32.totalorder %s37, 0
      %p120 = por %p118, %p119
      %s122 = sadd.s32 %s121, 1
      %p125 = scmp.eq.s32.totalorder %s31, 1
      %p126 = scmp.ne.s32.totalorder %s121, %s123
      %p127 = scmp.eq.s32.totalorder %s31, 0
      %p128 = por %p126, %p127
      %p129 = scmp.ne.s32.totalorder %s121, %s123
      %p130 = scmp.eq.s32.totalorder %s36, 1
      %p131 = por %p129, %p130
      %p132 = scmp.ne.s32.totalorder %s123, %s124
      %p133 = scmp.eq.s32.totalorder %s36, 0
      %p134 = por %p132, %p133
      %p135 = scmp.ne.s32.totalorder %s123, %s124
      %p136 = scmp.eq.s32.totalorder %s37, 1
      %p137 = por %p135, %p136
      %p139 = scmp.ne.s32.totalorder %s124, %s138
      %p140 = scmp.eq.s32.totalorder %s37, 0
      %p141 = por %p139, %p140
      %s143 = sadd.s32 %s142, 1
      %p146 = scmp.eq.s32.totalorder %s31, 1
      %p147 = scmp.ne.s32.totalorder %s142, %s144
      %p148 = scmp.eq.s32.totalorder %s31, 0
      %p149 = por %p147, %p148
      %p150 = scmp.ne.s32.totalorder %s142, %s144
      %p151 = scmp.eq.s32.totalorder %s36, 1
      %p152 = por %p150, %p151
      %p153 = scmp.ne.s32.totalorder %s144, %s145
      %p154 = scmp.eq.s32.totalorder %s36, 0
      %p155 = por %p153, %p154
      %p156 = scmp.ne.s32.totalorder %s144, %s145
      %p157 = scmp.eq.s32.totalorder %s37, 1
      %p158 = por %p156, %p157
      %p160 = scmp.ne.s32.totalorder %s145, %s159
      %p161 = scmp.eq.s32.totalorder %s37, 0
      %p162 = por %p160, %p161
      %s164 = sadd.s32 %s163, 1
      %p167 = scmp.eq.s32.totalorder %s31, 1
      %p168 = scmp.ne.s32.totalorder %s163, %s165
      %p169 = scmp.eq.s32.totalorder %s31, 0
      %p170 = por %p168, %p169
      %p171 = scmp.ne.s32.totalorder %s163, %s165
      %p172 = scmp.eq.s32.totalorder %s36, 1
      %p173 = por %p171, %p172
      %p174 = scmp.ne.s32.totalorder %s165, %s166
      %p175 = scmp.eq.s32.totalorder %s36, 0
      %p176 = por %p174, %p175
      %p177 = scmp.ne.s32.totalorder %s165, %s166
      %p178 = scmp.eq.s32.totalorder %s37, 1
      %p179 = por %p177, %p178
      %p181 = scmp.ne.s32.totalorder %s166, %s180
      %p182 = scmp.eq.s32.totalorder %s37, 0
      %p183 = por %p181, %p182
      %s185 = sadd.s32 %s184, 1
      %p188 = scmp.eq.s32.totalorder %s31, 1
      %p189 = scmp.ne.s32.totalorder %s184, %s186
      %p190 = scmp.eq.s32.totalorder %s31, 0
      %p191 = por %p189, %p190
      %p192 = scmp.ne.s32.totalorder %s184, %s186
      %p193 = scmp.eq.s32.totalorder %s36, 1
      %p194 = por %p192, %p193
      %p195 = scmp.ne.s32.totalorder %s186, %s187
      %p196 = scmp.eq.s32.totalorder %s36, 0
      %p197 = por %p195, %p196
      %p198 = scmp.ne.s32.totalorder %s186, %s187
      %p199 = scmp.eq.s32.totalorder %s37, 1
      %p200 = por %p198, %p199
      %p202 = scmp.ne.s32.totalorder %s187, %s201
      %p203 = scmp.eq.s32.totalorder %s37, 0
      %p204 = por %p202, %p203
      %s206 = sadd.s32 %s205, 1
      %p209 = scmp.eq.s32.totalorder %s31, 1
      %p210 = scmp.ne.s32.totalorder %s205, %s207
      %p211 = scmp.eq.s32.totalorder %s31, 0
      %p212 = por %p210, %p211
      %p213 = scmp.ne.s32.totalorder %s205, %s207
      %p214 = scmp.eq.s32.totalorder %s36, 1
      %p215 = por %p213, %p214
      %p216 = scmp.ne.s32.totalorder %s207, %s208
      %p217 = scmp.eq.s32.totalorder %s36, 0
      %p218 = por %p216, %p217
      %p219 = scmp.ne.s32.totalorder %s207, %s208
      %p220 = scmp.eq.s32.totalorder %s37, 1
      %p221 = por %p219, %p220
      %p223 = scmp.ne.s32.totalorder %s208, %s222
      %p224 = scmp.eq.s32.totalorder %s37, 0
      %p225 = por %p223, %p224
      %s227 = sadd.s32 %s226, 1
      %p230 = scmp.eq.s32.totalorder %s31, 1
      %p231 = scmp.ne.s32.totalorder %s226, %s228
      %p232 = scmp.eq.s32.totalorder %s31, 0
      %p233 = por %p231, %p232
      %p234 = scmp.ne.s32.totalorder %s226, %s228
      %p235 = scmp.eq.s32.totalorder %s36, 1
      %p236 = por %p234, %p235
      %p237 = scmp.ne.s32.totalorder %s228, %s229
      %p238 = scmp.eq.s32.totalorder %s36, 0
      %p239 = por %p237, %p238
      %p240 = scmp.ne.s32.totalorder %s228, %s229
      %p241 = scmp.eq.s32.totalorder %s37, 1
      %p242 = por %p240, %p241
      %p244 = scmp.ne.s32.totalorder %s229, %s243
      %p245 = scmp.eq.s32.totalorder %s37, 0
      %p246 = por %p244, %p245
      %s248 = sadd.s32 %s247, 1
      %p251 = scmp.eq.s32.totalorder %s31, 1
      %p252 = scmp.ne.s32.totalorder %s247, %s249
      %p253 = scmp.eq.s32.totalorder %s31, 0
      %p254 = por %p252, %p253
      %p255 = scmp.ne.s32.totalorder %s247, %s249
      %p256 = scmp.eq.s32.totalorder %s36, 1
      %p257 = por %p255, %p256
      %p258 = scmp.ne.s32.totalorder %s249, %s250
      %p259 = scmp.eq.s32.totalorder %s36, 0
      %p260 = por %p258, %p259
      %p261 = scmp.ne.s32.totalorder %s249, %s250
      %p262 = scmp.eq.s32.totalorder %s37, 1
      %p263 = por %p261, %p262
      %p265 = scmp.ne.s32.totalorder %s250, %s264
      %p266 = scmp.eq.s32.totalorder %s37, 0
      %p267 = por %p265, %p266
      %s269 = sadd.s32 %s268, 1
      %p272 = scmp.eq.s32.totalorder %s31, 1
      %p273 = scmp.ne.s32.totalorder %s268, %s270
      %p274 = scmp.eq.s32.totalorder %s31, 0
      %p275 = por %p273, %p274
      %p276 = scmp.ne.s32.totalorder %s268, %s270
      %p277 = scmp.eq.s32.totalorder %s36, 1
      %p278 = por %p276, %p277
      %p279 = scmp.ne.s32.totalorder %s270, %s271
      %p280 = scmp.eq.s32.totalorder %s36, 0
      %p281 = por %p279, %p280
      %p282 = scmp.ne.s32.totalorder %s270, %s271
      %p283 = scmp.eq.s32.totalorder %s37, 1
      %p284 = por %p282, %p283
      %p286 = scmp.ne.s32.totalorder %s271, %s285
      %p287 = scmp.eq.s32.totalorder %s37, 0
      %p288 = por %p286, %p287
      %s289 = sadd.s32 %s38, %s39
      %s290 = sadd.s32 %s50, %s46
      %s291 = ssub.s32 %s289, %s290
      %p292 = scmp.eq.s32.totalorder %s291, 0
      %s294 = sadd.s32 %s293, 1
      %s295 = scalar_select %p292, %s293, %s294
      %p298 = pneg %p292
      %p299 = scmp.eq.s32.totalorder %s31, 1
      %p300 = por %p298, %p299
      %p301 = scmp.ne.s32.totalorder %s293, %s296
      %p302 = scmp.eq.s32.totalorder %s31, 0
      %p303 = por %p301, %p302
      %p304 = scmp.ne.s32.totalorder %s293, %s296
      %p305 = scmp.eq.s32.totalorder %s36, 1
      %p306 = por %p304, %p305
      %p307 = scmp.ne.s32.totalorder %s296, %s297
      %p308 = scmp.eq.s32.totalorder %s36, 0
      %p309 = por %p307, %p308
      %p310 = scmp.ne.s32.totalorder %s296, %s297
      %p311 = scmp.eq.s32.totalorder %s37, 1
      %p312 = por %p310, %p311
      %p314 = scmp.ne.s32.totalorder %s297, %s313
      %p315 = scmp.eq.s32.totalorder %s37, 0
      %p316 = por %p314, %p315
      %s317 = ssub.s32 %s38, %s50
      %p318 = scmp.eq.s32.totalorder %s317, 0
      %s320 = sadd.s32 %s319, 1
      %s321 = scalar_select %p318, %s319, %s320
      %p324 = pneg %p318
      %p325 = scmp.eq.s32.totalorder %s31, 1
      %p326 = por %p324, %p325
      %p327 = scmp.ne.s32.totalorder %s319, %s322
      %p328 = scmp.eq.s32.totalorder %s31, 0
      %p329 = por %p327, %p328
      %p330 = scmp.ne.s32.totalorder %s319, %s322
      %p331 = scmp.eq.s32.totalorder %s36, 1
      %p332 = por %p330, %p331
      %p333 = scmp.ne.s32.totalorder %s322, %s323
      %p334 = scmp.eq.s32.totalorder %s36, 0
      %p335 = por %p333, %p334
      %p336 = scmp.ne.s32.totalorder %s322, %s323
      %p337 = scmp.eq.s32.totalorder %s37, 1
      %p338 = por %p336, %p337
      %p340 = scmp.ne.s32.totalorder %s323, %s339
      %p341 = scmp.eq.s32.totalorder %s37, 0
      %p342 = por %p340, %p341
      %s343 = ssub.s32 %s38, %s50
      %p344 = scmp.eq.s32.totalorder %s343, 0
      %s346 = sadd.s32 %s345, 1
      %s347 = scalar_select %p344, %s345, %s346
      %p350 = pneg %p344
      %p351 = scmp.eq.s32.totalorder %s31, 1
      %p352 = por %p350, %p351
      %p353 = scmp.ne.s32.totalorder %s345, %s348
      %p354 = scmp.eq.s32.totalorder %s31, 0
      %p355 = por %p353, %p354
      %p356 = scmp.ne.s32.totalorder %s345, %s348
      %p357 = scmp.eq.s32.totalorder %s36, 1
      %p358 = por %p356, %p357
      %p359 = scmp.ne.s32.totalorder %s348, %s349
      %p360 = scmp.eq.s32.totalorder %s36, 0
      %p361 = por %p359, %p360
      %p362 = scmp.ne.s32.totalorder %s348, %s349
      %p363 = scmp.eq.s32.totalorder %s37, 1
      %p364 = por %p362, %p363
      %p366 = scmp.ne.s32.totalorder %s349, %s365
      %p367 = scmp.eq.s32.totalorder %s37, 0
      %p368 = por %p366, %p367
      %p369 = scmp.le.s32.totalorder 1, %s31
      %p370 = scmp.lt.s32.totalorder %s31, 3
      %p371 = pnand %p369, %p370
      %p372 = pneg %p371
      // Predicated region
      $region9: #{tpu_custom_call.1} parent=5 // pred_check
        _
      $region10: #{tpu_custom_call.1} parent=5 // pred_check_branch
        %374 = sbr.rel (%p371) target = $region12
      $region11: #{tpu_custom_call.1} parent=5 // pred_region
        %s375 = ssub.s32 %s31, 1
        // Predicated region
        $region13: #{tpu_custom_call.1} parent=11 // pred_check
          %p376 = pneg %p92
        $region14: #{tpu_custom_call.1} parent=11 // pred_check_branch
          %378 = sbr.rel (%p376) target = $region16
        $region15: #{tpu_custom_call.1} parent=11 // pred_region
          _
        $region16: #{tpu_custom_call.1} parent=11 // pred_fallthru
          _
        // Predicated region
        $region17: #{tpu_custom_call.1} parent=11 // pred_check
          %p379 = pneg %p113
        $region18: #{tpu_custom_call.1} parent=11 // pred_check_branch
          %381 = sbr.rel (%p379) target = $region20
        $region19: #{tpu_custom_call.1} parent=11 // pred_region
          %383 = vsyncadd [#allocation12], 0
          %s385 = sshll.u32 %s2, 4
          %s386 = int_to_ptr.hbm [resolvable:$true] %s385
          %s387 = sshll.u32 [#allocation11], 4
          %s388 = int_to_ptr.vmem [resolvable:$true] %s387
          %390 = dma.hbm_to_vmem [thread:$0]  %s386, 16, %s388, [#allocation12]
        $region20: #{tpu_custom_call.1} parent=11 // pred_fallthru
          _
        // Predicated region
        $region21: #{tpu_custom_call.1} parent=11 // pred_check
          %p391 = pneg %p134
        $region22: #{tpu_custom_call.1} parent=11 // pred_check_branch
          %393 = sbr.rel (%p391) target = $region24
        $region23: #{tpu_custom_call.1} parent=11 // pred_region
          _
        $region24: #{tpu_custom_call.1} parent=11 // pred_fallthru
          _
        // Predicated region
        $region25: #{tpu_custom_call.1} parent=11 // pred_check
          %p394 = pneg %p155
        $region26: #{tpu_custom_call.1} parent=11 // pred_check_branch
          %396 = sbr.rel (%p394) target = $region28
        $region27: #{tpu_custom_call.1} parent=11 // pred_region
          _
        $region28: #{tpu_custom_call.1} parent=11 // pred_fallthru
          _
        // Predicated region
        $region29: #{tpu_custom_call.1} parent=11 // pred_check
          %p397 = pneg %p176
        $region30: #{tpu_custom_call.1} parent=11 // pred_check_branch
          %399 = sbr.rel (%p397) target = $region32
        $region31: #{tpu_custom_call.1} parent=11 // pred_region
          %401 = vsyncadd [#allocation12], 0
          %s403 = sshll.u32 %s5, 4
          %s404 = int_to_ptr.hbm [resolvable:$true] %s403
          %s405 = sshll.u32 [#allocation13], 4
          %s406 = int_to_ptr.vmem [resolvable:$true] %s405
          %408 = dma.hbm_to_vmem [thread:$0]  %s404, 16, %s406, [#allocation12]
        $region32: #{tpu_custom_call.1} parent=11 // pred_fallthru
          _
        // Predicated region
        $region33: #{tpu_custom_call.1} parent=11 // pred_check
          %p409 = pneg %p197
        $region34: #{tpu_custom_call.1} parent=11 // pred_check_branch
          %411 = sbr.rel (%p409) target = $region36
        $region35: #{tpu_custom_call.1} parent=11 // pred_region
          _
        $region36: #{tpu_custom_call.1} parent=11 // pred_fallthru
          _
        // Predicated region
        $region37: #{tpu_custom_call.1} parent=11 // pred_check
          %p412 = pneg %p218
        $region38: #{tpu_custom_call.1} parent=11 // pred_check_branch
          %414 = sbr.rel (%p412) target = $region40
        $region39: #{tpu_custom_call.1} parent=11 // pred_region
          %416 = vsyncadd [#allocation15], 0
          %s418 = sshll.u32 %s7, 4
          %s419 = int_to_ptr.hbm [resolvable:$true] %s418
          %s420 = sshll.u32 [#allocation14], 4
          %s421 = int_to_ptr.vmem [resolvable:$true] %s420
          %423 = dma.hbm_to_vmem [thread:$0]  %s419, 16, %s421, [#allocation15]
        $region40: #{tpu_custom_call.1} parent=11 // pred_fallthru
          _
        // Predicated region
        $region41: #{tpu_custom_call.1} parent=11 // pred_check
          %p424 = pneg %p239
        $region42: #{tpu_custom_call.1} parent=11 // pred_check_branch
          %426 = sbr.rel (%p424) target = $region44
        $region43: #{tpu_custom_call.1} parent=11 // pred_region
          %428 = vsyncadd [#allocation15], 0
          %s429 = sshll.u32 %s8, 4
          %s430 = int_to_ptr.hbm [resolvable:$true] %s429
          %s431 = sshll.u32 [#allocation16], 4
          %s432 = int_to_ptr.vmem [resolvable:$true] %s431
          %437 = dma.hbm_to_vmem [thread:$0]  %s430, 256, %s432, [#allocation15], 16, 16, 1
        $region44: #{tpu_custom_call.1} parent=11 // pred_fallthru
          _
        // Predicated region
        $region45: #{tpu_custom_call.1} parent=11 // pred_check
          %p438 = pneg %p260
        $region46: #{tpu_custom_call.1} parent=11 // pred_check_branch
          %440 = sbr.rel (%p438) target = $region48
        $region47: #{tpu_custom_call.1} parent=11 // pred_region
          _
        $region48: #{tpu_custom_call.1} parent=11 // pred_fallthru
          _
        // Predicated region
        $region49: #{tpu_custom_call.1} parent=11 // pred_check
          %p441 = pneg %p281
        $region50: #{tpu_custom_call.1} parent=11 // pred_check_branch
          %443 = sbr.rel (%p441) target = $region52
        $region51: #{tpu_custom_call.1} parent=11 // pred_region
          _
        $region52: #{tpu_custom_call.1} parent=11 // pred_fallthru
          _
      $region12: #{tpu_custom_call.1} parent=5 // pred_fallthru
        _
      %p444 = scmp.lt.s32.totalorder %s31, 2
      // Predicated region
      $region53: #{tpu_custom_call.1} parent=5 // pred_check
        %p445 = pneg %p444
      $region54: #{tpu_custom_call.1} parent=5 // pred_check_branch
        %447 = sbr.rel (%p445) target = $region56
      $region55: #{tpu_custom_call.1} parent=5 // pred_region
        // Predicated region
        $region57: #{tpu_custom_call.1} parent=55 // pred_check
          %p448 = pneg %p65
        $region58: #{tpu_custom_call.1} parent=55 // pred_check_branch
          %450 = sbr.rel (%p448) target = $region60
        $region59: #{tpu_custom_call.1} parent=55 // pred_region
          %s451 = sand.u32 %s55, 1
          %s452 = scalar_lea.sflag [#allocation9], %s451
          %s453 = sand.u32 %s55, 1
          %s454 = smul.addr %s453, 8
          %s455 = scalar_lea.vmem [#allocation8], %s454
          %s456 = sadd.s32 %s38, %s39
          %458 = vsyncadd %s452, 0
          %s459 = smul.addr %s456, 8
          %s460 = scalar_lea.hbm %s0, %s459
          %s462 = sshll.u32 %s460, 4
          %s463 = int_to_ptr.hbm [resolvable:$true] %s462
          %s464 = sshll.u32 %s455, 4
          %s465 = int_to_ptr.vmem [resolvable:$true] %s464
          %467 = dma.hbm_to_vmem [thread:$0]  %s463, 128, %s465, %s452
        $region60: #{tpu_custom_call.1} parent=55 // pred_fallthru
          _
      $region56: #{tpu_custom_call.1} parent=5 // pred_fallthru
        _
      %p468 = scmp.le.s32.totalorder 1, %s31
      %p469 = scmp.lt.s32.totalorder %s31, 3
      %p470 = pnand %p468, %p469
      %p471 = pneg %p470
      // Predicated region
      $region61: #{tpu_custom_call.1} parent=5 // pred_check
        _
      $region62: #{tpu_custom_call.1} parent=5 // pred_check_branch
        %473 = sbr.rel (%p470) target = $region64
      $region63: #{tpu_custom_call.1} parent=5 // pred_region
        %s474 = ssub.s32 %s31, 1
        %s475 = sand.u32 %s58, 1
        %s476 = scalar_lea.sflag [#allocation9], %s475
        %s477 = sand.u32 %s58, 1
        %s478 = smul.addr %s477, 8
        %s479 = scalar_lea.vmem [#allocation8], %s478
        // Predicated region
        $region65: #{tpu_custom_call.1} parent=63 // pred_check
          %p480 = pneg %p71
        $region66: #{tpu_custom_call.1} parent=63 // pred_check_branch
          %482 = sbr.rel (%p480) target = $region68
        $region67: #{tpu_custom_call.1} parent=63 // pred_region
          %484 = dma.done %s476, 128
        $region68: #{tpu_custom_call.1} parent=63 // pred_fallthru
          _
        // Predicated region
        $region69: #{tpu_custom_call.1} parent=63 // pred_check
          %p485 = pneg %p113
        $region70: #{tpu_custom_call.1} parent=63 // pred_check_branch
          %487 = sbr.rel (%p485) target = $region72
        $region71: #{tpu_custom_call.1} parent=63 // pred_region
          %489 = dma.done [#allocation12], 16
        $region72: #{tpu_custom_call.1} parent=63 // pred_fallthru
          _
        // Predicated region
        $region73: #{tpu_custom_call.1} parent=63 // pred_check
          %p490 = pneg %p176
        $region74: #{tpu_custom_call.1} parent=63 // pred_check_branch
          %492 = sbr.rel (%p490) target = $region76
        $region75: #{tpu_custom_call.1} parent=63 // pred_region
          %494 = dma.done [#allocation12], 16
        $region76: #{tpu_custom_call.1} parent=63 // pred_fallthru
          _
        // Predicated region
        $region77: #{tpu_custom_call.1} parent=63 // pred_check
          %p495 = pneg %p218
        $region78: #{tpu_custom_call.1} parent=63 // pred_check_branch
          %497 = sbr.rel (%p495) target = $region80
        $region79: #{tpu_custom_call.1} parent=63 // pred_region
          %499 = dma.done [#allocation15], 16
        $region80: #{tpu_custom_call.1} parent=63 // pred_fallthru
          _
        // Predicated region
        $region81: #{tpu_custom_call.1} parent=63 // pred_check
          %p500 = pneg %p239
        $region82: #{tpu_custom_call.1} parent=63 // pred_check_branch
          %502 = sbr.rel (%p500) target = $region84
        $region83: #{tpu_custom_call.1} parent=63 // pred_region
          %504 = dma.done [#allocation15], 256
        $region84: #{tpu_custom_call.1} parent=63 // pred_fallthru
          _
        %s505 = sand.u32 %s58, 1
        %s506 = scalar_lea.sflag [#allocation9], %s505
        %s507 = sand.u32 %s58, 1
        %s508 = smul.addr %s507, 8
        %s509 = scalar_lea.vmem [#allocation8], %s508
        %p510 = pneg %p71
        %p511 = pneg %p68
        %p512 = pneg %p92
        %p513 = pneg %p89
        %p514 = pneg %p113
        %p515 = pneg %p110
        %p516 = pneg %p134
        %p517 = pneg %p131
        %p518 = pneg %p155
        %p519 = pneg %p152
        %p520 = pneg %p176
        %p521 = pneg %p173
        %p522 = pneg %p197
        %p523 = pneg %p194
        %p524 = pneg %p218
        %p525 = pneg %p215
        %p526 = pneg %p239
        %p527 = pneg %p236
        %p528 = pneg %p260
        %p529 = pneg %p257
        %p530 = pneg %p281
        %p531 = pneg %p278
        %p532 = pneg %p309
        %p533 = pneg %p306
        %s534 = sand.u32 %s296, 1
        %s535 = scalar_lea.sflag [#allocation10], %s534
        %s536 = sand.u32 %s296, 1
        %s537 = smul.addr %s536, 8
        %s538 = scalar_lea.vmem [#allocation17], %s537
        %p539 = pneg %p335
        %p540 = pneg %p332
        %s541 = sand.u32 %s36, 1
        %s542 = scalar_lea.sflag [#allocation19], %s541
        %s543 = sand.u32 %s322, 1
        %s544 = smul.addr %s543, 3
        %s545 = scalar_lea.vmem [#allocation18], %s544
        %p546 = pneg %p361
        %p547 = pneg %p358
        %s548 = sand.u32 %s36, 1
        %s549 = scalar_lea.sflag [#allocation19], %s548
        %s550 = sand.u32 %s348, 1
        %s551 = smul.addr %s550, 16
        %s552 = scalar_lea.vmem [#allocation20], %s551
        %s553 = sadd.s32 %s40, %s41
        %s554 = sadd.s32 %s40, %s41
        %p555 = scmp.eq.s32.totalorder %s41, 0
        // Predicated region
        $region85: #{tpu_custom_call.1} parent=63 // pred_check
          %p556 = pneg %p555
        $region86: #{tpu_custom_call.1} parent=63 // pred_check_branch
          %558 = sbr.rel (%p556) target = $region88
        $region87: #{tpu_custom_call.1} parent=63 // pred_region
          %vm559 = vcmask 516096
          %560 = vst.msk [vmem:[#allocation6] sm:$0x1] %vm559, 0.0
          %561 = vst.msk [vmem:[#allocation6 + $0x1] sm:$0x1] %vm559, 0.0
          %562 = vst.msk [vmem:[#allocation6 + $0x2] sm:$0x1] %vm559, 0.0
          %563 = vst.msk [vmem:[#allocation6 + $0x3] sm:$0x1] %vm559, 0.0
          %564 = vst.msk [vmem:[#allocation6 + $0x4] sm:$0x1] %vm559, 0.0
          %565 = vst.msk [vmem:[#allocation6 + $0x5] sm:$0x1] %vm559, 0.0
          %566 = vst.msk [vmem:[#allocation6 + $0x6] sm:$0x1] %vm559, 0.0
          %567 = vst.msk [vmem:[#allocation6 + $0x7] sm:$0x1] %vm559, 0.0
          %568 = vst.msk [vmem:[#allocation6 + $0x8] sm:$0x1] %vm559, 0.0
          %569 = vst.msk [vmem:[#allocation6 + $0x9] sm:$0x1] %vm559, 0.0
          %570 = vst.msk [vmem:[#allocation6 + $0xa] sm:$0x1] %vm559, 0.0
          %571 = vst.msk [vmem:[#allocation6 + $0xb] sm:$0x1] %vm559, 0.0
          %572 = vst.msk [vmem:[#allocation6 + $0xc] sm:$0x1] %vm559, 0.0
          %573 = vst.msk [vmem:[#allocation6 + $0xd] sm:$0x1] %vm559, 0.0
          %574 = vst.msk [vmem:[#allocation6 + $0xe] sm:$0x1] %vm559, 0.0
          %575 = vst.msk [vmem:[#allocation6 + $0xf] sm:$0x1] %vm559, 0.0
          %576 = vst.msk [vmem:[#allocation7] sm:$0x1] %vm559, 0.0
          %577 = vst.msk [vmem:[#allocation7 + $0x1] sm:$0x1] %vm559, 0.0
          %578 = vst.msk [vmem:[#allocation7 + $0x2] sm:$0x1] %vm559, 0.0
        $region88: #{tpu_custom_call.1} parent=63 // pred_fallthru
          _
        %v579 = vld [vmem:[%s479] sm:$0xff]
        %vm580 = vcmask 261120
        %v581 = vsel %vm580, %v579, 0.0
        %582 = vadd.xlane.f32.xlu0 %v581
        %v583 = vpop.xlane.xlu0 %582
        %v584 = vrcp.pop 32.0
        %v585 = vmul.f32 32.0, %v584
        %v586 = vsub.f32 1.0, %v585
        %v587 = vmul.f32 %v584, %v586
        %v588 = vadd.f32 %v584, %v587
        %vm589 = vweird.f32 %v584
        %v590 = vsel %vm589, %v584, %v588
        %v591 = vmul.f32 %v583, %v590
        %v592 = vsub.f32 %v579, %v591
        %v593 = vmul.f32 %v592, %v592
        %v594 = vsel %vm580, %v593, 0.0
        %595 = vadd.xlane.f32.xlu0 %v594
        %v596 = vpop.xlane.xlu0 %595
        %v597 = vmul.f32 %v596, %v590
        %v598 = vadd.f32 %v597, 1e-05
        %v599 = vrsqrt.pop %v598
        %v600 = vmul.f32 %v599, %v598
        %v601 = vmul.f32 %v600, %v599
        %v602 = vmul.f32 0.5, %v601
        %v603 = vsub.f32 1.5, %v602
        %v604 = vmul.f32 %v599, %v603
        %vm605 = vweird.f32 %v598
        %vm606 = vweird.f32 %v599
        %vm607 = vmor %vm605, %vm606
        %v608 = vsel %vm607, %v599, %v604
        %v609 = vmul.f32 %v592, %v608
        %v610 = vld [vmem:[%s1] sm:$0x1]
        %v612 = vperm.slane %v610, 0
        %v614 = vmul.f32 %v609, %v612
        %v615 = vld [vmem:[#allocation11] sm:$0x1]
        %v617 = vperm.slane %v615, 0
        %v619 = vadd.f32 %v614, %v617
        %v620 = vld [vmem:[%s3] sm:$0xff]
        %v621 = vld [vmem:[%s3 + $0x8] sm:$0xff]
        %v622 = vld [vmem:[%s3 + $0x10] sm:$0xff]
        %v623 = vld [vmem:[%s3 + $0x18] sm:$0xff]
        %v625 = vsel %vm580, %v619, 0
        %627 = vmatpush.msra.mxu0 0.0
        %628 = vmatpush.msra.mxu0 0.0
        %629 = vmatpush.msra.mxu0 0.0
        %630 = vmatpush.msra.mxu0 0.0
        %631 = vmatpush.msra.mxu0 0.0
        %632 = vmatpush.msra.mxu0 0.0
        %633 = vmatpush.msra.mxu0 0.0
        %634 = vmatpush.msra.mxu0 0.0
        %635 = vmatpush.msra.mxu0 0.0
        %636 = vmatpush.msra.mxu0 0.0
        %637 = vmatpush.msra.mxu0 0.0
        %638 = vmatpush.msra.mxu0 0.0
        %639 = vmatpush.msra.mxu0 %v623
        %640 = vmatpush.msra.mxu0 %v622
        %641 = vmatpush.msra.mxu0 %v621
        %642 = vmatpush.msra.mxu0 %v620
        %643 = vmatmul.f32.gmra.mxu0 %v625
        %v644 = vpop.f32.mrf.mxu0
        %v645 = vadd.f32 0.0, %v644
        %646 = vdwg.mxu0
        %v647 = vld [vmem:[%s4] sm:$0xf]
        %v648 = vld [vmem:[#allocation7] sm:$0x1]
        %s649 = scalar_lea.vmem [#allocation7], 1
        %v650 = vld [vmem:[%s649] sm:$0x1]
        %s651 = scalar_lea.vmem [#allocation7], 2
        %v652 = vld [vmem:[%s651] sm:$0x1]
        %v654 = vperm.slane %v650, 0
        %v657 = vperm.slane %v652, 0
        %v660 = vrot.slane %v645, 5
        %vm662 = vcmask 1040384
        %v663 = vsel %vm662, %v648, %v654
        %vm664 = vcmask 1041408
        %v665 = vsel %vm664, %v663, %v657
        %vm666 = vcmask 1042432
        %v667 = vsel %vm666, %v665, %v660
        %v668 = vld [vmem:[#allocation13] sm:$0x1]
        %v670 = vperm.slane %v668, 0
        %v672 = vadd.f32 %v670, 0.0
        %v673 = vperm.slane %v647, 0
        %v674 = vmul.f32 %v673, %v667
        %v675 = vadd.f32 %v672, %v674
        %v676 = vperm.slane %v647, 1
        %v677 = vmul.f32 %v676, %v667
        %v678 = vmul.f32 %v676, %v660
        %vm681 = vcmask 1046528
        %v682 = vrot.slane %v677, 1
        %v683 = vrot.slane %v678, 1
        %v684 = vsel %vm681, %v682, %v683
        %v686 = vadd.f32 %v675, %v684
        %v687 = vperm.slane %v647, 2
        %v688 = vmul.f32 %v687, %v667
        %v689 = vmul.f32 %v687, %v660
        %vm692 = vcmask 1045504
        %v693 = vrot.slane %v688, 2
        %v694 = vrot.slane %v689, 2
        %v695 = vsel %vm692, %v693, %v694
        %v697 = vadd.f32 %v686, %v695
        %v698 = vperm.slane %v647, 3
        %v699 = vmul.f32 %v698, %v667
        %v700 = vmul.f32 %v698, %v660
        %vm703 = vcmask 1044480
        %v704 = vrot.slane %v699, 3
        %v705 = vrot.slane %v700, 3
        %v706 = vsel %vm703, %v704, %v705
        %v708 = vadd.f32 %v697, %v706
        %v709 = vsub.f32 0.0, %v708
        %v710 = vmul.f32 %v709, 1.442695
        %v711 = vpow.pop %v710
        %v712 = vadd.f32 %v711, 1.0
        %v713 = vrcp.pop %v712
        %v714 = vmul.f32 %v708, %v713
        %vm715 = vcmask 521221
        %716 = vst.msk [vmem:[#allocation7 - $0x5] sm:$0x20] %vm715, %v645
        %vm717 = vcmask 522246
        %718 = vst.msk [vmem:[%s649 - $0x6] sm:$0x40] %vm717, %v645
        %vm719 = vcmask 523271
        %720 = vst.msk [vmem:[%s651 - $0x7] sm:$0x80] %vm719, %v645
        // Predicated region
        $region89: #{tpu_custom_call.1} parent=63 // pred_check
          %p721 = pneg %p555
        $region90: #{tpu_custom_call.1} parent=63 // pred_check_branch
          %723 = sbr.rel (%p721) target = $region92
        $region91: #{tpu_custom_call.1} parent=63 // pred_region
          %724 = vst.msk [vmem:[%s545 - $0x5] sm:$0x20] %vm715, %v714
          %s725 = scalar_lea.vmem %s545, 1 [#allocation18]
          %726 = vst.msk [vmem:[%s725 - $0x6] sm:$0x40] %vm717, %v714
          %s727 = scalar_lea.vmem %s545, 2 [#allocation18]
          %728 = vst.msk [vmem:[%s727 - $0x7] sm:$0x80] %vm719, %v714
        $region92: #{tpu_custom_call.1} parent=63 // pred_fallthru
          _
        %v729 = vld [vmem:[%s6] sm:$0xff]
        %v730 = vld [vmem:[%s6 + $0x8] sm:$0xff]
        %v731 = vld [vmem:[%s6 + $0x10] sm:$0xff]
        %v732 = vld [vmem:[%s6 + $0x18] sm:$0xff]
        %v733 = vld [vmem:[%s6 + $0x20] sm:$0xff]
        %v734 = vld [vmem:[%s6 + $0x28] sm:$0xff]
        %v735 = vld [vmem:[%s6 + $0x30] sm:$0xff]
        %v736 = vld [vmem:[%s6 + $0x38] sm:$0xff]
        %vm737 = vcmask 523264
        %v739 = vsel %vm737, %v714, 0
        %741 = vmatpush.msra.mxu0 0.0
        %742 = vmatpush.msra.mxu0 0.0
        %743 = vmatpush.msra.mxu0 0.0
        %744 = vmatpush.msra.mxu0 0.0
        %745 = vmatpush.msra.mxu0 0.0
        %746 = vmatpush.msra.mxu0 0.0
        %747 = vmatpush.msra.mxu0 0.0
        %748 = vmatpush.msra.mxu0 0.0
        %749 = vmatpush.msra.mxu0 %v736
        %750 = vmatpush.msra.mxu0 %v735
        %751 = vmatpush.msra.mxu0 %v734
        %752 = vmatpush.msra.mxu0 %v733
        %753 = vmatpush.msra.mxu0 %v732
        %754 = vmatpush.msra.mxu0 %v731
        %755 = vmatpush.msra.mxu0 %v730
        %756 = vmatpush.msra.mxu0 %v729
        %757 = vmatmul.f32.gmra.mxu0 %v739
        %v758 = vpop.f32.mrf.mxu0
        %v759 = vadd.f32 0.0, %v758
        %760 = vdwg.mxu0
        %761 = vst.msk [vmem:[#allocation4] sm:$0xff] %vm580, %v759
        %v762 = vld [vmem:[#allocation14] sm:$0x1]
        %v764 = vperm.slane %v762, 0
        %765 = vrot.lane.b32.xlu0 %v764, 32
        %v766 = vpop.permute.xlu0 %765
        %v768 = vadd.f32 %v759, %v766
        %vm769 = vcmp.gt.f32.partialorder %v768, 20.0
        %v770 = vmin.f32 %v768, 20.0
        %v771 = vmul.f32 %v770, 1.442695
        %v772 = vpow.pop %v771
        %v773 = vadd.f32 %v772, 1.0
        %v774 = vlog2.pop %v773
        %v775 = vmul.f32 %v774, 0.6931472
        %v776 = vmul.f32 -0.5, %v772
        %v777 = vadd.f32 %v776, 1.0
        %v778 = vmul.f32 %v777, %v772
        %v779 = vand.u32 2147483647, %v772
        %vm780 = vcmp.lt.f32.partialorder %v779, 0.0004427343
        %v781 = vsel %vm780, %v778, %v775
        %v782 = vsel %vm769, %v768, %v781
        %784 = vrot.lane.b32.xlu0 %v782, 96
        %v785 = vpop.permute.xlu0 %784
        %787 = vst.msk [vmem:[#allocation2] sm:$0xff] %vm737, %v785
        %788 = vrot.lane.b32.xlu0 %v714, 32
        %v789 = vpop.permute.xlu0 %788
        %v791 = vmul.f32 %v782, %v789
        %793 = vrot.lane.b32.xlu0 %v791, 96
        %v794 = vpop.permute.xlu0 %793
        %796 = vst.msk [vmem:[#allocation3] sm:$0xff] %vm737, %v794
        %v797 = vld [vmem:[#allocation16] sm:$0x1]
        %v798 = vld [vmem:[#allocation16 + $0x1] sm:$0x1]
        %v799 = vld [vmem:[#allocation16 + $0x2] sm:$0x1]
        %v800 = vld [vmem:[#allocation16 + $0x3] sm:$0x1]
        %v801 = vld [vmem:[#allocation16 + $0x4] sm:$0x1]
        %v802 = vld [vmem:[#allocation16 + $0x5] sm:$0x1]
        %v803 = vld [vmem:[#allocation16 + $0x6] sm:$0x1]
        %v804 = vld [vmem:[#allocation16 + $0x7] sm:$0x1]
        %v805 = vld [vmem:[#allocation16 + $0x8] sm:$0x1]
        %v806 = vld [vmem:[#allocation16 + $0x9] sm:$0x1]
        %v807 = vld [vmem:[#allocation16 + $0xa] sm:$0x1]
        %v808 = vld [vmem:[#allocation16 + $0xb] sm:$0x1]
        %v809 = vld [vmem:[#allocation16 + $0xc] sm:$0x1]
        %v810 = vld [vmem:[#allocation16 + $0xd] sm:$0x1]
        %v811 = vld [vmem:[#allocation16 + $0xe] sm:$0x1]
        %v812 = vld [vmem:[#allocation16 + $0xf] sm:$0x1]
        %v813 = vmul.f32 %v797, 1.442695
        %v814 = vpow.pop %v813
        %v815 = vmul.f32 %v798, 1.442695
        %v816 = vpow.pop %v815
        %v817 = vmul.f32 %v799, 1.442695
        %v818 = vpow.pop %v817
        %v819 = vmul.f32 %v800, 1.442695
        %v820 = vpow.pop %v819
        %v821 = vmul.f32 %v801, 1.442695
        %v822 = vpow.pop %v821
        %v823 = vmul.f32 %v802, 1.442695
        %v824 = vpow.pop %v823
        %v825 = vmul.f32 %v803, 1.442695
        %v826 = vpow.pop %v825
        %v827 = vmul.f32 %v804, 1.442695
        %v828 = vpow.pop %v827
        %v829 = vmul.f32 %v805, 1.442695
        %v830 = vpow.pop %v829
        %v831 = vmul.f32 %v806, 1.442695
        %v832 = vpow.pop %v831
        %v833 = vmul.f32 %v807, 1.442695
        %v834 = vpow.pop %v833
        %v835 = vmul.f32 %v808, 1.442695
        %v836 = vpow.pop %v835
        %v837 = vmul.f32 %v809, 1.442695
        %v838 = vpow.pop %v837
        %v839 = vmul.f32 %v810, 1.442695
        %v840 = vpow.pop %v839
        %v841 = vmul.f32 %v811, 1.442695
        %v842 = vpow.pop %v841
        %v843 = vmul.f32 %v812, 1.442695
        %v844 = vpow.pop %v843
        %v845 = vsub.f32 0.0, %v814
        %v846 = vsub.f32 0.0, %v816
        %v847 = vsub.f32 0.0, %v818
        %v848 = vsub.f32 0.0, %v820
        %v849 = vsub.f32 0.0, %v822
        %v850 = vsub.f32 0.0, %v824
        %v851 = vsub.f32 0.0, %v826
        %v852 = vsub.f32 0.0, %v828
        %v853 = vsub.f32 0.0, %v830
        %v854 = vsub.f32 0.0, %v832
        %v855 = vsub.f32 0.0, %v834
        %v856 = vsub.f32 0.0, %v836
        %v857 = vsub.f32 0.0, %v838
        %v858 = vsub.f32 0.0, %v840
        %v859 = vsub.f32 0.0, %v842
        %v860 = vsub.f32 0.0, %v844
        %v861 = vlaneseq
        %v862 = vand.u32 %v861, 127
        %vm863 = vcmp.eq.s32.totalorder %v862, 0
        %vm864 = vcmp.eq.s32.totalorder %v862, 1
        %vm865 = vcmp.eq.s32.totalorder %v862, 2
        %vm866 = vcmp.eq.s32.totalorder %v862, 3
        %vm867 = vcmp.eq.s32.totalorder %v862, 4
        %vm868 = vcmp.eq.s32.totalorder %v862, 5
        %vm869 = vcmp.eq.s32.totalorder %v862, 6
        %vm870 = vcmp.eq.s32.totalorder %v862, 7
        %vm871 = vcmp.eq.s32.totalorder %v862, 8
        %vm872 = vcmp.eq.s32.totalorder %v862, 9
        %vm873 = vcmp.eq.s32.totalorder %v862, 10
        %vm874 = vcmp.eq.s32.totalorder %v862, 11
        %vm875 = vcmp.eq.s32.totalorder %v862, 12
        %vm876 = vcmp.eq.s32.totalorder %v862, 13
        %vm877 = vcmp.eq.s32.totalorder %v862, 14
        %vm878 = vcmp.eq.s32.totalorder %v862, 15
        %vm879 = vcmp.eq.s32.totalorder %v862, 16
        %vm880 = vcmp.eq.s32.totalorder %v862, 17
        %vm881 = vcmp.eq.s32.totalorder %v862, 18
        %vm882 = vcmp.eq.s32.totalorder %v862, 19
        %vm883 = vcmp.eq.s32.totalorder %v862, 20
        %vm884 = vcmp.eq.s32.totalorder %v862, 21
        %vm885 = vcmp.eq.s32.totalorder %v862, 22
        %vm886 = vcmp.eq.s32.totalorder %v862, 23
        %vm887 = vcmp.eq.s32.totalorder %v862, 24
        %vm888 = vcmp.eq.s32.totalorder %v862, 25
        %vm889 = vcmp.eq.s32.totalorder %v862, 26
        %vm890 = vcmp.eq.s32.totalorder %v862, 27
        %vm891 = vcmp.eq.s32.totalorder %v862, 28
        %vm892 = vcmp.eq.s32.totalorder %v862, 29
        %vm893 = vcmp.eq.s32.totalorder %v862, 30
        %vm894 = vcmp.eq.s32.totalorder %v862, 31
        %v895 = vsel %vm863, 1, 0
        %v896 = vsel %vm864, 1, 0
        %v897 = vsel %vm865, 1, 0
        %v898 = vsel %vm866, 1, 0
        %v899 = vsel %vm867, 1, 0
        %v900 = vsel %vm868, 1, 0
        %v901 = vsel %vm869, 1, 0
        %v902 = vsel %vm870, 1, 0
        %v903 = vsel %vm871, 1, 0
        %v904 = vsel %vm872, 1, 0
        %v905 = vsel %vm873, 1, 0
        %v906 = vsel %vm874, 1, 0
        %v907 = vsel %vm875, 1, 0
        %v908 = vsel %vm876, 1, 0
        %v909 = vsel %vm877, 1, 0
        %v910 = vsel %vm878, 1, 0
        %v911 = vsel %vm879, 1, 0
        %v912 = vsel %vm880, 1, 0
        %v913 = vsel %vm881, 1, 0
        %v914 = vsel %vm882, 1, 0
        %v915 = vsel %vm883, 1, 0
        %v916 = vsel %vm884, 1, 0
        %v917 = vsel %vm885, 1, 0
        %v918 = vsel %vm886, 1, 0
        %v919 = vsel %vm887, 1, 0
        %v920 = vsel %vm888, 1, 0
        %v921 = vsel %vm889, 1, 0
        %v922 = vsel %vm890, 1, 0
        %v923 = vsel %vm891, 1, 0
        %v924 = vsel %vm892, 1, 0
        %v925 = vsel %vm893, 1, 0
        %v926 = vsel %vm894, 1, 0
        %v927 = vcvt.s32.f32 %v895
        %v928 = vcvt.s32.f32 %v896
        %v929 = vcvt.s32.f32 %v897
        %v930 = vcvt.s32.f32 %v898
        %v931 = vcvt.s32.f32 %v899
        %v932 = vcvt.s32.f32 %v900
        %v933 = vcvt.s32.f32 %v901
        %v934 = vcvt.s32.f32 %v902
        %v935 = vcvt.s32.f32 %v903
        %v936 = vcvt.s32.f32 %v904
        %v937 = vcvt.s32.f32 %v905
        %v938 = vcvt.s32.f32 %v906
        %v939 = vcvt.s32.f32 %v907
        %v940 = vcvt.s32.f32 %v908
        %v941 = vcvt.s32.f32 %v909
        %v942 = vcvt.s32.f32 %v910
        %v943 = vcvt.s32.f32 %v911
        %v944 = vcvt.s32.f32 %v912
        %v945 = vcvt.s32.f32 %v913
        %v946 = vcvt.s32.f32 %v914
        %v947 = vcvt.s32.f32 %v915
        %v948 = vcvt.s32.f32 %v916
        %v949 = vcvt.s32.f32 %v917
        %v950 = vcvt.s32.f32 %v918
        %v951 = vcvt.s32.f32 %v919
        %v952 = vcvt.s32.f32 %v920
        %v953 = vcvt.s32.f32 %v921
        %v954 = vcvt.s32.f32 %v922
        %v955 = vcvt.s32.f32 %v923
        %v956 = vcvt.s32.f32 %v924
        %v957 = vcvt.s32.f32 %v925
        %v958 = vcvt.s32.f32 %v926
        %v959 = vld [vmem:[#allocation6] sm:$0x1]
        %v960 = vld [vmem:[#allocation6 + $0x1] sm:$0x1]
        %v961 = vld [vmem:[#allocation6 + $0x2] sm:$0x1]
        %v962 = vld [vmem:[#allocation6 + $0x3] sm:$0x1]
        %v963 = vld [vmem:[#allocation6 + $0x4] sm:$0x1]
        %v964 = vld [vmem:[#allocation6 + $0x5] sm:$0x1]
        %v965 = vld [vmem:[#allocation6 + $0x6] sm:$0x1]
        %v966 = vld [vmem:[#allocation6 + $0x7] sm:$0x1]
        %v967 = vld [vmem:[#allocation6 + $0x8] sm:$0x1]
        %v968 = vld [vmem:[#allocation6 + $0x9] sm:$0x1]
        %v969 = vld [vmem:[#allocation6 + $0xa] sm:$0x1]
        %v970 = vld [vmem:[#allocation6 + $0xb] sm:$0x1]
        %v971 = vld [vmem:[#allocation6 + $0xc] sm:$0x1]
        %v972 = vld [vmem:[#allocation6 + $0xd] sm:$0x1]
        %v973 = vld [vmem:[#allocation6 + $0xe] sm:$0x1]
        %v974 = vld [vmem:[#allocation6 + $0xf] sm:$0x1]
        %v975 = vld [vmem:[#allocation2] sm:$0xff]
        %v976 = vld [vmem:[#allocation3] sm:$0xff]
        %v977 = vld [vmem:[#allocation4] sm:$0xff]
        %v994 = vperm.slane %v845, 0
        %v995 = vperm.slane %v846, 0
        %v996 = vperm.slane %v847, 0
        %v997 = vperm.slane %v848, 0
        %v998 = vperm.slane %v849, 0
        %v999 = vperm.slane %v850, 0
        %v1000 = vperm.slane %v851, 0
        %v1001 = vperm.slane %v852, 0
        %v1002 = vperm.slane %v853, 0
        %v1003 = vperm.slane %v854, 0
        %v1004 = vperm.slane %v855, 0
        %v1005 = vperm.slane %v856, 0
        %v1006 = vperm.slane %v857, 0
        %v1007 = vperm.slane %v858, 0
        %v1008 = vperm.slane %v859, 0
        %v1009 = vperm.slane %v860, 0
        %v1026 = vmul.f32 %v994, %v975
        %v1027 = vmul.f32 %v995, %v975
        %v1028 = vmul.f32 %v996, %v975
        %v1029 = vmul.f32 %v997, %v975
        %v1030 = vmul.f32 %v998, %v975
        %v1031 = vmul.f32 %v999, %v975
        %v1032 = vmul.f32 %v1000, %v975
        %v1033 = vmul.f32 %v1001, %v975
        %v1034 = vmul.f32 %v1002, %v975
        %v1035 = vmul.f32 %v1003, %v975
        %v1036 = vmul.f32 %v1004, %v975
        %v1037 = vmul.f32 %v1005, %v975
        %v1038 = vmul.f32 %v1006, %v975
        %v1039 = vmul.f32 %v1007, %v975
        %v1040 = vmul.f32 %v1008, %v975
        %v1041 = vmul.f32 %v1009, %v975
        %v1042 = vmul.f32 %v1026, 1.442695
        %v1043 = vpow.pop %v1042
        %v1044 = vmul.f32 %v1027, 1.442695
        %v1045 = vpow.pop %v1044
        %v1046 = vmul.f32 %v1028, 1.442695
        %v1047 = vpow.pop %v1046
        %v1048 = vmul.f32 %v1029, 1.442695
        %v1049 = vpow.pop %v1048
        %v1050 = vmul.f32 %v1030, 1.442695
        %v1051 = vpow.pop %v1050
        %v1052 = vmul.f32 %v1031, 1.442695
        %v1053 = vpow.pop %v1052
        %v1054 = vmul.f32 %v1032, 1.442695
        %v1055 = vpow.pop %v1054
        %v1056 = vmul.f32 %v1033, 1.442695
        %v1057 = vpow.pop %v1056
        %v1058 = vmul.f32 %v1034, 1.442695
        %v1059 = vpow.pop %v1058
        %v1060 = vmul.f32 %v1035, 1.442695
        %v1061 = vpow.pop %v1060
        %v1062 = vmul.f32 %v1036, 1.442695
        %v1063 = vpow.pop %v1062
        %v1064 = vmul.f32 %v1037, 1.442695
        %v1065 = vpow.pop %v1064
        %v1066 = vmul.f32 %v1038, 1.442695
        %v1067 = vpow.pop %v1066
        %v1068 = vmul.f32 %v1039, 1.442695
        %v1069 = vpow.pop %v1068
        %v1070 = vmul.f32 %v1040, 1.442695
        %v1071 = vpow.pop %v1070
        %v1072 = vmul.f32 %v1041, 1.442695
        %v1073 = vpow.pop %v1072
        %v1074 = vmul.f32 %v977, %v927
        %v1075 = vmul.f32 %v977, %v928
        %v1076 = vmul.f32 %v977, %v929
        %v1077 = vmul.f32 %v977, %v930
        %v1078 = vmul.f32 %v977, %v931
        %v1079 = vmul.f32 %v977, %v932
        %v1080 = vmul.f32 %v977, %v933
        %v1081 = vmul.f32 %v977, %v934
        %v1082 = vmul.f32 %v977, %v935
        %v1083 = vmul.f32 %v977, %v936
        %v1084 = vmul.f32 %v977, %v937
        %v1085 = vmul.f32 %v977, %v938
        %v1086 = vmul.f32 %v977, %v939
        %v1087 = vmul.f32 %v977, %v940
        %v1088 = vmul.f32 %v977, %v941
        %v1089 = vmul.f32 %v977, %v942
        %v1090 = vmul.f32 %v977, %v943
        %v1091 = vmul.f32 %v977, %v944
        %v1092 = vmul.f32 %v977, %v945
        %v1093 = vmul.f32 %v977, %v946
        %v1094 = vmul.f32 %v977, %v947
        %v1095 = vmul.f32 %v977, %v948
        %v1096 = vmul.f32 %v977, %v949
        %v1097 = vmul.f32 %v977, %v950
        %v1098 = vmul.f32 %v977, %v951
        %v1099 = vmul.f32 %v977, %v952
        %v1100 = vmul.f32 %v977, %v953
        %v1101 = vmul.f32 %v977, %v954
        %v1102 = vmul.f32 %v977, %v955
        %v1103 = vmul.f32 %v977, %v956
        %v1104 = vmul.f32 %v977, %v957
        %v1105 = vmul.f32 %v977, %v958
        %v1106 = vsel %vm580, %v1074, 0.0
        %1107 = vadd.xlane.f32.xlu0 %v1106
        %v1108 = vpop.xlane.xlu0 %1107
        %v1109 = vsel %vm580, %v1075, 0.0
        %1110 = vadd.xlane.f32.xlu0 %v1109
        %v1111 = vpop.xlane.xlu0 %1110
        %v1112 = vsel %vm580, %v1076, 0.0
        %1113 = vadd.xlane.f32.xlu0 %v1112
        %v1114 = vpop.xlane.xlu0 %1113
        %v1115 = vsel %vm580, %v1077, 0.0
        %1116 = vadd.xlane.f32.xlu0 %v1115
        %v1117 = vpop.xlane.xlu0 %1116
        %v1118 = vsel %vm580, %v1078, 0.0
        %1119 = vadd.xlane.f32.xlu0 %v1118
        %v1120 = vpop.xlane.xlu0 %1119
        %v1121 = vsel %vm580, %v1079, 0.0
        %1122 = vadd.xlane.f32.xlu0 %v1121
        %v1123 = vpop.xlane.xlu0 %1122
        %v1124 = vsel %vm580, %v1080, 0.0
        %1125 = vadd.xlane.f32.xlu0 %v1124
        %v1126 = vpop.xlane.xlu0 %1125
        %v1127 = vsel %vm580, %v1081, 0.0
        %1128 = vadd.xlane.f32.xlu0 %v1127
        %v1129 = vpop.xlane.xlu0 %1128
        %v1130 = vsel %vm580, %v1082, 0.0
        %1131 = vadd.xlane.f32.xlu0 %v1130
        %v1132 = vpop.xlane.xlu0 %1131
        %v1133 = vsel %vm580, %v1083, 0.0
        %1134 = vadd.xlane.f32.xlu0 %v1133
        %v1135 = vpop.xlane.xlu0 %1134
        %v1136 = vsel %vm580, %v1084, 0.0
        %1137 = vadd.xlane.f32.xlu0 %v1136
        %v1138 = vpop.xlane.xlu0 %1137
        %v1139 = vsel %vm580, %v1085, 0.0
        %1140 = vadd.xlane.f32.xlu0 %v1139
        %v1141 = vpop.xlane.xlu0 %1140
        %v1142 = vsel %vm580, %v1086, 0.0
        %1143 = vadd.xlane.f32.xlu0 %v1142
        %v1144 = vpop.xlane.xlu0 %1143
        %v1145 = vsel %vm580, %v1087, 0.0
        %1146 = vadd.xlane.f32.xlu0 %v1145
        %v1147 = vpop.xlane.xlu0 %1146
        %v1148 = vsel %vm580, %v1088, 0.0
        %1149 = vadd.xlane.f32.xlu0 %v1148
        %v1150 = vpop.xlane.xlu0 %1149
        %v1151 = vsel %vm580, %v1089, 0.0
        %1152 = vadd.xlane.f32.xlu0 %v1151
        %v1153 = vpop.xlane.xlu0 %1152
        %v1154 = vsel %vm580, %v1090, 0.0
        %1155 = vadd.xlane.f32.xlu0 %v1154
        %v1156 = vpop.xlane.xlu0 %1155
        %v1157 = vsel %vm580, %v1091, 0.0
        %1158 = vadd.xlane.f32.xlu0 %v1157
        %v1159 = vpop.xlane.xlu0 %1158
        %v1160 = vsel %vm580, %v1092, 0.0
        %1161 = vadd.xlane.f32.xlu0 %v1160
        %v1162 = vpop.xlane.xlu0 %1161
        %v1163 = vsel %vm580, %v1093, 0.0
        %1164 = vadd.xlane.f32.xlu0 %v1163
        %v1165 = vpop.xlane.xlu0 %1164
        %v1166 = vsel %vm580, %v1094, 0.0
        %1167 = vadd.xlane.f32.xlu0 %v1166
        %v1168 = vpop.xlane.xlu0 %1167
        %v1169 = vsel %vm580, %v1095, 0.0
        %1170 = vadd.xlane.f32.xlu0 %v1169
        %v1171 = vpop.xlane.xlu0 %1170
        %v1172 = vsel %vm580, %v1096, 0.0
        %1173 = vadd.xlane.f32.xlu0 %v1172
        %v1174 = vpop.xlane.xlu0 %1173
        %v1175 = vsel %vm580, %v1097, 0.0
        %1176 = vadd.xlane.f32.xlu0 %v1175
        %v1177 = vpop.xlane.xlu0 %1176
        %v1178 = vsel %vm580, %v1098, 0.0
        %1179 = vadd.xlane.f32.xlu0 %v1178
        %v1180 = vpop.xlane.xlu0 %1179
        %v1181 = vsel %vm580, %v1099, 0.0
        %1182 = vadd.xlane.f32.xlu0 %v1181
        %v1183 = vpop.xlane.xlu0 %1182
        %v1184 = vsel %vm580, %v1100, 0.0
        %1185 = vadd.xlane.f32.xlu0 %v1184
        %v1186 = vpop.xlane.xlu0 %1185
        %v1187 = vsel %vm580, %v1101, 0.0
        %1188 = vadd.xlane.f32.xlu0 %v1187
        %v1189 = vpop.xlane.xlu0 %1188
        %v1190 = vsel %vm580, %v1102, 0.0
        %1191 = vadd.xlane.f32.xlu0 %v1190
        %v1192 = vpop.xlane.xlu0 %1191
        %v1193 = vsel %vm580, %v1103, 0.0
        %1194 = vadd.xlane.f32.xlu0 %v1193
        %v1195 = vpop.xlane.xlu0 %1194
        %v1196 = vsel %vm580, %v1104, 0.0
        %1197 = vadd.xlane.f32.xlu0 %v1196
        %v1198 = vpop.xlane.xlu0 %1197
        %v1199 = vsel %vm580, %v1105, 0.0
        %1200 = vadd.xlane.f32.xlu0 %v1199
        %v1201 = vpop.xlane.xlu0 %1200
        %v1202 = vmul.f32 %v976, %v1108
        %v1203 = vmul.f32 %v976, %v1111
        %v1204 = vmul.f32 %v976, %v1114
        %v1205 = vmul.f32 %v976, %v1117
        %v1206 = vmul.f32 %v976, %v1120
        %v1207 = vmul.f32 %v976, %v1123
        %v1208 = vmul.f32 %v976, %v1126
        %v1209 = vmul.f32 %v976, %v1129
        %v1210 = vmul.f32 %v976, %v1132
        %v1211 = vmul.f32 %v976, %v1135
        %v1212 = vmul.f32 %v976, %v1138
        %v1213 = vmul.f32 %v976, %v1141
        %v1214 = vmul.f32 %v976, %v1144
        %v1215 = vmul.f32 %v976, %v1147
        %v1216 = vmul.f32 %v976, %v1150
        %v1217 = vmul.f32 %v976, %v1153
        %v1218 = vmul.f32 %v1043, %v959
        %v1219 = vmul.f32 %v1045, %v960
        %v1220 = vmul.f32 %v1047, %v961
        %v1221 = vmul.f32 %v1049, %v962
        %v1222 = vmul.f32 %v1051, %v963
        %v1223 = vmul.f32 %v1053, %v964
        %v1224 = vmul.f32 %v1055, %v965
        %v1225 = vmul.f32 %v1057, %v966
        %v1226 = vmul.f32 %v1059, %v967
        %v1227 = vmul.f32 %v1061, %v968
        %v1228 = vmul.f32 %v1063, %v969
        %v1229 = vmul.f32 %v1065, %v970
        %v1230 = vmul.f32 %v1067, %v971
        %v1231 = vmul.f32 %v1069, %v972
        %v1232 = vmul.f32 %v1071, %v973
        %v1233 = vmul.f32 %v1073, %v974
        %v1234 = vadd.f32 %v1218, %v1202
        %v1235 = vadd.f32 %v1219, %v1203
        %v1236 = vadd.f32 %v1220, %v1204
        %v1237 = vadd.f32 %v1221, %v1205
        %v1238 = vadd.f32 %v1222, %v1206
        %v1239 = vadd.f32 %v1223, %v1207
        %v1240 = vadd.f32 %v1224, %v1208
        %v1241 = vadd.f32 %v1225, %v1209
        %v1242 = vadd.f32 %v1226, %v1210
        %v1243 = vadd.f32 %v1227, %v1211
        %v1244 = vadd.f32 %v1228, %v1212
        %v1245 = vadd.f32 %v1229, %v1213
        %v1246 = vadd.f32 %v1230, %v1214
        %v1247 = vadd.f32 %v1231, %v1215
        %v1248 = vadd.f32 %v1232, %v1216
        %v1249 = vadd.f32 %v1233, %v1217
        %v1250 = vmul.f32 %v1156, %v1234
        %v1251 = vmul.f32 %v1159, %v1235
        %v1252 = vadd.f32 %v1250, %v1251
        %v1253 = vmul.f32 %v1162, %v1236
        %v1254 = vadd.f32 %v1252, %v1253
        %v1255 = vmul.f32 %v1165, %v1237
        %v1256 = vadd.f32 %v1254, %v1255
        %v1257 = vmul.f32 %v1168, %v1238
        %v1258 = vadd.f32 %v1256, %v1257
        %v1259 = vmul.f32 %v1171, %v1239
        %v1260 = vadd.f32 %v1258, %v1259
        %v1261 = vmul.f32 %v1174, %v1240
        %v1262 = vadd.f32 %v1260, %v1261
        %v1263 = vmul.f32 %v1177, %v1241
        %v1264 = vadd.f32 %v1262, %v1263
        %v1265 = vmul.f32 %v1180, %v1242
        %v1266 = vadd.f32 %v1264, %v1265
        %v1267 = vmul.f32 %v1183, %v1243
        %v1268 = vadd.f32 %v1266, %v1267
        %v1269 = vmul.f32 %v1186, %v1244
        %v1270 = vadd.f32 %v1268, %v1269
        %v1271 = vmul.f32 %v1189, %v1245
        %v1272 = vadd.f32 %v1270, %v1271
        %v1273 = vmul.f32 %v1192, %v1246
        %v1274 = vadd.f32 %v1272, %v1273
        %v1275 = vmul.f32 %v1195, %v1247
        %v1276 = vadd.f32 %v1274, %v1275
        %v1277 = vmul.f32 %v1198, %v1248
        %v1278 = vadd.f32 %v1276, %v1277
        %v1279 = vmul.f32 %v1201, %v1249
        %v1280 = vadd.f32 %v1278, %v1279
        %v1297 = vrot.slane %v1234, 7
        %v1298 = vrot.slane %v1235, 7
        %v1299 = vrot.slane %v1236, 7
        %v1300 = vrot.slane %v1237, 7
        %v1301 = vrot.slane %v1238, 7
        %v1302 = vrot.slane %v1239, 7
        %v1303 = vrot.slane %v1240, 7
        %v1304 = vrot.slane %v1241, 7
        %v1305 = vrot.slane %v1242, 7
        %v1306 = vrot.slane %v1243, 7
        %v1307 = vrot.slane %v1244, 7
        %v1308 = vrot.slane %v1245, 7
        %v1309 = vrot.slane %v1246, 7
        %v1310 = vrot.slane %v1247, 7
        %v1311 = vrot.slane %v1248, 7
        %v1312 = vrot.slane %v1249, 7
        %v1329 = vmul.f32 %v1043, %v1297
        %v1330 = vmul.f32 %v1045, %v1298
        %v1331 = vmul.f32 %v1047, %v1299
        %v1332 = vmul.f32 %v1049, %v1300
        %v1333 = vmul.f32 %v1051, %v1301
        %v1334 = vmul.f32 %v1053, %v1302
        %v1335 = vmul.f32 %v1055, %v1303
        %v1336 = vmul.f32 %v1057, %v1304
        %v1337 = vmul.f32 %v1059, %v1305
        %v1338 = vmul.f32 %v1061, %v1306
        %v1339 = vmul.f32 %v1063, %v1307
        %v1340 = vmul.f32 %v1065, %v1308
        %v1341 = vmul.f32 %v1067, %v1309
        %v1342 = vmul.f32 %v1069, %v1310
        %v1343 = vmul.f32 %v1071, %v1311
        %v1344 = vmul.f32 %v1073, %v1312
        %v1345 = vadd.f32 %v1329, %v1202
        %v1346 = vadd.f32 %v1330, %v1203
        %v1347 = vadd.f32 %v1331, %v1204
        %v1348 = vadd.f32 %v1332, %v1205
        %v1349 = vadd.f32 %v1333, %v1206
        %v1350 = vadd.f32 %v1334, %v1207
        %v1351 = vadd.f32 %v1335, %v1208
        %v1352 = vadd.f32 %v1336, %v1209
        %v1353 = vadd.f32 %v1337, %v1210
        %v1354 = vadd.f32 %v1338, %v1211
        %v1355 = vadd.f32 %v1339, %v1212
        %v1356 = vadd.f32 %v1340, %v1213
        %v1357 = vadd.f32 %v1341, %v1214
        %v1358 = vadd.f32 %v1342, %v1215
        %v1359 = vadd.f32 %v1343, %v1216
        %v1360 = vadd.f32 %v1344, %v1217
        %v1361 = vmul.f32 %v1156, %v1345
        %v1362 = vmul.f32 %v1159, %v1346
        %v1363 = vadd.f32 %v1361, %v1362
        %v1364 = vmul.f32 %v1162, %v1347
        %v1365 = vadd.f32 %v1363, %v1364
        %v1366 = vmul.f32 %v1165, %v1348
        %v1367 = vadd.f32 %v1365, %v1366
        %v1368 = vmul.f32 %v1168, %v1349
        %v1369 = vadd.f32 %v1367, %v1368
        %v1370 = vmul.f32 %v1171, %v1350
        %v1371 = vadd.f32 %v1369, %v1370
        %v1372 = vmul.f32 %v1174, %v1351
        %v1373 = vadd.f32 %v1371, %v1372
        %v1374 = vmul.f32 %v1177, %v1352
        %v1375 = vadd.f32 %v1373, %v1374
        %v1376 = vmul.f32 %v1180, %v1353
        %v1377 = vadd.f32 %v1375, %v1376
        %v1378 = vmul.f32 %v1183, %v1354
        %v1379 = vadd.f32 %v1377, %v1378
        %v1380 = vmul.f32 %v1186, %v1355
        %v1381 = vadd.f32 %v1379, %v1380
        %v1382 = vmul.f32 %v1189, %v1356
        %v1383 = vadd.f32 %v1381, %v1382
        %v1384 = vmul.f32 %v1192, %v1357
        %v1385 = vadd.f32 %v1383, %v1384
        %v1386 = vmul.f32 %v1195, %v1358
        %v1387 = vadd.f32 %v1385, %v1386
        %v1388 = vmul.f32 %v1198, %v1359
        %v1389 = vadd.f32 %v1387, %v1388
        %v1390 = vmul.f32 %v1201, %v1360
        %v1391 = vadd.f32 %v1389, %v1390
        %v1408 = vrot.slane %v1345, 7
        %v1409 = vrot.slane %v1346, 7
        %v1410 = vrot.slane %v1347, 7
        %v1411 = vrot.slane %v1348, 7
        %v1412 = vrot.slane %v1349, 7
        %v1413 = vrot.slane %v1350, 7
        %v1414 = vrot.slane %v1351, 7
        %v1415 = vrot.slane %v1352, 7
        %v1416 = vrot.slane %v1353, 7
        %v1417 = vrot.slane %v1354, 7
        %v1418 = vrot.slane %v1355, 7
        %v1419 = vrot.slane %v1356, 7
        %v1420 = vrot.slane %v1357, 7
        %v1421 = vrot.slane %v1358, 7
        %v1422 = vrot.slane %v1359, 7
        %v1423 = vrot.slane %v1360, 7
        %v1440 = vmul.f32 %v1043, %v1408
        %v1441 = vmul.f32 %v1045, %v1409
        %v1442 = vmul.f32 %v1047, %v1410
        %v1443 = vmul.f32 %v1049, %v1411
        %v1444 = vmul.f32 %v1051, %v1412
        %v1445 = vmul.f32 %v1053, %v1413
        %v1446 = vmul.f32 %v1055, %v1414
        %v1447 = vmul.f32 %v1057, %v1415
        %v1448 = vmul.f32 %v1059, %v1416
        %v1449 = vmul.f32 %v1061, %v1417
        %v1450 = vmul.f32 %v1063, %v1418
        %v1451 = vmul.f32 %v1065, %v1419
        %v1452 = vmul.f32 %v1067, %v1420
        %v1453 = vmul.f32 %v1069, %v1421
        %v1454 = vmul.f32 %v1071, %v1422
        %v1455 = vmul.f32 %v1073, %v1423
        %v1456 = vadd.f32 %v1440, %v1202
        %v1457 = vadd.f32 %v1441, %v1203
        %v1458 = vadd.f32 %v1442, %v1204
        %v1459 = vadd.f32 %v1443, %v1205
        %v1460 = vadd.f32 %v1444, %v1206
        %v1461 = vadd.f32 %v1445, %v1207
        %v1462 = vadd.f32 %v1446, %v1208
        %v1463 = vadd.f32 %v1447, %v1209
        %v1464 = vadd.f32 %v1448, %v1210
        %v1465 = vadd.f32 %v1449, %v1211
        %v1466 = vadd.f32 %v1450, %v1212
        %v1467 = vadd.f32 %v1451, %v1213
        %v1468 = vadd.f32 %v1452, %v1214
        %v1469 = vadd.f32 %v1453, %v1215
        %v1470 = vadd.f32 %v1454, %v1216
        %v1471 = vadd.f32 %v1455, %v1217
        %v1472 = vmul.f32 %v1156, %v1456
        %v1473 = vmul.f32 %v1159, %v1457
        %v1474 = vadd.f32 %v1472, %v1473
        %v1475 = vmul.f32 %v1162, %v1458
        %v1476 = vadd.f32 %v1474, %v1475
        %v1477 = vmul.f32 %v1165, %v1459
        %v1478 = vadd.f32 %v1476, %v1477
        %v1479 = vmul.f32 %v1168, %v1460
        %v1480 = vadd.f32 %v1478, %v1479
        %v1481 = vmul.f32 %v1171, %v1461
        %v1482 = vadd.f32 %v1480, %v1481
        %v1483 = vmul.f32 %v1174, %v1462
        %v1484 = vadd.f32 %v1482, %v1483
        %v1485 = vmul.f32 %v1177, %v1463
        %v1486 = vadd.f32 %v1484, %v1485
        %v1487 = vmul.f32 %v1180, %v1464
        %v1488 = vadd.f32 %v1486, %v1487
        %v1489 = vmul.f32 %v1183, %v1465
        %v1490 = vadd.f32 %v1488, %v1489
        %v1491 = vmul.f32 %v1186, %v1466
        %v1492 = vadd.f32 %v1490, %v1491
        %v1493 = vmul.f32 %v1189, %v1467
        %v1494 = vadd.f32 %v1492, %v1493
        %v1495 = vmul.f32 %v1192, %v1468
        %v1496 = vadd.f32 %v1494, %v1495
        %v1497 = vmul.f32 %v1195, %v1469
        %v1498 = vadd.f32 %v1496, %v1497
        %v1499 = vmul.f32 %v1198, %v1470
        %v1500 = vadd.f32 %v1498, %v1499
        %v1501 = vmul.f32 %v1201, %v1471
        %v1502 = vadd.f32 %v1500, %v1501
        %v1519 = vrot.slane %v1456, 7
        %v1520 = vrot.slane %v1457, 7
        %v1521 = vrot.slane %v1458, 7
        %v1522 = vrot.slane %v1459, 7
        %v1523 = vrot.slane %v1460, 7
        %v1524 = vrot.slane %v1461, 7
        %v1525 = vrot.slane %v1462, 7
        %v1526 = vrot.slane %v1463, 7
        %v1527 = vrot.slane %v1464, 7
        %v1528 = vrot.slane %v1465, 7
        %v1529 = vrot.slane %v1466, 7
        %v1530 = vrot.slane %v1467, 7
        %v1531 = vrot.slane %v1468, 7
        %v1532 = vrot.slane %v1469, 7
        %v1533 = vrot.slane %v1470, 7
        %v1534 = vrot.slane %v1471, 7
        %v1551 = vmul.f32 %v1043, %v1519
        %v1552 = vmul.f32 %v1045, %v1520
        %v1553 = vmul.f32 %v1047, %v1521
        %v1554 = vmul.f32 %v1049, %v1522
        %v1555 = vmul.f32 %v1051, %v1523
        %v1556 = vmul.f32 %v1053, %v1524
        %v1557 = vmul.f32 %v1055, %v1525
        %v1558 = vmul.f32 %v1057, %v1526
        %v1559 = vmul.f32 %v1059, %v1527
        %v1560 = vmul.f32 %v1061, %v1528
        %v1561 = vmul.f32 %v1063, %v1529
        %v1562 = vmul.f32 %v1065, %v1530
        %v1563 = vmul.f32 %v1067, %v1531
        %v1564 = vmul.f32 %v1069, %v1532
        %v1565 = vmul.f32 %v1071, %v1533
        %v1566 = vmul.f32 %v1073, %v1534
        %v1567 = vadd.f32 %v1551, %v1202
        %v1568 = vadd.f32 %v1552, %v1203
        %v1569 = vadd.f32 %v1553, %v1204
        %v1570 = vadd.f32 %v1554, %v1205
        %v1571 = vadd.f32 %v1555, %v1206
        %v1572 = vadd.f32 %v1556, %v1207
        %v1573 = vadd.f32 %v1557, %v1208
        %v1574 = vadd.f32 %v1558, %v1209
        %v1575 = vadd.f32 %v1559, %v1210
        %v1576 = vadd.f32 %v1560, %v1211
        %v1577 = vadd.f32 %v1561, %v1212
        %v1578 = vadd.f32 %v1562, %v1213
        %v1579 = vadd.f32 %v1563, %v1214
        %v1580 = vadd.f32 %v1564, %v1215
        %v1581 = vadd.f32 %v1565, %v1216
        %v1582 = vadd.f32 %v1566, %v1217
        %v1583 = vmul.f32 %v1156, %v1567
        %v1584 = vmul.f32 %v1159, %v1568
        %v1585 = vadd.f32 %v1583, %v1584
        %v1586 = vmul.f32 %v1162, %v1569
        %v1587 = vadd.f32 %v1585, %v1586
        %v1588 = vmul.f32 %v1165, %v1570
        %v1589 = vadd.f32 %v1587, %v1588
        %v1590 = vmul.f32 %v1168, %v1571
        %v1591 = vadd.f32 %v1589, %v1590
        %v1592 = vmul.f32 %v1171, %v1572
        %v1593 = vadd.f32 %v1591, %v1592
        %v1594 = vmul.f32 %v1174, %v1573
        %v1595 = vadd.f32 %v1593, %v1594
        %v1596 = vmul.f32 %v1177, %v1574
        %v1597 = vadd.f32 %v1595, %v1596
        %v1598 = vmul.f32 %v1180, %v1575
        %v1599 = vadd.f32 %v1597, %v1598
        %v1600 = vmul.f32 %v1183, %v1576
        %v1601 = vadd.f32 %v1599, %v1600
        %v1602 = vmul.f32 %v1186, %v1577
        %v1603 = vadd.f32 %v1601, %v1602
        %v1604 = vmul.f32 %v1189, %v1578
        %v1605 = vadd.f32 %v1603, %v1604
        %v1606 = vmul.f32 %v1192, %v1579
        %v1607 = vadd.f32 %v1605, %v1606
        %v1608 = vmul.f32 %v1195, %v1580
        %v1609 = vadd.f32 %v1607, %v1608
        %v1610 = vmul.f32 %v1198, %v1581
        %v1611 = vadd.f32 %v1609, %v1610
        %v1612 = vmul.f32 %v1201, %v1582
        %v1613 = vadd.f32 %v1611, %v1612
        %v1630 = vrot.slane %v1567, 7
        %v1631 = vrot.slane %v1568, 7
        %v1632 = vrot.slane %v1569, 7
        %v1633 = vrot.slane %v1570, 7
        %v1634 = vrot.slane %v1571, 7
        %v1635 = vrot.slane %v1572, 7
        %v1636 = vrot.slane %v1573, 7
        %v1637 = vrot.slane %v1574, 7
        %v1638 = vrot.slane %v1575, 7
        %v1639 = vrot.slane %v1576, 7
        %v1640 = vrot.slane %v1577, 7
        %v1641 = vrot.slane %v1578, 7
        %v1642 = vrot.slane %v1579, 7
        %v1643 = vrot.slane %v1580, 7
        %v1644 = vrot.slane %v1581, 7
        %v1645 = vrot.slane %v1582, 7
        %v1662 = vmul.f32 %v1043, %v1630
        %v1663 = vmul.f32 %v1045, %v1631
        %v1664 = vmul.f32 %v1047, %v1632
        %v1665 = vmul.f32 %v1049, %v1633
        %v1666 = vmul.f32 %v1051, %v1634
        %v1667 = vmul.f32 %v1053, %v1635
        %v1668 = vmul.f32 %v1055, %v1636
        %v1669 = vmul.f32 %v1057, %v1637
        %v1670 = vmul.f32 %v1059, %v1638
        %v1671 = vmul.f32 %v1061, %v1639
        %v1672 = vmul.f32 %v1063, %v1640
        %v1673 = vmul.f32 %v1065, %v1641
        %v1674 = vmul.f32 %v1067, %v1642
        %v1675 = vmul.f32 %v1069, %v1643
        %v1676 = vmul.f32 %v1071, %v1644
        %v1677 = vmul.f32 %v1073, %v1645
        %v1678 = vadd.f32 %v1662, %v1202
        %v1679 = vadd.f32 %v1663, %v1203
        %v1680 = vadd.f32 %v1664, %v1204
        %v1681 = vadd.f32 %v1665, %v1205
        %v1682 = vadd.f32 %v1666, %v1206
        %v1683 = vadd.f32 %v1667, %v1207
        %v1684 = vadd.f32 %v1668, %v1208
        %v1685 = vadd.f32 %v1669, %v1209
        %v1686 = vadd.f32 %v1670, %v1210
        %v1687 = vadd.f32 %v1671, %v1211
        %v1688 = vadd.f32 %v1672, %v1212
        %v1689 = vadd.f32 %v1673, %v1213
        %v1690 = vadd.f32 %v1674, %v1214
        %v1691 = vadd.f32 %v1675, %v1215
        %v1692 = vadd.f32 %v1676, %v1216
        %v1693 = vadd.f32 %v1677, %v1217
        %v1694 = vmul.f32 %v1156, %v1678
        %v1695 = vmul.f32 %v1159, %v1679
        %v1696 = vadd.f32 %v1694, %v1695
        %v1697 = vmul.f32 %v1162, %v1680
        %v1698 = vadd.f32 %v1696, %v1697
        %v1699 = vmul.f32 %v1165, %v1681
        %v1700 = vadd.f32 %v1698, %v1699
        %v1701 = vmul.f32 %v1168, %v1682
        %v1702 = vadd.f32 %v1700, %v1701
        %v1703 = vmul.f32 %v1171, %v1683
        %v1704 = vadd.f32 %v1702, %v1703
        %v1705 = vmul.f32 %v1174, %v1684
        %v1706 = vadd.f32 %v1704, %v1705
        %v1707 = vmul.f32 %v1177, %v1685
        %v1708 = vadd.f32 %v1706, %v1707
        %v1709 = vmul.f32 %v1180, %v1686
        %v1710 = vadd.f32 %v1708, %v1709
        %v1711 = vmul.f32 %v1183, %v1687
        %v1712 = vadd.f32 %v1710, %v1711
        %v1713 = vmul.f32 %v1186, %v1688
        %v1714 = vadd.f32 %v1712, %v1713
        %v1715 = vmul.f32 %v1189, %v1689
        %v1716 = vadd.f32 %v1714, %v1715
        %v1717 = vmul.f32 %v1192, %v1690
        %v1718 = vadd.f32 %v1716, %v1717
        %v1719 = vmul.f32 %v1195, %v1691
        %v1720 = vadd.f32 %v1718, %v1719
        %v1721 = vmul.f32 %v1198, %v1692
        %v1722 = vadd.f32 %v1720, %v1721
        %v1723 = vmul.f32 %v1201, %v1693
        %v1724 = vadd.f32 %v1722, %v1723
        %v1741 = vrot.slane %v1678, 7
        %v1742 = vrot.slane %v1679, 7
        %v1743 = vrot.slane %v1680, 7
        %v1744 = vrot.slane %v1681, 7
        %v1745 = vrot.slane %v1682, 7
        %v1746 = vrot.slane %v1683, 7
        %v1747 = vrot.slane %v1684, 7
        %v1748 = vrot.slane %v1685, 7
        %v1749 = vrot.slane %v1686, 7
        %v1750 = vrot.slane %v1687, 7
        %v1751 = vrot.slane %v1688, 7
        %v1752 = vrot.slane %v1689, 7
        %v1753 = vrot.slane %v1690, 7
        %v1754 = vrot.slane %v1691, 7
        %v1755 = vrot.slane %v1692, 7
        %v1756 = vrot.slane %v1693, 7
        %v1773 = vmul.f32 %v1043, %v1741
        %v1774 = vmul.f32 %v1045, %v1742
        %v1775 = vmul.f32 %v1047, %v1743
        %v1776 = vmul.f32 %v1049, %v1744
        %v1777 = vmul.f32 %v1051, %v1745
        %v1778 = vmul.f32 %v1053, %v1746
        %v1779 = vmul.f32 %v1055, %v1747
        %v1780 = vmul.f32 %v1057, %v1748
        %v1781 = vmul.f32 %v1059, %v1749
        %v1782 = vmul.f32 %v1061, %v1750
        %v1783 = vmul.f32 %v1063, %v1751
        %v1784 = vmul.f32 %v1065, %v1752
        %v1785 = vmul.f32 %v1067, %v1753
        %v1786 = vmul.f32 %v1069, %v1754
        %v1787 = vmul.f32 %v1071, %v1755
        %v1788 = vmul.f32 %v1073, %v1756
        %v1789 = vadd.f32 %v1773, %v1202
        %v1790 = vadd.f32 %v1774, %v1203
        %v1791 = vadd.f32 %v1775, %v1204
        %v1792 = vadd.f32 %v1776, %v1205
        %v1793 = vadd.f32 %v1777, %v1206
        %v1794 = vadd.f32 %v1778, %v1207
        %v1795 = vadd.f32 %v1779, %v1208
        %v1796 = vadd.f32 %v1780, %v1209
        %v1797 = vadd.f32 %v1781, %v1210
        %v1798 = vadd.f32 %v1782, %v1211
        %v1799 = vadd.f32 %v1783, %v1212
        %v1800 = vadd.f32 %v1784, %v1213
        %v1801 = vadd.f32 %v1785, %v1214
        %v1802 = vadd.f32 %v1786, %v1215
        %v1803 = vadd.f32 %v1787, %v1216
        %v1804 = vadd.f32 %v1788, %v1217
        %v1805 = vmul.f32 %v1156, %v1789
        %v1806 = vmul.f32 %v1159, %v1790
        %v1807 = vadd.f32 %v1805, %v1806
        %v1808 = vmul.f32 %v1162, %v1791
        %v1809 = vadd.f32 %v1807, %v1808
        %v1810 = vmul.f32 %v1165, %v1792
        %v1811 = vadd.f32 %v1809, %v1810
        %v1812 = vmul.f32 %v1168, %v1793
        %v1813 = vadd.f32 %v1811, %v1812
        %v1814 = vmul.f32 %v1171, %v1794
        %v1815 = vadd.f32 %v1813, %v1814
        %v1816 = vmul.f32 %v1174, %v1795
        %v1817 = vadd.f32 %v1815, %v1816
        %v1818 = vmul.f32 %v1177, %v1796
        %v1819 = vadd.f32 %v1817, %v1818
        %v1820 = vmul.f32 %v1180, %v1797
        %v1821 = vadd.f32 %v1819, %v1820
        %v1822 = vmul.f32 %v1183, %v1798
        %v1823 = vadd.f32 %v1821, %v1822
        %v1824 = vmul.f32 %v1186, %v1799
        %v1825 = vadd.f32 %v1823, %v1824
        %v1826 = vmul.f32 %v1189, %v1800
        %v1827 = vadd.f32 %v1825, %v1826
        %v1828 = vmul.f32 %v1192, %v1801
        %v1829 = vadd.f32 %v1827, %v1828
        %v1830 = vmul.f32 %v1195, %v1802
        %v1831 = vadd.f32 %v1829, %v1830
        %v1832 = vmul.f32 %v1198, %v1803
        %v1833 = vadd.f32 %v1831, %v1832
        %v1834 = vmul.f32 %v1201, %v1804
        %v1835 = vadd.f32 %v1833, %v1834
        %v1852 = vrot.slane %v1789, 7
        %v1853 = vrot.slane %v1790, 7
        %v1854 = vrot.slane %v1791, 7
        %v1855 = vrot.slane %v1792, 7
        %v1856 = vrot.slane %v1793, 7
        %v1857 = vrot.slane %v1794, 7
        %v1858 = vrot.slane %v1795, 7
        %v1859 = vrot.slane %v1796, 7
        %v1860 = vrot.slane %v1797, 7
        %v1861 = vrot.slane %v1798, 7
        %v1862 = vrot.slane %v1799, 7
        %v1863 = vrot.slane %v1800, 7
        %v1864 = vrot.slane %v1801, 7
        %v1865 = vrot.slane %v1802, 7
        %v1866 = vrot.slane %v1803, 7
        %v1867 = vrot.slane %v1804, 7
        %v1884 = vmul.f32 %v1043, %v1852
        %v1885 = vmul.f32 %v1045, %v1853
        %v1886 = vmul.f32 %v1047, %v1854
        %v1887 = vmul.f32 %v1049, %v1855
        %v1888 = vmul.f32 %v1051, %v1856
        %v1889 = vmul.f32 %v1053, %v1857
        %v1890 = vmul.f32 %v1055, %v1858
        %v1891 = vmul.f32 %v1057, %v1859
        %v1892 = vmul.f32 %v1059, %v1860
        %v1893 = vmul.f32 %v1061, %v1861
        %v1894 = vmul.f32 %v1063, %v1862
        %v1895 = vmul.f32 %v1065, %v1863
        %v1896 = vmul.f32 %v1067, %v1864
        %v1897 = vmul.f32 %v1069, %v1865
        %v1898 = vmul.f32 %v1071, %v1866
        %v1899 = vmul.f32 %v1073, %v1867
        %v1900 = vadd.f32 %v1884, %v1202
        %v1901 = vadd.f32 %v1885, %v1203
        %v1902 = vadd.f32 %v1886, %v1204
        %v1903 = vadd.f32 %v1887, %v1205
        %v1904 = vadd.f32 %v1888, %v1206
        %v1905 = vadd.f32 %v1889, %v1207
        %v1906 = vadd.f32 %v1890, %v1208
        %v1907 = vadd.f32 %v1891, %v1209
        %v1908 = vadd.f32 %v1892, %v1210
        %v1909 = vadd.f32 %v1893, %v1211
        %v1910 = vadd.f32 %v1894, %v1212
        %v1911 = vadd.f32 %v1895, %v1213
        %v1912 = vadd.f32 %v1896, %v1214
        %v1913 = vadd.f32 %v1897, %v1215
        %v1914 = vadd.f32 %v1898, %v1216
        %v1915 = vadd.f32 %v1899, %v1217
        %v1916 = vmul.f32 %v1156, %v1900
        %v1917 = vmul.f32 %v1159, %v1901
        %v1918 = vadd.f32 %v1916, %v1917
        %v1919 = vmul.f32 %v1162, %v1902
        %v1920 = vadd.f32 %v1918, %v1919
        %v1921 = vmul.f32 %v1165, %v1903
        %v1922 = vadd.f32 %v1920, %v1921
        %v1923 = vmul.f32 %v1168, %v1904
        %v1924 = vadd.f32 %v1922, %v1923
        %v1925 = vmul.f32 %v1171, %v1905
        %v1926 = vadd.f32 %v1924, %v1925
        %v1927 = vmul.f32 %v1174, %v1906
        %v1928 = vadd.f32 %v1926, %v1927
        %v1929 = vmul.f32 %v1177, %v1907
        %v1930 = vadd.f32 %v1928, %v1929
        %v1931 = vmul.f32 %v1180, %v1908
        %v1932 = vadd.f32 %v1930, %v1931
        %v1933 = vmul.f32 %v1183, %v1909
        %v1934 = vadd.f32 %v1932, %v1933
        %v1935 = vmul.f32 %v1186, %v1910
        %v1936 = vadd.f32 %v1934, %v1935
        %v1937 = vmul.f32 %v1189, %v1911
        %v1938 = vadd.f32 %v1936, %v1937
        %v1939 = vmul.f32 %v1192, %v1912
        %v1940 = vadd.f32 %v1938, %v1939
        %v1941 = vmul.f32 %v1195, %v1913
        %v1942 = vadd.f32 %v1940, %v1941
        %v1943 = vmul.f32 %v1198, %v1914
        %v1944 = vadd.f32 %v1942, %v1943
        %v1945 = vmul.f32 %v1201, %v1915
        %v1946 = vadd.f32 %v1944, %v1945
        %v1963 = vrot.slane %v1900, 7
        %v1964 = vrot.slane %v1901, 7
        %v1965 = vrot.slane %v1902, 7
        %v1966 = vrot.slane %v1903, 7
        %v1967 = vrot.slane %v1904, 7
        %v1968 = vrot.slane %v1905, 7
        %v1969 = vrot.slane %v1906, 7
        %v1970 = vrot.slane %v1907, 7
        %v1971 = vrot.slane %v1908, 7
        %v1972 = vrot.slane %v1909, 7
        %v1973 = vrot.slane %v1910, 7
        %v1974 = vrot.slane %v1911, 7
        %v1975 = vrot.slane %v1912, 7
        %v1976 = vrot.slane %v1913, 7
        %v1977 = vrot.slane %v1914, 7
        %v1978 = vrot.slane %v1915, 7
        %v1995 = vmul.f32 %v1043, %v1963
        %v1996 = vmul.f32 %v1045, %v1964
        %v1997 = vmul.f32 %v1047, %v1965
        %v1998 = vmul.f32 %v1049, %v1966
        %v1999 = vmul.f32 %v1051, %v1967
        %v2000 = vmul.f32 %v1053, %v1968
        %v2001 = vmul.f32 %v1055, %v1969
        %v2002 = vmul.f32 %v1057, %v1970
        %v2003 = vmul.f32 %v1059, %v1971
        %v2004 = vmul.f32 %v1061, %v1972
        %v2005 = vmul.f32 %v1063, %v1973
        %v2006 = vmul.f32 %v1065, %v1974
        %v2007 = vmul.f32 %v1067, %v1975
        %v2008 = vmul.f32 %v1069, %v1976
        %v2009 = vmul.f32 %v1071, %v1977
        %v2010 = vmul.f32 %v1073, %v1978
        %v2011 = vadd.f32 %v1995, %v1202
        %v2012 = vadd.f32 %v1996, %v1203
        %v2013 = vadd.f32 %v1997, %v1204
        %v2014 = vadd.f32 %v1998, %v1205
        %v2015 = vadd.f32 %v1999, %v1206
        %v2016 = vadd.f32 %v2000, %v1207
        %v2017 = vadd.f32 %v2001, %v1208
        %v2018 = vadd.f32 %v2002, %v1209
        %v2019 = vadd.f32 %v2003, %v1210
        %v2020 = vadd.f32 %v2004, %v1211
        %v2021 = vadd.f32 %v2005, %v1212
        %v2022 = vadd.f32 %v2006, %v1213
        %v2023 = vadd.f32 %v2007, %v1214
        %v2024 = vadd.f32 %v2008, %v1215
        %v2025 = vadd.f32 %v2009, %v1216
        %v2026 = vadd.f32 %v2010, %v1217
        %v2027 = vmul.f32 %v1156, %v2011
        %v2028 = vmul.f32 %v1159, %v2012
        %v2029 = vadd.f32 %v2027, %v2028
        %v2030 = vmul.f32 %v1162, %v2013
        %v2031 = vadd.f32 %v2029, %v2030
        %v2032 = vmul.f32 %v1165, %v2014
        %v2033 = vadd.f32 %v2031, %v2032
        %v2034 = vmul.f32 %v1168, %v2015
        %v2035 = vadd.f32 %v2033, %v2034
        %v2036 = vmul.f32 %v1171, %v2016
        %v2037 = vadd.f32 %v2035, %v2036
        %v2038 = vmul.f32 %v1174, %v2017
        %v2039 = vadd.f32 %v2037, %v2038
        %v2040 = vmul.f32 %v1177, %v2018
        %v2041 = vadd.f32 %v2039, %v2040
        %v2042 = vmul.f32 %v1180, %v2019
        %v2043 = vadd.f32 %v2041, %v2042
        %v2044 = vmul.f32 %v1183, %v2020
        %v2045 = vadd.f32 %v2043, %v2044
        %v2046 = vmul.f32 %v1186, %v2021
        %v2047 = vadd.f32 %v2045, %v2046
        %v2048 = vmul.f32 %v1189, %v2022
        %v2049 = vadd.f32 %v2047, %v2048
        %v2050 = vmul.f32 %v1192, %v2023
        %v2051 = vadd.f32 %v2049, %v2050
        %v2052 = vmul.f32 %v1195, %v2024
        %v2053 = vadd.f32 %v2051, %v2052
        %v2054 = vmul.f32 %v1198, %v2025
        %v2055 = vadd.f32 %v2053, %v2054
        %v2056 = vmul.f32 %v1201, %v2026
        %v2057 = vadd.f32 %v2055, %v2056
        %v2058 = vsel %vm662, %v1280, %v1391
        %v2059 = vsel %vm664, %v2058, %v1502
        %v2060 = vsel %vm666, %v2059, %v1613
        %vm2061 = vcmask 1043456
        %v2062 = vsel %vm2061, %v2060, %v1724
        %v2063 = vsel %vm703, %v2062, %v1835
        %v2064 = vsel %vm692, %v2063, %v1946
        %v2065 = vsel %vm681, %v2064, %v2057
        %2066 = vst.msk [vmem:[#allocation5] sm:$0xff] %vm737, %v2065
        %2067 = vst.msk [vmem:[#allocation6 - $0x7] sm:$0x80] %vm719, %v2011
        %2068 = vst.msk [vmem:[#allocation6 - $0x6] sm:$0x80] %vm719, %v2012
        %2069 = vst.msk [vmem:[#allocation6 - $0x5] sm:$0x80] %vm719, %v2013
        %2070 = vst.msk [vmem:[#allocation6 - $0x4] sm:$0x80] %vm719, %v2014
        %2071 = vst.msk [vmem:[#allocation6 - $0x3] sm:$0x80] %vm719, %v2015
        %2072 = vst.msk [vmem:[#allocation6 - $0x2] sm:$0x80] %vm719, %v2016
        %2073 = vst.msk [vmem:[#allocation6 - $0x1] sm:$0x80] %vm719, %v2017
        %2074 = vst.msk [vmem:[#allocation6] sm:$0x80] %vm719, %v2018
        %2075 = vst.msk [vmem:[#allocation6 + $0x1] sm:$0x80] %vm719, %v2019
        %2076 = vst.msk [vmem:[#allocation6 + $0x2] sm:$0x80] %vm719, %v2020
        %2077 = vst.msk [vmem:[#allocation6 + $0x3] sm:$0x80] %vm719, %v2021
        %2078 = vst.msk [vmem:[#allocation6 + $0x4] sm:$0x80] %vm719, %v2022
        %2079 = vst.msk [vmem:[#allocation6 + $0x5] sm:$0x80] %vm719, %v2023
        %2080 = vst.msk [vmem:[#allocation6 + $0x6] sm:$0x80] %vm719, %v2024
        %2081 = vst.msk [vmem:[#allocation6 + $0x7] sm:$0x80] %vm719, %v2025
        %2082 = vst.msk [vmem:[#allocation6 + $0x8] sm:$0x80] %vm719, %v2026
        // Predicated region
        $region93: #{tpu_custom_call.1} parent=63 // pred_check
          %p2083 = pneg %p555
        $region94: #{tpu_custom_call.1} parent=63 // pred_check_branch
          %2085 = sbr.rel (%p2083) target = $region96
        $region95: #{tpu_custom_call.1} parent=63 // pred_region
          %2086 = vst.msk [vmem:[%s552 - $0x7] sm:$0x80] %vm719, %v2011
          %2087 = vst.msk [vmem:[%s552 - $0x6] sm:$0x80] %vm719, %v2012
          %2088 = vst.msk [vmem:[%s552 - $0x5] sm:$0x80] %vm719, %v2013
          %2089 = vst.msk [vmem:[%s552 - $0x4] sm:$0x80] %vm719, %v2014
          %2090 = vst.msk [vmem:[%s552 - $0x3] sm:$0x80] %vm719, %v2015
          %2091 = vst.msk [vmem:[%s552 - $0x2] sm:$0x80] %vm719, %v2016
          %2092 = vst.msk [vmem:[%s552 - $0x1] sm:$0x80] %vm719, %v2017
          %2093 = vst.msk [vmem:[%s552] sm:$0x80] %vm719, %v2018
          %2094 = vst.msk [vmem:[%s552 + $0x1] sm:$0x80] %vm719, %v2019
          %2095 = vst.msk [vmem:[%s552 + $0x2] sm:$0x80] %vm719, %v2020
          %2096 = vst.msk [vmem:[%s552 + $0x3] sm:$0x80] %vm719, %v2021
          %2097 = vst.msk [vmem:[%s552 + $0x4] sm:$0x80] %vm719, %v2022
          %2098 = vst.msk [vmem:[%s552 + $0x5] sm:$0x80] %vm719, %v2023
          %2099 = vst.msk [vmem:[%s552 + $0x6] sm:$0x80] %vm719, %v2024
          %2100 = vst.msk [vmem:[%s552 + $0x7] sm:$0x80] %vm719, %v2025
          %2101 = vst.msk [vmem:[%s552 + $0x8] sm:$0x80] %vm719, %v2026
        $region96: #{tpu_custom_call.1} parent=63 // pred_fallthru
          _
        %v2102 = vld [vmem:[#allocation5] sm:$0xff]
        %v2103 = vld [vmem:[%s9] sm:$0x1]
        %v2105 = vperm.slane %v2103, 0
        %v2107 = vmul.f32 %v714, %v2105
        %v2108 = vadd.f32 %v2102, %v2107
        %v2109 = vsub.f32 0.0, %v645
        %v2110 = vmul.f32 %v2109, 1.442695
        %v2111 = vpow.pop %v2110
        %v2112 = vadd.f32 %v2111, 1.0
        %v2113 = vrcp.pop %v2112
        %v2114 = vmul.f32 %v645, %v2113
        %2116 = vrot.lane.b32.xlu0 %v2114, 64
        %v2117 = vpop.permute.xlu0 %2116
        %v2119 = vmul.f32 %v2108, %v2117
        %v2120 = vld [vmem:[%s10] sm:$0xff]
        %v2121 = vld [vmem:[%s10 + $0x8] sm:$0xff]
        %v2122 = vld [vmem:[%s10 + $0x10] sm:$0xff]
        %v2123 = vld [vmem:[%s10 + $0x18] sm:$0xff]
        %v2124 = vld [vmem:[%s10 + $0x20] sm:$0xff]
        %v2125 = vld [vmem:[%s10 + $0x28] sm:$0xff]
        %v2126 = vld [vmem:[%s10 + $0x30] sm:$0xff]
        %v2127 = vld [vmem:[%s10 + $0x38] sm:$0xff]
        %v2129 = vsel %vm737, %v2119, 0
        %2131 = vmatpush.msra.mxu0 0.0
        %2132 = vmatpush.msra.mxu0 0.0
        %2133 = vmatpush.msra.mxu0 0.0
        %2134 = vmatpush.msra.mxu0 0.0
        %2135 = vmatpush.msra.mxu0 0.0
        %2136 = vmatpush.msra.mxu0 0.0
        %2137 = vmatpush.msra.mxu0 0.0
        %2138 = vmatpush.msra.mxu0 0.0
        %2139 = vmatpush.msra.mxu0 %v2127
        %2140 = vmatpush.msra.mxu0 %v2126
        %2141 = vmatpush.msra.mxu0 %v2125
        %2142 = vmatpush.msra.mxu0 %v2124
        %2143 = vmatpush.msra.mxu0 %v2123
        %2144 = vmatpush.msra.mxu0 %v2122
        %2145 = vmatpush.msra.mxu0 %v2121
        %2146 = vmatpush.msra.mxu0 %v2120
        %2147 = vmatmul.f32.gmra.mxu0 %v2129
        %v2148 = vpop.f32.mrf.mxu0
        %v2149 = vadd.f32 0.0, %v2148
        %2150 = vdwg.mxu0
        %v2151 = vadd.f32 %v579, %v2149
        %2152 = vst.msk [vmem:[%s538] sm:$0xff] %vm580, %v2151
        %s2153 = sand.u32 %s296, 1
        %s2154 = scalar_lea.sflag [#allocation10], %s2153
        %s2155 = sand.u32 %s296, 1
        %s2156 = smul.addr %s2155, 8
        %s2157 = scalar_lea.vmem [#allocation17], %s2156
        %s2158 = sand.u32 %s36, 1
        %s2159 = scalar_lea.sflag [#allocation19], %s2158
        %s2160 = sand.u32 %s322, 1
        %s2161 = smul.addr %s2160, 3
        %s2162 = scalar_lea.vmem [#allocation18], %s2161
        %s2163 = sand.u32 %s36, 1
        %s2164 = scalar_lea.sflag [#allocation19], %s2163
        %s2165 = sand.u32 %s348, 1
        %s2166 = smul.addr %s2165, 16
        %s2167 = scalar_lea.vmem [#allocation20], %s2166
        // Predicated region
        $region97: #{tpu_custom_call.1} parent=63 // pred_check
          %p2168 = pneg %p306
        $region98: #{tpu_custom_call.1} parent=63 // pred_check_branch
          %2170 = sbr.rel (%p2168) target = $region100
        $region99: #{tpu_custom_call.1} parent=63 // pred_region
          %s2171 = sadd.s32 %s40, %s41
          %2173 = vsyncadd %s2154, 0
          %s2174 = smul.addr %s2171, 8
          %s2175 = scalar_lea.hbm %s11, %s2174
          %s2177 = sshll.u32 %s2157, 4
          %s2178 = int_to_ptr.vmem [resolvable:$true] %s2177
          %s2179 = sshll.u32 %s2175, 4
          %s2180 = int_to_ptr.hbm [resolvable:$true] %s2179
          %2182 = dma.vmem_to_hbm [thread:$0]  %s2178, 128, %s2180, %s2154
        $region100: #{tpu_custom_call.1} parent=63 // pred_fallthru
          _
        // Predicated region
        $region101: #{tpu_custom_call.1} parent=63 // pred_check
          %p2183 = pneg %p332
        $region102: #{tpu_custom_call.1} parent=63 // pred_check_branch
          %2185 = sbr.rel (%p2183) target = $region104
        $region103: #{tpu_custom_call.1} parent=63 // pred_region
          %2187 = vsyncadd %s2159, 0
          %s2188 = smul.addr %s40, 3
          %s2189 = scalar_lea.hbm %s12, %s2188
          %s2190 = sshll.u32 %s2162, 4
          %s2191 = int_to_ptr.vmem [resolvable:$true] %s2190
          %s2192 = sshll.u32 %s2189, 4
          %s2193 = int_to_ptr.hbm [resolvable:$true] %s2192
          %2198 = dma.vmem_to_hbm [thread:$0]  %s2191, 48, %s2193, %s2159, 16, 16, 1
        $region104: #{tpu_custom_call.1} parent=63 // pred_fallthru
          _
        // Predicated region
        $region105: #{tpu_custom_call.1} parent=63 // pred_check
          %p2199 = pneg %p358
        $region106: #{tpu_custom_call.1} parent=63 // pred_check_branch
          %2201 = sbr.rel (%p2199) target = $region108
        $region107: #{tpu_custom_call.1} parent=63 // pred_region
          %2203 = vsyncadd %s2164, 0
          %s2204 = smul.addr %s40, 16
          %s2205 = scalar_lea.hbm %s13, %s2204
          %s2206 = sshll.u32 %s2167, 4
          %s2207 = int_to_ptr.vmem [resolvable:$true] %s2206
          %s2208 = sshll.u32 %s2205, 4
          %s2209 = int_to_ptr.hbm [resolvable:$true] %s2208
          %2214 = dma.vmem_to_hbm [thread:$0]  %s2207, 256, %s2209, %s2164, 16, 16, 1
        $region108: #{tpu_custom_call.1} parent=63 // pred_fallthru
          _
      $region64: #{tpu_custom_call.1} parent=5 // pred_fallthru
        _
      %p2215 = scmp.le.s32.totalorder 2, %s31
      // Predicated region
      $region109: #{tpu_custom_call.1} parent=5 // pred_check
        %p2216 = pneg %p2215
      $region110: #{tpu_custom_call.1} parent=5 // pred_check_branch
        %2218 = sbr.rel (%p2216) target = $region112
      $region111: #{tpu_custom_call.1} parent=5 // pred_region
        %s2219 = ssub.s32 %s31, 2
        // Predicated region
        $region113: #{tpu_custom_call.1} parent=111 // pred_check
          %p2220 = pneg %p312
        $region114: #{tpu_custom_call.1} parent=111 // pred_check_branch
          %2222 = sbr.rel (%p2220) target = $region116
        $region115: #{tpu_custom_call.1} parent=111 // pred_region
          %s2223 = sand.u32 %s297, 1
          %s2224 = scalar_lea.sflag [#allocation10], %s2223
          %s2225 = sand.u32 %s297, 1
          %s2226 = smul.addr %s2225, 8
          %s2227 = scalar_lea.vmem [#allocation17], %s2226
          %2229 = dma.done %s2224, 128
        $region116: #{tpu_custom_call.1} parent=111 // pred_fallthru
          _
        // Predicated region
        $region117: #{tpu_custom_call.1} parent=111 // pred_check
          %p2230 = pneg %p338
        $region118: #{tpu_custom_call.1} parent=111 // pred_check_branch
          %2232 = sbr.rel (%p2230) target = $region120
        $region119: #{tpu_custom_call.1} parent=111 // pred_region
          %s2233 = sand.u32 %s37, 1
          %s2234 = scalar_lea.sflag [#allocation19], %s2233
          %s2235 = sand.u32 %s323, 1
          %s2236 = smul.addr %s2235, 3
          %s2237 = scalar_lea.vmem [#allocation18], %s2236
          %2239 = dma.done %s2234, 48
        $region120: #{tpu_custom_call.1} parent=111 // pred_fallthru
          _
        // Predicated region
        $region121: #{tpu_custom_call.1} parent=111 // pred_check
          %p2240 = pneg %p364
        $region122: #{tpu_custom_call.1} parent=111 // pred_check_branch
          %2242 = sbr.rel (%p2240) target = $region124
        $region123: #{tpu_custom_call.1} parent=111 // pred_region
          %s2243 = sand.u32 %s37, 1
          %s2244 = scalar_lea.sflag [#allocation19], %s2243
          %s2245 = sand.u32 %s349, 1
          %s2246 = smul.addr %s2245, 16
          %s2247 = scalar_lea.vmem [#allocation20], %s2246
          %2249 = dma.done %s2244, 256
        $region124: #{tpu_custom_call.1} parent=111 // pred_fallthru
          _
      $region112: #{tpu_custom_call.1} parent=5 // pred_fallthru
        _
    $region6: #{tpu_custom_call.1} parent=1 // loop_footer
      %s35 = sadd.s32 1, %s31
    $region7: #{tpu_custom_call.1} parent=1 // loop_footer_branch
      %30 = sbr.rel target = $region3
    $region8: #{tpu_custom_call.1} parent=1 // loop_exit
      _
    %2250 = vsyncpa [#allocation9], 1
    %s2251 = scalar_lea.sflag [#allocation9], 1
    %2252 = vsyncpa %s2251, 1
    %2253 = vsyncpa [#allocation12], 1
    %2254 = vsyncpa [#allocation15], 1
    %2255 = vsyncpa [#allocation10], 1
    %s2256 = scalar_lea.sflag [#allocation10], 1
    %2257 = vsyncpa %s2256, 1
    %2258 = vsyncpa [#allocation19], 1
    %s2259 = scalar_lea.sflag [#allocation19], 1
    %2260 = vsyncpa %s2259, 1

// kernel: tpu_custom_call.1
$region0: #{tpu_custom_call.1}
  #allocation0 [shape = 'u32[]', space=smem, size = 0x4, offset = 0x4, fixed_abs, tag = 'smem constant byte address 0x4 - core index']
  #allocation1 [shape = 'u32[72,128]{1,0:T(1,128)}', space=vmem, size = 0x9000, scoped, tag = 'internal scratch']
  #allocation2 [shape = 'f32[8,64]{1,0:T(8,128)}', space=vmem, size = 0x1000, scoped, tag = 'scratch operand']
  #allocation3 [shape = 'f32[8,64]{1,0:T(8,128)}', space=vmem, size = 0x1000, scoped, tag = 'scratch operand']
  #allocation4 [shape = 'f32[8,32]{1,0:T(8,128)}', space=vmem, size = 0x1000, scoped, tag = 'scratch operand']
  #allocation5 [shape = 'f32[8,64]{1,0:T(8,128)}', space=vmem, size = 0x1000, scoped, tag = 'scratch operand']
  #allocation6 [shape = 'f32[16,1,64]{2,1,0:T(1,128)}', space=vmem, size = 0x2000, scoped, tag = 'scratch operand']
  #allocation7 [shape = 'f32[3,1,64]{2,1,0:T(1,128)}', space=vmem, size = 0x600, scoped, tag = 'scratch operand']
  %s0 = inlined_call_operand.hbm [shape: f32[16,32], index: 0, kind: input, shape index: {}]
  %s1 = inlined_call_operand.vmem [shape: f32[1,32], index: 1, kind: input, shape index: {}]
  %s2 = inlined_call_operand.hbm [shape: f32[1,32], index: 2, kind: input, shape index: {}]
  %s3 = inlined_call_operand.vmem [shape: f32[32,128], index: 3, kind: input, shape index: {}]
  %s4 = inlined_call_operand.vmem [shape: f32[4,64], index: 4, kind: input, shape index: {}]
  %s5 = inlined_call_operand.hbm [shape: f32[1,64], index: 5, kind: input, shape index: {}]
  %s6 = inlined_call_operand.vmem [shape: f32[64,96], index: 6, kind: input, shape index: {}]
  %s7 = inlined_call_operand.hbm [shape: f32[1,64], index: 7, kind: input, shape index: {}]
  %s8 = inlined_call_operand.hbm [shape: f32[16,1,64], index: 8, kind: input, shape index: {}]
  %s9 = inlined_call_operand.vmem [shape: f32[1,64], index: 9, kind: input, shape index: {}]
  %s10 = inlined_call_operand.vmem [shape: f32[64,32], index: 10, kind: input, shape index: {}]
  %s11 = inlined_call_operand.hbm [shape: f32[16,32], index: 11, kind: output, shape index: {0}]
  %s12 = inlined_call_operand.hbm [shape: f32[2,3,1,64], index: 12, kind: output, shape index: {1}]
  %s13 = inlined_call_operand.hbm [shape: f32[2,16,1,64], index: 13, kind: output, shape index: {2}]
  %14 = xla_tuple %s11, %s12, %s13
  %s15 = sld [smem:[#allocation0]]
  $region125: #{tpu_custom_call.1} parent=0
    _
  %s17 = ssub.s32 1, %s15
  %s18 = scalar_select 0, %s17, %s15
  $region1: #{tpu_custom_call.1} parent=0
    #allocation8 [shape = 'u8[8192]{0}', space=vmem, size = 0x2000, scoped, tag = 'input window, operand 0']
    #allocation9 [shape = 's32[2]{0}', space=sflag, size = 0x8, scoped, tag = 'scoped memory for tpu_custom_call.1']
    #allocation10 [shape = 's32[2]{0}', space=sflag, size = 0x8, scoped, tag = 'scoped memory for tpu_custom_call.1']
    #allocation11 [shape = 'u8[512]{0}', space=vmem, size = 0x400, scoped, tag = 'input window, operand 2, single buffered']
    #allocation12 [shape = 's32[1]{0}', space=sflag, size = 0x4, scoped, tag = 'scoped memory for tpu_custom_call.1']
    #allocation13 [shape = 'u8[512]{0}', space=vmem, size = 0x400, scoped, tag = 'input window, operand 5, single buffered']
    #allocation14 [shape = 'u8[512]{0}', space=vmem, size = 0x400, scoped, tag = 'input window, operand 7, single buffered']
    #allocation15 [shape = 's32[1]{0}', space=sflag, size = 0x4, scoped, tag = 'scoped memory for tpu_custom_call.1']
    #allocation16 [shape = 'u8[8192]{0}', space=vmem, size = 0x2000, scoped, tag = 'input window, operand 8, single buffered']
    #allocation17 [shape = 'u8[8192]{0}', space=vmem, size = 0x2000, scoped, tag = 'output window, operand 0']
    #allocation18 [shape = 'u8[3072]{0}', space=vmem, size = 0xc00, scoped, tag = 'output window, operand 1']
    #allocation19 [shape = 's32[2]{0}', space=sflag, size = 0x8, scoped, tag = 'scoped memory for tpu_custom_call.1']
    #allocation20 [shape = 'u8[16384]{0}', space=vmem, size = 0x4000, scoped, tag = 'output window, operand 2']
    %19 = vsyncpa [#allocation9], 0
    %s20 = scalar_lea.sflag [#allocation9], 1
    %21 = vsyncpa %s20, 0
    %22 = vsyncpa [#allocation12], 0
    %23 = vsyncpa [#allocation15], 0
    %24 = vsyncpa [#allocation10], 0
    %s25 = scalar_lea.sflag [#allocation10], 1
    %26 = vsyncpa %s25, 0
    %27 = vsyncpa [#allocation19], 0
    %s28 = scalar_lea.sflag [#allocation19], 1
    %29 = vsyncpa %s28, 0
    loop: start=0, step=1, limit=4
    $region2: #{tpu_custom_call.1} parent=1 // loop_pre_header
      _
    $region3: #{tpu_custom_call.1} parent=1 // loop_header
      %s31 = sphi 0, %s35
      %p32 = scmp.ge.s32.totalorder %s31, 4
      %s38 = sphi 0, %s50
      %s39 = sphi 0, %s46
      %s40 = sphi 0, %s38
      %s41 = sphi 0, %s39
      %s42 = sphi 0, %s40
      %s43 = sphi 0, %s41
      %s55 = sphi 0, %s57
      %s58 = sphi 0, %s55
      %s59 = sphi 0, %s58
      %s75 = sphi 0, %s59
      %s79 = sphi 0, %s79
      %s81 = sphi 0, %s79
      %s82 = sphi 0, %s81
      %s96 = sphi 0, %s82
      %s100 = sphi 0, %s100
      %s102 = sphi 0, %s100
      %s103 = sphi 0, %s102
      %s117 = sphi 0, %s103
      %s121 = sphi 0, %s121
      %s123 = sphi 0, %s121
      %s124 = sphi 0, %s123
      %s138 = sphi 0, %s124
      %s142 = sphi 0, %s142
      %s144 = sphi 0, %s142
      %s145 = sphi 0, %s144
      %s159 = sphi 0, %s145
      %s163 = sphi 0, %s163
      %s165 = sphi 0, %s163
      %s166 = sphi 0, %s165
      %s180 = sphi 0, %s166
      %s184 = sphi 0, %s184
      %s186 = sphi 0, %s184
      %s187 = sphi 0, %s186
      %s201 = sphi 0, %s187
      %s205 = sphi 0, %s205
      %s207 = sphi 0, %s205
      %s208 = sphi 0, %s207
      %s222 = sphi 0, %s208
      %s226 = sphi 0, %s226
      %s228 = sphi 0, %s226
      %s229 = sphi 0, %s228
      %s243 = sphi 0, %s229
      %s247 = sphi 0, %s247
      %s249 = sphi 0, %s247
      %s250 = sphi 0, %s249
      %s264 = sphi 0, %s250
      %s268 = sphi 0, %s268
      %s270 = sphi 0, %s268
      %s271 = sphi 0, %s270
      %s285 = sphi 0, %s271
      %s293 = sphi 0, %s295
      %s296 = sphi 0, %s293
      %s297 = sphi 0, %s296
      %s313 = sphi 0, %s297
      %s319 = sphi 0, %s321
      %s322 = sphi 0, %s319
      %s323 = sphi 0, %s322
      %s339 = sphi 0, %s323
      %s345 = sphi 0, %s347
      %s348 = sphi 0, %s345
      %s349 = sphi 0, %s348
      %s365 = sphi 0, %s349
    $region4: #{tpu_custom_call.1} parent=1 // loop_header_branch
      %34 = sbr.rel (%p32) target = $region8
    $region5: #{tpu_custom_call.1} parent=1 // loop_body
      %s36 = ssub.s32 %s31, 1
      %s37 = ssub.s32 %s31, 2
      %s44 = sadd.s32 1, %s39
      %p45 = scmp.ge.s32.totalorder %s44, 1
      %s46 = scalar_select %p45, 0, %s44
      %s47 = sadd.s32 1, %s38
      %s48 = scalar_select %p45, %s47, %s38
      %p49 = scmp.ge.s32.totalorder %s48, 2
      %s50 = scalar_select %p49, 0, %s48
      %s51 = sadd.s32 %s38, %s39
      %s52 = sadd.s32 %s50, %s46
      %s53 = ssub.s32 %s51, %s52
      %p54 = scmp.eq.s32.totalorder %s53, 0
      %s56 = sadd.s32 %s55, 1
      %s57 = scalar_select %p54, %s55, %s56
      %p60 = pneg %p54
      %p61 = scmp.eq.s32.totalorder %s31, 1
      %p62 = por %p60, %p61
      %p63 = scmp.ne.s32.totalorder %s55, %s58
      %p64 = scmp.eq.s32.totalorder %s31, 0
      %p65 = por %p63, %p64
      %p66 = scmp.ne.s32.totalorder %s55, %s58
      %p67 = scmp.eq.s32.totalorder %s36, 1
      %p68 = por %p66, %p67
      %p69 = scmp.ne.s32.totalorder %s58, %s59
      %p70 = scmp.eq.s32.totalorder %s36, 0
      %p71 = por %p69, %p70
      %p72 = scmp.ne.s32.totalorder %s58, %s59
      %p73 = scmp.eq.s32.totalorder %s37, 1
      %p74 = por %p72, %p73
      %p76 = scmp.ne.s32.totalorder %s59, %s75
      %p77 = scmp.eq.s32.totalorder %s37, 0
      %p78 = por %p76, %p77
      %s80 = sadd.s32 %s79, 1
      %p83 = scmp.eq.s32.totalorder %s31, 1
      %p84 = scmp.ne.s32.totalorder %s79, %s81
      %p85 = scmp.eq.s32.totalorder %s31, 0
      %p86 = por %p84, %p85
      %p87 = scmp.ne.s32.totalorder %s79, %s81
      %p88 = scmp.eq.s32.totalorder %s36, 1
      %p89 = por %p87, %p88
      %p90 = scmp.ne.s32.totalorder %s81, %s82
      %p91 = scmp.eq.s32.totalorder %s36, 0
      %p92 = por %p90, %p91
      %p93 = scmp.ne.s32.totalorder %s81, %s82
      %p94 = scmp.eq.s32.totalorder %s37, 1
      %p95 = por %p93, %p94
      %p97 = scmp.ne.s32.totalorder %s82, %s96
      %p98 = scmp.eq.s32.totalorder %s37, 0
      %p99 = por %p97, %p98
      %s101 = sadd.s32 %s100, 1
      %p104 = scmp.eq.s32.totalorder %s31, 1
      %p105 = scmp.ne.s32.totalorder %s100, %s102
      %p106 = scmp.eq.s32.totalorder %s31, 0
      %p107 = por %p105, %p106
      %p108 = scmp.ne.s32.totalorder %s100, %s102
      %p109 = scmp.eq.s32.totalorder %s36, 1
      %p110 = por %p108, %p109
      %p111 = scmp.ne.s32.totalorder %s102, %s103
      %p112 = scmp.eq.s32.totalorder %s36, 0
      %p113 = por %p111, %p112
      %p114 = scmp.ne.s32.totalorder %s102, %s103
      %p115 = scmp.eq.s32.totalorder %s37, 1
      %p116 = por %p114, %p115
      %p118 = scmp.ne.s32.totalorder %s103, %s117
      %p119 = scmp.eq.s32.totalorder %s37, 0
      %p120 = por %p118, %p119
      %s122 = sadd.s32 %s121, 1
      %p125 = scmp.eq.s32.totalorder %s31, 1
      %p126 = scmp.ne.s32.totalorder %s121, %s123
      %p127 = scmp.eq.s32.totalorder %s31, 0
      %p128 = por %p126, %p127
      %p129 = scmp.ne.s32.totalorder %s121, %s123
      %p130 = scmp.eq.s32.totalorder %s36, 1
      %p131 = por %p129, %p130
      %p132 = scmp.ne.s32.totalorder %s123, %s124
      %p133 = scmp.eq.s32.totalorder %s36, 0
      %p134 = por %p132, %p133
      %p135 = scmp.ne.s32.totalorder %s123, %s124
      %p136 = scmp.eq.s32.totalorder %s37, 1
      %p137 = por %p135, %p136
      %p139 = scmp.ne.s32.totalorder %s124, %s138
      %p140 = scmp.eq.s32.totalorder %s37, 0
      %p141 = por %p139, %p140
      %s143 = sadd.s32 %s142, 1
      %p146 = scmp.eq.s32.totalorder %s31, 1
      %p147 = scmp.ne.s32.totalorder %s142, %s144
      %p148 = scmp.eq.s32.totalorder %s31, 0
      %p149 = por %p147, %p148
      %p150 = scmp.ne.s32.totalorder %s142, %s144
      %p151 = scmp.eq.s32.totalorder %s36, 1
      %p152 = por %p150, %p151
      %p153 = scmp.ne.s32.totalorder %s144, %s145
      %p154 = scmp.eq.s32.totalorder %s36, 0
      %p155 = por %p153, %p154
      %p156 = scmp.ne.s32.totalorder %s144, %s145
      %p157 = scmp.eq.s32.totalorder %s37, 1
      %p158 = por %p156, %p157
      %p160 = scmp.ne.s32.totalorder %s145, %s159
      %p161 = scmp.eq.s32.totalorder %s37, 0
      %p162 = por %p160, %p161
      %s164 = sadd.s32 %s163, 1
      %p167 = scmp.eq.s32.totalorder %s31, 1
      %p168 = scmp.ne.s32.totalorder %s163, %s165
      %p169 = scmp.eq.s32.totalorder %s31, 0
      %p170 = por %p168, %p169
      %p171 = scmp.ne.s32.totalorder %s163, %s165
      %p172 = scmp.eq.s32.totalorder %s36, 1
      %p173 = por %p171, %p172
      %p174 = scmp.ne.s32.totalorder %s165, %s166
      %p175 = scmp.eq.s32.totalorder %s36, 0
      %p176 = por %p174, %p175
      %p177 = scmp.ne.s32.totalorder %s165, %s166
      %p178 = scmp.eq.s32.totalorder %s37, 1
      %p179 = por %p177, %p178
      %p181 = scmp.ne.s32.totalorder %s166, %s180
      %p182 = scmp.eq.s32.totalorder %s37, 0
      %p183 = por %p181, %p182
      %s185 = sadd.s32 %s184, 1
      %p188 = scmp.eq.s32.totalorder %s31, 1
      %p189 = scmp.ne.s32.totalorder %s184, %s186
      %p190 = scmp.eq.s32.totalorder %s31, 0
      %p191 = por %p189, %p190
      %p192 = scmp.ne.s32.totalorder %s184, %s186
      %p193 = scmp.eq.s32.totalorder %s36, 1
      %p194 = por %p192, %p193
      %p195 = scmp.ne.s32.totalorder %s186, %s187
      %p196 = scmp.eq.s32.totalorder %s36, 0
      %p197 = por %p195, %p196
      %p198 = scmp.ne.s32.totalorder %s186, %s187
      %p199 = scmp.eq.s32.totalorder %s37, 1
      %p200 = por %p198, %p199
      %p202 = scmp.ne.s32.totalorder %s187, %s201
      %p203 = scmp.eq.s32.totalorder %s37, 0
      %p204 = por %p202, %p203
      %s206 = sadd.s32 %s205, 1
      %p209 = scmp.eq.s32.totalorder %s31, 1
      %p210 = scmp.ne.s32.totalorder %s205, %s207
      %p211 = scmp.eq.s32.totalorder %s31, 0
      %p212 = por %p210, %p211
      %p213 = scmp.ne.s32.totalorder %s205, %s207
      %p214 = scmp.eq.s32.totalorder %s36, 1
      %p215 = por %p213, %p214
      %p216 = scmp.ne.s32.totalorder %s207, %s208
      %p217 = scmp.eq.s32.totalorder %s36, 0
      %p218 = por %p216, %p217
      %p219 = scmp.ne.s32.totalorder %s207, %s208
      %p220 = scmp.eq.s32.totalorder %s37, 1
      %p221 = por %p219, %p220
      %p223 = scmp.ne.s32.totalorder %s208, %s222
      %p224 = scmp.eq.s32.totalorder %s37, 0
      %p225 = por %p223, %p224
      %s227 = sadd.s32 %s226, 1
      %p230 = scmp.eq.s32.totalorder %s31, 1
      %p231 = scmp.ne.s32.totalorder %s226, %s228
      %p232 = scmp.eq.s32.totalorder %s31, 0
      %p233 = por %p231, %p232
      %p234 = scmp.ne.s32.totalorder %s226, %s228
      %p235 = scmp.eq.s32.totalorder %s36, 1
      %p236 = por %p234, %p235
      %p237 = scmp.ne.s32.totalorder %s228, %s229
      %p238 = scmp.eq.s32.totalorder %s36, 0
      %p239 = por %p237, %p238
      %p240 = scmp.ne.s32.totalorder %s228, %s229
      %p241 = scmp.eq.s32.totalorder %s37, 1
      %p242 = por %p240, %p241
      %p244 = scmp.ne.s32.totalorder %s229, %s243
      %p245 = scmp.eq.s32.totalorder %s37, 0
      %p246 = por %p244, %p245
      %s248 = sadd.s32 %s247, 1
      %p251 = scmp.eq.s32.totalorder %s31, 1
      %p252 = scmp.ne.s32.totalorder %s247, %s249
      %p253 = scmp.eq.s32.totalorder %s31, 0
      %p254 = por %p252, %p253
      %p255 = scmp.ne.s32.totalorder %s247, %s249
      %p256 = scmp.eq.s32.totalorder %s36, 1
      %p257 = por %p255, %p256
      %p258 = scmp.ne.s32.totalorder %s249, %s250
      %p259 = scmp.eq.s32.totalorder %s36, 0
      %p260 = por %p258, %p259
      %p261 = scmp.ne.s32.totalorder %s249, %s250
      %p262 = scmp.eq.s32.totalorder %s37, 1
      %p263 = por %p261, %p262
      %p265 = scmp.ne.s32.totalorder %s250, %s264
      %p266 = scmp.eq.s32.totalorder %s37, 0
      %p267 = por %p265, %p266
      %s269 = sadd.s32 %s268, 1
      %p272 = scmp.eq.s32.totalorder %s31, 1
      %p273 = scmp.ne.s32.totalorder %s268, %s270
      %p274 = scmp.eq.s32.totalorder %s31, 0
      %p275 = por %p273, %p274
      %p276 = scmp.ne.s32.totalorder %s268, %s270
      %p277 = scmp.eq.s32.totalorder %s36, 1
      %p278 = por %p276, %p277
      %p279 = scmp.ne.s32.totalorder %s270, %s271
      %p280 = scmp.eq.s32.totalorder %s36, 0
      %p281 = por %p279, %p280
      %p282 = scmp.ne.s32.totalorder %s270, %s271
      %p283 = scmp.eq.s32.totalorder %s37, 1
      %p284 = por %p282, %p283
      %p286 = scmp.ne.s32.totalorder %s271, %s285
      %p287 = scmp.eq.s32.totalorder %s37, 0
      %p288 = por %p286, %p287
      %s289 = sadd.s32 %s38, %s39
      %s290 = sadd.s32 %s50, %s46
      %s291 = ssub.s32 %s289, %s290
      %p292 = scmp.eq.s32.totalorder %s291, 0
      %s294 = sadd.s32 %s293, 1
      %s295 = scalar_select %p292, %s293, %s294
      %p298 = pneg %p292
      %p299 = scmp.eq.s32.totalorder %s31, 1
      %p300 = por %p298, %p299
      %p301 = scmp.ne.s32.totalorder %s293, %s296
      %p302 = scmp.eq.s32.totalorder %s31, 0
      %p303 = por %p301, %p302
      %p304 = scmp.ne.s32.totalorder %s293, %s296
      %p305 = scmp.eq.s32.totalorder %s36, 1
      %p306 = por %p304, %p305
      %p307 = scmp.ne.s32.totalorder %s296, %s297
      %p308 = scmp.eq.s32.totalorder %s36, 0
      %p309 = por %p307, %p308
      %p310 = scmp.ne.s32.totalorder %s296, %s297
      %p311 = scmp.eq.s32.totalorder %s37, 1
      %p312 = por %p310, %p311
      %p314 = scmp.ne.s32.totalorder %s297, %s313
      %p315 = scmp.eq.s32.totalorder %s37, 0
      %p316 = por %p314, %p315
      %s317 = ssub.s32 %s38, %s50
      %p318 = scmp.eq.s32.totalorder %s317, 0
      %s320 = sadd.s32 %s319, 1
      %s321 = scalar_select %p318, %s319, %s320
      %p324 = pneg %p318
      %p325 = scmp.eq.s32.totalorder %s31, 1
      %p326 = por %p324, %p325
      %p327 = scmp.ne.s32.totalorder %s319, %s322
      %p328 = scmp.eq.s32.totalorder %s31, 0
      %p329 = por %p327, %p328
      %p330 = scmp.ne.s32.totalorder %s319, %s322
      %p331 = scmp.eq.s32.totalorder %s36, 1
      %p332 = por %p330, %p331
      %p333 = scmp.ne.s32.totalorder %s322, %s323
      %p334 = scmp.eq.s32.totalorder %s36, 0
      %p335 = por %p333, %p334
      %p336 = scmp.ne.s32.totalorder %s322, %s323
      %p337 = scmp.eq.s32.totalorder %s37, 1
      %p338 = por %p336, %p337
      %p340 = scmp.ne.s32.totalorder %s323, %s339
      %p341 = scmp.eq.s32.totalorder %s37, 0
      %p342 = por %p340, %p341
      %s343 = ssub.s32 %s38, %s50
      %p344 = scmp.eq.s32.totalorder %s343, 0
      %s346 = sadd.s32 %s345, 1
      %s347 = scalar_select %p344, %s345, %s346
      %p350 = pneg %p344
      %p351 = scmp.eq.s32.totalorder %s31, 1
      %p352 = por %p350, %p351
      %p353 = scmp.ne.s32.totalorder %s345, %s348
      %p354 = scmp.eq.s32.totalorder %s31, 0
      %p355 = por %p353, %p354
      %p356 = scmp.ne.s32.totalorder %s345, %s348
      %p357 = scmp.eq.s32.totalorder %s36, 1
      %p358 = por %p356, %p357
      %p359 = scmp.ne.s32.totalorder %s348, %s349
      %p360 = scmp.eq.s32.totalorder %s36, 0
      %p361 = por %p359, %p360
      %p362 = scmp.ne.s32.totalorder %s348, %s349
      %p363 = scmp.eq.s32.totalorder %s37, 1
      %p364 = por %p362, %p363
      %p366 = scmp.ne.s32.totalorder %s349, %s365
      %p367 = scmp.eq.s32.totalorder %s37, 0
      %p368 = por %p366, %p367
      %p369 = scmp.le.s32.totalorder 1, %s31
      %p370 = scmp.lt.s32.totalorder %s31, 3
      %p371 = pnand %p369, %p370
      %p372 = pneg %p371
      // Predicated region
      $region9: #{tpu_custom_call.1} parent=5 // pred_check
        _
      $region10: #{tpu_custom_call.1} parent=5 // pred_check_branch
        %374 = sbr.rel (%p371) target = $region12
      $region11: #{tpu_custom_call.1} parent=5 // pred_region
        %s375 = ssub.s32 %s31, 1
        // Predicated region
        $region13: #{tpu_custom_call.1} parent=11 // pred_check
          %p376 = pneg %p92
        $region14: #{tpu_custom_call.1} parent=11 // pred_check_branch
          %378 = sbr.rel (%p376) target = $region16
        $region15: #{tpu_custom_call.1} parent=11 // pred_region
          _
        $region16: #{tpu_custom_call.1} parent=11 // pred_fallthru
          _
        // Predicated region
        $region17: #{tpu_custom_call.1} parent=11 // pred_check
          %p379 = pneg %p113
        $region18: #{tpu_custom_call.1} parent=11 // pred_check_branch
          %381 = sbr.rel (%p379) target = $region20
        $region19: #{tpu_custom_call.1} parent=11 // pred_region
          %383 = vsyncadd [#allocation12], 0
          %s385 = sshll.u32 %s2, 4
          %s386 = int_to_ptr.hbm [resolvable:$true] %s385
          %s387 = sshll.u32 [#allocation11], 4
          %s388 = int_to_ptr.vmem [resolvable:$true] %s387
          %390 = dma.hbm_to_vmem [thread:$0]  %s386, 16, %s388, [#allocation12]
        $region20: #{tpu_custom_call.1} parent=11 // pred_fallthru
          _
        // Predicated region
        $region21: #{tpu_custom_call.1} parent=11 // pred_check
          %p391 = pneg %p134
        $region22: #{tpu_custom_call.1} parent=11 // pred_check_branch
          %393 = sbr.rel (%p391) target = $region24
        $region23: #{tpu_custom_call.1} parent=11 // pred_region
          _
        $region24: #{tpu_custom_call.1} parent=11 // pred_fallthru
          _
        // Predicated region
        $region25: #{tpu_custom_call.1} parent=11 // pred_check
          %p394 = pneg %p155
        $region26: #{tpu_custom_call.1} parent=11 // pred_check_branch
          %396 = sbr.rel (%p394) target = $region28
        $region27: #{tpu_custom_call.1} parent=11 // pred_region
          _
        $region28: #{tpu_custom_call.1} parent=11 // pred_fallthru
          _
        // Predicated region
        $region29: #{tpu_custom_call.1} parent=11 // pred_check
          %p397 = pneg %p176
        $region30: #{tpu_custom_call.1} parent=11 // pred_check_branch
          %399 = sbr.rel (%p397) target = $region32
        $region31: #{tpu_custom_call.1} parent=11 // pred_region
          %401 = vsyncadd [#allocation12], 0
          %s403 = sshll.u32 %s5, 4
          %s404 = int_to_ptr.hbm [resolvable:$true] %s403
          %s405 = sshll.u32 [#allocation13], 4
          %s406 = int_to_ptr.vmem [resolvable:$true] %s405
          %408 = dma.hbm_to_vmem [thread:$0]  %s404, 16, %s406, [#allocation12]
        $region32: #{tpu_custom_call.1} parent=11 // pred_fallthru
          _
        // Predicated region
        $region33: #{tpu_custom_call.1} parent=11 // pred_check
          %p409 = pneg %p197
        $region34: #{tpu_custom_call.1} parent=11 // pred_check_branch
          %411 = sbr.rel (%p409) target = $region36
        $region35: #{tpu_custom_call.1} parent=11 // pred_region
          _
        $region36: #{tpu_custom_call.1} parent=11 // pred_fallthru
          _
        // Predicated region
        $region37: #{tpu_custom_call.1} parent=11 // pred_check
          %p412 = pneg %p218
        $region38: #{tpu_custom_call.1} parent=11 // pred_check_branch
          %414 = sbr.rel (%p412) target = $region40
        $region39: #{tpu_custom_call.1} parent=11 // pred_region
          %416 = vsyncadd [#allocation15], 0
          %s418 = sshll.u32 %s7, 4
          %s419 = int_to_ptr.hbm [resolvable:$true] %s418
          %s420 = sshll.u32 [#allocation14], 4
          %s421 = int_to_ptr.vmem [resolvable:$true] %s420
          %423 = dma.hbm_to_vmem [thread:$0]  %s419, 16, %s421, [#allocation15]
        $region40: #{tpu_custom_call.1} parent=11 // pred_fallthru
          _
        // Predicated region
        $region41: #{tpu_custom_call.1} parent=11 // pred_check
          %p424 = pneg %p239
        $region42: #{tpu_custom_call.1} parent=11 // pred_check_branch
          %426 = sbr.rel (%p424) target = $region44
        $region43: #{tpu_custom_call.1} parent=11 // pred_region
          %428 = vsyncadd [#allocation15], 0
          %s429 = sshll.u32 %s8, 4
          %s430 = int_to_ptr.hbm [resolvable:$true] %s429
          %s431 = sshll.u32 [#allocation16], 4
          %s432 = int_to_ptr.vmem [resolvable:$true] %s431
          %437 = dma.hbm_to_vmem [thread:$0]  %s430, 256, %s432, [#allocation15], 16, 16, 1
        $region44: #{tpu_custom_call.1} parent=11 // pred_fallthru
          _
        // Predicated region
        $region45: #{tpu_custom_call.1} parent=11 // pred_check
          %p438 = pneg %p260
        $region46: #{tpu_custom_call.1} parent=11 // pred_check_branch
          %440 = sbr.rel (%p438) target = $region48
        $region47: #{tpu_custom_call.1} parent=11 // pred_region
          _
        $region48: #{tpu_custom_call.1} parent=11 // pred_fallthru
          _
        // Predicated region
        $region49: #{tpu_custom_call.1} parent=11 // pred_check
          %p441 = pneg %p281
        $region50: #{tpu_custom_call.1} parent=11 // pred_check_branch
          %443 = sbr.rel (%p441) target = $region52
        $region51: #{tpu_custom_call.1} parent=11 // pred_region
          _
        $region52: #{tpu_custom_call.1} parent=11 // pred_fallthru
          _
      $region12: #{tpu_custom_call.1} parent=5 // pred_fallthru
        _
      %p444 = scmp.lt.s32.totalorder %s31, 2
      // Predicated region
      $region53: #{tpu_custom_call.1} parent=5 // pred_check
        %p445 = pneg %p444
      $region54: #{tpu_custom_call.1} parent=5 // pred_check_branch
        %447 = sbr.rel (%p445) target = $region56
      $region55: #{tpu_custom_call.1} parent=5 // pred_region
        // Predicated region
        $region57: #{tpu_custom_call.1} parent=55 // pred_check
          %p448 = pneg %p65
        $region58: #{tpu_custom_call.1} parent=55 // pred_check_branch
          %450 = sbr.rel (%p448) target = $region60
        $region59: #{tpu_custom_call.1} parent=55 // pred_region
          %s451 = sand.u32 %s55, 1
          %s452 = scalar_lea.sflag [#allocation9], %s451
          %s453 = sand.u32 %s55, 1
          %s454 = smul.addr %s453, 8
          %s455 = scalar_lea.vmem [#allocation8], %s454
          %s456 = sadd.s32 %s38, %s39
          %458 = vsyncadd %s452, 0
          %s459 = smul.addr %s456, 8
          %s460 = scalar_lea.hbm %s0, %s459
          %s462 = sshll.u32 %s460, 4
          %s463 = int_to_ptr.hbm [resolvable:$true] %s462
          %s464 = sshll.u32 %s455, 4
          %s465 = int_to_ptr.vmem [resolvable:$true] %s464
          %467 = dma.hbm_to_vmem [thread:$0]  %s463, 128, %s465, %s452
        $region60: #{tpu_custom_call.1} parent=55 // pred_fallthru
          _
      $region56: #{tpu_custom_call.1} parent=5 // pred_fallthru
        _
      %p468 = scmp.le.s32.totalorder 1, %s31
      %p469 = scmp.lt.s32.totalorder %s31, 3
      %p470 = pnand %p468, %p469
      %p471 = pneg %p470
      // Predicated region
      $region61: #{tpu_custom_call.1} parent=5 // pred_check
        _
      $region62: #{tpu_custom_call.1} parent=5 // pred_check_branch
        %473 = sbr.rel (%p470) target = $region64
      $region63: #{tpu_custom_call.1} parent=5 // pred_region
        %s474 = ssub.s32 %s31, 1
        %s475 = sand.u32 %s58, 1
        %s476 = scalar_lea.sflag [#allocation9], %s475
        %s477 = sand.u32 %s58, 1
        %s478 = smul.addr %s477, 8
        %s479 = scalar_lea.vmem [#allocation8], %s478
        // Predicated region
        $region65: #{tpu_custom_call.1} parent=63 // pred_check
          %p480 = pneg %p71
        $region66: #{tpu_custom_call.1} parent=63 // pred_check_branch
          %482 = sbr.rel (%p480) target = $region68
        $region67: #{tpu_custom_call.1} parent=63 // pred_region
          %484 = dma.done %s476, 128
        $region68: #{tpu_custom_call.1} parent=63 // pred_fallthru
          _
        // Predicated region
        $region69: #{tpu_custom_call.1} parent=63 // pred_check
          %p485 = pneg %p113
        $region70: #{tpu_custom_call.1} parent=63 // pred_check_branch
          %487 = sbr.rel (%p485) target = $region72
        $region71: #{tpu_custom_call.1} parent=63 // pred_region
          %489 = dma.done [#allocation12], 16
        $region72: #{tpu_custom_call.1} parent=63 // pred_fallthru
          _
        // Predicated region
        $region73: #{tpu_custom_call.1} parent=63 // pred_check
          %p490 = pneg %p176
        $region74: #{tpu_custom_call.1} parent=63 // pred_check_branch
          %492 = sbr.rel (%p490) target = $region76
        $region75: #{tpu_custom_call.1} parent=63 // pred_region
          %494 = dma.done [#allocation12], 16
        $region76: #{tpu_custom_call.1} parent=63 // pred_fallthru
          _
        // Predicated region
        $region77: #{tpu_custom_call.1} parent=63 // pred_check
          %p495 = pneg %p218
        $region78: #{tpu_custom_call.1} parent=63 // pred_check_branch
          %497 = sbr.rel (%p495) target = $region80
        $region79: #{tpu_custom_call.1} parent=63 // pred_region
          %499 = dma.done [#allocation15], 16
        $region80: #{tpu_custom_call.1} parent=63 // pred_fallthru
          _
        // Predicated region
        $region81: #{tpu_custom_call.1} parent=63 // pred_check
          %p500 = pneg %p239
        $region82: #{tpu_custom_call.1} parent=63 // pred_check_branch
          %502 = sbr.rel (%p500) target = $region84
        $region83: #{tpu_custom_call.1} parent=63 // pred_region
          %504 = dma.done [#allocation15], 256
        $region84: #{tpu_custom_call.1} parent=63 // pred_fallthru
          _
        %s505 = sand.u32 %s58, 1
        %s506 = scalar_lea.sflag [#allocation9], %s505
        %s507 = sand.u32 %s58, 1
        %s508 = smul.addr %s507, 8
        %s509 = scalar_lea.vmem [#allocation8], %s508
        %p510 = pneg %p71
        %p511 = pneg %p68
        %p512 = pneg %p92
        %p513 = pneg %p89
        %p514 = pneg %p113
        %p515 = pneg %p110
        %p516 = pneg %p134
        %p517 = pneg %p131
        %p518 = pneg %p155
        %p519 = pneg %p152
        %p520 = pneg %p176
        %p521 = pneg %p173
        %p522 = pneg %p197
        %p523 = pneg %p194
        %p524 = pneg %p218
        %p525 = pneg %p215
        %p526 = pneg %p239
        %p527 = pneg %p236
        %p528 = pneg %p260
        %p529 = pneg %p257
        %p530 = pneg %p281
        %p531 = pneg %p278
        %p532 = pneg %p309
        %p533 = pneg %p306
        %s534 = sand.u32 %s296, 1
        %s535 = scalar_lea.sflag [#allocation10], %s534
        %s536 = sand.u32 %s296, 1
        %s537 = smul.addr %s536, 8
        %s538 = scalar_lea.vmem [#allocation17], %s537
        %p539 = pneg %p335
        %p540 = pneg %p332
        %s541 = sand.u32 %s36, 1
        %s542 = scalar_lea.sflag [#allocation19], %s541
        %s543 = sand.u32 %s322, 1
        %s544 = smul.addr %s543, 3
        %s545 = scalar_lea.vmem [#allocation18], %s544
        %p546 = pneg %p361
        %p547 = pneg %p358
        %s548 = sand.u32 %s36, 1
        %s549 = scalar_lea.sflag [#allocation19], %s548
        %s550 = sand.u32 %s348, 1
        %s551 = smul.addr %s550, 16
        %s552 = scalar_lea.vmem [#allocation20], %s551
        %s553 = sadd.s32 %s40, %s41
        %s554 = sadd.s32 %s40, %s41
        %p555 = scmp.eq.s32.totalorder %s41, 0
        // Predicated region
        $region85: #{tpu_custom_call.1} parent=63 // pred_check
          %p556 = pneg %p555
        $region86: #{tpu_custom_call.1} parent=63 // pred_check_branch
          %558 = sbr.rel (%p556) target = $region88
        $region87: #{tpu_custom_call.1} parent=63 // pred_region
          %vm559 = vcmask 516096
          %560 = vst.msk [vmem:[#allocation6] sm:$0x1] %vm559, 0.0
          %561 = vst.msk [vmem:[#allocation6 + $0x1] sm:$0x1] %vm559, 0.0
          %562 = vst.msk [vmem:[#allocation6 + $0x2] sm:$0x1] %vm559, 0.0
          %563 = vst.msk [vmem:[#allocation6 + $0x3] sm:$0x1] %vm559, 0.0
          %564 = vst.msk [vmem:[#allocation6 + $0x4] sm:$0x1] %vm559, 0.0
          %565 = vst.msk [vmem:[#allocation6 + $0x5] sm:$0x1] %vm559, 0.0
          %566 = vst.msk [vmem:[#allocation6 + $0x6] sm:$0x1] %vm559, 0.0
          %567 = vst.msk [vmem:[#allocation6 + $0x7] sm:$0x1] %vm559, 0.0
          %568 = vst.msk [vmem:[#allocation6 + $0x8] sm:$0x1] %vm559, 0.0
          %569 = vst.msk [vmem:[#allocation6 + $0x9] sm:$0x1] %vm559, 0.0
          %570 = vst.msk [vmem:[#allocation6 + $0xa] sm:$0x1] %vm559, 0.0
          %571 = vst.msk [vmem:[#allocation6 + $0xb] sm:$0x1] %vm559, 0.0
          %572 = vst.msk [vmem:[#allocation6 + $0xc] sm:$0x1] %vm559, 0.0
          %573 = vst.msk [vmem:[#allocation6 + $0xd] sm:$0x1] %vm559, 0.0
          %574 = vst.msk [vmem:[#allocation6 + $0xe] sm:$0x1] %vm559, 0.0
          %575 = vst.msk [vmem:[#allocation6 + $0xf] sm:$0x1] %vm559, 0.0
          %576 = vst.msk [vmem:[#allocation7] sm:$0x1] %vm559, 0.0
          %577 = vst.msk [vmem:[#allocation7 + $0x1] sm:$0x1] %vm559, 0.0
          %578 = vst.msk [vmem:[#allocation7 + $0x2] sm:$0x1] %vm559, 0.0
        $region88: #{tpu_custom_call.1} parent=63 // pred_fallthru
          _
        %v579 = vld [vmem:[%s479] sm:$0xff]
        %vm580 = vcmask 261120
        %v581 = vsel %vm580, %v579, 0.0
        %582 = vadd.xlane.f32.xlu0 %v581
        %v583 = vpop.xlane.xlu0 %582
        %v584 = vrcp.pop 32.0
        %v585 = vmul.f32 32.0, %v584
        %v586 = vsub.f32 1.0, %v585
        %v587 = vmul.f32 %v584, %v586
        %v588 = vadd.f32 %v584, %v587
        %vm589 = vweird.f32 %v584
        %v590 = vsel %vm589, %v584, %v588
        %v591 = vmul.f32 %v583, %v590
        %v592 = vsub.f32 %v579, %v591
        %v593 = vmul.f32 %v592, %v592
        %v594 = vsel %vm580, %v593, 0.0
        %595 = vadd.xlane.f32.xlu0 %v594
        %v596 = vpop.xlane.xlu0 %595
        %v597 = vmul.f32 %v596, %v590
        %v598 = vadd.f32 %v597, 1e-05
        %v599 = vrsqrt.pop %v598
        %v600 = vmul.f32 %v599, %v598
        %v601 = vmul.f32 %v600, %v599
        %v602 = vmul.f32 0.5, %v601
        %v603 = vsub.f32 1.5, %v602
        %v604 = vmul.f32 %v599, %v603
        %vm605 = vweird.f32 %v598
        %vm606 = vweird.f32 %v599
        %vm607 = vmor %vm605, %vm606
        %v608 = vsel %vm607, %v599, %v604
        %v609 = vmul.f32 %v592, %v608
        %v610 = vld [vmem:[%s1] sm:$0x1]
        %v612 = vperm.slane %v610, 0
        %v614 = vmul.f32 %v609, %v612
        %v615 = vld [vmem:[#allocation11] sm:$0x1]
        %v617 = vperm.slane %v615, 0
        %v619 = vadd.f32 %v614, %v617
        %v620 = vld [vmem:[%s3] sm:$0xff]
        %v621 = vld [vmem:[%s3 + $0x8] sm:$0xff]
        %v622 = vld [vmem:[%s3 + $0x10] sm:$0xff]
        %v623 = vld [vmem:[%s3 + $0x18] sm:$0xff]
        %v625 = vsel %vm580, %v619, 0
        %627 = vmatpush.msra.mxu0 0.0
        %628 = vmatpush.msra.mxu0 0.0
        %629 = vmatpush.msra.mxu0 0.0
        %630 = vmatpush.msra.mxu0 0.0
        %631 = vmatpush.msra.mxu0 0.0
        %632 = vmatpush.msra.mxu0 0.0
        %633 = vmatpush.msra.mxu0 0.0
        %634 = vmatpush.msra.mxu0 0.0
        %635 = vmatpush.msra.mxu0 0.0
        %636 = vmatpush.msra.mxu0 0.0
        %637 = vmatpush.msra.mxu0 0.0
        %638 = vmatpush.msra.mxu0 0.0
        %639 = vmatpush.msra.mxu0 %v623
        %640 = vmatpush.msra.mxu0 %v622
        %641 = vmatpush.msra.mxu0 %v621
        %642 = vmatpush.msra.mxu0 %v620
        %643 = vmatmul.f32.gmra.mxu0 %v625
        %v644 = vpop.f32.mrf.mxu0
        %v645 = vadd.f32 0.0, %v644
        %646 = vdwg.mxu0
        %v647 = vld [vmem:[%s4] sm:$0xf]
        %v648 = vld [vmem:[#allocation7] sm:$0x1]
        %s649 = scalar_lea.vmem [#allocation7], 1
        %v650 = vld [vmem:[%s649] sm:$0x1]
        %s651 = scalar_lea.vmem [#allocation7], 2
        %v652 = vld [vmem:[%s651] sm:$0x1]
        %v654 = vperm.slane %v650, 0
        %v657 = vperm.slane %v652, 0
        %v660 = vrot.slane %v645, 5
        %vm662 = vcmask 1040384
        %v663 = vsel %vm662, %v648, %v654
        %vm664 = vcmask 1041408
        %v665 = vsel %vm664, %v663, %v657
        %vm666 = vcmask 1042432
        %v667 = vsel %vm666, %v665, %v660
        %v668 = vld [vmem:[#allocation13] sm:$0x1]
        %v670 = vperm.slane %v668, 0
        %v672 = vadd.f32 %v670, 0.0
        %v673 = vperm.slane %v647, 0
        %v674 = vmul.f32 %v673, %v667
        %v675 = vadd.f32 %v672, %v674
        %v676 = vperm.slane %v647, 1
        %v677 = vmul.f32 %v676, %v667
        %v678 = vmul.f32 %v676, %v660
        %vm681 = vcmask 1046528
        %v682 = vrot.slane %v677, 1
        %v683 = vrot.slane %v678, 1
        %v684 = vsel %vm681, %v682, %v683
        %v686 = vadd.f32 %v675, %v684
        %v687 = vperm.slane %v647, 2
        %v688 = vmul.f32 %v687, %v667
        %v689 = vmul.f32 %v687, %v660
        %vm692 = vcmask 1045504
        %v693 = vrot.slane %v688, 2
        %v694 = vrot.slane %v689, 2
        %v695 = vsel %vm692, %v693, %v694
        %v697 = vadd.f32 %v686, %v695
        %v698 = vperm.slane %v647, 3
        %v699 = vmul.f32 %v698, %v667
        %v700 = vmul.f32 %v698, %v660
        %vm703 = vcmask 1044480
        %v704 = vrot.slane %v699, 3
        %v705 = vrot.slane %v700, 3
        %v706 = vsel %vm703, %v704, %v705
        %v708 = vadd.f32 %v697, %v706
        %v709 = vsub.f32 0.0, %v708
        %v710 = vmul.f32 %v709, 1.442695
        %v711 = vpow.pop %v710
        %v712 = vadd.f32 %v711, 1.0
        %v713 = vrcp.pop %v712
        %v714 = vmul.f32 %v708, %v713
        %vm715 = vcmask 521221
        %716 = vst.msk [vmem:[#allocation7 - $0x5] sm:$0x20] %vm715, %v645
        %vm717 = vcmask 522246
        %718 = vst.msk [vmem:[%s649 - $0x6] sm:$0x40] %vm717, %v645
        %vm719 = vcmask 523271
        %720 = vst.msk [vmem:[%s651 - $0x7] sm:$0x80] %vm719, %v645
        // Predicated region
        $region89: #{tpu_custom_call.1} parent=63 // pred_check
          %p721 = pneg %p555
        $region90: #{tpu_custom_call.1} parent=63 // pred_check_branch
          %723 = sbr.rel (%p721) target = $region92
        $region91: #{tpu_custom_call.1} parent=63 // pred_region
          %724 = vst.msk [vmem:[%s545 - $0x5] sm:$0x20] %vm715, %v714
          %s725 = scalar_lea.vmem %s545, 1 [#allocation18]
          %726 = vst.msk [vmem:[%s725 - $0x6] sm:$0x40] %vm717, %v714
          %s727 = scalar_lea.vmem %s545, 2 [#allocation18]
          %728 = vst.msk [vmem:[%s727 - $0x7] sm:$0x80] %vm719, %v714
        $region92: #{tpu_custom_call.1} parent=63 // pred_fallthru
          _
        %v729 = vld [vmem:[%s6] sm:$0xff]
        %v730 = vld [vmem:[%s6 + $0x8] sm:$0xff]
        %v731 = vld [vmem:[%s6 + $0x10] sm:$0xff]
        %v732 = vld [vmem:[%s6 + $0x18] sm:$0xff]
        %v733 = vld [vmem:[%s6 + $0x20] sm:$0xff]
        %v734 = vld [vmem:[%s6 + $0x28] sm:$0xff]
        %v735 = vld [vmem:[%s6 + $0x30] sm:$0xff]
        %v736 = vld [vmem:[%s6 + $0x38] sm:$0xff]
        %vm737 = vcmask 523264
        %v739 = vsel %vm737, %v714, 0
        %741 = vmatpush.msra.mxu0 0.0
        %742 = vmatpush.msra.mxu0 0.0
        %743 = vmatpush.msra.mxu0 0.0
        %744 = vmatpush.msra.mxu0 0.0
        %745 = vmatpush.msra.mxu0 0.0
        %746 = vmatpush.msra.mxu0 0.0
        %747 = vmatpush.msra.mxu0 0.0
        %748 = vmatpush.msra.mxu0 0.0
        %749 = vmatpush.msra.mxu0 %v736
        %750 = vmatpush.msra.mxu0 %v735
        %751 = vmatpush.msra.mxu0 %v734
        %752 = vmatpush.msra.mxu0 %v733
        %753 = vmatpush.msra.mxu0 %v732
        %754 = vmatpush.msra.mxu0 %v731
        %755 = vmatpush.msra.mxu0 %v730
        %756 = vmatpush.msra.mxu0 %v729
        %757 = vmatmul.f32.gmra.mxu0 %v739
        %v758 = vpop.f32.mrf.mxu0
        %v759 = vadd.f32 0.0, %v758
        %760 = vdwg.mxu0
        %761 = vst.msk [vmem:[#allocation4] sm:$0xff] %vm580, %v759
        %v762 = vld [vmem:[#allocation14] sm:$0x1]
        %v764 = vperm.slane %v762, 0
        %765 = vrot.lane.b32.xlu0 %v764, 32
        %v766 = vpop.permute.xlu0 %765
        %v768 = vadd.f32 %v759, %v766
        %vm769 = vcmp.gt.f32.partialorder %v768, 20.0
        %v770 = vmin.f32 %v768, 20.0
        %v771 = vmul.f32 %v770, 1.442695
        %v772 = vpow.pop %v771
        %v773 = vadd.f32 %v772, 1.0
        %v774 = vlog2.pop %v773
        %v775 = vmul.f32 %v774, 0.6931472
        %v776 = vmul.f32 -0.5, %v772
        %v777 = vadd.f32 %v776, 1.0
        %v778 = vmul.f32 %v777, %v772
        %v779 = vand.u32 2147483647, %v772
        %vm780 = vcmp.lt.f32.partialorder %v779, 0.0004427343
        %v781 = vsel %vm780, %v778, %v775
        %v782 = vsel %vm769, %v768, %v781
        %784 = vrot.lane.b32.xlu0 %v782, 96
        %v785 = vpop.permute.xlu0 %784
        %787 = vst.msk [vmem:[#allocation2] sm:$0xff] %vm737, %v785
        %788 = vrot.lane.b32.xlu0 %v714, 32
        %v789 = vpop.permute.xlu0 %788
        %v791 = vmul.f32 %v782, %v789
        %793 = vrot.lane.b32.xlu0 %v791, 96
        %v794 = vpop.permute.xlu0 %793
        %796 = vst.msk [vmem:[#allocation3] sm:$0xff] %vm737, %v794
        %v797 = vld [vmem:[#allocation16] sm:$0x1]
        %v798 = vld [vmem:[#allocation16 + $0x1] sm:$0x1]
        %v799 = vld [vmem:[#allocation16 + $0x2] sm:$0x1]
        %v800 = vld [vmem:[#allocation16 + $0x3] sm:$0x1]
        %v801 = vld [vmem:[#allocation16 + $0x4] sm:$0x1]
        %v802 = vld [vmem:[#allocation16 + $0x5] sm:$0x1]
        %v803 = vld [vmem:[#allocation16 + $0x6] sm:$0x1]
        %v804 = vld [vmem:[#allocation16 + $0x7] sm:$0x1]
        %v805 = vld [vmem:[#allocation16 + $0x8] sm:$0x1]
        %v806 = vld [vmem:[#allocation16 + $0x9] sm:$0x1]
        %v807 = vld [vmem:[#allocation16 + $0xa] sm:$0x1]
        %v808 = vld [vmem:[#allocation16 + $0xb] sm:$0x1]
        %v809 = vld [vmem:[#allocation16 + $0xc] sm:$0x1]
        %v810 = vld [vmem:[#allocation16 + $0xd] sm:$0x1]
        %v811 = vld [vmem:[#allocation16 + $0xe] sm:$0x1]
        %v812 = vld [vmem:[#allocation16 + $0xf] sm:$0x1]
        %v813 = vmul.f32 %v797, 1.442695
        %v814 = vpow.pop %v813
        %v815 = vmul.f32 %v798, 1.442695
        %v816 = vpow.pop %v815
        %v817 = vmul.f32 %v799, 1.442695
        %v818 = vpow.pop %v817
        %v819 = vmul.f32 %v800, 1.442695
        %v820 = vpow.pop %v819
        %v821 = vmul.f32 %v801, 1.442695
        %v822 = vpow.pop %v821
        %v823 = vmul.f32 %v802, 1.442695
        %v824 = vpow.pop %v823
        %v825 = vmul.f32 %v803, 1.442695
        %v826 = vpow.pop %v825
        %v827 = vmul.f32 %v804, 1.442695
        %v828 = vpow.pop %v827
        %v829 = vmul.f32 %v805, 1.442695
        %v830 = vpow.pop %v829
        %v831 = vmul.f32 %v806, 1.442695
        %v832 = vpow.pop %v831
        %v833 = vmul.f32 %v807, 1.442695
        %v834 = vpow.pop %v833
        %v835 = vmul.f32 %v808, 1.442695
        %v836 = vpow.pop %v835
        %v837 = vmul.f32 %v809, 1.442695
        %v838 = vpow.pop %v837
        %v839 = vmul.f32 %v810, 1.442695
        %v840 = vpow.pop %v839
        %v841 = vmul.f32 %v811, 1.442695
        %v842 = vpow.pop %v841
        %v843 = vmul.f32 %v812, 1.442695
        %v844 = vpow.pop %v843
        %v845 = vsub.f32 0.0, %v814
        %v846 = vsub.f32 0.0, %v816
        %v847 = vsub.f32 0.0, %v818
        %v848 = vsub.f32 0.0, %v820
        %v849 = vsub.f32 0.0, %v822
        %v850 = vsub.f32 0.0, %v824
        %v851 = vsub.f32 0.0, %v826
        %v852 = vsub.f32 0.0, %v828
        %v853 = vsub.f32 0.0, %v830
        %v854 = vsub.f32 0.0, %v832
        %v855 = vsub.f32 0.0, %v834
        %v856 = vsub.f32 0.0, %v836
        %v857 = vsub.f32 0.0, %v838
        %v858 = vsub.f32 0.0, %v840
        %v859 = vsub.f32 0.0, %v842
        %v860 = vsub.f32 0.0, %v844
        %v861 = vlaneseq
        %v862 = vand.u32 %v861, 127
        %vm863 = vcmp.eq.s32.totalorder %v862, 0
        %vm864 = vcmp.eq.s32.totalorder %v862, 1
        %vm865 = vcmp.eq.s32.totalorder %v862, 2
        %vm866 = vcmp.eq.s32.totalorder %v862, 3
        %vm867 = vcmp.eq.s32.totalorder %v862, 4
        %vm868 = vcmp.eq.s32.totalorder %v862, 5
        %vm869 = vcmp.eq.s32.totalorder %v862, 6
        %vm870 = vcmp.eq.s32.totalorder %v862, 7
        %vm871 = vcmp.eq.s32.totalorder %v862, 8
        %vm872 = vcmp.eq.s32.totalorder %v862, 9
        %vm873 = vcmp.eq.s32.totalorder %v862, 10
        %vm874 = vcmp.eq.s32.totalorder %v862, 11
        %vm875 = vcmp.eq.s32.totalorder %v862, 12
        %vm876 = vcmp.eq.s32.totalorder %v862, 13
        %vm877 = vcmp.eq.s32.totalorder %v862, 14
        %vm878 = vcmp.eq.s32.totalorder %v862, 15
        %vm879 = vcmp.eq.s32.totalorder %v862, 16
        %vm880 = vcmp.eq.s32.totalorder %v862, 17
        %vm881 = vcmp.eq.s32.totalorder %v862, 18
        %vm882 = vcmp.eq.s32.totalorder %v862, 19
        %vm883 = vcmp.eq.s32.totalorder %v862, 20
        %vm884 = vcmp.eq.s32.totalorder %v862, 21
        %vm885 = vcmp.eq.s32.totalorder %v862, 22
        %vm886 = vcmp.eq.s32.totalorder %v862, 23
        %vm887 = vcmp.eq.s32.totalorder %v862, 24
        %vm888 = vcmp.eq.s32.totalorder %v862, 25
        %vm889 = vcmp.eq.s32.totalorder %v862, 26
        %vm890 = vcmp.eq.s32.totalorder %v862, 27
        %vm891 = vcmp.eq.s32.totalorder %v862, 28
        %vm892 = vcmp.eq.s32.totalorder %v862, 29
        %vm893 = vcmp.eq.s32.totalorder %v862, 30
        %vm894 = vcmp.eq.s32.totalorder %v862, 31
        %v895 = vsel %vm863, 1, 0
        %v896 = vsel %vm864, 1, 0
        %v897 = vsel %vm865, 1, 0
        %v898 = vsel %vm866, 1, 0
        %v899 = vsel %vm867, 1, 0
        %v900 = vsel %vm868, 1, 0
        %v901 = vsel %vm869, 1, 0
        %v902 = vsel %vm870, 1, 0
        %v903 = vsel %vm871, 1, 0
        %v904 = vsel %vm872, 1, 0
        %v905 = vsel %vm873, 1, 0
        %v906 = vsel %vm874, 1, 0
        %v907 = vsel %vm875, 1, 0
        %v908 = vsel %vm876, 1, 0
        %v909 = vsel %vm877, 1, 0
        %v910 = vsel %vm878, 1, 0
        %v911 = vsel %vm879, 1, 0
        %v912 = vsel %vm880, 1, 0
        %v913 = vsel %vm881, 1, 0
        %v914 = vsel %vm882, 1, 0
        %v915 = vsel %vm883, 1, 0
        %v916 = vsel %vm884, 1, 0
        %v917 = vsel %vm885, 1, 0
        %v918 = vsel %vm886, 1, 0
        %v919 = vsel %vm887, 1, 0
        %v920 = vsel %vm888, 1, 0
        %v921 = vsel %vm889, 1, 0
        %v922 = vsel %vm890, 1, 0
        %v923 = vsel %vm891, 1, 0
        %v924 = vsel %vm892, 1, 0
        %v925 = vsel %vm893, 1, 0
        %v926 = vsel %vm894, 1, 0
        %v927 = vcvt.s32.f32 %v895
        %v928 = vcvt.s32.f32 %v896
        %v929 = vcvt.s32.f32 %v897
        %v930 = vcvt.s32.f32 %v898
        %v931 = vcvt.s32.f32 %v899
        %v932 = vcvt.s32.f32 %v900
        %v933 = vcvt.s32.f32 %v901
        %v934 = vcvt.s32.f32 %v902
        %v935 = vcvt.s32.f32 %v903
        %v936 = vcvt.s32.f32 %v904
        %v937 = vcvt.s32.f32 %v905
        %v938 = vcvt.s32.f32 %v906
        %v939 = vcvt.s32.f32 %v907
        %v940 = vcvt.s32.f32 %v908
        %v941 = vcvt.s32.f32 %v909
        %v942 = vcvt.s32.f32 %v910
        %v943 = vcvt.s32.f32 %v911
        %v944 = vcvt.s32.f32 %v912
        %v945 = vcvt.s32.f32 %v913
        %v946 = vcvt.s32.f32 %v914
        %v947 = vcvt.s32.f32 %v915
        %v948 = vcvt.s32.f32 %v916
        %v949 = vcvt.s32.f32 %v917
        %v950 = vcvt.s32.f32 %v918
        %v951 = vcvt.s32.f32 %v919
        %v952 = vcvt.s32.f32 %v920
        %v953 = vcvt.s32.f32 %v921
        %v954 = vcvt.s32.f32 %v922
        %v955 = vcvt.s32.f32 %v923
        %v956 = vcvt.s32.f32 %v924
        %v957 = vcvt.s32.f32 %v925
        %v958 = vcvt.s32.f32 %v926
        %v959 = vld [vmem:[#allocation6] sm:$0x1]
        %v960 = vld [vmem:[#allocation6 + $0x1] sm:$0x1]
        %v961 = vld [vmem:[#allocation6 + $0x2] sm:$0x1]
        %v962 = vld [vmem:[#allocation6 + $0x3] sm:$0x1]
        %v963 = vld [vmem:[#allocation6 + $0x4] sm:$0x1]
        %v964 = vld [vmem:[#allocation6 + $0x5] sm:$0x1]
        %v965 = vld [vmem:[#allocation6 + $0x6] sm:$0x1]
        %v966 = vld [vmem:[#allocation6 + $0x7] sm:$0x1]
        %v967 = vld [vmem:[#allocation6 + $0x8] sm:$0x1]
        %v968 = vld [vmem:[#allocation6 + $0x9] sm:$0x1]
        %v969 = vld [vmem:[#allocation6 + $0xa] sm:$0x1]
        %v970 = vld [vmem:[#allocation6 + $0xb] sm:$0x1]
        %v971 = vld [vmem:[#allocation6 + $0xc] sm:$0x1]
        %v972 = vld [vmem:[#allocation6 + $0xd] sm:$0x1]
        %v973 = vld [vmem:[#allocation6 + $0xe] sm:$0x1]
        %v974 = vld [vmem:[#allocation6 + $0xf] sm:$0x1]
        %v975 = vld [vmem:[#allocation2] sm:$0xff]
        %v976 = vld [vmem:[#allocation3] sm:$0xff]
        %v977 = vld [vmem:[#allocation4] sm:$0xff]
        %v994 = vperm.slane %v845, 0
        %v995 = vperm.slane %v846, 0
        %v996 = vperm.slane %v847, 0
        %v997 = vperm.slane %v848, 0
        %v998 = vperm.slane %v849, 0
        %v999 = vperm.slane %v850, 0
        %v1000 = vperm.slane %v851, 0
        %v1001 = vperm.slane %v852, 0
        %v1002 = vperm.slane %v853, 0
        %v1003 = vperm.slane %v854, 0
        %v1004 = vperm.slane %v855, 0
        %v1005 = vperm.slane %v856, 0
        %v1006 = vperm.slane %v857, 0
        %v1007 = vperm.slane %v858, 0
        %v1008 = vperm.slane %v859, 0
        %v1009 = vperm.slane %v860, 0
        %v1026 = vmul.f32 %v994, %v975
        %v1027 = vmul.f32 %v995, %v975
        %v1028 = vmul.f32 %v996, %v975
        %v1029 = vmul.f32 %v997, %v975
        %v1030 = vmul.f32 %v998, %v975
        %v1031 = vmul.f32 %v999, %v975
        %v1032 = vmul.f32 %v1000, %v975
        %v1033 = vmul.f32 %v1001, %v975
        %v1034 = vmul.f32 %v1002, %v975
        %v1035 = vmul.f32 %v1003, %v975
        %v1036 = vmul.f32 %v1004, %v975
        %v1037 = vmul.f32 %v1005, %v975
        %v1038 = vmul.f32 %v1006, %v975
        %v1039 = vmul.f32 %v1007, %v975
        %v1040 = vmul.f32 %v1008, %v975
        %v1041 = vmul.f32 %v1009, %v975
        %v1042 = vmul.f32 %v1026, 1.442695
        %v1043 = vpow.pop %v1042
        %v1044 = vmul.f32 %v1027, 1.442695
        %v1045 = vpow.pop %v1044
        %v1046 = vmul.f32 %v1028, 1.442695
        %v1047 = vpow.pop %v1046
        %v1048 = vmul.f32 %v1029, 1.442695
        %v1049 = vpow.pop %v1048
        %v1050 = vmul.f32 %v1030, 1.442695
        %v1051 = vpow.pop %v1050
        %v1052 = vmul.f32 %v1031, 1.442695
        %v1053 = vpow.pop %v1052
        %v1054 = vmul.f32 %v1032, 1.442695
        %v1055 = vpow.pop %v1054
        %v1056 = vmul.f32 %v1033, 1.442695
        %v1057 = vpow.pop %v1056
        %v1058 = vmul.f32 %v1034, 1.442695
        %v1059 = vpow.pop %v1058
        %v1060 = vmul.f32 %v1035, 1.442695
        %v1061 = vpow.pop %v1060
        %v1062 = vmul.f32 %v1036, 1.442695
        %v1063 = vpow.pop %v1062
        %v1064 = vmul.f32 %v1037, 1.442695
        %v1065 = vpow.pop %v1064
        %v1066 = vmul.f32 %v1038, 1.442695
        %v1067 = vpow.pop %v1066
        %v1068 = vmul.f32 %v1039, 1.442695
        %v1069 = vpow.pop %v1068
        %v1070 = vmul.f32 %v1040, 1.442695
        %v1071 = vpow.pop %v1070
        %v1072 = vmul.f32 %v1041, 1.442695
        %v1073 = vpow.pop %v1072
        %v1074 = vmul.f32 %v977, %v927
        %v1075 = vmul.f32 %v977, %v928
        %v1076 = vmul.f32 %v977, %v929
        %v1077 = vmul.f32 %v977, %v930
        %v1078 = vmul.f32 %v977, %v931
        %v1079 = vmul.f32 %v977, %v932
        %v1080 = vmul.f32 %v977, %v933
        %v1081 = vmul.f32 %v977, %v934
        %v1082 = vmul.f32 %v977, %v935
        %v1083 = vmul.f32 %v977, %v936
        %v1084 = vmul.f32 %v977, %v937
        %v1085 = vmul.f32 %v977, %v938
        %v1086 = vmul.f32 %v977, %v939
        %v1087 = vmul.f32 %v977, %v940
        %v1088 = vmul.f32 %v977, %v941
        %v1089 = vmul.f32 %v977, %v942
        %v1090 = vmul.f32 %v977, %v943
        %v1091 = vmul.f32 %v977, %v944
        %v1092 = vmul.f32 %v977, %v945
        %v1093 = vmul.f32 %v977, %v946
        %v1094 = vmul.f32 %v977, %v947
        %v1095 = vmul.f32 %v977, %v948
        %v1096 = vmul.f32 %v977, %v949
        %v1097 = vmul.f32 %v977, %v950
        %v1098 = vmul.f32 %v977, %v951
        %v1099 = vmul.f32 %v977, %v952
        %v1100 = vmul.f32 %v977, %v953
        %v1101 = vmul.f32 %v977, %v954
        %v1102 = vmul.f32 %v977, %v955
        %v1103 = vmul.f32 %v977, %v956
        %v1104 = vmul.f32 %v977, %v957
        %v1105 = vmul.f32 %v977, %v958
        %v1106 = vsel %vm580, %v1074, 0.0
        %1107 = vadd.xlane.f32.xlu0 %v1106
        %v1108 = vpop.xlane.xlu0 %1107
        %v1109 = vsel %vm580, %v1075, 0.0
        %1110 = vadd.xlane.f32.xlu0 %v1109
        %v1111 = vpop.xlane.xlu0 %1110
        %v1112 = vsel %vm580, %v1076, 0.0
        %1113 = vadd.xlane.f32.xlu0 %v1112
        %v1114 = vpop.xlane.xlu0 %1113
        %v1115 = vsel %vm580, %v1077, 0.0
        %1116 = vadd.xlane.f32.xlu0 %v1115
        %v1117 = vpop.xlane.xlu0 %1116
        %v1118 = vsel %vm580, %v1078, 0.0
        %1119 = vadd.xlane.f32.xlu0 %v1118
        %v1120 = vpop.xlane.xlu0 %1119
        %v1121 = vsel %vm580, %v1079, 0.0
        %1122 = vadd.xlane.f32.xlu0 %v1121
        %v1123 = vpop.xlane.xlu0 %1122
        %v1124 = vsel %vm580, %v1080, 0.0
        %1125 = vadd.xlane.f32.xlu0 %v1124
        %v1126 = vpop.xlane.xlu0 %1125
        %v1127 = vsel %vm580, %v1081, 0.0
        %1128 = vadd.xlane.f32.xlu0 %v1127
        %v1129 = vpop.xlane.xlu0 %1128
        %v1130 = vsel %vm580, %v1082, 0.0
        %1131 = vadd.xlane.f32.xlu0 %v1130
        %v1132 = vpop.xlane.xlu0 %1131
        %v1133 = vsel %vm580, %v1083, 0.0
        %1134 = vadd.xlane.f32.xlu0 %v1133
        %v1135 = vpop.xlane.xlu0 %1134
        %v1136 = vsel %vm580, %v1084, 0.0
        %1137 = vadd.xlane.f32.xlu0 %v1136
        %v1138 = vpop.xlane.xlu0 %1137
        %v1139 = vsel %vm580, %v1085, 0.0
        %1140 = vadd.xlane.f32.xlu0 %v1139
        %v1141 = vpop.xlane.xlu0 %1140
        %v1142 = vsel %vm580, %v1086, 0.0
        %1143 = vadd.xlane.f32.xlu0 %v1142
        %v1144 = vpop.xlane.xlu0 %1143
        %v1145 = vsel %vm580, %v1087, 0.0
        %1146 = vadd.xlane.f32.xlu0 %v1145
        %v1147 = vpop.xlane.xlu0 %1146
        %v1148 = vsel %vm580, %v1088, 0.0
        %1149 = vadd.xlane.f32.xlu0 %v1148
        %v1150 = vpop.xlane.xlu0 %1149
        %v1151 = vsel %vm580, %v1089, 0.0
        %1152 = vadd.xlane.f32.xlu0 %v1151
        %v1153 = vpop.xlane.xlu0 %1152
        %v1154 = vsel %vm580, %v1090, 0.0
        %1155 = vadd.xlane.f32.xlu0 %v1154
        %v1156 = vpop.xlane.xlu0 %1155
        %v1157 = vsel %vm580, %v1091, 0.0
        %1158 = vadd.xlane.f32.xlu0 %v1157
        %v1159 = vpop.xlane.xlu0 %1158
        %v1160 = vsel %vm580, %v1092, 0.0
        %1161 = vadd.xlane.f32.xlu0 %v1160
        %v1162 = vpop.xlane.xlu0 %1161
        %v1163 = vsel %vm580, %v1093, 0.0
        %1164 = vadd.xlane.f32.xlu0 %v1163
        %v1165 = vpop.xlane.xlu0 %1164
        %v1166 = vsel %vm580, %v1094, 0.0
        %1167 = vadd.xlane.f32.xlu0 %v1166
        %v1168 = vpop.xlane.xlu0 %1167
        %v1169 = vsel %vm580, %v1095, 0.0
        %1170 = vadd.xlane.f32.xlu0 %v1169
        %v1171 = vpop.xlane.xlu0 %1170
        %v1172 = vsel %vm580, %v1096, 0.0
        %1173 = vadd.xlane.f32.xlu0 %v1172
        %v1174 = vpop.xlane.xlu0 %1173
        %v1175 = vsel %vm580, %v1097, 0.0
        %1176 = vadd.xlane.f32.xlu0 %v1175
        %v1177 = vpop.xlane.xlu0 %1176
        %v1178 = vsel %vm580, %v1098, 0.0
        %1179 = vadd.xlane.f32.xlu0 %v1178
        %v1180 = vpop.xlane.xlu0 %1179
        %v1181 = vsel %vm580, %v1099, 0.0
        %1182 = vadd.xlane.f32.xlu0 %v1181
        %v1183 = vpop.xlane.xlu0 %1182
        %v1184 = vsel %vm580, %v1100, 0.0
        %1185 = vadd.xlane.f32.xlu0 %v1184
        %v1186 = vpop.xlane.xlu0 %1185
        %v1187 = vsel %vm580, %v1101, 0.0
        %1188 = vadd.xlane.f32.xlu0 %v1187
        %v1189 = vpop.xlane.xlu0 %1188
        %v1190 = vsel %vm580, %v1102, 0.0
        %1191 = vadd.xlane.f32.xlu0 %v1190
        %v1192 = vpop.xlane.xlu0 %1191
        %v1193 = vsel %vm580, %v1103, 0.0
        %1194 = vadd.xlane.f32.xlu0 %v1193
        %v1195 = vpop.xlane.xlu0 %1194
        %v1196 = vsel %vm580, %v1104, 0.0
        %1197 = vadd.xlane.f32.xlu0 %v1196
        %v1198 = vpop.xlane.xlu0 %1197
        %v1199 = vsel %vm580, %v1105, 0.0
        %1200 = vadd.xlane.f32.xlu0 %v1199
        %v1201 = vpop.xlane.xlu0 %1200
        %v1202 = vmul.f32 %v976, %v1108
        %v1203 = vmul.f32 %v976, %v1111
        %v1204 = vmul.f32 %v976, %v1114
        %v1205 = vmul.f32 %v976, %v1117
        %v1206 = vmul.f32 %v976, %v1120
        %v1207 = vmul.f32 %v976, %v1123
        %v1208 = vmul.f32 %v976, %v1126
        %v1209 = vmul.f32 %v976, %v1129
        %v1210 = vmul.f32 %v976, %v1132
        %v1211 = vmul.f32 %v976, %v1135
        %v1212 = vmul.f32 %v976, %v1138
        %v1213 = vmul.f32 %v976, %v1141
        %v1214 = vmul.f32 %v976, %v1144
        %v1215 = vmul.f32 %v976, %v1147
        %v1216 = vmul.f32 %v976, %v1150
        %v1217 = vmul.f32 %v976, %v1153
        %v1218 = vmul.f32 %v1043, %v959
        %v1219 = vmul.f32 %v1045, %v960
        %v1220 = vmul.f32 %v1047, %v961
        %v1221 = vmul.f32 %v1049, %v962
        %v1222 = vmul.f32 %v1051, %v963
        %v1223 = vmul.f32 %v1053, %v964
        %v1224 = vmul.f32 %v1055, %v965
        %v1225 = vmul.f32 %v1057, %v966
        %v1226 = vmul.f32 %v1059, %v967
        %v1227 = vmul.f32 %v1061, %v968
        %v1228 = vmul.f32 %v1063, %v969
        %v1229 = vmul.f32 %v1065, %v970
        %v1230 = vmul.f32 %v1067, %v971
        %v1231 = vmul.f32 %v1069, %v972
        %v1232 = vmul.f32 %v1071, %v973
        %v1233 = vmul.f32 %v1073, %v974
        %v1234 = vadd.f32 %v1218, %v1202
        %v1235 = vadd.f32 %v1219, %v1203
        %v1236 = vadd.f32 %v1220, %v1204
        %v1237 = vadd.f32 %v1221, %v1205
        %v1238 = vadd.f32 %v1222, %v1206
        %v1239 = vadd.f32 %v1223, %v1207
        %v1240 = vadd.f32 %v1224, %v1208
        %v1241 = vadd.f32 %v1225, %v1209
        %v1242 = vadd.f32 %v1226, %v1210
        %v1243 = vadd.f32 %v1227, %v1211
        %v1244 = vadd.f32 %v1228, %v1212
        %v1245 = vadd.f32 %v1229, %v1213
        %v1246 = vadd.f32 %v1230, %v1214
        %v1247 = vadd.f32 %v1231, %v1215
        %v1248 = vadd.f32 %v1232, %v1216
        %v1249 = vadd.f32 %v1233, %v1217
        %v1250 = vmul.f32 %v1156, %v1234
        %v1251 = vmul.f32 %v1159, %v1235
        %v1252 = vadd.f32 %v1250, %v1251
        %v1253 = vmul.f32 %v1162, %v1236
        %v1254 = vadd.f32 %v1252, %v1253
        %v1255 = vmul.f32 %v1165, %v1237
        %v1256 = vadd.f32 %v1254, %v1255
        %v1257 = vmul.f32 %v1168, %v1238
        %v1258 = vadd.f32 %v1256, %v1257
        %v1259 = vmul.f32 %v1171, %v1239
        %v1260 = vadd.f32 %v1258, %v1259
        %v1261 = vmul.f32 %v1174, %v1240
        %v1262 = vadd.f32 %v1260, %v1261
        %v1263 = vmul.f32 %v1177, %v1241
        %v1264 = vadd.f32 %v1262, %v1263
        %v1265 = vmul.f32 %v1180, %v1242
        %v1266 = vadd.f32 %v1264, %v1265
        %v1267 = vmul.f32 %v1183, %v1243
        %v1268 = vadd.f32 %v1266, %v1267
        %v1269 = vmul.f32 %v1186, %v1244
        %v1270 = vadd.f32 %v1268, %v1269
        %v1271 = vmul.f32 %v1189, %v1245
        %v1272 = vadd.f32 %v1270, %v1271
        %v1273 = vmul.f32 %v1192, %v1246
        %v1274 = vadd.f32 %v1272, %v1273
        %v1275 = vmul.f32 %v1195, %v1247
        %v1276 = vadd.f32 %v1274, %v1275
        %v1277 = vmul.f32 %v1198, %v1248
        %v1278 = vadd.f32 %v1276, %v1277
        %v1279 = vmul.f32 %v1201, %v1249
        %v1280 = vadd.f32 %v1278, %v1279
        %v1297 = vrot.slane %v1234, 7
        %v1298 = vrot.slane %v1235, 7
        %v1299 = vrot.slane %v1236, 7
        %v1300 = vrot.slane %v1237, 7
        %v1301 = vrot.slane %v1238, 7
        %v1302 = vrot.slane %v1239, 7
        %v1303 = vrot.slane %v1240, 7
        %v1304 = vrot.slane %v1241, 7
        %v1305 = vrot.slane %v1242, 7
        %v1306 = vrot.slane %v1243, 7
        %v1307 = vrot.slane %v1244, 7
        %v1308 = vrot.slane %v1245, 7
        %v1309 = vrot.slane %v1246, 7
        %v1310 = vrot.slane %v1247, 7
        %v1311 = vrot.slane %v1248, 7
        %v1312 = vrot.slane %v1249, 7
        %v1329 = vmul.f32 %v1043, %v1297
        %v1330 = vmul.f32 %v1045, %v1298
        %v1331 = vmul.f32 %v1047, %v1299
        %v1332 = vmul.f32 %v1049, %v1300
        %v1333 = vmul.f32 %v1051, %v1301
        %v1334 = vmul.f32 %v1053, %v1302
        %v1335 = vmul.f32 %v1055, %v1303
        %v1336 = vmul.f32 %v1057, %v1304
        %v1337 = vmul.f32 %v1059, %v1305
        %v1338 = vmul.f32 %v1061, %v1306
        %v1339 = vmul.f32 %v1063, %v1307
        %v1340 = vmul.f32 %v1065, %v1308
        %v1341 = vmul.f32 %v1067, %v1309
        %v1342 = vmul.f32 %v1069, %v1310
        %v1343 = vmul.f32 %v1071, %v1311
        %v1344 = vmul.f32 %v1073, %v1312
        %v1345 = vadd.f32 %v1329, %v1202
        %v1346 = vadd.f32 %v1330, %v1203
        %v1347 = vadd.f32 %v1331, %v1204
        %v1348 = vadd.f32 %v1332, %v1205
        %v1349 = vadd.f32 %v1333, %v1206
        %v1350 = vadd.f32 %v1334, %v1207
        %v1351 = vadd.f32 %v1335, %v1208
        %v1352 = vadd.f32 %v1336, %v1209
        %v1353 = vadd.f32 %v1337, %v1210
        %v1354 = vadd.f32 %v1338, %v1211
        %v1355 = vadd.f32 %v1339, %v1212
        %v1356 = vadd.f32 %v1340, %v1213
        %v1357 = vadd.f32 %v1341, %v1214
        %v1358 = vadd.f32 %v1342, %v1215
        %v1359 = vadd.f32 %v1343, %v1216
        %v1360 = vadd.f32 %v1344, %v1217
        %v1361 = vmul.f32 %v1156, %v1345
        %v1362 = vmul.f32 %v1159, %v1346
        %v1363 = vadd.f32 %v1361, %v1362
        %v1364 = vmul.f32 %v1162, %v1347
        %v1365 = vadd.f32 %v1363, %v1364
        %v1366 = vmul.f32 %v1165, %v1348
        %v1367 = vadd.f32 %v1365, %v1366
        %v1368 = vmul.f32 %v1168, %v1349
        %v1369 = vadd.f32 %v1367, %v1368
        %v1370 = vmul.f32 %v1171, %v1350
        %v1371 = vadd.f32 %v1369, %v1370
        %v1372 = vmul.f32 %v1174, %v1351
        %v1373 = vadd.f32 %v1371, %v1372
        %v1374 = vmul.f32 %v1177, %v1352
        %v1375 = vadd.f32 %v1373, %v1374
        %v1376 = vmul.f32 %v1180, %v1353
        %v1377 = vadd.f32 %v1375, %v1376
        %v1378 = vmul.f32 %v1183, %v1354
        %v1379 = vadd.f32 %v1377, %v1378
        %v1380 = vmul.f32 %v1186, %v1355
        %v1381 = vadd.f32 %v1379, %v1380
        %v1382 = vmul.f32 %v1189, %v1356
        %v1383 = vadd.f32 %v1381, %v1382
        %v1384 = vmul.f32 %v1192, %v1357
        %v1385 = vadd.f32 %v1383, %v1384
        %v1386 = vmul.f32 %v1195, %v1358
        %v1387 = vadd.f32 %v1385, %v1386
        %v1388 = vmul.f32 %v1198, %v1359
        %v1389 = vadd.f32 %v1387, %v1388
        %v1390 = vmul.f32 %v1201, %v1360
        %v1391 = vadd.f32 %v1389, %v1390
        %v1408 = vrot.slane %v1345, 7
        %v1409 = vrot.slane %v1346, 7
        %v1410 = vrot.slane %v1347, 7
        %v1411 = vrot.slane %v1348, 7
        %v1412 = vrot.slane %v1349, 7
        %v1413 = vrot.slane %v1350, 7
        %v1414 = vrot.slane %v1351, 7
        %v1415 = vrot.slane %v1352, 7
        %v1416 = vrot.slane %v1353, 7
        %v1417 = vrot.slane %v1354, 7
        %v1418 = vrot.slane %v1355, 7
        %v1419 = vrot.slane %v1356, 7
        %v1420 = vrot.slane %v1357, 7
        %v1421 = vrot.slane %v1358, 7
        %v1422 = vrot.slane %v1359, 7
        %v1423 = vrot.slane %v1360, 7
        %v1440 = vmul.f32 %v1043, %v1408
        %v1441 = vmul.f32 %v1045, %v1409
        %v1442 = vmul.f32 %v1047, %v1410
        %v1443 = vmul.f32 %v1049, %v1411
        %v1444 = vmul.f32 %v1051, %v1412
        %v1445 = vmul.f32 %v1053, %v1413
        %v1446 = vmul.f32 %v1055, %v1414
        %v1447 = vmul.f32 %v1057, %v1415
        %v1448 = vmul.f32 %v1059, %v1416
        %v1449 = vmul.f32 %v1061, %v1417
        %v1450 = vmul.f32 %v1063, %v1418
        %v1451 = vmul.f32 %v1065, %v1419
        %v1452 = vmul.f32 %v1067, %v1420
        %v1453 = vmul.f32 %v1069, %v1421
        %v1454 = vmul.f32 %v1071, %v1422
        %v1455 = vmul.f32 %v1073, %v1423
        %v1456 = vadd.f32 %v1440, %v1202
        %v1457 = vadd.f32 %v1441, %v1203
        %v1458 = vadd.f32 %v1442, %v1204
        %v1459 = vadd.f32 %v1443, %v1205
        %v1460 = vadd.f32 %v1444, %v1206
        %v1461 = vadd.f32 %v1445, %v1207
        %v1462 = vadd.f32 %v1446, %v1208
        %v1463 = vadd.f32 %v1447, %v1209
        %v1464 = vadd.f32 %v1448, %v1210
        %v1465 = vadd.f32 %v1449, %v1211
        %v1466 = vadd.f32 %v1450, %v1212
        %v1467 = vadd.f32 %v1451, %v1213
        %v1468 = vadd.f32 %v1452, %v1214
        %v1469 = vadd.f32 %v1453, %v1215
        %v1470 = vadd.f32 %v1454, %v1216
        %v1471 = vadd.f32 %v1455, %v1217
        %v1472 = vmul.f32 %v1156, %v1456
        %v1473 = vmul.f32 %v1159, %v1457
        %v1474 = vadd.f32 %v1472, %v1473
        %v1475 = vmul.f32 %v1162, %v1458
        %v1476 = vadd.f32 %v1474, %v1475
        %v1477 = vmul.f32 %v1165, %v1459
        %v1478 = vadd.f32 %v1476, %v1477
        %v1479 = vmul.f32 %v1168, %v1460
        %v1480 = vadd.f32 %v1478, %v1479
        %v1481 = vmul.f32 %v1171, %v1461
        %v1482 = vadd.f32 %v1480, %v1481
        %v1483 = vmul.f32 %v1174, %v1462
        %v1484 = vadd.f32 %v1482, %v1483
        %v1485 = vmul.f32 %v1177, %v1463
        %v1486 = vadd.f32 %v1484, %v1485
        %v1487 = vmul.f32 %v1180, %v1464
        %v1488 = vadd.f32 %v1486, %v1487
        %v1489 = vmul.f32 %v1183, %v1465
        %v1490 = vadd.f32 %v1488, %v1489
        %v1491 = vmul.f32 %v1186, %v1466
        %v1492 = vadd.f32 %v1490, %v1491
        %v1493 = vmul.f32 %v1189, %v1467
        %v1494 = vadd.f32 %v1492, %v1493
        %v1495 = vmul.f32 %v1192, %v1468
        %v1496 = vadd.f32 %v1494, %v1495
        %v1497 = vmul.f32 %v1195, %v1469
        %v1498 = vadd.f32 %v1496, %v1497
        %v1499 = vmul.f32 %v1198, %v1470
        %v1500 = vadd.f32 %v1498, %v1499
        %v1501 = vmul.f32 %v1201, %v1471
        %v1502 = vadd.f32 %v1500, %v1501
        %v1519 = vrot.slane %v1456, 7
        %v1520 = vrot.slane %v1457, 7
        %v1521 = vrot.slane %v1458, 7
        %v1522 = vrot.slane %v1459, 7
        %v1523 = vrot.slane %v1460, 7
        %v1524 = vrot.slane %v1461, 7
        %v1525 = vrot.slane %v1462, 7
        %v1526 = vrot.slane %v1463, 7
        %v1527 = vrot.slane %v1464, 7
        %v1528 = vrot.slane %v1465, 7
        %v1529 = vrot.slane %v1466, 7
        %v1530 = vrot.slane %v1467, 7
        %v1531 = vrot.slane %v1468, 7
        %v1532 = vrot.slane %v1469, 7
        %v1533 = vrot.slane %v1470, 7
        %v1534 = vrot.slane %v1471, 7
        %v1551 = vmul.f32 %v1043, %v1519
        %v1552 = vmul.f32 %v1045, %v1520
        %v1553 = vmul.f32 %v1047, %v1521
        %v1554 = vmul.f32 %v1049, %v1522
        %v1555 = vmul.f32 %v1051, %v1523
        %v1556 = vmul.f32 %v1053, %v1524
        %v1557 = vmul.f32 %v1055, %v1525
        %v1558 = vmul.f32 %v1057, %v1526
        %v1559 = vmul.f32 %v1059, %v1527
        %v1560 = vmul.f32 %v1061, %v1528
        %v1561 = vmul.f32 %v1063, %v1529
        %v1562 = vmul.f32 %v1065, %v1530
        %v1563 = vmul.f32 %v1067, %v1531
        %v1564 = vmul.f32 %v1069, %v1532
        %v1565 = vmul.f32 %v1071, %v1533
        %v1566 = vmul.f32 %v1073, %v1534
        %v1567 = vadd.f32 %v1551, %v1202
        %v1568 = vadd.f32 %v1552, %v1203
        %v1569 = vadd.f32 %v1553, %v1204
        %v1570 = vadd.f32 %v1554, %v1205
        %v1571 = vadd.f32 %v1555, %v1206
        %v1572 = vadd.f32 %v1556, %v1207
        %v1573 = vadd.f32 %v1557, %v1208
        %v1574 = vadd.f32 %v1558, %v1209
        %v1575 = vadd.f32 %v1559, %v1210
        %v1576 = vadd.f32 %v1560, %v1211
        %v1577 = vadd.f32 %v1561, %v1212
        %v1578 = vadd.f32 %v1562, %v1213
        %v1579 = vadd.f32 %v1563, %v1214
        %v1580 = vadd.f32 %v1564, %v1215
        %v1581 = vadd.f32 %v1565, %v1216
        %v1582 = vadd.f32 %v1566, %v1217
        %v1583 = vmul.f32 %v1156, %v1567
        %v1584 = vmul.f32 %v1159, %v1568
        %v1585 = vadd.f32 %v1583, %v1584
        %v1586 = vmul.f32 %v1162, %v1569
        %v1587 = vadd.f32 %v1585, %v1586
        %v1588 = vmul.f32 %v1165, %v1570
        %v1589 = vadd.f32 %v1587, %v1588
        %v1590 = vmul.f32 %v1168, %v1571
        %v1591 = vadd.f32 %v1589, %v1590
        %v1592 = vmul.f32 %v1171, %v1572
        %v1593 = vadd.f32 %v1591, %v1592
        %v1594 = vmul.f32 %v1174, %v1573
        %v1595 = vadd.f32 %v1593, %v1594
        %v1596 = vmul.f32 %v1177, %v1574
        %v1597 = vadd.f32 %v1595, %v1596
        %v1598 = vmul.f32 %v1180, %v1575
        %v1599 = vadd.f32 %v1597, %v1598
        %v1600 = vmul.f32 %v1183, %v1576
        %v1601 = vadd.f32 %v1599, %v1600
        %v1602 = vmul.f32 %v1186, %v1577
        %v1603 = vadd.f32 %v1601, %v1602
        %v1604 = vmul.f32 %v1189, %v1578
        %v1605 = vadd.f32 %v1603, %v1604
        %v1606 = vmul.f32 %v1192, %v1579
        %v1607 = vadd.f32 %v1605, %v1606
        %v1608 = vmul.f32 %v1195, %v1580
        %v1609 = vadd.f32 %v1607, %v1608
        %v1610 = vmul.f32 %v1198, %v1581
        %v1611 = vadd.f32 %v1609, %v1610
        %v1612 = vmul.f32 %v1201, %v1582
        %v1613 = vadd.f32 %v1611, %v1612
        %v1630 = vrot.slane %v1567, 7
        %v1631 = vrot.slane %v1568, 7
        %v1632 = vrot.slane %v1569, 7
        %v1633 = vrot.slane %v1570, 7
        %v1634 = vrot.slane %v1571, 7
        %v1635 = vrot.slane %v1572, 7
        %v1636 = vrot.slane %v1573, 7
        %v1637 = vrot.slane %v1574, 7
        %v1638 = vrot.slane %v1575, 7
        %v1639 = vrot.slane %v1576, 7
        %v1640 = vrot.slane %v1577, 7
        %v1641 = vrot.slane %v1578, 7
        %v1642 = vrot.slane %v1579, 7
        %v1643 = vrot.slane %v1580, 7
        %v1644 = vrot.slane %v1581, 7
        %v1645 = vrot.slane %v1582, 7
        %v1662 = vmul.f32 %v1043, %v1630
        %v1663 = vmul.f32 %v1045, %v1631
        %v1664 = vmul.f32 %v1047, %v1632
        %v1665 = vmul.f32 %v1049, %v1633
        %v1666 = vmul.f32 %v1051, %v1634
        %v1667 = vmul.f32 %v1053, %v1635
        %v1668 = vmul.f32 %v1055, %v1636
        %v1669 = vmul.f32 %v1057, %v1637
        %v1670 = vmul.f32 %v1059, %v1638
        %v1671 = vmul.f32 %v1061, %v1639
        %v1672 = vmul.f32 %v1063, %v1640
        %v1673 = vmul.f32 %v1065, %v1641
        %v1674 = vmul.f32 %v1067, %v1642
        %v1675 = vmul.f32 %v1069, %v1643
        %v1676 = vmul.f32 %v1071, %v1644
        %v1677 = vmul.f32 %v1073, %v1645
        %v1678 = vadd.f32 %v1662, %v1202
        %v1679 = vadd.f32 %v1663, %v1203
        %v1680 = vadd.f32 %v1664, %v1204
        %v1681 = vadd.f32 %v1665, %v1205
        %v1682 = vadd.f32 %v1666, %v1206
        %v1683 = vadd.f32 %v1667, %v1207
        %v1684 = vadd.f32 %v1668, %v1208
        %v1685 = vadd.f32 %v1669, %v1209
        %v1686 = vadd.f32 %v1670, %v1210
        %v1687 = vadd.f32 %v1671, %v1211
        %v1688 = vadd.f32 %v1672, %v1212
        %v1689 = vadd.f32 %v1673, %v1213
        %v1690 = vadd.f32 %v1674, %v1214
        %v1691 = vadd.f32 %v1675, %v1215
        %v1692 = vadd.f32 %v1676, %v1216
        %v1693 = vadd.f32 %v1677, %v1217
        %v1694 = vmul.f32 %v1156, %v1678
        %v1695 = vmul.f32 %v1159, %v1679
        %v1696 = vadd.f32 %v1694, %v1695
        %v1697 = vmul.f32 %v1162, %v1680
        %v1698 = vadd.f32 %v1696, %v1697
        %v1699 = vmul.f32 %v1165, %v1681
        %v1700 = vadd.f32 %v1698, %v1699
        %v1701 = vmul.f32 %v1168, %v1682
        %v1702 = vadd.f32 %v1700, %v1701
        %v1703 = vmul.f32 %v1171, %v1683
        %v1704 = vadd.f32 %v1702, %v1703
        %v1705 = vmul.f32 %v1174, %v1684
        %v1706 = vadd.f32 %v1704, %v1705
        %v1707 = vmul.f32 %v1177, %v1685
        %v1708 = vadd.f32 %v1706, %v1707
        %v1709 = vmul.f32 %v1180, %v1686
        %v1710 = vadd.f32 %v1708, %v1709
        %v1711 = vmul.f32 %v1183, %v1687
        %v1712 = vadd.f32 %v1710, %v1711
        %v1713 = vmul.f32 %v1186, %v1688
        %v1714 = vadd.f32 %v1712, %v1713
        %v1715 = vmul.f32 %v1189, %v1689
        %v1716 = vadd.f32 %v1714, %v1715
        %v1717 = vmul.f32 %v1192, %v1690
        %v1718 = vadd.f32 %v1716, %v1717
        %v1719 = vmul.f32 %v1195, %v1691
        %v1720 = vadd.f32 %v1718, %v1719
        %v1721 = vmul.f32 %v1198, %v1692
        %v1722 = vadd.f32 %v1720, %v1721
        %v1723 = vmul.f32 %v1201, %v1693
        %v1724 = vadd.f32 %v1722, %v1723
        %v1741 = vrot.slane %v1678, 7
        %v1742 = vrot.slane %v1679, 7
        %v1743 = vrot.slane %v1680, 7
        %v1744 = vrot.slane %v1681, 7
        %v1745 = vrot.slane %v1682, 7
        %v1746 = vrot.slane %v1683, 7
        %v1747 = vrot.slane %v1684, 7
        %v1748 = vrot.slane %v1685, 7
        %v1749 = vrot.slane %v1686, 7
        %v1750 = vrot.slane %v1687, 7
        %v1751 = vrot.slane %v1688, 7
        %v1752 = vrot.slane %v1689, 7
        %v1753 = vrot.slane %v1690, 7
        %v1754 = vrot.slane %v1691, 7
        %v1755 = vrot.slane %v1692, 7
        %v1756 = vrot.slane %v1693, 7
        %v1773 = vmul.f32 %v1043, %v1741
        %v1774 = vmul.f32 %v1045, %v1742
        %v1775 = vmul.f32 %v1047, %v1743
        %v1776 = vmul.f32 %v1049, %v1744
        %v1777 = vmul.f32 %v1051, %v1745
        %v1778 = vmul.f32 %v1053, %v1746
        %v1779 = vmul.f32 %v1055, %v1747
        %v1780 = vmul.f32 %v1057, %v1748
        %v1781 = vmul.f32 %v1059, %v1749
        %v1782 = vmul.f32 %v1061, %v1750
        %v1783 = vmul.f32 %v1063, %v1751
        %v1784 = vmul.f32 %v1065, %v1752
        %v1785 = vmul.f32 %v1067, %v1753
        %v1786 = vmul.f32 %v1069, %v1754
        %v1787 = vmul.f32 %v1071, %v1755
        %v1788 = vmul.f32 %v1073, %v1756
        %v1789 = vadd.f32 %v1773, %v1202
        %v1790 = vadd.f32 %v1774, %v1203
        %v1791 = vadd.f32 %v1775, %v1204
        %v1792 = vadd.f32 %v1776, %v1205
        %v1793 = vadd.f32 %v1777, %v1206
        %v1794 = vadd.f32 %v1778, %v1207
        %v1795 = vadd.f32 %v1779, %v1208
        %v1796 = vadd.f32 %v1780, %v1209
        %v1797 = vadd.f32 %v1781, %v1210
        %v1798 = vadd.f32 %v1782, %v1211
        %v1799 = vadd.f32 %v1783, %v1212
        %v1800 = vadd.f32 %v1784, %v1213
        %v1801 = vadd.f32 %v1785, %v1214
        %v1802 = vadd.f32 %v1786, %v1215
        %v1803 = vadd.f32 %v1787, %v1216
        %v1804 = vadd.f32 %v1788, %v1217
        %v1805 = vmul.f32 %v1156, %v1789
        %v1806 = vmul.f32 %v1159, %v1790
        %v1807 = vadd.f32 %v1805, %v1806
        %v1808 = vmul.f32 %v1162, %v1791
        %v1809 = vadd.f32 %v1807, %v1808
        %v1810 = vmul.f32 %v1165, %v1792
        %v1811 = vadd.f32 %v1809, %v1810
        %v1812 = vmul.f32 %v1168, %v1793
        %v1813 = vadd.f32 %v1811, %v1812
        %v1814 = vmul.f32 %v1171, %v1794
        %v1815 = vadd.f32 %v1813, %v1814
        %v1816 = vmul.f32 %v1174, %v1795
        %v1817 = vadd.f32 %v1815, %v1816
        %v1818 = vmul.f32 %v1177, %v1796
        %v1819 = vadd.f32 %v1817, %v1818
        %v1820 = vmul.f32 %v1180, %v1797
        %v1821 = vadd.f32 %v1819, %v1820
        %v1822 = vmul.f32 %v1183, %v1798
        %v1823 = vadd.f32 %v1821, %v1822
        %v1824 = vmul.f32 %v1186, %v1799
        %v1825 = vadd.f32 %v1823, %v1824
        %v1826 = vmul.f32 %v1189, %v1800
        %v1827 = vadd.f32 %v1825, %v1826
        %v1828 = vmul.f32 %v1192, %v1801
        %v1829 = vadd.f32 %v1827, %v1828
        %v1830 = vmul.f32 %v1195, %v1802
        %v1831 = vadd.f32 %v1829, %v1830
        %v1832 = vmul.f32 %v1198, %v1803
        %v1833 = vadd.f32 %v1831, %v1832
        %v1834 = vmul.f32 %v1201, %v1804
        %v1835 = vadd.f32 %v1833, %v1834
        %v1852 = vrot.slane %v1789, 7
        %v1853 = vrot.slane %v1790, 7
        %v1854 = vrot.slane %v1791, 7
        %v1855 = vrot.slane %v1792, 7
        %v1856 = vrot.slane %v1793, 7
        %v1857 = vrot.slane %v1794, 7
        %v1858 = vrot.slane %v1795, 7
        %v1859 = vrot.slane %v1796, 7
        %v1860 = vrot.slane %v1797, 7
        %v1861 = vrot.slane %v1798, 7
        %v1862 = vrot.slane %v1799, 7
        %v1863 = vrot.slane %v1800, 7
        %v1864 = vrot.slane %v1801, 7
        %v1865 = vrot.slane %v1802, 7
        %v1866 = vrot.slane %v1803, 7
        %v1867 = vrot.slane %v1804, 7
        %v1884 = vmul.f32 %v1043, %v1852
        %v1885 = vmul.f32 %v1045, %v1853
        %v1886 = vmul.f32 %v1047, %v1854
        %v1887 = vmul.f32 %v1049, %v1855
        %v1888 = vmul.f32 %v1051, %v1856
        %v1889 = vmul.f32 %v1053, %v1857
        %v1890 = vmul.f32 %v1055, %v1858
        %v1891 = vmul.f32 %v1057, %v1859
        %v1892 = vmul.f32 %v1059, %v1860
        %v1893 = vmul.f32 %v1061, %v1861
        %v1894 = vmul.f32 %v1063, %v1862
        %v1895 = vmul.f32 %v1065, %v1863
        %v1896 = vmul.f32 %v1067, %v1864
        %v1897 = vmul.f32 %v1069, %v1865
        %v1898 = vmul.f32 %v1071, %v1866
        %v1899 = vmul.f32 %v1073, %v1867
        %v1900 = vadd.f32 %v1884, %v1202
        %v1901 = vadd.f32 %v1885, %v1203
        %v1902 = vadd.f32 %v1886, %v1204
        %v1903 = vadd.f32 %v1887, %v1205
        %v1904 = vadd.f32 %v1888, %v1206
        %v1905 = vadd.f32 %v1889, %v1207
        %v1906 = vadd.f32 %v1890, %v1208
        %v1907 = vadd.f32 %v1891, %v1209
        %v1908 = vadd.f32 %v1892, %v1210
        %v1909 = vadd.f32 %v1893, %v1211
        %v1910 = vadd.f32 %v1894, %v1212
        %v1911 = vadd.f32 %v1895, %v1213
        %v1912 = vadd.f32 %v1896, %v1214
        %v1913 = vadd.f32 %v1897, %v1215
        %v1914 = vadd.f32 %v1898, %v1216
        %v1915 = vadd.f32 %v1899, %v1217
        %v1916 = vmul.f32 %v1156, %v1900
        %v1917 = vmul.f32 %v1159, %v1901
        %v1918 = vadd.f32 %v1916, %v1917
        %v1919 = vmul.f32 %v1162, %v1902
        %v1920 = vadd.f32 %v1918, %v1919
        %v1921 = vmul.f32 %v1165, %v1903
        %v1922 = vadd.f32 %v1920, %v1921
        %v1923 = vmul.f32 %v1168, %v1904
        %v1924 = vadd.f32 %v1922, %v1923
        %v1925 = vmul.f32 %v1171, %v1905
        %v1926 = vadd.f32 %v1924, %v1925
        %v1927 = vmul.f32 %v1174, %v1906
        %v1928 = vadd.f32 %v1926, %v1927
        %v1929 = vmul.f32 %v1177, %v1907
        %v1930 = vadd.f32 %v1928, %v1929
        %v1931 = vmul.f32 %v1180, %v1908
        %v1932 = vadd.f32 %v1930, %v1931
        %v1933 = vmul.f32 %v1183, %v1909
        %v1934 = vadd.f32 %v1932, %v1933
        %v1935 = vmul.f32 %v1186, %v1910
        %v1936 = vadd.f32 %v1934, %v1935
        %v1937 = vmul.f32 %v1189, %v1911
        %v1938 = vadd.f32 %v1936, %v1937
        %v1939 = vmul.f32 %v1192, %v1912
        %v1940 = vadd.f32 %v1938, %v1939
        %v1941 = vmul.f32 %v1195, %v1913
        %v1942 = vadd.f32 %v1940, %v1941
        %v1943 = vmul.f32 %v1198, %v1914
        %v1944 = vadd.f32 %v1942, %v1943
        %v1945 = vmul.f32 %v1201, %v1915
        %v1946 = vadd.f32 %v1944, %v1945
        %v1963 = vrot.slane %v1900, 7
        %v1964 = vrot.slane %v1901, 7
        %v1965 = vrot.slane %v1902, 7
        %v1966 = vrot.slane %v1903, 7
        %v1967 = vrot.slane %v1904, 7
        %v1968 = vrot.slane %v1905, 7
        %v1969 = vrot.slane %v1906, 7
        %v1970 = vrot.slane %v1907, 7
        %v1971 = vrot.slane %v1908, 7
        %v1972 = vrot.slane %v1909, 7
        %v1973 = vrot.slane %v1910, 7
        %v1974 = vrot.slane %v1911, 7
        %v1975 = vrot.slane %v1912, 7
        %v1976 = vrot.slane %v1913, 7
        %v1977 = vrot.slane %v1914, 7
        %v1978 = vrot.slane %v1915, 7
        %v1995 = vmul.f32 %v1043, %v1963
        %v1996 = vmul.f32 %v1045, %v1964
        %v1997 = vmul.f32 %v1047, %v1965
        %v1998 = vmul.f32 %v1049, %v1966
        %v1999 = vmul.f32 %v1051, %v1967
        %v2000 = vmul.f32 %v1053, %v1968
        %v2001 = vmul.f32 %v1055, %v1969
        %v2002 = vmul.f32 %v1057, %v1970
        %v2003 = vmul.f32 %v1059, %v1971
        %v2004 = vmul.f32 %v1061, %v1972
        %v2005 = vmul.f32 %v1063, %v1973
        %v2006 = vmul.f32 %v1065, %v1974
        %v2007 = vmul.f32 %v1067, %v1975
        %v2008 = vmul.f32 %v1069, %v1976
        %v2009 = vmul.f32 %v1071, %v1977
        %v2010 = vmul.f32 %v1073, %v1978
        %v2011 = vadd.f32 %v1995, %v1202
        %v2012 = vadd.f32 %v1996, %v1203
        %v2013 = vadd.f32 %v1997, %v1204
        %v2014 = vadd.f32 %v1998, %v1205
        %v2015 = vadd.f32 %v1999, %v1206
        %v2016 = vadd.f32 %v2000, %v1207
        %v2017 = vadd.f32 %v2001, %v1208
        %v2018 = vadd.f32 %v2002, %v1209
        %v2019 = vadd.f32 %v2003, %v1210
        %v2020 = vadd.f32 %v2004, %v1211
        %v2021 = vadd.f32 %v2005, %v1212
        %v2022 = vadd.f32 %v2006, %v1213
        %v2023 = vadd.f32 %v2007, %v1214
        %v2024 = vadd.f32 %v2008, %v1215
        %v2025 = vadd.f32 %v2009, %v1216
        %v2026 = vadd.f32 %v2010, %v1217
        %v2027 = vmul.f32 %v1156, %v2011
        %v2028 = vmul.f32 %v1159, %v2012
        %v2029 = vadd.f32 %v2027, %v2028
        %v2030 = vmul.f32 %v1162, %v2013
        %v2031 = vadd.f32 %v2029, %v2030
        %v2032 = vmul.f32 %v1165, %v2014
        %v2033 = vadd.f32 %v2031, %v2032
        %v2034 = vmul.f32 %v1168, %v2015
        %v2035 = vadd.f32 %v2033, %v2034
        %v2036 = vmul.f32 %v1171, %v2016
        %v2037 = vadd.f32 %v2035, %v2036
        %v2038 = vmul.f32 %v1174, %v2017
        %v2039 = vadd.f32 %v2037, %v2038
        %v2040 = vmul.f32 %v1177, %v2018
        %v2041 = vadd.f32 %v2039, %v2040
        %v2042 = vmul.f32 %v1180, %v2019
        %v2043 = vadd.f32 %v2041, %v2042
        %v2044 = vmul.f32 %v1183, %v2020
        %v2045 = vadd.f32 %v2043, %v2044
        %v2046 = vmul.f32 %v1186, %v2021
        %v2047 = vadd.f32 %v2045, %v2046
        %v2048 = vmul.f32 %v1189, %v2022
        %v2049 = vadd.f32 %v2047, %v2048
        %v2050 = vmul.f32 %v1192, %v2023
        %v2051 = vadd.f32 %v2049, %v2050
        %v2052 = vmul.f32 %v1195, %v2024
        %v2053 = vadd.f32 %v2051, %v2052
        %v2054 = vmul.f32 %v1198, %v2025
        %v2055 = vadd.f32 %v2053, %v2054
        %v2056 = vmul.f32 %v1201, %v2026
        %v2057 = vadd.f32 %v2055, %v2056
        %v2058 = vsel %vm662, %v1280, %v1391
        %v2059 = vsel %vm664, %v2058, %v1502
        %v2060 = vsel %vm666, %v2059, %v1613
        %vm2061 = vcmask 1043456
        %v2062 = vsel %vm2061, %v2060, %v1724
        %v2063 = vsel %vm703, %v2062, %v1835
        %v2064 = vsel %vm692, %v2063, %v1946
        %v2065 = vsel %vm681, %v2064, %v2057
        %2066 = vst.msk [vmem:[#allocation5] sm:$0xff] %vm737, %v2065
        %2067 = vst.msk [vmem:[#allocation6 - $0x7] sm:$0x80] %vm719, %v2011
        %2068 = vst.msk [vmem:[#allocation6 - $0x6] sm:$0x80] %vm719, %v2012
        %2069 = vst.msk [vmem:[#allocation6 - $0x5] sm:$0x80] %vm719, %v2013
        %2070 = vst.msk [vmem:[#allocation6 - $0x4] sm:$0x80] %vm719, %v2014
        %2071 = vst.msk [vmem:[#allocation6 - $0x3] sm:$0x80] %vm719, %v2015
        %2072 = vst.msk [vmem:[#allocation6 - $0x2] sm:$0x80] %vm719, %v2016
        %2073 = vst.msk [vmem:[#allocation6 - $0x1] sm:$0x80] %vm719, %v2017
        %2074 = vst.msk [vmem:[#allocation6] sm:$0x80] %vm719, %v2018
        %2075 = vst.msk [vmem:[#allocation6 + $0x1] sm:$0x80] %vm719, %v2019
        %2076 = vst.msk [vmem:[#allocation6 + $0x2] sm:$0x80] %vm719, %v2020
        %2077 = vst.msk [vmem:[#allocation6 + $0x3] sm:$0x80] %vm719, %v2021
        %2078 = vst.msk [vmem:[#allocation6 + $0x4] sm:$0x80] %vm719, %v2022
        %2079 = vst.msk [vmem:[#allocation6 + $0x5] sm:$0x80] %vm719, %v2023
        %2080 = vst.msk [vmem:[#allocation6 + $0x6] sm:$0x80] %vm719, %v2024
        %2081 = vst.msk [vmem:[#allocation6 + $0x7] sm:$0x80] %vm719, %v2025
        %2082 = vst.msk [vmem:[#allocation6 + $0x8] sm:$0x80] %vm719, %v2026
        // Predicated region
        $region93: #{tpu_custom_call.1} parent=63 // pred_check
          %p2083 = pneg %p555
        $region94: #{tpu_custom_call.1} parent=63 // pred_check_branch
          %2085 = sbr.rel (%p2083) target = $region96
        $region95: #{tpu_custom_call.1} parent=63 // pred_region
          %2086 = vst.msk [vmem:[%s552 - $0x7] sm:$0x80] %vm719, %v2011
          %2087 = vst.msk [vmem:[%s552 - $0x6] sm:$0x80] %vm719, %v2012
          %2088 = vst.msk [vmem:[%s552 - $0x5] sm:$0x80] %vm719, %v2013
          %2089 = vst.msk [vmem:[%s552 - $0x4] sm:$0x80] %vm719, %v2014
          %2090 = vst.msk [vmem:[%s552 - $0x3] sm:$0x80] %vm719, %v2015
          %2091 = vst.msk [vmem:[%s552 - $0x2] sm:$0x80] %vm719, %v2016
          %2092 = vst.msk [vmem:[%s552 - $0x1] sm:$0x80] %vm719, %v2017
          %2093 = vst.msk [vmem:[%s552] sm:$0x80] %vm719, %v2018
          %2094 = vst.msk [vmem:[%s552 + $0x1] sm:$0x80] %vm719, %v2019
          %2095 = vst.msk [vmem:[%s552 + $0x2] sm:$0x80] %vm719, %v2020
          %2096 = vst.msk [vmem:[%s552 + $0x3] sm:$0x80] %vm719, %v2021
          %2097 = vst.msk [vmem:[%s552 + $0x4] sm:$0x80] %vm719, %v2022
          %2098 = vst.msk [vmem:[%s552 + $0x5] sm:$0x80] %vm719, %v2023
          %2099 = vst.msk [vmem:[%s552 + $0x6] sm:$0x80] %vm719, %v2024
          %2100 = vst.msk [vmem:[%s552 + $0x7] sm:$0x80] %vm719, %v2025
          %2101 = vst.msk [vmem:[%s552 + $0x8] sm:$0x80] %vm719, %v2026
        $region96: #{tpu_custom_call.1} parent=63 // pred_fallthru
          _
        %v2102 = vld [vmem:[#allocation5] sm:$0xff]
        %v2103 = vld [vmem:[%s9] sm:$0x1]
        %v2105 = vperm.slane %v2103, 0
        %v2107 = vmul.f32 %v714, %v2105
        %v2108 = vadd.f32 %v2102, %v2107
        %v2109 = vsub.f32 0.0, %v645
        %v2110 = vmul.f32 %v2109, 1.442695
        %v2111 = vpow.pop %v2110
        %v2112 = vadd.f32 %v2111, 1.0
        %v2113 = vrcp.pop %v2112
        %v2114 = vmul.f32 %v645, %v2113
        %2116 = vrot.lane.b32.xlu0 %v2114, 64
        %v2117 = vpop.permute.xlu0 %2116
        %v2119 = vmul.f32 %v2108, %v2117
        %v2120 = vld [vmem:[%s10] sm:$0xff]
        %v2121 = vld [vmem:[%s10 + $0x8] sm:$0xff]
        %v2122 = vld [vmem:[%s10 + $0x10] sm:$0xff]
        %v2123 = vld [vmem:[%s10 + $0x18] sm:$0xff]
        %v2124 = vld [vmem:[%s10 + $0x20] sm:$0xff]
        %v2125 = vld [vmem:[%s10 + $0x28] sm:$0xff]
        %v2126 = vld [vmem:[%s10 + $0x30] sm:$0xff]
        %v2127 = vld [vmem:[%s10 + $0x38] sm:$0xff]
        %v2129 = vsel %vm737, %v2119, 0
        %2131 = vmatpush.msra.mxu0 0.0
        %2132 = vmatpush.msra.mxu0 0.0
        %2133 = vmatpush.msra.mxu0 0.0
        %2134 = vmatpush.msra.mxu0 0.0
        %2135 = vmatpush.msra.mxu0 0.0
        %2136 = vmatpush.msra.mxu0 0.0
        %2137 = vmatpush.msra.mxu0 0.0
        %2138 = vmatpush.msra.mxu0 0.0
        %2139 = vmatpush.msra.mxu0 %v2127
        %2140 = vmatpush.msra.mxu0 %v2126
        %2141 = vmatpush.msra.mxu0 %v2125
        %2142 = vmatpush.msra.mxu0 %v2124
        %2143 = vmatpush.msra.mxu0 %v2123
        %2144 = vmatpush.msra.mxu0 %v2122
        %2145 = vmatpush.msra.mxu0 %v2121
        %2146 = vmatpush.msra.mxu0 %v2120
        %2147 = vmatmul.f32.gmra.mxu0 %v2129
        %v2148 = vpop.f32.mrf.mxu0
        %v2149 = vadd.f32 0.0, %v2148
        %2150 = vdwg.mxu0
        %v2151 = vadd.f32 %v579, %v2149
        %2152 = vst.msk [vmem:[%s538] sm:$0xff] %vm580, %v2151
        %s2153 = sand.u32 %s296, 1
        %s2154 = scalar_lea.sflag [#allocation10], %s2153
        %s2155 = sand.u32 %s296, 1
        %s2156 = smul.addr %s2155, 8
        %s2157 = scalar_lea.vmem [#allocation17], %s2156
        %s2158 = sand.u32 %s36, 1
        %s2159 = scalar_lea.sflag [#allocation19], %s2158
        %s2160 = sand.u32 %s322, 1
        %s2161 = smul.addr %s2160, 3
        %s2162 = scalar_lea.vmem [#allocation18], %s2161
        %s2163 = sand.u32 %s36, 1
        %s2164 = scalar_lea.sflag [#allocation19], %s2163
        %s2165 = sand.u32 %s348, 1
        %s2166 = smul.addr %s2165, 16
        %s2167 = scalar_lea.vmem [#allocation20], %s2166
        // Predicated region
        $region97: #{tpu_custom_call.1} parent=63 // pred_check
          %p2168 = pneg %p306
        $region98: #{tpu_custom_call.1} parent=63 // pred_check_branch
          %2170 = sbr.rel (%p2168) target = $region100
        $region99: #{tpu_custom_call.1} parent=63 // pred_region
          %s2171 = sadd.s32 %s40, %s41
          %2173 = vsyncadd %s2154, 0
          %s2174 = smul.addr %s2171, 8
          %s2175 = scalar_lea.hbm %s11, %s2174
          %s2177 = sshll.u32 %s2157, 4
          %s2178 = int_to_ptr.vmem [resolvable:$true] %s2177
          %s2179 = sshll.u32 %s2175, 4
          %s2180 = int_to_ptr.hbm [resolvable:$true] %s2179
          %2182 = dma.vmem_to_hbm [thread:$0]  %s2178, 128, %s2180, %s2154
        $region100: #{tpu_custom_call.1} parent=63 // pred_fallthru
          _
        // Predicated region
        $region101: #{tpu_custom_call.1} parent=63 // pred_check
          %p2183 = pneg %p332
        $region102: #{tpu_custom_call.1} parent=63 // pred_check_branch
          %2185 = sbr.rel (%p2183) target = $region104
        $region103: #{tpu_custom_call.1} parent=63 // pred_region
          %2187 = vsyncadd %s2159, 0
          %s2188 = smul.addr %s40, 3
          %s2189 = scalar_lea.hbm %s12, %s2188
          %s2190 = sshll.u32 %s2162, 4
          %s2191 = int_to_ptr.vmem [resolvable:$true] %s2190
          %s2192 = sshll.u32 %s2189, 4
          %s2193 = int_to_ptr.hbm [resolvable:$true] %s2192
          %2198 = dma.vmem_to_hbm [thread:$0]  %s2191, 48, %s2193, %s2159, 16, 16, 1
        $region104: #{tpu_custom_call.1} parent=63 // pred_fallthru
          _
        // Predicated region
        $region105: #{tpu_custom_call.1} parent=63 // pred_check
          %p2199 = pneg %p358
        $region106: #{tpu_custom_call.1} parent=63 // pred_check_branch
          %2201 = sbr.rel (%p2199) target = $region108
        $region107: #{tpu_custom_call.1} parent=63 // pred_region
          %2203 = vsyncadd %s2164, 0
          %s2204 = smul.addr %s40, 16
          %s2205 = scalar_lea.hbm %s13, %s2204
          %s2206 = sshll.u32 %s2167, 4
          %s2207 = int_to_ptr.vmem [resolvable:$true] %s2206
          %s2208 = sshll.u32 %s2205, 4
          %s2209 = int_to_ptr.hbm [resolvable:$true] %s2208
          %2214 = dma.vmem_to_hbm [thread:$0]  %s2207, 256, %s2209, %s2164, 16, 16, 1
        $region108: #{tpu_custom_call.1} parent=63 // pred_fallthru
          _
      $region64: #{tpu_custom_call.1} parent=5 // pred_fallthru
        _
      %p2215 = scmp.le.s32.totalorder 2, %s31
      // Predicated region
      $region109: #{tpu_custom_call.1} parent=5 // pred_check
        %p2216 = pneg %p2215
      $region110: #{tpu_custom_call.1} parent=5 // pred_check_branch
        %2218 = sbr.rel (%p2216) target = $region112
      $region111: #{tpu_custom_call.1} parent=5 // pred_region
        %s2219 = ssub.s32 %s31, 2
        // Predicated region
        $region113: #{tpu_custom_call.1} parent=111 // pred_check
          %p2220 = pneg %p312
        $region114: #{tpu_custom_call.1} parent=111 // pred_check_branch
          %2222 = sbr.rel (%p2220) target = $region116
        $region115: #{tpu_custom_call.1} parent=111 // pred_region
          %s2223 = sand.u32 %s297, 1
          %s2224 = scalar_lea.sflag [#allocation10], %s2223
          %s2225 = sand.u32 %s297, 1
          %s2226 = smul.addr %s2225, 8
          %s2227 = scalar_lea.vmem [#allocation17], %s2226
          %2229 = dma.done %s2224, 128
        $region116: #{tpu_custom_call.1} parent=111 // pred_fallthru
          _
        // Predicated region
        $region117: #{tpu_custom_call.1} parent=111 // pred_check
          %p2230 = pneg %p338
        $region118: #{tpu_custom_call.1} parent=111 // pred_check_branch
          %2232 = sbr.rel (%p2230) target = $region120
        $region119: #{tpu_custom_call.1} parent=111 // pred_region
          %s2233 = sand.u32 %s37, 1
          %s2234 = scalar_lea.sflag [#allocation19], %s2233
          %s2235 = sand.u32 %s323, 1
          %s2236 = smul.addr %s2235, 3
          %s2237 = scalar_lea.vmem [#allocation18], %s2236
          %2239 = dma.done %s2234, 48
        $region120: #{tpu_custom_call.1} parent=111 // pred_fallthru
          _
        // Predicated region
        $region121: #{tpu_custom_call.1} parent=111 // pred_check
          %p2240 = pneg %p364
        $region122: #{tpu_custom_call.1} parent=111 // pred_check_branch
          %2242 = sbr.rel (%p2240) target = $region124
        $region123: #{tpu_custom_call.1} parent=111 // pred_region
          %s2243 = sand.u32 %s37, 1
          %s2244 = scalar_lea.sflag [#allocation19], %s2243
          %s2245 = sand.u32 %s349, 1
          %s2246 = smul.addr %s2245, 16
          %s2247 = scalar_lea.vmem [#allocation20], %s2246
          %2249 = dma.done %s2244, 256
        $region124: #{tpu_custom_call.1} parent=111 // pred_fallthru
          _
      $region112: #{tpu_custom_call.1} parent=5 // pred_fallthru
        _
    $region6: #{tpu_custom_call.1} parent=1 // loop_footer
      %s35 = sadd.s32 1, %s31
    $region7: #{tpu_custom_call.1} parent=1 // loop_footer_branch
      %30 = sbr.rel target = $region3
    $region8: #{tpu_custom_call.1} parent=1 // loop_exit
      _
    %2250 = vsyncpa [#allocation9], 1
    %s2251 = scalar_lea.sflag [#allocation9], 1
    %2252 = vsyncpa %s2251, 1
    %2253 = vsyncpa [#allocation12], 1
    %2254 = vsyncpa [#allocation15], 1
    %2255 = vsyncpa [#allocation10], 1
    %s2256 = scalar_lea.sflag [#allocation10], 1
    %2257 = vsyncpa %s2256, 1
    %2258 = vsyncpa [#allocation19], 1
    %s2259 = scalar_lea.sflag [#allocation19], 1
    %2260 = vsyncpa %s2259, 1

</llo_original>
